<compile_context>
chip_gen: v6e
topology: v6e:2x2x1
jax: 0.10.0
libtpu: 0.0.40
codegen_flags: <defaults>
</compile_context>

<pallas_src>
import functools

import jax
import jax.numpy as jnp
from jax.experimental import pallas as pl
from jax.experimental.pallas import tpu as pltpu


# ----------------------------- Pallas kernels -------------------------------

def _conv_pool_kernel(p0_ref, p1_ref, p2_ref, p3_ref, w_ref, b_ref, o_ref):
    """Fused valid-conv-as-GEMM + bias + ReLU + 2x2/2 max-pool.

    p{q}_ref : (Mp, K)   f32   im2col patches for pool-window corner q
    w_ref    : (K, Cout) bf16  conv weights in GEMM layout
    b_ref    : (1, Cout) f32
    o_ref    : (Mp, Cout) f32  pooled output, row = (n, h_pooled, w_pooled)
    """
    w = w_ref[...]

    def mm(p_ref):
        return jnp.dot(p_ref[...].astype(jnp.bfloat16), w,
                       preferred_element_type=jnp.float32)

    # max over the four 2x2-window positions commutes with +bias and ReLU.
    m = jnp.maximum(jnp.maximum(mm(p0_ref), mm(p1_ref)),
                    jnp.maximum(mm(p2_ref), mm(p3_ref)))
    o_ref[...] = jnp.maximum(m + b_ref[...], 0.0).astype(o_ref.dtype)


def conv_relu_pool(x_nhwc, w_mat, b, k):
    """conv(kxk, stride 1, valid) -> ReLU -> maxpool(2,2) in one pallas_call."""
    n, h, w, c = x_nhwc.shape
    ho, wo = h - k + 1, w - k + 1
    assert ho % 2 == 0 and wo % 2 == 0, "maxpool(2) requires even conv output"
    hp, wp = ho // 2, wo // 2
    kk = k * k * c
    cout = w_mat.shape[1]
    mp_rows = n * hp * wp

    # im2col + 4 pool-corner views in XLA (tiny glue tensors, <1.5 MB).
    cols = [x_nhwc[:, i:i + ho, j:j + wo, :] for i in range(k) for j in range(k)]
    patches = jnp.concatenate(cols, axis=-1)                 # (N, Ho, Wo, k*k*C)
    corners = [patches[:, a::2, b::2, :].reshape(mp_rows, kk)
               for a in (0, 1) for b in (0, 1)]

    full = lambda i: (0, 0)
    out = pl.pallas_call(
        _conv_pool_kernel,
        out_shape=jax.ShapeDtypeStruct((mp_rows, cout), jnp.float32),
        grid_spec=pltpu.PrefetchScalarGridSpec(
            num_scalar_prefetch=0,
            # TODO(synk): add an M ("parallel") grid axis for large batch so the
            # patch matrices stay under v7x's 64 MiB VMEM; at batch=2 everything
            # fits in a single block on every generation.
            grid=(1,),
            in_specs=[pl.BlockSpec((mp_rows, kk), full)] * 4
                     + [pl.BlockSpec((kk, cout), full),
                        pl.BlockSpec((1, cout), full)],
            out_specs=pl.BlockSpec((mp_rows, cout), full),
        ),
        compiler_params=pltpu.CompilerParams(
            dimension_semantics=("arbitrary",)),
    )(*corners, w_mat, b.reshape(1, cout))
    return out.reshape(n, hp, wp, cout)


def _fc_fused_kernel(x_ref, w1_ref, b1_ref, w2_ref, b2_ref, o_ref, acc_ref):
    """out = relu(relu(x @ W1 + b1) @ W2 + b2), W1 blocked over its N axis.

    Per grid step j: h_j = relu(x @ W1[:, j] + b1[j]) is immediately folded
    into the fc2 accumulator via W2[j, :], so the fc1 activation never leaves
    VMEM.  f32 accumulation, bf16 MXU inputs, f32 epilogue.
    """
    j = pl.program_id(0)

    @pl.when(j == 0)
    def _():
        acc_ref[...] = jnp.zeros_like(acc_ref)

    h = jnp.dot(x_ref[...].astype(jnp.bfloat16), w1_ref[...],
                preferred_element_type=jnp.float32) + b1_ref[...]
    h = jnp.maximum(h, 0.0)
    acc_ref[...] += jnp.dot(h.astype(jnp.bfloat16), w2_ref[...],
                            preferred_element_type=jnp.float32)

    @pl.when(j == pl.num_programs(0) - 1)
    def _():
        o_ref[...] = jnp.maximum(acc_ref[...] + b2_ref[...], 0.0).astype(o_ref.dtype)


def fc1_fc2_relu(flat, w1, b1, w2, b2, *, block_n=256):
    """Fused fc1+ReLU+fc2+ReLU.  w1:(K1,N1) bf16, w2:(N1,N2) bf16, biases (1,N) f32."""
    m, k1 = flat.shape
    n1 = w1.shape[1]
    n2 = w2.shape[1]
    assert w1.shape[0] == k1 and w2.shape[0] == n1
    assert n1 % block_n == 0 and block_n % 128 == 0
    steps = n1 // block_n
    return pl.pallas_call(
        _fc_fused_kernel,
        out_shape=jax.ShapeDtypeStruct((m, n2), jnp.float32),
        grid_spec=pltpu.PrefetchScalarGridSpec(
            num_scalar_prefetch=0,
            grid=(steps,),
            in_specs=[
                pl.BlockSpec((m, k1), lambda j: (0, 0)),        # x resident
                pl.BlockSpec((k1, block_n), lambda j: (0, j)),  # fc1 weight col-block (streamed)
                pl.BlockSpec((1, block_n), lambda j: (0, j)),   # fc1 bias block
                pl.BlockSpec((block_n, n2), lambda j: (j, 0)),  # fc2 weight row-block (streamed)
                pl.BlockSpec((1, n2), lambda j: (0, 0)),        # fc2 bias resident
            ],
            out_specs=pl.BlockSpec((m, n2), lambda j: (0, 0)),
            scratch_shapes=[pltpu.VMEM((m, n2), jnp.float32)],
        ),
        compiler_params=pltpu.CompilerParams(
            dimension_semantics=("arbitrary",)),
    )(flat, w1, b1, w2, b2)


# -------------------------- params & layout prep -----------------------------

def init_params(key, imdim=3):
    """Random params in the PyTorch module's native layouts."""
    ks = jax.random.split(key, 8)
    s = 0.05
    return {
        "conv1_w": jax.random.normal(ks[0], (64, imdim, 5, 5), jnp.float32) * s,
        "conv1_b": jax.random.normal(ks[1], (64,), jnp.float32) * s,
        "conv2_w": jax.random.normal(ks[2], (128, 64, 5, 5), jnp.float32) * s,
        "conv2_b": jax.random.normal(ks[3], (128,), jnp.float32) * s,
        "fc1_w": jax.random.normal(ks[4], (1024, 128 * 5 * 5), jnp.float32) * s,
        "fc1_b": jax.random.normal(ks[5], (1024,), jnp.float32) * s,
        "fc2_w": jax.random.normal(ks[6], (1024, 1024), jnp.float32) * s,
        "fc2_b": jax.random.normal(ks[7], (1024,), jnp.float32) * s,
    }


def prepare_params(p):
    """One-time (NOT per-forward) conversion to kernel-friendly layouts:
       * conv weights  -> (kh*kw*Cin, Cout) GEMM matrices, bf16
       * fc1 weight    -> (3200, 1024), rows permuted from PyTorch's NCHW
                          flatten order to our NHWC flatten order, bf16
       * fc2 weight    -> W.T (K, N), bf16
       * biases        -> f32, FC biases pre-shaped (1, N)
    """
    def conv_mat(w):  # (Cout, Cin, kh, kw) -> (kh*kw*Cin, Cout)
        cout, cin, kh, kw = w.shape
        return (jnp.transpose(w, (2, 3, 1, 0))
                .reshape(kh * kw * cin, cout).astype(jnp.bfloat16))

    # fc1_w[o, c*25 + h*5 + w]  ->  w1_mat[h*5*128 + w*128 + c, o]
    fc1 = p["fc1_w"].reshape(1024, 128, 5, 5)
    fc1 = jnp.transpose(fc1, (2, 3, 1, 0)).reshape(128 * 5 * 5, 1024)
    return {
        "conv1_w": conv_mat(p["conv1_w"]),
        "conv1_b": p["conv1_b"].astype(jnp.float32),
        "conv2_w": conv_mat(p["conv2_w"]),
        "conv2_b": p["conv2_b"].astype(jnp.float32),
        "fc1_w": fc1.astype(jnp.bfloat16),
        "fc1_b": p["fc1_b"].reshape(1, -1).astype(jnp.float32),
        "fc2_w": jnp.transpose(p["fc2_w"]).astype(jnp.bfloat16),
        "fc2_b": p["fc2_b"].reshape(1, -1).astype(jnp.float32),
    }


# --------------------------------- forward -----------------------------------

def convnet_forward(kp, x_nchw):
    """out4 = relu(fc2(relu(fc1(view(mp(relu(conv2(mp(relu(conv1(x)))))))))))"""
    n = x_nchw.shape[0]
    x = jnp.transpose(x_nchw, (0, 2, 3, 1))                   # NCHW -> NHWC
    out1 = conv_relu_pool(x, kp["conv1_w"], kp["conv1_b"], 5)   # (N,14,14,64)
    # NOTE: conv1's 64-wide output is <128 lanes (masked stores); acceptable at
    # this tiny size -- would pack two row-blocks per store if it ever mattered.
    out2 = conv_relu_pool(out1, kp["conv2_w"], kp["conv2_b"], 5)  # (N,5,5,128)
    # TODO(synk): self.feats = out2.detach() is autograd/state bookkeeping; no-op here.
    flat = out2.reshape(n, -1)  # contiguous NHWC flatten; PyTorch's NCHW view()
    #                             semantics are folded into fc1_w's row order.
    return fc1_fc2_relu(flat, kp["fc1_w"], kp["fc1_b"], kp["fc2_w"], kp["fc2_b"])


if __name__ == "__main__":
    key = jax.random.PRNGKey(0)
    pkey, xkey = jax.random.split(key)
    params = prepare_params(init_params(pkey, imdim=3))
    # 32x32 input: conv5 -> 28 -> pool 14 -> conv5 -> 10 -> pool 5, so fc1 sees 128*5*5.
    x = jax.random.normal(xkey, (2, 3, 32, 32), jnp.float32)
    fwd = jax.jit(convnet_forward)
    out = jax.block_until_ready(fwd(params, x))
    assert out.shape == (2, 1024), out.shape
    assert bool(jnp.all(jnp.isfinite(out)))
    print("KERNEL_OK")
</pallas_src>

<mosaic_0001>
module attributes {stable_mosaic.version = 11 : i64} {
  func.func @_conv_pool_kernel(%arg0: i32, %arg1: memref<392x75xf32, #tpu.memory_space<vmem>>, %arg2: memref<392x75xf32, #tpu.memory_space<vmem>>, %arg3: memref<392x75xf32, #tpu.memory_space<vmem>>, %arg4: memref<392x75xf32, #tpu.memory_space<vmem>>, %arg5: memref<75x64xbf16, #tpu.memory_space<vmem>>, %arg6: memref<1x64xf32, #tpu.memory_space<vmem>>, %arg7: memref<392x64xf32, #tpu.memory_space<vmem>>) attributes {dimension_semantics = [#tpu.dimension_semantics<arbitrary>], iteration_bounds = array<i64: 1>, scalar_prefetch = 0 : i64, scratch_operands = 0 : i64, tpu.core_type = #tpu.core_type<tc>, window_params = [{pipeline_mode = #tpu.pipeline_mode<synchronous>, transform_indices = @transform_0, window_bounds = array<i64: 392, 75>}, {pipeline_mode = #tpu.pipeline_mode<synchronous>, transform_indices = @transform_1, window_bounds = array<i64: 392, 75>}, {pipeline_mode = #tpu.pipeline_mode<synchronous>, transform_indices = @transform_2, window_bounds = array<i64: 392, 75>}, {pipeline_mode = #tpu.pipeline_mode<synchronous>, transform_indices = @transform_3, window_bounds = array<i64: 392, 75>}, {pipeline_mode = #tpu.pipeline_mode<synchronous>, transform_indices = @transform_4, window_bounds = array<i64: 75, 64>}, {pipeline_mode = #tpu.pipeline_mode<synchronous>, transform_indices = @transform_5, window_bounds = array<i64: 1, 64>}, {pipeline_mode = #tpu.pipeline_mode<synchronous>, transform_indices = @transform_6, window_bounds = array<i64: 392, 64>}]} {
    %c0 = arith.constant 0 : index
    %c0_0 = arith.constant 0 : index
    %0 = vector.load %arg5[%c0, %c0_0] : memref<75x64xbf16, #tpu.memory_space<vmem>>, vector<75x64xbf16>
    %c0_1 = arith.constant 0 : index
    %c0_2 = arith.constant 0 : index
    %1 = vector.load %arg1[%c0_1, %c0_2] : memref<392x75xf32, #tpu.memory_space<vmem>>, vector<392x75xf32>
    %2 = arith.truncf %1 : vector<392x75xf32> to vector<392x75xbf16>
    %cst = arith.constant dense<0.000000e+00> : vector<392x64xf32>
    %3 = tpu.matmul %2, %0, %cst {dimension_numbers = #tpu.dot_dimension_numbers<[1], [0], [0], [1], [0, 0, 1, 1], [], []>} : vector<392x75xbf16>, vector<75x64xbf16>, vector<392x64xf32> -> vector<392x64xf32>
    %c0_3 = arith.constant 0 : index
    %c0_4 = arith.constant 0 : index
    %4 = vector.load %arg2[%c0_3, %c0_4] : memref<392x75xf32, #tpu.memory_space<vmem>>, vector<392x75xf32>
    %5 = arith.truncf %4 : vector<392x75xf32> to vector<392x75xbf16>
    %cst_5 = arith.constant dense<0.000000e+00> : vector<392x64xf32>
    %6 = tpu.matmul %5, %0, %cst_5 {dimension_numbers = #tpu.dot_dimension_numbers<[1], [0], [0], [1], [0, 0, 1, 1], [], []>} : vector<392x75xbf16>, vector<75x64xbf16>, vector<392x64xf32> -> vector<392x64xf32>
    %7 = arith.maximumf %3, %6 : vector<392x64xf32>
    %c0_6 = arith.constant 0 : index
    %c0_7 = arith.constant 0 : index
    %8 = vector.load %arg3[%c0_6, %c0_7] : memref<392x75xf32, #tpu.memory_space<vmem>>, vector<392x75xf32>
    %9 = arith.truncf %8 : vector<392x75xf32> to vector<392x75xbf16>
    %cst_8 = arith.constant dense<0.000000e+00> : vector<392x64xf32>
    %10 = tpu.matmul %9, %0, %cst_8 {dimension_numbers = #tpu.dot_dimension_numbers<[1], [0], [0], [1], [0, 0, 1, 1], [], []>} : vector<392x75xbf16>, vector<75x64xbf16>, vector<392x64xf32> -> vector<392x64xf32>
    %c0_9 = arith.constant 0 : index
    %c0_10 = arith.constant 0 : index
    %11 = vector.load %arg4[%c0_9, %c0_10] : memref<392x75xf32, #tpu.memory_space<vmem>>, vector<392x75xf32>
    %12 = arith.truncf %11 : vector<392x75xf32> to vector<392x75xbf16>
    %cst_11 = arith.constant dense<0.000000e+00> : vector<392x64xf32>
    %13 = tpu.matmul %12, %0, %cst_11 {dimension_numbers = #tpu.dot_dimension_numbers<[1], [0], [0], [1], [0, 0, 1, 1], [], []>} : vector<392x75xbf16>, vector<75x64xbf16>, vector<392x64xf32> -> vector<392x64xf32>
    %14 = arith.maximumf %10, %13 : vector<392x64xf32>
    %15 = arith.maximumf %7, %14 : vector<392x64xf32>
    %c0_12 = arith.constant 0 : index
    %c0_13 = arith.constant 0 : index
    %16 = vector.load %arg6[%c0_12, %c0_13] : memref<1x64xf32, #tpu.memory_space<vmem>>, vector<1x64xf32>
    %17 = vector.broadcast %16 : vector<1x64xf32> to vector<392x64xf32>
    %18 = arith.addf %15, %17 : vector<392x64xf32>
    %cst_14 = arith.constant 0.000000e+00 : f32
    %19 = vector.broadcast %cst_14 : f32 to vector<392x64xf32>
    %20 = arith.maximumf %18, %19 : vector<392x64xf32>
    %c0_15 = arith.constant 0 : index
    %c0_16 = arith.constant 0 : index
    %21 = vector.load %arg7[%c0_15, %c0_16] : memref<392x64xf32, #tpu.memory_space<vmem>>, vector<392x64xf32>
    tpu.vector_store %arg7[%c0_15, %c0_16], %20 {strides = array<i32>} : memref<392x64xf32, #tpu.memory_space<vmem>>, vector<392x64xf32>,
    return
  }
  func.func @transform_0(%arg0: i32) -> (i32, i32) {
    %c0_i32 = arith.constant 0 : i32
    %c0_i32_0 = arith.constant 0 : i32
    %c0_i32_1 = arith.constant 0 : i32
    return %c0_i32, %c0_i32_0 : i32, i32
  }
  func.func @transform_1(%arg0: i32) -> (i32, i32) {
    %c0_i32 = arith.constant 0 : i32
    %c0_i32_0 = arith.constant 0 : i32
    %c0_i32_1 = arith.constant 0 : i32
    return %c0_i32, %c0_i32_0 : i32, i32
  }
  func.func @transform_2(%arg0: i32) -> (i32, i32) {
    %c0_i32 = arith.constant 0 : i32
    %c0_i32_0 = arith.constant 0 : i32
    %c0_i32_1 = arith.constant 0 : i32
    return %c0_i32, %c0_i32_0 : i32, i32
  }
  func.func @transform_3(%arg0: i32) -> (i32, i32) {
    %c0_i32 = arith.constant 0 : i32
    %c0_i32_0 = arith.constant 0 : i32
    %c0_i32_1 = arith.constant 0 : i32
    return %c0_i32, %c0_i32_0 : i32, i32
  }
  func.func @transform_4(%arg0: i32) -> (i32, i32) {
    %c0_i32 = arith.constant 0 : i32
    %c0_i32_0 = arith.constant 0 : i32
    %c0_i32_1 = arith.constant 0 : i32
    return %c0_i32, %c0_i32_0 : i32, i32
  }
  func.func @transform_5(%arg0: i32) -> (i32, i32) {
    %c0_i32 = arith.constant 0 : i32
    %c0_i32_0 = arith.constant 0 : i32
    %c0_i32_1 = arith.constant 0 : i32
    return %c0_i32, %c0_i32_0 : i32, i32
  }
  func.func @transform_6(%arg0: i32) -> (i32, i32) {
    %c0_i32 = arith.constant 0 : i32
    %c0_i32_0 = arith.constant 0 : i32
    %c0_i32_1 = arith.constant 0 : i32
    return %c0_i32, %c0_i32_0 : i32, i32
  }
}

module attributes {stable_mosaic.version = 11 : i64} {
  func.func @_conv_pool_kernel(%arg0: i32, %arg1: memref<50x1600xf32, #tpu.memory_space<vmem>>, %arg2: memref<50x1600xf32, #tpu.memory_space<vmem>>, %arg3: memref<50x1600xf32, #tpu.memory_space<vmem>>, %arg4: memref<50x1600xf32, #tpu.memory_space<vmem>>, %arg5: memref<1600x128xbf16, #tpu.memory_space<vmem>>, %arg6: memref<1x128xf32, #tpu.memory_space<vmem>>, %arg7: memref<50x128xf32, #tpu.memory_space<vmem>>) attributes {dimension_semantics = [#tpu.dimension_semantics<arbitrary>], iteration_bounds = array<i64: 1>, scalar_prefetch = 0 : i64, scratch_operands = 0 : i64, tpu.core_type = #tpu.core_type<tc>, window_params = [{pipeline_mode = #tpu.pipeline_mode<synchronous>, transform_indices = @transform_0, window_bounds = array<i64: 50, 1600>}, {pipeline_mode = #tpu.pipeline_mode<synchronous>, transform_indices = @transform_1, window_bounds = array<i64: 50, 1600>}, {pipeline_mode = #tpu.pipeline_mode<synchronous>, transform_indices = @transform_2, window_bounds = array<i64: 50, 1600>}, {pipeline_mode = #tpu.pipeline_mode<synchronous>, transform_indices = @transform_3, window_bounds = array<i64: 50, 1600>}, {pipeline_mode = #tpu.pipeline_mode<synchronous>, transform_indices = @transform_4, window_bounds = array<i64: 1600, 128>}, {pipeline_mode = #tpu.pipeline_mode<synchronous>, transform_indices = @transform_5, window_bounds = array<i64: 1, 128>}, {pipeline_mode = #tpu.pipeline_mode<synchronous>, transform_indices = @transform_6, window_bounds = array<i64: 50, 128>}]} {
    %c0 = arith.constant 0 : index
    %c0_0 = arith.constant 0 : index
    %0 = vector.load %arg5[%c0, %c0_0] : memref<1600x128xbf16, #tpu.memory_space<vmem>>, vector<1600x128xbf16>
    %c0_1 = arith.constant 0 : index
    %c0_2 = arith.constant 0 : index
    %1 = vector.load %arg1[%c0_1, %c0_2] : memref<50x1600xf32, #tpu.memory_space<vmem>>, vector<50x1600xf32>
    %2 = arith.truncf %1 : vector<50x1600xf32> to vector<50x1600xbf16>
    %cst = arith.constant dense<0.000000e+00> : vector<50x128xf32>
    %3 = tpu.matmul %2, %0, %cst {dimension_numbers = #tpu.dot_dimension_numbers<[1], [0], [0], [1], [0, 0, 1, 1], [], []>} : vector<50x1600xbf16>, vector<1600x128xbf16>, vector<50x128xf32> -> vector<50x128xf32>
    %c0_3 = arith.constant 0 : index
    %c0_4 = arith.constant 0 : index
    %4 = vector.load %arg2[%c0_3, %c0_4] : memref<50x1600xf32, #tpu.memory_space<vmem>>, vector<50x1600xf32>
    %5 = arith.truncf %4 : vector<50x1600xf32> to vector<50x1600xbf16>
    %cst_5 = arith.constant dense<0.000000e+00> : vector<50x128xf32>
    %6 = tpu.matmul %5, %0, %cst_5 {dimension_numbers = #tpu.dot_dimension_numbers<[1], [0], [0], [1], [0, 0, 1, 1], [], []>} : vector<50x1600xbf16>, vector<1600x128xbf16>, vector<50x128xf32> -> vector<50x128xf32>
    %7 = arith.maximumf %3, %6 : vector<50x128xf32>
    %c0_6 = arith.constant 0 : index
    %c0_7 = arith.constant 0 : index
    %8 = vector.load %arg3[%c0_6, %c0_7] : memref<50x1600xf32, #tpu.memory_space<vmem>>, vector<50x1600xf32>
    %9 = arith.truncf %8 : vector<50x1600xf32> to vector<50x1600xbf16>
    %cst_8 = arith.constant dense<0.000000e+00> : vector<50x128xf32>
    %10 = tpu.matmul %9, %0, %cst_8 {dimension_numbers = #tpu.dot_dimension_numbers<[1], [0], [0], [1], [0, 0, 1, 1], [], []>} : vector<50x1600xbf16>, vector<1600x128xbf16>, vector<50x128xf32> -> vector<50x128xf32>
    %c0_9 = arith.constant 0 : index
    %c0_10 = arith.constant 0 : index
    %11 = vector.load %arg4[%c0_9, %c0_10] : memref<50x1600xf32, #tpu.memory_space<vmem>>, vector<50x1600xf32>
    %12 = arith.truncf %11 : vector<50x1600xf32> to vector<50x1600xbf16>
    %cst_11 = arith.constant dense<0.000000e+00> : vector<50x128xf32>
    %13 = tpu.matmul %12, %0, %cst_11 {dimension_numbers = #tpu.dot_dimension_numbers<[1], [0], [0], [1], [0, 0, 1, 1], [], []>} : vector<50x1600xbf16>, vector<1600x128xbf16>, vector<50x128xf32> -> vector<50x128xf32>
    %14 = arith.maximumf %10, %13 : vector<50x128xf32>
    %15 = arith.maximumf %7, %14 : vector<50x128xf32>
    %c0_12 = arith.constant 0 : index
    %c0_13 = arith.constant 0 : index
    %16 = vector.load %arg6[%c0_12, %c0_13] : memref<1x128xf32, #tpu.memory_space<vmem>>, vector<1x128xf32>
    %17 = vector.broadcast %16 : vector<1x128xf32> to vector<50x128xf32>
    %18 = arith.addf %15, %17 : vector<50x128xf32>
    %cst_14 = arith.constant 0.000000e+00 : f32
    %19 = vector.broadcast %cst_14 : f32 to vector<50x128xf32>
    %20 = arith.maximumf %18, %19 : vector<50x128xf32>
    %c0_15 = arith.constant 0 : index
    %c0_16 = arith.constant 0 : index
    %21 = vector.load %arg7[%c0_15, %c0_16] : memref<50x128xf32, #tpu.memory_space<vmem>>, vector<50x128xf32>
    tpu.vector_store %arg7[%c0_15, %c0_16], %20 {strides = array<i32>} : memref<50x128xf32, #tpu.memory_space<vmem>>, vector<50x128xf32>,
    return
  }
  func.func @transform_0(%arg0: i32) -> (i32, i32) {
    %c0_i32 = arith.constant 0 : i32
    %c0_i32_0 = arith.constant 0 : i32
    %c0_i32_1 = arith.constant 0 : i32
    return %c0_i32, %c0_i32_0 : i32, i32
  }
  func.func @transform_1(%arg0: i32) -> (i32, i32) {
    %c0_i32 = arith.constant 0 : i32
    %c0_i32_0 = arith.constant 0 : i32
    %c0_i32_1 = arith.constant 0 : i32
    return %c0_i32, %c0_i32_0 : i32, i32
  }
  func.func @transform_2(%arg0: i32) -> (i32, i32) {
    %c0_i32 = arith.constant 0 : i32
    %c0_i32_0 = arith.constant 0 : i32
    %c0_i32_1 = arith.constant 0 : i32
    return %c0_i32, %c0_i32_0 : i32, i32
  }
  func.func @transform_3(%arg0: i32) -> (i32, i32) {
    %c0_i32 = arith.constant 0 : i32
    %c0_i32_0 = arith.constant 0 : i32
    %c0_i32_1 = arith.constant 0 : i32
    return %c0_i32, %c0_i32_0 : i32, i32
  }
  func.func @transform_4(%arg0: i32) -> (i32, i32) {
    %c0_i32 = arith.constant 0 : i32
    %c0_i32_0 = arith.constant 0 : i32
    %c0_i32_1 = arith.constant 0 : i32
    return %c0_i32, %c0_i32_0 : i32, i32
  }
  func.func @transform_5(%arg0: i32) -> (i32, i32) {
    %c0_i32 = arith.constant 0 : i32
    %c0_i32_0 = arith.constant 0 : i32
    %c0_i32_1 = arith.constant 0 : i32
    return %c0_i32, %c0_i32_0 : i32, i32
  }
  func.func @transform_6(%arg0: i32) -> (i32, i32) {
    %c0_i32 = arith.constant 0 : i32
    %c0_i32_0 = arith.constant 0 : i32
    %c0_i32_1 = arith.constant 0 : i32
    return %c0_i32, %c0_i32_0 : i32, i32
  }
}

module attributes {stable_mosaic.version = 11 : i64} {
  func.func @_fc_fused_kernel(%arg0: i32, %arg1: memref<2x3200xf32, #tpu.memory_space<vmem>>, %arg2: memref<3200x256xbf16, #tpu.memory_space<vmem>>, %arg3: memref<1x256xf32, #tpu.memory_space<vmem>>, %arg4: memref<256x1024xbf16, #tpu.memory_space<vmem>>, %arg5: memref<1x1024xf32, #tpu.memory_space<vmem>>, %arg6: memref<2x1024xf32, #tpu.memory_space<vmem>>, %arg7: memref<2x1024xf32, #tpu.memory_space<vmem>>) attributes {dimension_semantics = [#tpu.dimension_semantics<arbitrary>], iteration_bounds = array<i64: 4>, scalar_prefetch = 0 : i64, scratch_operands = 1 : i64, tpu.core_type = #tpu.core_type<tc>, window_params = [{pipeline_mode = #tpu.pipeline_mode<synchronous>, transform_indices = @transform_0, window_bounds = array<i64: 2, 3200>}, {transform_indices = @transform_1, window_bounds = array<i64: 3200, 256>}, {transform_indices = @transform_2, window_bounds = array<i64: 1, 256>}, {transform_indices = @transform_3, window_bounds = array<i64: 256, 1024>}, {pipeline_mode = #tpu.pipeline_mode<synchronous>, transform_indices = @transform_4, window_bounds = array<i64: 1, 1024>}, {pipeline_mode = #tpu.pipeline_mode<synchronous>, transform_indices = @transform_5, window_bounds = array<i64: 2, 1024>}]} {
    %c0_i32 = arith.constant 0 : i32
    %0 = arith.cmpi eq, %arg0, %c0_i32 : i32
    %1 = arith.extui %0 : i1 to i32
    %c0_i32_0 = arith.constant 0 : i32
    %2 = arith.cmpi ne, %1, %c0_i32_0 : i32
    scf.if %2 {
      %cst_15 = arith.constant 0.000000e+00 : f32
      %21 = vector.broadcast %cst_15 : f32 to vector<2x1024xf32>
      %c0_16 = arith.constant 0 : index
      %c0_17 = arith.constant 0 : index
      %22 = vector.load %arg7[%c0_16, %c0_17] : memref<2x1024xf32, #tpu.memory_space<vmem>>, vector<2x1024xf32>
      tpu.vector_store %arg7[%c0_16, %c0_17], %21 {strides = array<i32>} : memref<2x1024xf32, #tpu.memory_space<vmem>>, vector<2x1024xf32>,
    } else {
    }
    %c0 = arith.constant 0 : index
    %c0_1 = arith.constant 0 : index
    %3 = vector.load %arg1[%c0, %c0_1] : memref<2x3200xf32, #tpu.memory_space<vmem>>, vector<2x3200xf32>
    %4 = arith.truncf %3 : vector<2x3200xf32> to vector<2x3200xbf16>
    %c0_2 = arith.constant 0 : index
    %c0_3 = arith.constant 0 : index
    %5 = vector.load %arg2[%c0_2, %c0_3] : memref<3200x256xbf16, #tpu.memory_space<vmem>>, vector<3200x256xbf16>
    %cst = arith.constant dense<0.000000e+00> : vector<2x256xf32>
    %6 = tpu.matmul %4, %5, %cst {dimension_numbers = #tpu.dot_dimension_numbers<[1], [0], [0], [1], [0, 0, 1, 1], [], []>} : vector<2x3200xbf16>, vector<3200x256xbf16>, vector<2x256xf32> -> vector<2x256xf32>
    %c0_4 = arith.constant 0 : index
    %c0_5 = arith.constant 0 : index
    %7 = vector.load %arg3[%c0_4, %c0_5] : memref<1x256xf32, #tpu.memory_space<vmem>>, vector<1x256xf32>
    %8 = vector.broadcast %7 : vector<1x256xf32> to vector<2x256xf32>
    %9 = arith.addf %6, %8 : vector<2x256xf32>
    %cst_6 = arith.constant 0.000000e+00 : f32
    %10 = vector.broadcast %cst_6 : f32 to vector<2x256xf32>
    %11 = arith.maximumf %9, %10 : vector<2x256xf32>
    %c0_7 = arith.constant 0 : index
    %c0_8 = arith.constant 0 : index
    %12 = vector.load %arg7[%c0_7, %c0_8] : memref<2x1024xf32, #tpu.memory_space<vmem>>, vector<2x1024xf32>
    %13 = arith.truncf %11 : vector<2x256xf32> to vector<2x256xbf16>
    %c0_9 = arith.constant 0 : index
    %c0_10 = arith.constant 0 : index
    %14 = vector.load %arg4[%c0_9, %c0_10] : memref<256x1024xbf16, #tpu.memory_space<vmem>>, vector<256x1024xbf16>
    %cst_11 = arith.constant dense<0.000000e+00> : vector<2x1024xf32>
    %15 = tpu.matmul %13, %14, %cst_11 {dimension_numbers = #tpu.dot_dimension_numbers<[1], [0], [0], [1], [0, 0, 1, 1], [], []>} : vector<2x256xbf16>, vector<256x1024xbf16>, vector<2x1024xf32> -> vector<2x1024xf32>
    %16 = arith.addf %12, %15 : vector<2x1024xf32>
    %c0_12 = arith.constant 0 : index
    %c0_13 = arith.constant 0 : index
    %17 = vector.load %arg7[%c0_12, %c0_13] : memref<2x1024xf32, #tpu.memory_space<vmem>>, vector<2x1024xf32>
    tpu.vector_store %arg7[%c0_12, %c0_13], %16 {strides = array<i32>} : memref<2x1024xf32, #tpu.memory_space<vmem>>, vector<2x1024xf32>,
    %c3_i32 = arith.constant 3 : i32
    %18 = arith.cmpi eq, %arg0, %c3_i32 : i32
    %19 = arith.extui %18 : i1 to i32
    %c0_i32_14 = arith.constant 0 : i32
    %20 = arith.cmpi ne, %19, %c0_i32_14 : i32
    scf.if %20 {
      %c0_15 = arith.constant 0 : index
      %c0_16 = arith.constant 0 : index
      %21 = vector.load %arg7[%c0_15, %c0_16] : memref<2x1024xf32, #tpu.memory_space<vmem>>, vector<2x1024xf32>
      %c0_17 = arith.constant 0 : index
      %c0_18 = arith.constant 0 : index
      %22 = vector.load %arg5[%c0_17, %c0_18] : memref<1x1024xf32, #tpu.memory_space<vmem>>, vector<1x1024xf32>
      %23 = vector.broadcast %22 : vector<1x1024xf32> to vector<2x1024xf32>
      %24 = arith.addf %21, %23 : vector<2x1024xf32>
      %cst_19 = arith.constant 0.000000e+00 : f32
      %25 = vector.broadcast %cst_19 : f32 to vector<2x1024xf32>
      %26 = arith.maximumf %24, %25 : vector<2x1024xf32>
      %c0_20 = arith.constant 0 : index
      %c0_21 = arith.constant 0 : index
      %27 = vector.load %arg6[%c0_20, %c0_21] : memref<2x1024xf32, #tpu.memory_space<vmem>>, vector<2x1024xf32>
      tpu.vector_store %arg6[%c0_20, %c0_21], %26 {strides = array<i32>} : memref<2x1024xf32, #tpu.memory_space<vmem>>, vector<2x1024xf32>,
    } else {
    }
    return
  }
  func.func @transform_0(%arg0: i32) -> (i32, i32) {
    %c0_i32 = arith.constant 0 : i32
    %c0_i32_0 = arith.constant 0 : i32
    %c0_i32_1 = arith.constant 0 : i32
    return %c0_i32, %c0_i32_0 : i32, i32
  }
  func.func @transform_1(%arg0: i32) -> (i32, i32) {
    %c0_i32 = arith.constant 0 : i32
    %c0_i32_0 = arith.constant 0 : i32
    return %c0_i32, %arg0 : i32, i32
  }
  func.func @transform_2(%arg0: i32) -> (i32, i32) {
    %c0_i32 = arith.constant 0 : i32
    %c0_i32_0 = arith.constant 0 : i32
    return %c0_i32, %arg0 : i32, i32
  }
  func.func @transform_3(%arg0: i32) -> (i32, i32) {
    %c0_i32 = arith.constant 0 : i32
    %c0_i32_0 = arith.constant 0 : i32
    return %arg0, %c0_i32 : i32, i32
  }
  func.func @transform_4(%arg0: i32) -> (i32, i32) {
    %c0_i32 = arith.constant 0 : i32
    %c0_i32_0 = arith.constant 0 : i32
    %c0_i32_1 = arith.constant 0 : i32
    return %c0_i32, %c0_i32_0 : i32, i32
  }
  func.func @transform_5(%arg0: i32) -> (i32, i32) {
    %c0_i32 = arith.constant 0 : i32
    %c0_i32_0 = arith.constant 0 : i32
    %c0_i32_1 = arith.constant 0 : i32
    return %c0_i32, %c0_i32_0 : i32, i32
  }
}

</mosaic_0001>

<llo_original>
// kernel: convnet_forward.3
$region0: #{convnet_forward.3}
  #allocation0 [shape = 'u32[]', space=smem, size = 0x4, offset = 0x4, fixed_abs, tag = 'smem constant byte address 0x4 - core index']
  #allocation1 [shape = 'u32[144,128]{1,0:T(1,128)}', space=vmem, size = 0x12000, scoped, tag = 'internal scratch']
  %s0 = inlined_call_operand.vmem [shape: f32[392,75], index: 0, kind: input, shape index: {}]
  %s1 = inlined_call_operand.vmem [shape: f32[392,75], index: 1, kind: input, shape index: {}]
  %s2 = inlined_call_operand.vmem [shape: f32[392,75], index: 2, kind: input, shape index: {}]
  %s3 = inlined_call_operand.vmem [shape: f32[392,75], index: 3, kind: input, shape index: {}]
  %s4 = inlined_call_operand.vmem [shape: bf16[75,64], index: 4, kind: input, shape index: {}]
  %s5 = inlined_call_operand.vmem [shape: f32[1,64], index: 5, kind: input, shape index: {}]
  %s6 = inlined_call_operand.vmem [shape: f32[392,64], index: 6, kind: output, shape index: {}]
  %s7 = sld [smem:[#allocation0]]
  $region34: #{convnet_forward.3} parent=0
    _
  %s9 = ssub.s32 1, %s7
  %s10 = scalar_select 0, %s9, %s7
  // Predicated region
  $region2: #{convnet_forward.3} parent=0 // pred_check
    _
  $region3: #{convnet_forward.3} parent=0 // pred_check_branch
    %12 = sbr.rel (0) target = $region5
  $region4: #{convnet_forward.3} parent=0 // pred_region
    _
  $region5: #{convnet_forward.3} parent=0 // pred_fallthru
    _
  // Predicated region
  $region6: #{convnet_forward.3} parent=0 // pred_check
    _
  $region7: #{convnet_forward.3} parent=0 // pred_check_branch
    %14 = sbr.rel (0) target = $region9
  $region8: #{convnet_forward.3} parent=0 // pred_region
    _
  $region9: #{convnet_forward.3} parent=0 // pred_fallthru
    _
  // Predicated region
  $region10: #{convnet_forward.3} parent=0 // pred_check
    _
  $region11: #{convnet_forward.3} parent=0 // pred_check_branch
    %16 = sbr.rel (0) target = $region13
  $region12: #{convnet_forward.3} parent=0 // pred_region
    _
  $region13: #{convnet_forward.3} parent=0 // pred_fallthru
    _
  // Predicated region
  $region14: #{convnet_forward.3} parent=0 // pred_check
    _
  $region15: #{convnet_forward.3} parent=0 // pred_check_branch
    %18 = sbr.rel (0) target = $region17
  $region16: #{convnet_forward.3} parent=0 // pred_region
    _
  $region17: #{convnet_forward.3} parent=0 // pred_fallthru
    _
  // Predicated region
  $region18: #{convnet_forward.3} parent=0 // pred_check
    _
  $region19: #{convnet_forward.3} parent=0 // pred_check_branch
    %20 = sbr.rel (0) target = $region21
  $region20: #{convnet_forward.3} parent=0 // pred_region
    _
  $region21: #{convnet_forward.3} parent=0 // pred_fallthru
    _
  // Predicated region
  $region22: #{convnet_forward.3} parent=0 // pred_check
    _
  $region23: #{convnet_forward.3} parent=0 // pred_check_branch
    %22 = sbr.rel (0) target = $region25
  $region24: #{convnet_forward.3} parent=0 // pred_region
    _
  $region25: #{convnet_forward.3} parent=0 // pred_fallthru
    _
  %v24 = vld [vmem:[%s4] sm:$0xf]
  %v25 = vld [vmem:[%s4 + $0x4] sm:$0xf]
  %v26 = vld [vmem:[%s4 + $0x8] sm:$0xf]
  %v27 = vld [vmem:[%s4 + $0xc] sm:$0xf]
  %v28 = vld [vmem:[%s4 + $0x10] sm:$0xf]
  %v29 = vld [vmem:[%s4 + $0x14] sm:$0xf]
  %v30 = vld [vmem:[%s4 + $0x18] sm:$0xf]
  %v31 = vld [vmem:[%s4 + $0x1c] sm:$0xf]
  %v32 = vld [vmem:[%s4 + $0x20] sm:$0xf]
  %v33 = vld [vmem:[%s4 + $0x24] sm:$0x3]
  %v34 = vld [vmem:[%s0] sm:$0xff]
  %v35 = vld [vmem:[%s0 + $0x8] sm:$0xff]
  %v36 = vld [vmem:[%s0 + $0x10] sm:$0xff]
  %v37 = vld [vmem:[%s0 + $0x18] sm:$0xff]
  %v38 = vld [vmem:[%s0 + $0x20] sm:$0xff]
  %v39 = vld [vmem:[%s0 + $0x28] sm:$0xff]
  %v40 = vld [vmem:[%s0 + $0x30] sm:$0xff]
  %v41 = vld [vmem:[%s0 + $0x38] sm:$0xff]
  %v42 = vld [vmem:[%s0 + $0x40] sm:$0xff]
  %v43 = vld [vmem:[%s0 + $0x48] sm:$0xff]
  %v44 = vld [vmem:[%s0 + $0x50] sm:$0xff]
  %v45 = vld [vmem:[%s0 + $0x58] sm:$0xff]
  %v46 = vld [vmem:[%s0 + $0x60] sm:$0xff]
  %v47 = vld [vmem:[%s0 + $0x68] sm:$0xff]
  %v48 = vld [vmem:[%s0 + $0x70] sm:$0xff]
  %v49 = vld [vmem:[%s0 + $0x78] sm:$0xff]
  %v50 = vld [vmem:[%s0 + $0x80] sm:$0xff]
  %v51 = vld [vmem:[%s0 + $0x88] sm:$0xff]
  %v52 = vld [vmem:[%s0 + $0x90] sm:$0xff]
  %v53 = vld [vmem:[%s0 + $0x98] sm:$0xff]
  %v54 = vld [vmem:[%s0 + $0xa0] sm:$0xff]
  %v55 = vld [vmem:[%s0 + $0xa8] sm:$0xff]
  %v56 = vld [vmem:[%s0 + $0xb0] sm:$0xff]
  %v57 = vld [vmem:[%s0 + $0xb8] sm:$0xff]
  %v58 = vld [vmem:[%s0 + $0xc0] sm:$0xff]
  %v59 = vld [vmem:[%s0 + $0xc8] sm:$0xff]
  %v60 = vld [vmem:[%s0 + $0xd0] sm:$0xff]
  %v61 = vld [vmem:[%s0 + $0xd8] sm:$0xff]
  %v62 = vld [vmem:[%s0 + $0xe0] sm:$0xff]
  %v63 = vld [vmem:[%s0 + $0xe8] sm:$0xff]
  %v64 = vld [vmem:[%s0 + $0xf0] sm:$0xff]
  %v65 = vld [vmem:[%s0 + $0xf8] sm:$0xff]
  %v66 = vld [vmem:[%s0 + $0x100] sm:$0xff]
  %v67 = vld [vmem:[%s0 + $0x108] sm:$0xff]
  %v68 = vld [vmem:[%s0 + $0x110] sm:$0xff]
  %v69 = vld [vmem:[%s0 + $0x118] sm:$0xff]
  %v70 = vld [vmem:[%s0 + $0x120] sm:$0xff]
  %v71 = vld [vmem:[%s0 + $0x128] sm:$0xff]
  %v72 = vld [vmem:[%s0 + $0x130] sm:$0xff]
  %v73 = vld [vmem:[%s0 + $0x138] sm:$0xff]
  %v74 = vld [vmem:[%s0 + $0x140] sm:$0xff]
  %v75 = vld [vmem:[%s0 + $0x148] sm:$0xff]
  %v76 = vld [vmem:[%s0 + $0x150] sm:$0xff]
  %v77 = vld [vmem:[%s0 + $0x158] sm:$0xff]
  %v78 = vld [vmem:[%s0 + $0x160] sm:$0xff]
  %v79 = vld [vmem:[%s0 + $0x168] sm:$0xff]
  %v80 = vld [vmem:[%s0 + $0x170] sm:$0xff]
  %v81 = vld [vmem:[%s0 + $0x178] sm:$0xff]
  %v82 = vld [vmem:[%s0 + $0x180] sm:$0xff]
  %v83 = vpack.c.bf16 %v35, %v34
  %v84 = vpack.c.bf16 %v37, %v36
  %v85 = vpack.c.bf16 %v39, %v38
  %v86 = vpack.c.bf16 %v41, %v40
  %v87 = vpack.c.bf16 %v43, %v42
  %v88 = vpack.c.bf16 %v45, %v44
  %v89 = vpack.c.bf16 %v47, %v46
  %v90 = vpack.c.bf16 %v49, %v48
  %v91 = vpack.c.bf16 %v51, %v50
  %v92 = vpack.c.bf16 %v53, %v52
  %v93 = vpack.c.bf16 %v55, %v54
  %v94 = vpack.c.bf16 %v57, %v56
  %v95 = vpack.c.bf16 %v59, %v58
  %v96 = vpack.c.bf16 %v61, %v60
  %v97 = vpack.c.bf16 %v63, %v62
  %v98 = vpack.c.bf16 %v65, %v64
  %v99 = vpack.c.bf16 %v67, %v66
  %v100 = vpack.c.bf16 %v69, %v68
  %v101 = vpack.c.bf16 %v71, %v70
  %v102 = vpack.c.bf16 %v73, %v72
  %v103 = vpack.c.bf16 %v75, %v74
  %v104 = vpack.c.bf16 %v77, %v76
  %v105 = vpack.c.bf16 %v79, %v78
  %v106 = vpack.c.bf16 %v81, %v80
  %v107 = vpack.c.bf16 %v82, %v82
  %v118 = vunpack.c.l.b16 %v24
  %v119 = vunpack.c.l.b16 %v25
  %v120 = vunpack.c.l.b16 %v26
  %v121 = vunpack.c.l.b16 %v27
  %v122 = vunpack.c.l.b16 %v28
  %v123 = vunpack.c.l.b16 %v29
  %v124 = vunpack.c.l.b16 %v30
  %v125 = vunpack.c.l.b16 %v31
  %v126 = vunpack.c.l.b16 %v32
  %v127 = vunpack.c.l.b16 %v33
  %v128 = vpack.c.b16 %v119, %v118
  %v129 = vpack.c.b16 %v121, %v120
  %v130 = vpack.c.b16 %v123, %v122
  %v131 = vpack.c.b16 %v125, %v124
  %v132 = vpack.c.b16 %v127, %v126
  %vm137 = vcmask 613376
  %v139 = vsel %vm137, %v83, 0
  %v142 = vsel %vm137, %v84, 0
  %v145 = vsel %vm137, %v85, 0
  %v148 = vsel %vm137, %v86, 0
  %v151 = vsel %vm137, %v87, 0
  %v154 = vsel %vm137, %v88, 0
  %v157 = vsel %vm137, %v89, 0
  %v160 = vsel %vm137, %v90, 0
  %v163 = vsel %vm137, %v91, 0
  %v166 = vsel %vm137, %v92, 0
  %v169 = vsel %vm137, %v93, 0
  %v172 = vsel %vm137, %v94, 0
  %v175 = vsel %vm137, %v95, 0
  %v178 = vsel %vm137, %v96, 0
  %v181 = vsel %vm137, %v97, 0
  %v184 = vsel %vm137, %v98, 0
  %v187 = vsel %vm137, %v99, 0
  %v190 = vsel %vm137, %v100, 0
  %v193 = vsel %vm137, %v101, 0
  %v196 = vsel %vm137, %v102, 0
  %v199 = vsel %vm137, %v103, 0
  %v202 = vsel %vm137, %v104, 0
  %v205 = vsel %vm137, %v105, 0
  %v208 = vsel %vm137, %v106, 0
  %v211 = vsel %vm137, %v107, 0
  %vm213 = vcmask 1044480
  %vm214 = vcmask 1045504
  %v215 = vsel %vm213, 4294967295, 65535
  %v216 = vsel %vm214, %v215, 0
  %v218 = vand.u32 %v132, %v216
  %220 = vmatprep.subr.bf16.mxu0 0
  %221 = vmatpush1.bf16.msra.mxu0 0
  %222 = vmatprep.subr.bf16.mxu0 0
  %223 = vmatpush1.bf16.msra.mxu0 0
  %224 = vmatprep.subr.bf16.mxu0 0
  %225 = vmatpush1.bf16.msra.mxu0 0
  %226 = vmatprep.subr.bf16.mxu0 0
  %227 = vmatpush1.bf16.msra.mxu0 %v218
  %228 = vmatprep.subr.bf16.mxu0 0
  %229 = vmatpush1.bf16.msra.mxu0 %v131
  %230 = vmatprep.subr.bf16.mxu0 0
  %231 = vmatpush1.bf16.msra.mxu0 %v130
  %232 = vmatprep.subr.bf16.mxu0 0
  %233 = vmatpush1.bf16.msra.mxu0 %v129
  %234 = vmatprep.subr.bf16.mxu0 0
  %235 = vmatpush1.bf16.msra.mxu0 %v128
  %236 = vmatprep.subr.bf16.mxu0 0
  %237 = vmatpush2.bf16.msra.mxu0 0
  %238 = vmatprep.subr.bf16.mxu0 0
  %239 = vmatpush2.bf16.msra.mxu0 0
  %240 = vmatprep.subr.bf16.mxu0 0
  %241 = vmatpush2.bf16.msra.mxu0 0
  %242 = vmatprep.subr.bf16.mxu0 0
  %243 = vmatpush2.bf16.msra.mxu0 0
  %244 = vmatprep.subr.bf16.mxu0 0
  %245 = vmatpush2.bf16.msra.mxu0 0
  %246 = vmatprep.subr.bf16.mxu0 0
  %247 = vmatpush2.bf16.msra.mxu0 0
  %248 = vmatprep.subr.bf16.mxu0 0
  %249 = vmatpush2.bf16.msra.mxu0 0
  %250 = vmatprep.subr.bf16.mxu0 0
  %251 = vmatpush2.bf16.msra.mxu0 0
  %252 = vmatprep.mubr.bf16.mxu0 0
  %253 = vmatmul.mubr.bf16.gmra.mxu0 %v139
  %v254 = vpop.f32.mrf.mxu0
  %v255 = vadd.f32 0.0, %v254
  %v256 = vpop.f32.mrf.mxu0
  %v257 = vpop.f32.mrf.mxu0
  %v258 = vadd.f32 0.0, %v257
  %v259 = vpop.f32.mrf.mxu0
  %260 = vmatprep.mubr.bf16.mxu0 0
  %261 = vmatmul.mubr.bf16.gmra.mxu0 %v142
  %v262 = vpop.f32.mrf.mxu0
  %v263 = vadd.f32 0.0, %v262
  %v264 = vpop.f32.mrf.mxu0
  %v265 = vpop.f32.mrf.mxu0
  %v266 = vadd.f32 0.0, %v265
  %v267 = vpop.f32.mrf.mxu0
  %268 = vmatprep.mubr.bf16.mxu0 0
  %269 = vmatmul.mubr.bf16.gmra.mxu0 %v145
  %v270 = vpop.f32.mrf.mxu0
  %v271 = vadd.f32 0.0, %v270
  %v272 = vpop.f32.mrf.mxu0
  %v273 = vpop.f32.mrf.mxu0
  %v274 = vadd.f32 0.0, %v273
  %v275 = vpop.f32.mrf.mxu0
  %276 = vmatprep.mubr.bf16.mxu0 0
  %277 = vmatmul.mubr.bf16.gmra.mxu0 %v148
  %v278 = vpop.f32.mrf.mxu0
  %v279 = vadd.f32 0.0, %v278
  %v280 = vpop.f32.mrf.mxu0
  %v281 = vpop.f32.mrf.mxu0
  %v282 = vadd.f32 0.0, %v281
  %v283 = vpop.f32.mrf.mxu0
  %284 = vmatprep.mubr.bf16.mxu0 0
  %285 = vmatmul.mubr.bf16.gmra.mxu0 %v151
  %v286 = vpop.f32.mrf.mxu0
  %v287 = vadd.f32 0.0, %v286
  %v288 = vpop.f32.mrf.mxu0
  %v289 = vpop.f32.mrf.mxu0
  %v290 = vadd.f32 0.0, %v289
  %v291 = vpop.f32.mrf.mxu0
  %292 = vmatprep.mubr.bf16.mxu0 0
  %293 = vmatmul.mubr.bf16.gmra.mxu0 %v154
  %v294 = vpop.f32.mrf.mxu0
  %v295 = vadd.f32 0.0, %v294
  %v296 = vpop.f32.mrf.mxu0
  %v297 = vpop.f32.mrf.mxu0
  %v298 = vadd.f32 0.0, %v297
  %v299 = vpop.f32.mrf.mxu0
  %300 = vmatprep.mubr.bf16.mxu0 0
  %301 = vmatmul.mubr.bf16.gmra.mxu0 %v157
  %v302 = vpop.f32.mrf.mxu0
  %v303 = vadd.f32 0.0, %v302
  %v304 = vpop.f32.mrf.mxu0
  %v305 = vpop.f32.mrf.mxu0
  %v306 = vadd.f32 0.0, %v305
  %v307 = vpop.f32.mrf.mxu0
  %308 = vmatprep.mubr.bf16.mxu0 0
  %309 = vmatmul.mubr.bf16.gmra.mxu0 %v160
  %v310 = vpop.f32.mrf.mxu0
  %v311 = vadd.f32 0.0, %v310
  %v312 = vpop.f32.mrf.mxu0
  %v313 = vpop.f32.mrf.mxu0
  %v314 = vadd.f32 0.0, %v313
  %v315 = vpop.f32.mrf.mxu0
  %316 = vmatprep.mubr.bf16.mxu0 0
  %317 = vmatmul.mubr.bf16.gmra.mxu0 %v163
  %v318 = vpop.f32.mrf.mxu0
  %v319 = vadd.f32 0.0, %v318
  %v320 = vpop.f32.mrf.mxu0
  %v321 = vpop.f32.mrf.mxu0
  %v322 = vadd.f32 0.0, %v321
  %v323 = vpop.f32.mrf.mxu0
  %324 = vmatprep.mubr.bf16.mxu0 0
  %325 = vmatmul.mubr.bf16.gmra.mxu0 %v166
  %v326 = vpop.f32.mrf.mxu0
  %v327 = vadd.f32 0.0, %v326
  %v328 = vpop.f32.mrf.mxu0
  %v329 = vpop.f32.mrf.mxu0
  %v330 = vadd.f32 0.0, %v329
  %v331 = vpop.f32.mrf.mxu0
  %332 = vmatprep.mubr.bf16.mxu0 0
  %333 = vmatmul.mubr.bf16.gmra.mxu0 %v169
  %v334 = vpop.f32.mrf.mxu0
  %v335 = vadd.f32 0.0, %v334
  %v336 = vpop.f32.mrf.mxu0
  %v337 = vpop.f32.mrf.mxu0
  %v338 = vadd.f32 0.0, %v337
  %v339 = vpop.f32.mrf.mxu0
  %340 = vmatprep.mubr.bf16.mxu0 0
  %341 = vmatmul.mubr.bf16.gmra.mxu0 %v172
  %v342 = vpop.f32.mrf.mxu0
  %v343 = vadd.f32 0.0, %v342
  %v344 = vpop.f32.mrf.mxu0
  %v345 = vpop.f32.mrf.mxu0
  %v346 = vadd.f32 0.0, %v345
  %v347 = vpop.f32.mrf.mxu0
  %348 = vmatprep.mubr.bf16.mxu0 0
  %349 = vmatmul.mubr.bf16.gmra.mxu0 %v175
  %v350 = vpop.f32.mrf.mxu0
  %v351 = vadd.f32 0.0, %v350
  %v352 = vpop.f32.mrf.mxu0
  %v353 = vpop.f32.mrf.mxu0
  %v354 = vadd.f32 0.0, %v353
  %v355 = vpop.f32.mrf.mxu0
  %356 = vmatprep.mubr.bf16.mxu0 0
  %357 = vmatmul.mubr.bf16.gmra.mxu0 %v178
  %v358 = vpop.f32.mrf.mxu0
  %v359 = vadd.f32 0.0, %v358
  %v360 = vpop.f32.mrf.mxu0
  %v361 = vpop.f32.mrf.mxu0
  %v362 = vadd.f32 0.0, %v361
  %v363 = vpop.f32.mrf.mxu0
  %364 = vmatprep.mubr.bf16.mxu0 0
  %365 = vmatmul.mubr.bf16.gmra.mxu0 %v181
  %v366 = vpop.f32.mrf.mxu0
  %v367 = vadd.f32 0.0, %v366
  %v368 = vpop.f32.mrf.mxu0
  %v369 = vpop.f32.mrf.mxu0
  %v370 = vadd.f32 0.0, %v369
  %v371 = vpop.f32.mrf.mxu0
  %372 = vmatprep.mubr.bf16.mxu0 0
  %373 = vmatmul.mubr.bf16.gmra.mxu0 %v184
  %v374 = vpop.f32.mrf.mxu0
  %v375 = vadd.f32 0.0, %v374
  %v376 = vpop.f32.mrf.mxu0
  %v377 = vpop.f32.mrf.mxu0
  %v378 = vadd.f32 0.0, %v377
  %v379 = vpop.f32.mrf.mxu0
  %380 = vmatprep.mubr.bf16.mxu0 0
  %381 = vmatmul.mubr.bf16.gmra.mxu0 %v187
  %v382 = vpop.f32.mrf.mxu0
  %v383 = vadd.f32 0.0, %v382
  %v384 = vpop.f32.mrf.mxu0
  %v385 = vpop.f32.mrf.mxu0
  %v386 = vadd.f32 0.0, %v385
  %v387 = vpop.f32.mrf.mxu0
  %388 = vmatprep.mubr.bf16.mxu0 0
  %389 = vmatmul.mubr.bf16.gmra.mxu0 %v190
  %v390 = vpop.f32.mrf.mxu0
  %v391 = vadd.f32 0.0, %v390
  %v392 = vpop.f32.mrf.mxu0
  %v393 = vpop.f32.mrf.mxu0
  %v394 = vadd.f32 0.0, %v393
  %v395 = vpop.f32.mrf.mxu0
  %396 = vmatprep.mubr.bf16.mxu0 0
  %397 = vmatmul.mubr.bf16.gmra.mxu0 %v193
  %v398 = vpop.f32.mrf.mxu0
  %v399 = vadd.f32 0.0, %v398
  %v400 = vpop.f32.mrf.mxu0
  %v401 = vpop.f32.mrf.mxu0
  %v402 = vadd.f32 0.0, %v401
  %v403 = vpop.f32.mrf.mxu0
  %404 = vmatprep.mubr.bf16.mxu0 0
  %405 = vmatmul.mubr.bf16.gmra.mxu0 %v196
  %v406 = vpop.f32.mrf.mxu0
  %v407 = vadd.f32 0.0, %v406
  %v408 = vpop.f32.mrf.mxu0
  %v409 = vpop.f32.mrf.mxu0
  %v410 = vadd.f32 0.0, %v409
  %v411 = vpop.f32.mrf.mxu0
  %412 = vmatprep.mubr.bf16.mxu0 0
  %413 = vmatmul.mubr.bf16.gmra.mxu0 %v199
  %v414 = vpop.f32.mrf.mxu0
  %v415 = vadd.f32 0.0, %v414
  %v416 = vpop.f32.mrf.mxu0
  %v417 = vpop.f32.mrf.mxu0
  %v418 = vadd.f32 0.0, %v417
  %v419 = vpop.f32.mrf.mxu0
  %420 = vmatprep.mubr.bf16.mxu0 0
  %421 = vmatmul.mubr.bf16.gmra.mxu0 %v202
  %v422 = vpop.f32.mrf.mxu0
  %v423 = vadd.f32 0.0, %v422
  %v424 = vpop.f32.mrf.mxu0
  %v425 = vpop.f32.mrf.mxu0
  %v426 = vadd.f32 0.0, %v425
  %v427 = vpop.f32.mrf.mxu0
  %428 = vmatprep.mubr.bf16.mxu0 0
  %429 = vmatmul.mubr.bf16.gmra.mxu0 %v205
  %v430 = vpop.f32.mrf.mxu0
  %v431 = vadd.f32 0.0, %v430
  %v432 = vpop.f32.mrf.mxu0
  %v433 = vpop.f32.mrf.mxu0
  %v434 = vadd.f32 0.0, %v433
  %v435 = vpop.f32.mrf.mxu0
  %436 = vmatprep.mubr.bf16.mxu0 0
  %437 = vmatmul.mubr.bf16.gmra.mxu0 %v208
  %v438 = vpop.f32.mrf.mxu0
  %v439 = vadd.f32 0.0, %v438
  %v440 = vpop.f32.mrf.mxu0
  %v441 = vpop.f32.mrf.mxu0
  %v442 = vadd.f32 0.0, %v441
  %v443 = vpop.f32.mrf.mxu0
  %444 = vmatprep.mubr.bf16.mxu0 0
  %445 = vmatmul.mubr.bf16.gmra.mxu0 %v211
  %v446 = vpop.f32.mrf.mxu0
  %v447 = vadd.f32 0.0, %v446
  %v448 = vpop.f32.mrf.mxu0
  %v449 = vpop.f32.mrf.mxu0
  %v450 = vpop.f32.mrf.mxu0
  %451 = vdwg.mxu0
  %v452 = vld [vmem:[%s1] sm:$0xff]
  %v453 = vld [vmem:[%s1 + $0x8] sm:$0xff]
  %v454 = vld [vmem:[%s1 + $0x10] sm:$0xff]
  %v455 = vld [vmem:[%s1 + $0x18] sm:$0xff]
  %v456 = vld [vmem:[%s1 + $0x20] sm:$0xff]
  %v457 = vld [vmem:[%s1 + $0x28] sm:$0xff]
  %v458 = vld [vmem:[%s1 + $0x30] sm:$0xff]
  %v459 = vld [vmem:[%s1 + $0x38] sm:$0xff]
  %v460 = vld [vmem:[%s1 + $0x40] sm:$0xff]
  %v461 = vld [vmem:[%s1 + $0x48] sm:$0xff]
  %v462 = vld [vmem:[%s1 + $0x50] sm:$0xff]
  %v463 = vld [vmem:[%s1 + $0x58] sm:$0xff]
  %v464 = vld [vmem:[%s1 + $0x60] sm:$0xff]
  %v465 = vld [vmem:[%s1 + $0x68] sm:$0xff]
  %v466 = vld [vmem:[%s1 + $0x70] sm:$0xff]
  %v467 = vld [vmem:[%s1 + $0x78] sm:$0xff]
  %v468 = vld [vmem:[%s1 + $0x80] sm:$0xff]
  %v469 = vld [vmem:[%s1 + $0x88] sm:$0xff]
  %v470 = vld [vmem:[%s1 + $0x90] sm:$0xff]
  %v471 = vld [vmem:[%s1 + $0x98] sm:$0xff]
  %v472 = vld [vmem:[%s1 + $0xa0] sm:$0xff]
  %v473 = vld [vmem:[%s1 + $0xa8] sm:$0xff]
  %v474 = vld [vmem:[%s1 + $0xb0] sm:$0xff]
  %v475 = vld [vmem:[%s1 + $0xb8] sm:$0xff]
  %v476 = vld [vmem:[%s1 + $0xc0] sm:$0xff]
  %v477 = vld [vmem:[%s1 + $0xc8] sm:$0xff]
  %v478 = vld [vmem:[%s1 + $0xd0] sm:$0xff]
  %v479 = vld [vmem:[%s1 + $0xd8] sm:$0xff]
  %v480 = vld [vmem:[%s1 + $0xe0] sm:$0xff]
  %v481 = vld [vmem:[%s1 + $0xe8] sm:$0xff]
  %v482 = vld [vmem:[%s1 + $0xf0] sm:$0xff]
  %v483 = vld [vmem:[%s1 + $0xf8] sm:$0xff]
  %v484 = vld [vmem:[%s1 + $0x100] sm:$0xff]
  %v485 = vld [vmem:[%s1 + $0x108] sm:$0xff]
  %v486 = vld [vmem:[%s1 + $0x110] sm:$0xff]
  %v487 = vld [vmem:[%s1 + $0x118] sm:$0xff]
  %v488 = vld [vmem:[%s1 + $0x120] sm:$0xff]
  %v489 = vld [vmem:[%s1 + $0x128] sm:$0xff]
  %v490 = vld [vmem:[%s1 + $0x130] sm:$0xff]
  %v491 = vld [vmem:[%s1 + $0x138] sm:$0xff]
  %v492 = vld [vmem:[%s1 + $0x140] sm:$0xff]
  %v493 = vld [vmem:[%s1 + $0x148] sm:$0xff]
  %v494 = vld [vmem:[%s1 + $0x150] sm:$0xff]
  %v495 = vld [vmem:[%s1 + $0x158] sm:$0xff]
  %v496 = vld [vmem:[%s1 + $0x160] sm:$0xff]
  %v497 = vld [vmem:[%s1 + $0x168] sm:$0xff]
  %v498 = vld [vmem:[%s1 + $0x170] sm:$0xff]
  %v499 = vld [vmem:[%s1 + $0x178] sm:$0xff]
  %v500 = vld [vmem:[%s1 + $0x180] sm:$0xff]
  %v501 = vpack.c.bf16 %v453, %v452
  %v502 = vpack.c.bf16 %v455, %v454
  %v503 = vpack.c.bf16 %v457, %v456
  %v504 = vpack.c.bf16 %v459, %v458
  %v505 = vpack.c.bf16 %v461, %v460
  %v506 = vpack.c.bf16 %v463, %v462
  %v507 = vpack.c.bf16 %v465, %v464
  %v508 = vpack.c.bf16 %v467, %v466
  %v509 = vpack.c.bf16 %v469, %v468
  %v510 = vpack.c.bf16 %v471, %v470
  %v511 = vpack.c.bf16 %v473, %v472
  %v512 = vpack.c.bf16 %v475, %v474
  %v513 = vpack.c.bf16 %v477, %v476
  %v514 = vpack.c.bf16 %v479, %v478
  %v515 = vpack.c.bf16 %v481, %v480
  %v516 = vpack.c.bf16 %v483, %v482
  %v517 = vpack.c.bf16 %v485, %v484
  %v518 = vpack.c.bf16 %v487, %v486
  %v519 = vpack.c.bf16 %v489, %v488
  %v520 = vpack.c.bf16 %v491, %v490
  %v521 = vpack.c.bf16 %v493, %v492
  %v522 = vpack.c.bf16 %v495, %v494
  %v523 = vpack.c.bf16 %v497, %v496
  %v524 = vpack.c.bf16 %v499, %v498
  %v525 = vpack.c.bf16 %v500, %v500
  %v527 = vsel %vm137, %v501, 0
  %v530 = vsel %vm137, %v502, 0
  %v533 = vsel %vm137, %v503, 0
  %v536 = vsel %vm137, %v504, 0
  %v539 = vsel %vm137, %v505, 0
  %v542 = vsel %vm137, %v506, 0
  %v545 = vsel %vm137, %v507, 0
  %v548 = vsel %vm137, %v508, 0
  %v551 = vsel %vm137, %v509, 0
  %v554 = vsel %vm137, %v510, 0
  %v557 = vsel %vm137, %v511, 0
  %v560 = vsel %vm137, %v512, 0
  %v563 = vsel %vm137, %v513, 0
  %v566 = vsel %vm137, %v514, 0
  %v569 = vsel %vm137, %v515, 0
  %v572 = vsel %vm137, %v516, 0
  %v575 = vsel %vm137, %v517, 0
  %v578 = vsel %vm137, %v518, 0
  %v581 = vsel %vm137, %v519, 0
  %v584 = vsel %vm137, %v520, 0
  %v587 = vsel %vm137, %v521, 0
  %v590 = vsel %vm137, %v522, 0
  %v593 = vsel %vm137, %v523, 0
  %v596 = vsel %vm137, %v524, 0
  %v599 = vsel %vm137, %v525, 0
  %601 = vmatprep.subr.bf16.mxu0 0
  %602 = vmatpush1.bf16.msra.mxu0 0
  %603 = vmatprep.subr.bf16.mxu0 0
  %604 = vmatpush1.bf16.msra.mxu0 0
  %605 = vmatprep.subr.bf16.mxu0 0
  %606 = vmatpush1.bf16.msra.mxu0 0
  %607 = vmatprep.subr.bf16.mxu0 0
  %608 = vmatpush1.bf16.msra.mxu0 %v218
  %609 = vmatprep.subr.bf16.mxu0 0
  %610 = vmatpush1.bf16.msra.mxu0 %v131
  %611 = vmatprep.subr.bf16.mxu0 0
  %612 = vmatpush1.bf16.msra.mxu0 %v130
  %613 = vmatprep.subr.bf16.mxu0 0
  %614 = vmatpush1.bf16.msra.mxu0 %v129
  %615 = vmatprep.subr.bf16.mxu0 0
  %616 = vmatpush1.bf16.msra.mxu0 %v128
  %617 = vmatprep.subr.bf16.mxu0 0
  %618 = vmatpush2.bf16.msra.mxu0 0
  %619 = vmatprep.subr.bf16.mxu0 0
  %620 = vmatpush2.bf16.msra.mxu0 0
  %621 = vmatprep.subr.bf16.mxu0 0
  %622 = vmatpush2.bf16.msra.mxu0 0
  %623 = vmatprep.subr.bf16.mxu0 0
  %624 = vmatpush2.bf16.msra.mxu0 0
  %625 = vmatprep.subr.bf16.mxu0 0
  %626 = vmatpush2.bf16.msra.mxu0 0
  %627 = vmatprep.subr.bf16.mxu0 0
  %628 = vmatpush2.bf16.msra.mxu0 0
  %629 = vmatprep.subr.bf16.mxu0 0
  %630 = vmatpush2.bf16.msra.mxu0 0
  %631 = vmatprep.subr.bf16.mxu0 0
  %632 = vmatpush2.bf16.msra.mxu0 0
  %633 = vmatprep.mubr.bf16.mxu0 0
  %634 = vmatmul.mubr.bf16.gmra.mxu0 %v527
  %v635 = vpop.f32.mrf.mxu0
  %v636 = vadd.f32 0.0, %v635
  %v637 = vpop.f32.mrf.mxu0
  %v638 = vpop.f32.mrf.mxu0
  %v639 = vadd.f32 0.0, %v638
  %v640 = vpop.f32.mrf.mxu0
  %641 = vmatprep.mubr.bf16.mxu0 0
  %642 = vmatmul.mubr.bf16.gmra.mxu0 %v530
  %v643 = vpop.f32.mrf.mxu0
  %v644 = vadd.f32 0.0, %v643
  %v645 = vpop.f32.mrf.mxu0
  %v646 = vpop.f32.mrf.mxu0
  %v647 = vadd.f32 0.0, %v646
  %v648 = vpop.f32.mrf.mxu0
  %649 = vmatprep.mubr.bf16.mxu0 0
  %650 = vmatmul.mubr.bf16.gmra.mxu0 %v533
  %v651 = vpop.f32.mrf.mxu0
  %v652 = vadd.f32 0.0, %v651
  %v653 = vpop.f32.mrf.mxu0
  %v654 = vpop.f32.mrf.mxu0
  %v655 = vadd.f32 0.0, %v654
  %v656 = vpop.f32.mrf.mxu0
  %657 = vmatprep.mubr.bf16.mxu0 0
  %658 = vmatmul.mubr.bf16.gmra.mxu0 %v536
  %v659 = vpop.f32.mrf.mxu0
  %v660 = vadd.f32 0.0, %v659
  %v661 = vpop.f32.mrf.mxu0
  %v662 = vpop.f32.mrf.mxu0
  %v663 = vadd.f32 0.0, %v662
  %v664 = vpop.f32.mrf.mxu0
  %665 = vmatprep.mubr.bf16.mxu0 0
  %666 = vmatmul.mubr.bf16.gmra.mxu0 %v539
  %v667 = vpop.f32.mrf.mxu0
  %v668 = vadd.f32 0.0, %v667
  %v669 = vpop.f32.mrf.mxu0
  %v670 = vpop.f32.mrf.mxu0
  %v671 = vadd.f32 0.0, %v670
  %v672 = vpop.f32.mrf.mxu0
  %673 = vmatprep.mubr.bf16.mxu0 0
  %674 = vmatmul.mubr.bf16.gmra.mxu0 %v542
  %v675 = vpop.f32.mrf.mxu0
  %v676 = vadd.f32 0.0, %v675
  %v677 = vpop.f32.mrf.mxu0
  %v678 = vpop.f32.mrf.mxu0
  %v679 = vadd.f32 0.0, %v678
  %v680 = vpop.f32.mrf.mxu0
  %681 = vmatprep.mubr.bf16.mxu0 0
  %682 = vmatmul.mubr.bf16.gmra.mxu0 %v545
  %v683 = vpop.f32.mrf.mxu0
  %v684 = vadd.f32 0.0, %v683
  %v685 = vpop.f32.mrf.mxu0
  %v686 = vpop.f32.mrf.mxu0
  %v687 = vadd.f32 0.0, %v686
  %v688 = vpop.f32.mrf.mxu0
  %689 = vmatprep.mubr.bf16.mxu0 0
  %690 = vmatmul.mubr.bf16.gmra.mxu0 %v548
  %v691 = vpop.f32.mrf.mxu0
  %v692 = vadd.f32 0.0, %v691
  %v693 = vpop.f32.mrf.mxu0
  %v694 = vpop.f32.mrf.mxu0
  %v695 = vadd.f32 0.0, %v694
  %v696 = vpop.f32.mrf.mxu0
  %697 = vmatprep.mubr.bf16.mxu0 0
  %698 = vmatmul.mubr.bf16.gmra.mxu0 %v551
  %v699 = vpop.f32.mrf.mxu0
  %v700 = vadd.f32 0.0, %v699
  %v701 = vpop.f32.mrf.mxu0
  %v702 = vpop.f32.mrf.mxu0
  %v703 = vadd.f32 0.0, %v702
  %v704 = vpop.f32.mrf.mxu0
  %705 = vmatprep.mubr.bf16.mxu0 0
  %706 = vmatmul.mubr.bf16.gmra.mxu0 %v554
  %v707 = vpop.f32.mrf.mxu0
  %v708 = vadd.f32 0.0, %v707
  %v709 = vpop.f32.mrf.mxu0
  %v710 = vpop.f32.mrf.mxu0
  %v711 = vadd.f32 0.0, %v710
  %v712 = vpop.f32.mrf.mxu0
  %713 = vmatprep.mubr.bf16.mxu0 0
  %714 = vmatmul.mubr.bf16.gmra.mxu0 %v557
  %v715 = vpop.f32.mrf.mxu0
  %v716 = vadd.f32 0.0, %v715
  %v717 = vpop.f32.mrf.mxu0
  %v718 = vpop.f32.mrf.mxu0
  %v719 = vadd.f32 0.0, %v718
  %v720 = vpop.f32.mrf.mxu0
  %721 = vmatprep.mubr.bf16.mxu0 0
  %722 = vmatmul.mubr.bf16.gmra.mxu0 %v560
  %v723 = vpop.f32.mrf.mxu0
  %v724 = vadd.f32 0.0, %v723
  %v725 = vpop.f32.mrf.mxu0
  %v726 = vpop.f32.mrf.mxu0
  %v727 = vadd.f32 0.0, %v726
  %v728 = vpop.f32.mrf.mxu0
  %729 = vmatprep.mubr.bf16.mxu0 0
  %730 = vmatmul.mubr.bf16.gmra.mxu0 %v563
  %v731 = vpop.f32.mrf.mxu0
  %v732 = vadd.f32 0.0, %v731
  %v733 = vpop.f32.mrf.mxu0
  %v734 = vpop.f32.mrf.mxu0
  %v735 = vadd.f32 0.0, %v734
  %v736 = vpop.f32.mrf.mxu0
  %737 = vmatprep.mubr.bf16.mxu0 0
  %738 = vmatmul.mubr.bf16.gmra.mxu0 %v566
  %v739 = vpop.f32.mrf.mxu0
  %v740 = vadd.f32 0.0, %v739
  %v741 = vpop.f32.mrf.mxu0
  %v742 = vpop.f32.mrf.mxu0
  %v743 = vadd.f32 0.0, %v742
  %v744 = vpop.f32.mrf.mxu0
  %745 = vmatprep.mubr.bf16.mxu0 0
  %746 = vmatmul.mubr.bf16.gmra.mxu0 %v569
  %v747 = vpop.f32.mrf.mxu0
  %v748 = vadd.f32 0.0, %v747
  %v749 = vpop.f32.mrf.mxu0
  %v750 = vpop.f32.mrf.mxu0
  %v751 = vadd.f32 0.0, %v750
  %v752 = vpop.f32.mrf.mxu0
  %753 = vmatprep.mubr.bf16.mxu0 0
  %754 = vmatmul.mubr.bf16.gmra.mxu0 %v572
  %v755 = vpop.f32.mrf.mxu0
  %v756 = vadd.f32 0.0, %v755
  %v757 = vpop.f32.mrf.mxu0
  %v758 = vpop.f32.mrf.mxu0
  %v759 = vadd.f32 0.0, %v758
  %v760 = vpop.f32.mrf.mxu0
  %761 = vmatprep.mubr.bf16.mxu0 0
  %762 = vmatmul.mubr.bf16.gmra.mxu0 %v575
  %v763 = vpop.f32.mrf.mxu0
  %v764 = vadd.f32 0.0, %v763
  %v765 = vpop.f32.mrf.mxu0
  %v766 = vpop.f32.mrf.mxu0
  %v767 = vadd.f32 0.0, %v766
  %v768 = vpop.f32.mrf.mxu0
  %769 = vmatprep.mubr.bf16.mxu0 0
  %770 = vmatmul.mubr.bf16.gmra.mxu0 %v578
  %v771 = vpop.f32.mrf.mxu0
  %v772 = vadd.f32 0.0, %v771
  %v773 = vpop.f32.mrf.mxu0
  %v774 = vpop.f32.mrf.mxu0
  %v775 = vadd.f32 0.0, %v774
  %v776 = vpop.f32.mrf.mxu0
  %777 = vmatprep.mubr.bf16.mxu0 0
  %778 = vmatmul.mubr.bf16.gmra.mxu0 %v581
  %v779 = vpop.f32.mrf.mxu0
  %v780 = vadd.f32 0.0, %v779
  %v781 = vpop.f32.mrf.mxu0
  %v782 = vpop.f32.mrf.mxu0
  %v783 = vadd.f32 0.0, %v782
  %v784 = vpop.f32.mrf.mxu0
  %785 = vmatprep.mubr.bf16.mxu0 0
  %786 = vmatmul.mubr.bf16.gmra.mxu0 %v584
  %v787 = vpop.f32.mrf.mxu0
  %v788 = vadd.f32 0.0, %v787
  %v789 = vpop.f32.mrf.mxu0
  %v790 = vpop.f32.mrf.mxu0
  %v791 = vadd.f32 0.0, %v790
  %v792 = vpop.f32.mrf.mxu0
  %793 = vmatprep.mubr.bf16.mxu0 0
  %794 = vmatmul.mubr.bf16.gmra.mxu0 %v587
  %v795 = vpop.f32.mrf.mxu0
  %v796 = vadd.f32 0.0, %v795
  %v797 = vpop.f32.mrf.mxu0
  %v798 = vpop.f32.mrf.mxu0
  %v799 = vadd.f32 0.0, %v798
  %v800 = vpop.f32.mrf.mxu0
  %801 = vmatprep.mubr.bf16.mxu0 0
  %802 = vmatmul.mubr.bf16.gmra.mxu0 %v590
  %v803 = vpop.f32.mrf.mxu0
  %v804 = vadd.f32 0.0, %v803
  %v805 = vpop.f32.mrf.mxu0
  %v806 = vpop.f32.mrf.mxu0
  %v807 = vadd.f32 0.0, %v806
  %v808 = vpop.f32.mrf.mxu0
  %809 = vmatprep.mubr.bf16.mxu0 0
  %810 = vmatmul.mubr.bf16.gmra.mxu0 %v593
  %v811 = vpop.f32.mrf.mxu0
  %v812 = vadd.f32 0.0, %v811
  %v813 = vpop.f32.mrf.mxu0
  %v814 = vpop.f32.mrf.mxu0
  %v815 = vadd.f32 0.0, %v814
  %v816 = vpop.f32.mrf.mxu0
  %817 = vmatprep.mubr.bf16.mxu0 0
  %818 = vmatmul.mubr.bf16.gmra.mxu0 %v596
  %v819 = vpop.f32.mrf.mxu0
  %v820 = vadd.f32 0.0, %v819
  %v821 = vpop.f32.mrf.mxu0
  %v822 = vpop.f32.mrf.mxu0
  %v823 = vadd.f32 0.0, %v822
  %v824 = vpop.f32.mrf.mxu0
  %825 = vmatprep.mubr.bf16.mxu0 0
  %826 = vmatmul.mubr.bf16.gmra.mxu0 %v599
  %v827 = vpop.f32.mrf.mxu0
  %v828 = vadd.f32 0.0, %v827
  %v829 = vpop.f32.mrf.mxu0
  %v830 = vpop.f32.mrf.mxu0
  %v831 = vpop.f32.mrf.mxu0
  %832 = vdwg.mxu0
  %v833 = vmax.f32 %v255, %v636
  %v834 = vmax.f32 %v258, %v639
  %v835 = vmax.f32 %v263, %v644
  %v836 = vmax.f32 %v266, %v647
  %v837 = vmax.f32 %v271, %v652
  %v838 = vmax.f32 %v274, %v655
  %v839 = vmax.f32 %v279, %v660
  %v840 = vmax.f32 %v282, %v663
  %v841 = vmax.f32 %v287, %v668
  %v842 = vmax.f32 %v290, %v671
  %v843 = vmax.f32 %v295, %v676
  %v844 = vmax.f32 %v298, %v679
  %v845 = vmax.f32 %v303, %v684
  %v846 = vmax.f32 %v306, %v687
  %v847 = vmax.f32 %v311, %v692
  %v848 = vmax.f32 %v314, %v695
  %v849 = vmax.f32 %v319, %v700
  %v850 = vmax.f32 %v322, %v703
  %v851 = vmax.f32 %v327, %v708
  %v852 = vmax.f32 %v330, %v711
  %v853 = vmax.f32 %v335, %v716
  %v854 = vmax.f32 %v338, %v719
  %v855 = vmax.f32 %v343, %v724
  %v856 = vmax.f32 %v346, %v727
  %v857 = vmax.f32 %v351, %v732
  %v858 = vmax.f32 %v354, %v735
  %v859 = vmax.f32 %v359, %v740
  %v860 = vmax.f32 %v362, %v743
  %v861 = vmax.f32 %v367, %v748
  %v862 = vmax.f32 %v370, %v751
  %v863 = vmax.f32 %v375, %v756
  %v864 = vmax.f32 %v378, %v759
  %v865 = vmax.f32 %v383, %v764
  %v866 = vmax.f32 %v386, %v767
  %v867 = vmax.f32 %v391, %v772
  %v868 = vmax.f32 %v394, %v775
  %v869 = vmax.f32 %v399, %v780
  %v870 = vmax.f32 %v402, %v783
  %v871 = vmax.f32 %v407, %v788
  %v872 = vmax.f32 %v410, %v791
  %v873 = vmax.f32 %v415, %v796
  %v874 = vmax.f32 %v418, %v799
  %v875 = vmax.f32 %v423, %v804
  %v876 = vmax.f32 %v426, %v807
  %v877 = vmax.f32 %v431, %v812
  %v878 = vmax.f32 %v434, %v815
  %v879 = vmax.f32 %v439, %v820
  %v880 = vmax.f32 %v442, %v823
  %v881 = vmax.f32 %v447, %v828
  %v882 = vld [vmem:[%s2] sm:$0xff]
  %v883 = vld [vmem:[%s2 + $0x8] sm:$0xff]
  %v884 = vld [vmem:[%s2 + $0x10] sm:$0xff]
  %v885 = vld [vmem:[%s2 + $0x18] sm:$0xff]
  %v886 = vld [vmem:[%s2 + $0x20] sm:$0xff]
  %v887 = vld [vmem:[%s2 + $0x28] sm:$0xff]
  %v888 = vld [vmem:[%s2 + $0x30] sm:$0xff]
  %v889 = vld [vmem:[%s2 + $0x38] sm:$0xff]
  %v890 = vld [vmem:[%s2 + $0x40] sm:$0xff]
  %v891 = vld [vmem:[%s2 + $0x48] sm:$0xff]
  %v892 = vld [vmem:[%s2 + $0x50] sm:$0xff]
  %v893 = vld [vmem:[%s2 + $0x58] sm:$0xff]
  %v894 = vld [vmem:[%s2 + $0x60] sm:$0xff]
  %v895 = vld [vmem:[%s2 + $0x68] sm:$0xff]
  %v896 = vld [vmem:[%s2 + $0x70] sm:$0xff]
  %v897 = vld [vmem:[%s2 + $0x78] sm:$0xff]
  %v898 = vld [vmem:[%s2 + $0x80] sm:$0xff]
  %v899 = vld [vmem:[%s2 + $0x88] sm:$0xff]
  %v900 = vld [vmem:[%s2 + $0x90] sm:$0xff]
  %v901 = vld [vmem:[%s2 + $0x98] sm:$0xff]
  %v902 = vld [vmem:[%s2 + $0xa0] sm:$0xff]
  %v903 = vld [vmem:[%s2 + $0xa8] sm:$0xff]
  %v904 = vld [vmem:[%s2 + $0xb0] sm:$0xff]
  %v905 = vld [vmem:[%s2 + $0xb8] sm:$0xff]
  %v906 = vld [vmem:[%s2 + $0xc0] sm:$0xff]
  %v907 = vld [vmem:[%s2 + $0xc8] sm:$0xff]
  %v908 = vld [vmem:[%s2 + $0xd0] sm:$0xff]
  %v909 = vld [vmem:[%s2 + $0xd8] sm:$0xff]
  %v910 = vld [vmem:[%s2 + $0xe0] sm:$0xff]
  %v911 = vld [vmem:[%s2 + $0xe8] sm:$0xff]
  %v912 = vld [vmem:[%s2 + $0xf0] sm:$0xff]
  %v913 = vld [vmem:[%s2 + $0xf8] sm:$0xff]
  %v914 = vld [vmem:[%s2 + $0x100] sm:$0xff]
  %v915 = vld [vmem:[%s2 + $0x108] sm:$0xff]
  %v916 = vld [vmem:[%s2 + $0x110] sm:$0xff]
  %v917 = vld [vmem:[%s2 + $0x118] sm:$0xff]
  %v918 = vld [vmem:[%s2 + $0x120] sm:$0xff]
  %v919 = vld [vmem:[%s2 + $0x128] sm:$0xff]
  %v920 = vld [vmem:[%s2 + $0x130] sm:$0xff]
  %v921 = vld [vmem:[%s2 + $0x138] sm:$0xff]
  %v922 = vld [vmem:[%s2 + $0x140] sm:$0xff]
  %v923 = vld [vmem:[%s2 + $0x148] sm:$0xff]
  %v924 = vld [vmem:[%s2 + $0x150] sm:$0xff]
  %v925 = vld [vmem:[%s2 + $0x158] sm:$0xff]
  %v926 = vld [vmem:[%s2 + $0x160] sm:$0xff]
  %v927 = vld [vmem:[%s2 + $0x168] sm:$0xff]
  %v928 = vld [vmem:[%s2 + $0x170] sm:$0xff]
  %v929 = vld [vmem:[%s2 + $0x178] sm:$0xff]
  %v930 = vld [vmem:[%s2 + $0x180] sm:$0xff]
  %v931 = vpack.c.bf16 %v883, %v882
  %v932 = vpack.c.bf16 %v885, %v884
  %v933 = vpack.c.bf16 %v887, %v886
  %v934 = vpack.c.bf16 %v889, %v888
  %v935 = vpack.c.bf16 %v891, %v890
  %v936 = vpack.c.bf16 %v893, %v892
  %v937 = vpack.c.bf16 %v895, %v894
  %v938 = vpack.c.bf16 %v897, %v896
  %v939 = vpack.c.bf16 %v899, %v898
  %v940 = vpack.c.bf16 %v901, %v900
  %v941 = vpack.c.bf16 %v903, %v902
  %v942 = vpack.c.bf16 %v905, %v904
  %v943 = vpack.c.bf16 %v907, %v906
  %v944 = vpack.c.bf16 %v909, %v908
  %v945 = vpack.c.bf16 %v911, %v910
  %v946 = vpack.c.bf16 %v913, %v912
  %v947 = vpack.c.bf16 %v915, %v914
  %v948 = vpack.c.bf16 %v917, %v916
  %v949 = vpack.c.bf16 %v919, %v918
  %v950 = vpack.c.bf16 %v921, %v920
  %v951 = vpack.c.bf16 %v923, %v922
  %v952 = vpack.c.bf16 %v925, %v924
  %v953 = vpack.c.bf16 %v927, %v926
  %v954 = vpack.c.bf16 %v929, %v928
  %v955 = vpack.c.bf16 %v930, %v930
  %v957 = vsel %vm137, %v931, 0
  %v960 = vsel %vm137, %v932, 0
  %v963 = vsel %vm137, %v933, 0
  %v966 = vsel %vm137, %v934, 0
  %v969 = vsel %vm137, %v935, 0
  %v972 = vsel %vm137, %v936, 0
  %v975 = vsel %vm137, %v937, 0
  %v978 = vsel %vm137, %v938, 0
  %v981 = vsel %vm137, %v939, 0
  %v984 = vsel %vm137, %v940, 0
  %v987 = vsel %vm137, %v941, 0
  %v990 = vsel %vm137, %v942, 0
  %v993 = vsel %vm137, %v943, 0
  %v996 = vsel %vm137, %v944, 0
  %v999 = vsel %vm137, %v945, 0
  %v1002 = vsel %vm137, %v946, 0
  %v1005 = vsel %vm137, %v947, 0
  %v1008 = vsel %vm137, %v948, 0
  %v1011 = vsel %vm137, %v949, 0
  %v1014 = vsel %vm137, %v950, 0
  %v1017 = vsel %vm137, %v951, 0
  %v1020 = vsel %vm137, %v952, 0
  %v1023 = vsel %vm137, %v953, 0
  %v1026 = vsel %vm137, %v954, 0
  %v1029 = vsel %vm137, %v955, 0
  %1031 = vmatprep.subr.bf16.mxu0 0
  %1032 = vmatpush1.bf16.msra.mxu0 0
  %1033 = vmatprep.subr.bf16.mxu0 0
  %1034 = vmatpush1.bf16.msra.mxu0 0
  %1035 = vmatprep.subr.bf16.mxu0 0
  %1036 = vmatpush1.bf16.msra.mxu0 0
  %1037 = vmatprep.subr.bf16.mxu0 0
  %1038 = vmatpush1.bf16.msra.mxu0 %v218
  %1039 = vmatprep.subr.bf16.mxu0 0
  %1040 = vmatpush1.bf16.msra.mxu0 %v131
  %1041 = vmatprep.subr.bf16.mxu0 0
  %1042 = vmatpush1.bf16.msra.mxu0 %v130
  %1043 = vmatprep.subr.bf16.mxu0 0
  %1044 = vmatpush1.bf16.msra.mxu0 %v129
  %1045 = vmatprep.subr.bf16.mxu0 0
  %1046 = vmatpush1.bf16.msra.mxu0 %v128
  %1047 = vmatprep.subr.bf16.mxu0 0
  %1048 = vmatpush2.bf16.msra.mxu0 0
  %1049 = vmatprep.subr.bf16.mxu0 0
  %1050 = vmatpush2.bf16.msra.mxu0 0
  %1051 = vmatprep.subr.bf16.mxu0 0
  %1052 = vmatpush2.bf16.msra.mxu0 0
  %1053 = vmatprep.subr.bf16.mxu0 0
  %1054 = vmatpush2.bf16.msra.mxu0 0
  %1055 = vmatprep.subr.bf16.mxu0 0
  %1056 = vmatpush2.bf16.msra.mxu0 0
  %1057 = vmatprep.subr.bf16.mxu0 0
  %1058 = vmatpush2.bf16.msra.mxu0 0
  %1059 = vmatprep.subr.bf16.mxu0 0
  %1060 = vmatpush2.bf16.msra.mxu0 0
  %1061 = vmatprep.subr.bf16.mxu0 0
  %1062 = vmatpush2.bf16.msra.mxu0 0
  %1063 = vmatprep.mubr.bf16.mxu0 0
  %1064 = vmatmul.mubr.bf16.gmra.mxu0 %v957
  %v1065 = vpop.f32.mrf.mxu0
  %v1066 = vadd.f32 0.0, %v1065
  %v1067 = vpop.f32.mrf.mxu0
  %v1068 = vpop.f32.mrf.mxu0
  %v1069 = vadd.f32 0.0, %v1068
  %v1070 = vpop.f32.mrf.mxu0
  %1071 = vmatprep.mubr.bf16.mxu0 0
  %1072 = vmatmul.mubr.bf16.gmra.mxu0 %v960
  %v1073 = vpop.f32.mrf.mxu0
  %v1074 = vadd.f32 0.0, %v1073
  %v1075 = vpop.f32.mrf.mxu0
  %v1076 = vpop.f32.mrf.mxu0
  %v1077 = vadd.f32 0.0, %v1076
  %v1078 = vpop.f32.mrf.mxu0
  %1079 = vmatprep.mubr.bf16.mxu0 0
  %1080 = vmatmul.mubr.bf16.gmra.mxu0 %v963
  %v1081 = vpop.f32.mrf.mxu0
  %v1082 = vadd.f32 0.0, %v1081
  %v1083 = vpop.f32.mrf.mxu0
  %v1084 = vpop.f32.mrf.mxu0
  %v1085 = vadd.f32 0.0, %v1084
  %v1086 = vpop.f32.mrf.mxu0
  %1087 = vmatprep.mubr.bf16.mxu0 0
  %1088 = vmatmul.mubr.bf16.gmra.mxu0 %v966
  %v1089 = vpop.f32.mrf.mxu0
  %v1090 = vadd.f32 0.0, %v1089
  %v1091 = vpop.f32.mrf.mxu0
  %v1092 = vpop.f32.mrf.mxu0
  %v1093 = vadd.f32 0.0, %v1092
  %v1094 = vpop.f32.mrf.mxu0
  %1095 = vmatprep.mubr.bf16.mxu0 0
  %1096 = vmatmul.mubr.bf16.gmra.mxu0 %v969
  %v1097 = vpop.f32.mrf.mxu0
  %v1098 = vadd.f32 0.0, %v1097
  %v1099 = vpop.f32.mrf.mxu0
  %v1100 = vpop.f32.mrf.mxu0
  %v1101 = vadd.f32 0.0, %v1100
  %v1102 = vpop.f32.mrf.mxu0
  %1103 = vmatprep.mubr.bf16.mxu0 0
  %1104 = vmatmul.mubr.bf16.gmra.mxu0 %v972
  %v1105 = vpop.f32.mrf.mxu0
  %v1106 = vadd.f32 0.0, %v1105
  %v1107 = vpop.f32.mrf.mxu0
  %v1108 = vpop.f32.mrf.mxu0
  %v1109 = vadd.f32 0.0, %v1108
  %v1110 = vpop.f32.mrf.mxu0
  %1111 = vmatprep.mubr.bf16.mxu0 0
  %1112 = vmatmul.mubr.bf16.gmra.mxu0 %v975
  %v1113 = vpop.f32.mrf.mxu0
  %v1114 = vadd.f32 0.0, %v1113
  %v1115 = vpop.f32.mrf.mxu0
  %v1116 = vpop.f32.mrf.mxu0
  %v1117 = vadd.f32 0.0, %v1116
  %v1118 = vpop.f32.mrf.mxu0
  %1119 = vmatprep.mubr.bf16.mxu0 0
  %1120 = vmatmul.mubr.bf16.gmra.mxu0 %v978
  %v1121 = vpop.f32.mrf.mxu0
  %v1122 = vadd.f32 0.0, %v1121
  %v1123 = vpop.f32.mrf.mxu0
  %v1124 = vpop.f32.mrf.mxu0
  %v1125 = vadd.f32 0.0, %v1124
  %v1126 = vpop.f32.mrf.mxu0
  %1127 = vmatprep.mubr.bf16.mxu0 0
  %1128 = vmatmul.mubr.bf16.gmra.mxu0 %v981
  %v1129 = vpop.f32.mrf.mxu0
  %v1130 = vadd.f32 0.0, %v1129
  %v1131 = vpop.f32.mrf.mxu0
  %v1132 = vpop.f32.mrf.mxu0
  %v1133 = vadd.f32 0.0, %v1132
  %v1134 = vpop.f32.mrf.mxu0
  %1135 = vmatprep.mubr.bf16.mxu0 0
  %1136 = vmatmul.mubr.bf16.gmra.mxu0 %v984
  %v1137 = vpop.f32.mrf.mxu0
  %v1138 = vadd.f32 0.0, %v1137
  %v1139 = vpop.f32.mrf.mxu0
  %v1140 = vpop.f32.mrf.mxu0
  %v1141 = vadd.f32 0.0, %v1140
  %v1142 = vpop.f32.mrf.mxu0
  %1143 = vmatprep.mubr.bf16.mxu0 0
  %1144 = vmatmul.mubr.bf16.gmra.mxu0 %v987
  %v1145 = vpop.f32.mrf.mxu0
  %v1146 = vadd.f32 0.0, %v1145
  %v1147 = vpop.f32.mrf.mxu0
  %v1148 = vpop.f32.mrf.mxu0
  %v1149 = vadd.f32 0.0, %v1148
  %v1150 = vpop.f32.mrf.mxu0
  %1151 = vmatprep.mubr.bf16.mxu0 0
  %1152 = vmatmul.mubr.bf16.gmra.mxu0 %v990
  %v1153 = vpop.f32.mrf.mxu0
  %v1154 = vadd.f32 0.0, %v1153
  %v1155 = vpop.f32.mrf.mxu0
  %v1156 = vpop.f32.mrf.mxu0
  %v1157 = vadd.f32 0.0, %v1156
  %v1158 = vpop.f32.mrf.mxu0
  %1159 = vmatprep.mubr.bf16.mxu0 0
  %1160 = vmatmul.mubr.bf16.gmra.mxu0 %v993
  %v1161 = vpop.f32.mrf.mxu0
  %v1162 = vadd.f32 0.0, %v1161
  %v1163 = vpop.f32.mrf.mxu0
  %v1164 = vpop.f32.mrf.mxu0
  %v1165 = vadd.f32 0.0, %v1164
  %v1166 = vpop.f32.mrf.mxu0
  %1167 = vmatprep.mubr.bf16.mxu0 0
  %1168 = vmatmul.mubr.bf16.gmra.mxu0 %v996
  %v1169 = vpop.f32.mrf.mxu0
  %v1170 = vadd.f32 0.0, %v1169
  %v1171 = vpop.f32.mrf.mxu0
  %v1172 = vpop.f32.mrf.mxu0
  %v1173 = vadd.f32 0.0, %v1172
  %v1174 = vpop.f32.mrf.mxu0
  %1175 = vmatprep.mubr.bf16.mxu0 0
  %1176 = vmatmul.mubr.bf16.gmra.mxu0 %v999
  %v1177 = vpop.f32.mrf.mxu0
  %v1178 = vadd.f32 0.0, %v1177
  %v1179 = vpop.f32.mrf.mxu0
  %v1180 = vpop.f32.mrf.mxu0
  %v1181 = vadd.f32 0.0, %v1180
  %v1182 = vpop.f32.mrf.mxu0
  %1183 = vmatprep.mubr.bf16.mxu0 0
  %1184 = vmatmul.mubr.bf16.gmra.mxu0 %v1002
  %v1185 = vpop.f32.mrf.mxu0
  %v1186 = vadd.f32 0.0, %v1185
  %v1187 = vpop.f32.mrf.mxu0
  %v1188 = vpop.f32.mrf.mxu0
  %v1189 = vadd.f32 0.0, %v1188
  %v1190 = vpop.f32.mrf.mxu0
  %1191 = vmatprep.mubr.bf16.mxu0 0
  %1192 = vmatmul.mubr.bf16.gmra.mxu0 %v1005
  %v1193 = vpop.f32.mrf.mxu0
  %v1194 = vadd.f32 0.0, %v1193
  %v1195 = vpop.f32.mrf.mxu0
  %v1196 = vpop.f32.mrf.mxu0
  %v1197 = vadd.f32 0.0, %v1196
  %v1198 = vpop.f32.mrf.mxu0
  %1199 = vmatprep.mubr.bf16.mxu0 0
  %1200 = vmatmul.mubr.bf16.gmra.mxu0 %v1008
  %v1201 = vpop.f32.mrf.mxu0
  %v1202 = vadd.f32 0.0, %v1201
  %v1203 = vpop.f32.mrf.mxu0
  %v1204 = vpop.f32.mrf.mxu0
  %v1205 = vadd.f32 0.0, %v1204
  %v1206 = vpop.f32.mrf.mxu0
  %1207 = vmatprep.mubr.bf16.mxu0 0
  %1208 = vmatmul.mubr.bf16.gmra.mxu0 %v1011
  %v1209 = vpop.f32.mrf.mxu0
  %v1210 = vadd.f32 0.0, %v1209
  %v1211 = vpop.f32.mrf.mxu0
  %v1212 = vpop.f32.mrf.mxu0
  %v1213 = vadd.f32 0.0, %v1212
  %v1214 = vpop.f32.mrf.mxu0
  %1215 = vmatprep.mubr.bf16.mxu0 0
  %1216 = vmatmul.mubr.bf16.gmra.mxu0 %v1014
  %v1217 = vpop.f32.mrf.mxu0
  %v1218 = vadd.f32 0.0, %v1217
  %v1219 = vpop.f32.mrf.mxu0
  %v1220 = vpop.f32.mrf.mxu0
  %v1221 = vadd.f32 0.0, %v1220
  %v1222 = vpop.f32.mrf.mxu0
  %1223 = vmatprep.mubr.bf16.mxu0 0
  %1224 = vmatmul.mubr.bf16.gmra.mxu0 %v1017
  %v1225 = vpop.f32.mrf.mxu0
  %v1226 = vadd.f32 0.0, %v1225
  %v1227 = vpop.f32.mrf.mxu0
  %v1228 = vpop.f32.mrf.mxu0
  %v1229 = vadd.f32 0.0, %v1228
  %v1230 = vpop.f32.mrf.mxu0
  %1231 = vmatprep.mubr.bf16.mxu0 0
  %1232 = vmatmul.mubr.bf16.gmra.mxu0 %v1020
  %v1233 = vpop.f32.mrf.mxu0
  %v1234 = vadd.f32 0.0, %v1233
  %v1235 = vpop.f32.mrf.mxu0
  %v1236 = vpop.f32.mrf.mxu0
  %v1237 = vadd.f32 0.0, %v1236
  %v1238 = vpop.f32.mrf.mxu0
  %1239 = vmatprep.mubr.bf16.mxu0 0
  %1240 = vmatmul.mubr.bf16.gmra.mxu0 %v1023
  %v1241 = vpop.f32.mrf.mxu0
  %v1242 = vadd.f32 0.0, %v1241
  %v1243 = vpop.f32.mrf.mxu0
  %v1244 = vpop.f32.mrf.mxu0
  %v1245 = vadd.f32 0.0, %v1244
  %v1246 = vpop.f32.mrf.mxu0
  %1247 = vmatprep.mubr.bf16.mxu0 0
  %1248 = vmatmul.mubr.bf16.gmra.mxu0 %v1026
  %v1249 = vpop.f32.mrf.mxu0
  %v1250 = vadd.f32 0.0, %v1249
  %v1251 = vpop.f32.mrf.mxu0
  %v1252 = vpop.f32.mrf.mxu0
  %v1253 = vadd.f32 0.0, %v1252
  %v1254 = vpop.f32.mrf.mxu0
  %1255 = vmatprep.mubr.bf16.mxu0 0
  %1256 = vmatmul.mubr.bf16.gmra.mxu0 %v1029
  %v1257 = vpop.f32.mrf.mxu0
  %v1258 = vadd.f32 0.0, %v1257
  %v1259 = vpop.f32.mrf.mxu0
  %v1260 = vpop.f32.mrf.mxu0
  %v1261 = vpop.f32.mrf.mxu0
  %1262 = vdwg.mxu0
  %v1263 = vld [vmem:[%s3] sm:$0xff]
  %v1264 = vld [vmem:[%s3 + $0x8] sm:$0xff]
  %v1265 = vld [vmem:[%s3 + $0x10] sm:$0xff]
  %v1266 = vld [vmem:[%s3 + $0x18] sm:$0xff]
  %v1267 = vld [vmem:[%s3 + $0x20] sm:$0xff]
  %v1268 = vld [vmem:[%s3 + $0x28] sm:$0xff]
  %v1269 = vld [vmem:[%s3 + $0x30] sm:$0xff]
  %v1270 = vld [vmem:[%s3 + $0x38] sm:$0xff]
  %v1271 = vld [vmem:[%s3 + $0x40] sm:$0xff]
  %v1272 = vld [vmem:[%s3 + $0x48] sm:$0xff]
  %v1273 = vld [vmem:[%s3 + $0x50] sm:$0xff]
  %v1274 = vld [vmem:[%s3 + $0x58] sm:$0xff]
  %v1275 = vld [vmem:[%s3 + $0x60] sm:$0xff]
  %v1276 = vld [vmem:[%s3 + $0x68] sm:$0xff]
  %v1277 = vld [vmem:[%s3 + $0x70] sm:$0xff]
  %v1278 = vld [vmem:[%s3 + $0x78] sm:$0xff]
  %v1279 = vld [vmem:[%s3 + $0x80] sm:$0xff]
  %v1280 = vld [vmem:[%s3 + $0x88] sm:$0xff]
  %v1281 = vld [vmem:[%s3 + $0x90] sm:$0xff]
  %v1282 = vld [vmem:[%s3 + $0x98] sm:$0xff]
  %v1283 = vld [vmem:[%s3 + $0xa0] sm:$0xff]
  %v1284 = vld [vmem:[%s3 + $0xa8] sm:$0xff]
  %v1285 = vld [vmem:[%s3 + $0xb0] sm:$0xff]
  %v1286 = vld [vmem:[%s3 + $0xb8] sm:$0xff]
  %v1287 = vld [vmem:[%s3 + $0xc0] sm:$0xff]
  %v1288 = vld [vmem:[%s3 + $0xc8] sm:$0xff]
  %v1289 = vld [vmem:[%s3 + $0xd0] sm:$0xff]
  %v1290 = vld [vmem:[%s3 + $0xd8] sm:$0xff]
  %v1291 = vld [vmem:[%s3 + $0xe0] sm:$0xff]
  %v1292 = vld [vmem:[%s3 + $0xe8] sm:$0xff]
  %v1293 = vld [vmem:[%s3 + $0xf0] sm:$0xff]
  %v1294 = vld [vmem:[%s3 + $0xf8] sm:$0xff]
  %v1295 = vld [vmem:[%s3 + $0x100] sm:$0xff]
  %v1296 = vld [vmem:[%s3 + $0x108] sm:$0xff]
  %v1297 = vld [vmem:[%s3 + $0x110] sm:$0xff]
  %v1298 = vld [vmem:[%s3 + $0x118] sm:$0xff]
  %v1299 = vld [vmem:[%s3 + $0x120] sm:$0xff]
  %v1300 = vld [vmem:[%s3 + $0x128] sm:$0xff]
  %v1301 = vld [vmem:[%s3 + $0x130] sm:$0xff]
  %v1302 = vld [vmem:[%s3 + $0x138] sm:$0xff]
  %v1303 = vld [vmem:[%s3 + $0x140] sm:$0xff]
  %v1304 = vld [vmem:[%s3 + $0x148] sm:$0xff]
  %v1305 = vld [vmem:[%s3 + $0x150] sm:$0xff]
  %v1306 = vld [vmem:[%s3 + $0x158] sm:$0xff]
  %v1307 = vld [vmem:[%s3 + $0x160] sm:$0xff]
  %v1308 = vld [vmem:[%s3 + $0x168] sm:$0xff]
  %v1309 = vld [vmem:[%s3 + $0x170] sm:$0xff]
  %v1310 = vld [vmem:[%s3 + $0x178] sm:$0xff]
  %v1311 = vld [vmem:[%s3 + $0x180] sm:$0xff]
  %v1312 = vpack.c.bf16 %v1264, %v1263
  %v1313 = vpack.c.bf16 %v1266, %v1265
  %v1314 = vpack.c.bf16 %v1268, %v1267
  %v1315 = vpack.c.bf16 %v1270, %v1269
  %v1316 = vpack.c.bf16 %v1272, %v1271
  %v1317 = vpack.c.bf16 %v1274, %v1273
  %v1318 = vpack.c.bf16 %v1276, %v1275
  %v1319 = vpack.c.bf16 %v1278, %v1277
  %v1320 = vpack.c.bf16 %v1280, %v1279
  %v1321 = vpack.c.bf16 %v1282, %v1281
  %v1322 = vpack.c.bf16 %v1284, %v1283
  %v1323 = vpack.c.bf16 %v1286, %v1285
  %v1324 = vpack.c.bf16 %v1288, %v1287
  %v1325 = vpack.c.bf16 %v1290, %v1289
  %v1326 = vpack.c.bf16 %v1292, %v1291
  %v1327 = vpack.c.bf16 %v1294, %v1293
  %v1328 = vpack.c.bf16 %v1296, %v1295
  %v1329 = vpack.c.bf16 %v1298, %v1297
  %v1330 = vpack.c.bf16 %v1300, %v1299
  %v1331 = vpack.c.bf16 %v1302, %v1301
  %v1332 = vpack.c.bf16 %v1304, %v1303
  %v1333 = vpack.c.bf16 %v1306, %v1305
  %v1334 = vpack.c.bf16 %v1308, %v1307
  %v1335 = vpack.c.bf16 %v1310, %v1309
  %v1336 = vpack.c.bf16 %v1311, %v1311
  %v1338 = vsel %vm137, %v1312, 0
  %v1341 = vsel %vm137, %v1313, 0
  %v1344 = vsel %vm137, %v1314, 0
  %v1347 = vsel %vm137, %v1315, 0
  %v1350 = vsel %vm137, %v1316, 0
  %v1353 = vsel %vm137, %v1317, 0
  %v1356 = vsel %vm137, %v1318, 0
  %v1359 = vsel %vm137, %v1319, 0
  %v1362 = vsel %vm137, %v1320, 0
  %v1365 = vsel %vm137, %v1321, 0
  %v1368 = vsel %vm137, %v1322, 0
  %v1371 = vsel %vm137, %v1323, 0
  %v1374 = vsel %vm137, %v1324, 0
  %v1377 = vsel %vm137, %v1325, 0
  %v1380 = vsel %vm137, %v1326, 0
  %v1383 = vsel %vm137, %v1327, 0
  %v1386 = vsel %vm137, %v1328, 0
  %v1389 = vsel %vm137, %v1329, 0
  %v1392 = vsel %vm137, %v1330, 0
  %v1395 = vsel %vm137, %v1331, 0
  %v1398 = vsel %vm137, %v1332, 0
  %v1401 = vsel %vm137, %v1333, 0
  %v1404 = vsel %vm137, %v1334, 0
  %v1407 = vsel %vm137, %v1335, 0
  %v1410 = vsel %vm137, %v1336, 0
  %1412 = vmatprep.subr.bf16.mxu0 0
  %1413 = vmatpush1.bf16.msra.mxu0 0
  %1414 = vmatprep.subr.bf16.mxu0 0
  %1415 = vmatpush1.bf16.msra.mxu0 0
  %1416 = vmatprep.subr.bf16.mxu0 0
  %1417 = vmatpush1.bf16.msra.mxu0 0
  %1418 = vmatprep.subr.bf16.mxu0 0
  %1419 = vmatpush1.bf16.msra.mxu0 %v218
  %1420 = vmatprep.subr.bf16.mxu0 0
  %1421 = vmatpush1.bf16.msra.mxu0 %v131
  %1422 = vmatprep.subr.bf16.mxu0 0
  %1423 = vmatpush1.bf16.msra.mxu0 %v130
  %1424 = vmatprep.subr.bf16.mxu0 0
  %1425 = vmatpush1.bf16.msra.mxu0 %v129
  %1426 = vmatprep.subr.bf16.mxu0 0
  %1427 = vmatpush1.bf16.msra.mxu0 %v128
  %1428 = vmatprep.subr.bf16.mxu0 0
  %1429 = vmatpush2.bf16.msra.mxu0 0
  %1430 = vmatprep.subr.bf16.mxu0 0
  %1431 = vmatpush2.bf16.msra.mxu0 0
  %1432 = vmatprep.subr.bf16.mxu0 0
  %1433 = vmatpush2.bf16.msra.mxu0 0
  %1434 = vmatprep.subr.bf16.mxu0 0
  %1435 = vmatpush2.bf16.msra.mxu0 0
  %1436 = vmatprep.subr.bf16.mxu0 0
  %1437 = vmatpush2.bf16.msra.mxu0 0
  %1438 = vmatprep.subr.bf16.mxu0 0
  %1439 = vmatpush2.bf16.msra.mxu0 0
  %1440 = vmatprep.subr.bf16.mxu0 0
  %1441 = vmatpush2.bf16.msra.mxu0 0
  %1442 = vmatprep.subr.bf16.mxu0 0
  %1443 = vmatpush2.bf16.msra.mxu0 0
  %1444 = vmatprep.mubr.bf16.mxu0 0
  %1445 = vmatmul.mubr.bf16.gmra.mxu0 %v1338
  %v1446 = vpop.f32.mrf.mxu0
  %v1447 = vadd.f32 0.0, %v1446
  %v1448 = vpop.f32.mrf.mxu0
  %v1449 = vpop.f32.mrf.mxu0
  %v1450 = vadd.f32 0.0, %v1449
  %v1451 = vpop.f32.mrf.mxu0
  %1452 = vmatprep.mubr.bf16.mxu0 0
  %1453 = vmatmul.mubr.bf16.gmra.mxu0 %v1341
  %v1454 = vpop.f32.mrf.mxu0
  %v1455 = vadd.f32 0.0, %v1454
  %v1456 = vpop.f32.mrf.mxu0
  %v1457 = vpop.f32.mrf.mxu0
  %v1458 = vadd.f32 0.0, %v1457
  %v1459 = vpop.f32.mrf.mxu0
  %1460 = vmatprep.mubr.bf16.mxu0 0
  %1461 = vmatmul.mubr.bf16.gmra.mxu0 %v1344
  %v1462 = vpop.f32.mrf.mxu0
  %v1463 = vadd.f32 0.0, %v1462
  %v1464 = vpop.f32.mrf.mxu0
  %v1465 = vpop.f32.mrf.mxu0
  %v1466 = vadd.f32 0.0, %v1465
  %v1467 = vpop.f32.mrf.mxu0
  %1468 = vmatprep.mubr.bf16.mxu0 0
  %1469 = vmatmul.mubr.bf16.gmra.mxu0 %v1347
  %v1470 = vpop.f32.mrf.mxu0
  %v1471 = vadd.f32 0.0, %v1470
  %v1472 = vpop.f32.mrf.mxu0
  %v1473 = vpop.f32.mrf.mxu0
  %v1474 = vadd.f32 0.0, %v1473
  %v1475 = vpop.f32.mrf.mxu0
  %1476 = vmatprep.mubr.bf16.mxu0 0
  %1477 = vmatmul.mubr.bf16.gmra.mxu0 %v1350
  %v1478 = vpop.f32.mrf.mxu0
  %v1479 = vadd.f32 0.0, %v1478
  %v1480 = vpop.f32.mrf.mxu0
  %v1481 = vpop.f32.mrf.mxu0
  %v1482 = vadd.f32 0.0, %v1481
  %v1483 = vpop.f32.mrf.mxu0
  %1484 = vmatprep.mubr.bf16.mxu0 0
  %1485 = vmatmul.mubr.bf16.gmra.mxu0 %v1353
  %v1486 = vpop.f32.mrf.mxu0
  %v1487 = vadd.f32 0.0, %v1486
  %v1488 = vpop.f32.mrf.mxu0
  %v1489 = vpop.f32.mrf.mxu0
  %v1490 = vadd.f32 0.0, %v1489
  %v1491 = vpop.f32.mrf.mxu0
  %1492 = vmatprep.mubr.bf16.mxu0 0
  %1493 = vmatmul.mubr.bf16.gmra.mxu0 %v1356
  %v1494 = vpop.f32.mrf.mxu0
  %v1495 = vadd.f32 0.0, %v1494
  %v1496 = vpop.f32.mrf.mxu0
  %v1497 = vpop.f32.mrf.mxu0
  %v1498 = vadd.f32 0.0, %v1497
  %v1499 = vpop.f32.mrf.mxu0
  %1500 = vmatprep.mubr.bf16.mxu0 0
  %1501 = vmatmul.mubr.bf16.gmra.mxu0 %v1359
  %v1502 = vpop.f32.mrf.mxu0
  %v1503 = vadd.f32 0.0, %v1502
  %v1504 = vpop.f32.mrf.mxu0
  %v1505 = vpop.f32.mrf.mxu0
  %v1506 = vadd.f32 0.0, %v1505
  %v1507 = vpop.f32.mrf.mxu0
  %1508 = vmatprep.mubr.bf16.mxu0 0
  %1509 = vmatmul.mubr.bf16.gmra.mxu0 %v1362
  %v1510 = vpop.f32.mrf.mxu0
  %v1511 = vadd.f32 0.0, %v1510
  %v1512 = vpop.f32.mrf.mxu0
  %v1513 = vpop.f32.mrf.mxu0
  %v1514 = vadd.f32 0.0, %v1513
  %v1515 = vpop.f32.mrf.mxu0
  %1516 = vmatprep.mubr.bf16.mxu0 0
  %1517 = vmatmul.mubr.bf16.gmra.mxu0 %v1365
  %v1518 = vpop.f32.mrf.mxu0
  %v1519 = vadd.f32 0.0, %v1518
  %v1520 = vpop.f32.mrf.mxu0
  %v1521 = vpop.f32.mrf.mxu0
  %v1522 = vadd.f32 0.0, %v1521
  %v1523 = vpop.f32.mrf.mxu0
  %1524 = vmatprep.mubr.bf16.mxu0 0
  %1525 = vmatmul.mubr.bf16.gmra.mxu0 %v1368
  %v1526 = vpop.f32.mrf.mxu0
  %v1527 = vadd.f32 0.0, %v1526
  %v1528 = vpop.f32.mrf.mxu0
  %v1529 = vpop.f32.mrf.mxu0
  %v1530 = vadd.f32 0.0, %v1529
  %v1531 = vpop.f32.mrf.mxu0
  %1532 = vmatprep.mubr.bf16.mxu0 0
  %1533 = vmatmul.mubr.bf16.gmra.mxu0 %v1371
  %v1534 = vpop.f32.mrf.mxu0
  %v1535 = vadd.f32 0.0, %v1534
  %v1536 = vpop.f32.mrf.mxu0
  %v1537 = vpop.f32.mrf.mxu0
  %v1538 = vadd.f32 0.0, %v1537
  %v1539 = vpop.f32.mrf.mxu0
  %1540 = vmatprep.mubr.bf16.mxu0 0
  %1541 = vmatmul.mubr.bf16.gmra.mxu0 %v1374
  %v1542 = vpop.f32.mrf.mxu0
  %v1543 = vadd.f32 0.0, %v1542
  %v1544 = vpop.f32.mrf.mxu0
  %v1545 = vpop.f32.mrf.mxu0
  %v1546 = vadd.f32 0.0, %v1545
  %v1547 = vpop.f32.mrf.mxu0
  %1548 = vmatprep.mubr.bf16.mxu0 0
  %1549 = vmatmul.mubr.bf16.gmra.mxu0 %v1377
  %v1550 = vpop.f32.mrf.mxu0
  %v1551 = vadd.f32 0.0, %v1550
  %v1552 = vpop.f32.mrf.mxu0
  %v1553 = vpop.f32.mrf.mxu0
  %v1554 = vadd.f32 0.0, %v1553
  %v1555 = vpop.f32.mrf.mxu0
  %1556 = vmatprep.mubr.bf16.mxu0 0
  %1557 = vmatmul.mubr.bf16.gmra.mxu0 %v1380
  %v1558 = vpop.f32.mrf.mxu0
  %v1559 = vadd.f32 0.0, %v1558
  %v1560 = vpop.f32.mrf.mxu0
  %v1561 = vpop.f32.mrf.mxu0
  %v1562 = vadd.f32 0.0, %v1561
  %v1563 = vpop.f32.mrf.mxu0
  %1564 = vmatprep.mubr.bf16.mxu0 0
  %1565 = vmatmul.mubr.bf16.gmra.mxu0 %v1383
  %v1566 = vpop.f32.mrf.mxu0
  %v1567 = vadd.f32 0.0, %v1566
  %v1568 = vpop.f32.mrf.mxu0
  %v1569 = vpop.f32.mrf.mxu0
  %v1570 = vadd.f32 0.0, %v1569
  %v1571 = vpop.f32.mrf.mxu0
  %1572 = vmatprep.mubr.bf16.mxu0 0
  %1573 = vmatmul.mubr.bf16.gmra.mxu0 %v1386
  %v1574 = vpop.f32.mrf.mxu0
  %v1575 = vadd.f32 0.0, %v1574
  %v1576 = vpop.f32.mrf.mxu0
  %v1577 = vpop.f32.mrf.mxu0
  %v1578 = vadd.f32 0.0, %v1577
  %v1579 = vpop.f32.mrf.mxu0
  %1580 = vmatprep.mubr.bf16.mxu0 0
  %1581 = vmatmul.mubr.bf16.gmra.mxu0 %v1389
  %v1582 = vpop.f32.mrf.mxu0
  %v1583 = vadd.f32 0.0, %v1582
  %v1584 = vpop.f32.mrf.mxu0
  %v1585 = vpop.f32.mrf.mxu0
  %v1586 = vadd.f32 0.0, %v1585
  %v1587 = vpop.f32.mrf.mxu0
  %1588 = vmatprep.mubr.bf16.mxu0 0
  %1589 = vmatmul.mubr.bf16.gmra.mxu0 %v1392
  %v1590 = vpop.f32.mrf.mxu0
  %v1591 = vadd.f32 0.0, %v1590
  %v1592 = vpop.f32.mrf.mxu0
  %v1593 = vpop.f32.mrf.mxu0
  %v1594 = vadd.f32 0.0, %v1593
  %v1595 = vpop.f32.mrf.mxu0
  %1596 = vmatprep.mubr.bf16.mxu0 0
  %1597 = vmatmul.mubr.bf16.gmra.mxu0 %v1395
  %v1598 = vpop.f32.mrf.mxu0
  %v1599 = vadd.f32 0.0, %v1598
  %v1600 = vpop.f32.mrf.mxu0
  %v1601 = vpop.f32.mrf.mxu0
  %v1602 = vadd.f32 0.0, %v1601
  %v1603 = vpop.f32.mrf.mxu0
  %1604 = vmatprep.mubr.bf16.mxu0 0
  %1605 = vmatmul.mubr.bf16.gmra.mxu0 %v1398
  %v1606 = vpop.f32.mrf.mxu0
  %v1607 = vadd.f32 0.0, %v1606
  %v1608 = vpop.f32.mrf.mxu0
  %v1609 = vpop.f32.mrf.mxu0
  %v1610 = vadd.f32 0.0, %v1609
  %v1611 = vpop.f32.mrf.mxu0
  %1612 = vmatprep.mubr.bf16.mxu0 0
  %1613 = vmatmul.mubr.bf16.gmra.mxu0 %v1401
  %v1614 = vpop.f32.mrf.mxu0
  %v1615 = vadd.f32 0.0, %v1614
  %v1616 = vpop.f32.mrf.mxu0
  %v1617 = vpop.f32.mrf.mxu0
  %v1618 = vadd.f32 0.0, %v1617
  %v1619 = vpop.f32.mrf.mxu0
  %1620 = vmatprep.mubr.bf16.mxu0 0
  %1621 = vmatmul.mubr.bf16.gmra.mxu0 %v1404
  %v1622 = vpop.f32.mrf.mxu0
  %v1623 = vadd.f32 0.0, %v1622
  %v1624 = vpop.f32.mrf.mxu0
  %v1625 = vpop.f32.mrf.mxu0
  %v1626 = vadd.f32 0.0, %v1625
  %v1627 = vpop.f32.mrf.mxu0
  %1628 = vmatprep.mubr.bf16.mxu0 0
  %1629 = vmatmul.mubr.bf16.gmra.mxu0 %v1407
  %v1630 = vpop.f32.mrf.mxu0
  %v1631 = vadd.f32 0.0, %v1630
  %v1632 = vpop.f32.mrf.mxu0
  %v1633 = vpop.f32.mrf.mxu0
  %v1634 = vadd.f32 0.0, %v1633
  %v1635 = vpop.f32.mrf.mxu0
  %1636 = vmatprep.mubr.bf16.mxu0 0
  %1637 = vmatmul.mubr.bf16.gmra.mxu0 %v1410
  %v1638 = vpop.f32.mrf.mxu0
  %v1639 = vadd.f32 0.0, %v1638
  %v1640 = vpop.f32.mrf.mxu0
  %v1641 = vpop.f32.mrf.mxu0
  %v1642 = vpop.f32.mrf.mxu0
  %1643 = vdwg.mxu0
  %v1644 = vmax.f32 %v1066, %v1447
  %v1645 = vmax.f32 %v1069, %v1450
  %v1646 = vmax.f32 %v1074, %v1455
  %v1647 = vmax.f32 %v1077, %v1458
  %v1648 = vmax.f32 %v1082, %v1463
  %v1649 = vmax.f32 %v1085, %v1466
  %v1650 = vmax.f32 %v1090, %v1471
  %v1651 = vmax.f32 %v1093, %v1474
  %v1652 = vmax.f32 %v1098, %v1479
  %v1653 = vmax.f32 %v1101, %v1482
  %v1654 = vmax.f32 %v1106, %v1487
  %v1655 = vmax.f32 %v1109, %v1490
  %v1656 = vmax.f32 %v1114, %v1495
  %v1657 = vmax.f32 %v1117, %v1498
  %v1658 = vmax.f32 %v1122, %v1503
  %v1659 = vmax.f32 %v1125, %v1506
  %v1660 = vmax.f32 %v1130, %v1511
  %v1661 = vmax.f32 %v1133, %v1514
  %v1662 = vmax.f32 %v1138, %v1519
  %v1663 = vmax.f32 %v1141, %v1522
  %v1664 = vmax.f32 %v1146, %v1527
  %v1665 = vmax.f32 %v1149, %v1530
  %v1666 = vmax.f32 %v1154, %v1535
  %v1667 = vmax.f32 %v1157, %v1538
  %v1668 = vmax.f32 %v1162, %v1543
  %v1669 = vmax.f32 %v1165, %v1546
  %v1670 = vmax.f32 %v1170, %v1551
  %v1671 = vmax.f32 %v1173, %v1554
  %v1672 = vmax.f32 %v1178, %v1559
  %v1673 = vmax.f32 %v1181, %v1562
  %v1674 = vmax.f32 %v1186, %v1567
  %v1675 = vmax.f32 %v1189, %v1570
  %v1676 = vmax.f32 %v1194, %v1575
  %v1677 = vmax.f32 %v1197, %v1578
  %v1678 = vmax.f32 %v1202, %v1583
  %v1679 = vmax.f32 %v1205, %v1586
  %v1680 = vmax.f32 %v1210, %v1591
  %v1681 = vmax.f32 %v1213, %v1594
  %v1682 = vmax.f32 %v1218, %v1599
  %v1683 = vmax.f32 %v1221, %v1602
  %v1684 = vmax.f32 %v1226, %v1607
  %v1685 = vmax.f32 %v1229, %v1610
  %v1686 = vmax.f32 %v1234, %v1615
  %v1687 = vmax.f32 %v1237, %v1618
  %v1688 = vmax.f32 %v1242, %v1623
  %v1689 = vmax.f32 %v1245, %v1626
  %v1690 = vmax.f32 %v1250, %v1631
  %v1691 = vmax.f32 %v1253, %v1634
  %v1692 = vmax.f32 %v1258, %v1639
  %v1693 = vmax.f32 %v833, %v1644
  %v1694 = vmax.f32 %v834, %v1645
  %v1695 = vmax.f32 %v835, %v1646
  %v1696 = vmax.f32 %v836, %v1647
  %v1697 = vmax.f32 %v837, %v1648
  %v1698 = vmax.f32 %v838, %v1649
  %v1699 = vmax.f32 %v839, %v1650
  %v1700 = vmax.f32 %v840, %v1651
  %v1701 = vmax.f32 %v841, %v1652
  %v1702 = vmax.f32 %v842, %v1653
  %v1703 = vmax.f32 %v843, %v1654
  %v1704 = vmax.f32 %v844, %v1655
  %v1705 = vmax.f32 %v845, %v1656
  %v1706 = vmax.f32 %v846, %v1657
  %v1707 = vmax.f32 %v847, %v1658
  %v1708 = vmax.f32 %v848, %v1659
  %v1709 = vmax.f32 %v849, %v1660
  %v1710 = vmax.f32 %v850, %v1661
  %v1711 = vmax.f32 %v851, %v1662
  %v1712 = vmax.f32 %v852, %v1663
  %v1713 = vmax.f32 %v853, %v1664
  %v1714 = vmax.f32 %v854, %v1665
  %v1715 = vmax.f32 %v855, %v1666
  %v1716 = vmax.f32 %v856, %v1667
  %v1717 = vmax.f32 %v857, %v1668
  %v1718 = vmax.f32 %v858, %v1669
  %v1719 = vmax.f32 %v859, %v1670
  %v1720 = vmax.f32 %v860, %v1671
  %v1721 = vmax.f32 %v861, %v1672
  %v1722 = vmax.f32 %v862, %v1673
  %v1723 = vmax.f32 %v863, %v1674
  %v1724 = vmax.f32 %v864, %v1675
  %v1725 = vmax.f32 %v865, %v1676
  %v1726 = vmax.f32 %v866, %v1677
  %v1727 = vmax.f32 %v867, %v1678
  %v1728 = vmax.f32 %v868, %v1679
  %v1729 = vmax.f32 %v869, %v1680
  %v1730 = vmax.f32 %v870, %v1681
  %v1731 = vmax.f32 %v871, %v1682
  %v1732 = vmax.f32 %v872, %v1683
  %v1733 = vmax.f32 %v873, %v1684
  %v1734 = vmax.f32 %v874, %v1685
  %v1735 = vmax.f32 %v875, %v1686
  %v1736 = vmax.f32 %v876, %v1687
  %v1737 = vmax.f32 %v877, %v1688
  %v1738 = vmax.f32 %v878, %v1689
  %v1739 = vmax.f32 %v879, %v1690
  %v1740 = vmax.f32 %v880, %v1691
  %v1741 = vmax.f32 %v881, %v1692
  %v1742 = vld [vmem:[%s5] sm:$0x1]
  %v1744 = vlaneseq
  %v1745 = vshrl.u32 %v1744, 7
  %v1746 = vsub.s32 0, %v1745
  %v1747 = vrot.slane %v1742, %v1746
  %v1749 = vadd.f32 %v1693, %v1747
  %v1750 = vadd.f32 %v1694, %v1747
  %v1751 = vadd.f32 %v1695, %v1747
  %v1752 = vadd.f32 %v1696, %v1747
  %v1753 = vadd.f32 %v1697, %v1747
  %v1754 = vadd.f32 %v1698, %v1747
  %v1755 = vadd.f32 %v1699, %v1747
  %v1756 = vadd.f32 %v1700, %v1747
  %v1757 = vadd.f32 %v1701, %v1747
  %v1758 = vadd.f32 %v1702, %v1747
  %v1759 = vadd.f32 %v1703, %v1747
  %v1760 = vadd.f32 %v1704, %v1747
  %v1761 = vadd.f32 %v1705, %v1747
  %v1762 = vadd.f32 %v1706, %v1747
  %v1763 = vadd.f32 %v1707, %v1747
  %v1764 = vadd.f32 %v1708, %v1747
  %v1765 = vadd.f32 %v1709, %v1747
  %v1766 = vadd.f32 %v1710, %v1747
  %v1767 = vadd.f32 %v1711, %v1747
  %v1768 = vadd.f32 %v1712, %v1747
  %v1769 = vadd.f32 %v1713, %v1747
  %v1770 = vadd.f32 %v1714, %v1747
  %v1771 = vadd.f32 %v1715, %v1747
  %v1772 = vadd.f32 %v1716, %v1747
  %v1773 = vadd.f32 %v1717, %v1747
  %v1774 = vadd.f32 %v1718, %v1747
  %v1775 = vadd.f32 %v1719, %v1747
  %v1776 = vadd.f32 %v1720, %v1747
  %v1777 = vadd.f32 %v1721, %v1747
  %v1778 = vadd.f32 %v1722, %v1747
  %v1779 = vadd.f32 %v1723, %v1747
  %v1780 = vadd.f32 %v1724, %v1747
  %v1781 = vadd.f32 %v1725, %v1747
  %v1782 = vadd.f32 %v1726, %v1747
  %v1783 = vadd.f32 %v1727, %v1747
  %v1784 = vadd.f32 %v1728, %v1747
  %v1785 = vadd.f32 %v1729, %v1747
  %v1786 = vadd.f32 %v1730, %v1747
  %v1787 = vadd.f32 %v1731, %v1747
  %v1788 = vadd.f32 %v1732, %v1747
  %v1789 = vadd.f32 %v1733, %v1747
  %v1790 = vadd.f32 %v1734, %v1747
  %v1791 = vadd.f32 %v1735, %v1747
  %v1792 = vadd.f32 %v1736, %v1747
  %v1793 = vadd.f32 %v1737, %v1747
  %v1794 = vadd.f32 %v1738, %v1747
  %v1795 = vadd.f32 %v1739, %v1747
  %v1796 = vadd.f32 %v1740, %v1747
  %v1797 = vadd.f32 %v1741, %v1747
  %v1798 = vmax.f32 %v1749, 0.0
  %v1799 = vmax.f32 %v1750, 0.0
  %v1800 = vmax.f32 %v1751, 0.0
  %v1801 = vmax.f32 %v1752, 0.0
  %v1802 = vmax.f32 %v1753, 0.0
  %v1803 = vmax.f32 %v1754, 0.0
  %v1804 = vmax.f32 %v1755, 0.0
  %v1805 = vmax.f32 %v1756, 0.0
  %v1806 = vmax.f32 %v1757, 0.0
  %v1807 = vmax.f32 %v1758, 0.0
  %v1808 = vmax.f32 %v1759, 0.0
  %v1809 = vmax.f32 %v1760, 0.0
  %v1810 = vmax.f32 %v1761, 0.0
  %v1811 = vmax.f32 %v1762, 0.0
  %v1812 = vmax.f32 %v1763, 0.0
  %v1813 = vmax.f32 %v1764, 0.0
  %v1814 = vmax.f32 %v1765, 0.0
  %v1815 = vmax.f32 %v1766, 0.0
  %v1816 = vmax.f32 %v1767, 0.0
  %v1817 = vmax.f32 %v1768, 0.0
  %v1818 = vmax.f32 %v1769, 0.0
  %v1819 = vmax.f32 %v1770, 0.0
  %v1820 = vmax.f32 %v1771, 0.0
  %v1821 = vmax.f32 %v1772, 0.0
  %v1822 = vmax.f32 %v1773, 0.0
  %v1823 = vmax.f32 %v1774, 0.0
  %v1824 = vmax.f32 %v1775, 0.0
  %v1825 = vmax.f32 %v1776, 0.0
  %v1826 = vmax.f32 %v1777, 0.0
  %v1827 = vmax.f32 %v1778, 0.0
  %v1828 = vmax.f32 %v1779, 0.0
  %v1829 = vmax.f32 %v1780, 0.0
  %v1830 = vmax.f32 %v1781, 0.0
  %v1831 = vmax.f32 %v1782, 0.0
  %v1832 = vmax.f32 %v1783, 0.0
  %v1833 = vmax.f32 %v1784, 0.0
  %v1834 = vmax.f32 %v1785, 0.0
  %v1835 = vmax.f32 %v1786, 0.0
  %v1836 = vmax.f32 %v1787, 0.0
  %v1837 = vmax.f32 %v1788, 0.0
  %v1838 = vmax.f32 %v1789, 0.0
  %v1839 = vmax.f32 %v1790, 0.0
  %v1840 = vmax.f32 %v1791, 0.0
  %v1841 = vmax.f32 %v1792, 0.0
  %v1842 = vmax.f32 %v1793, 0.0
  %v1843 = vmax.f32 %v1794, 0.0
  %v1844 = vmax.f32 %v1795, 0.0
  %v1845 = vmax.f32 %v1796, 0.0
  %v1846 = vmax.f32 %v1797, 0.0
  %vm1847 = vcmask 523264
  %1848 = vst.msk [vmem:[%s6] sm:$0xff] %vm1847, %v1798
  %1849 = vst.msk [vmem:[%s6 + $0x8] sm:$0xff] %vm1847, %v1799
  %1850 = vst.msk [vmem:[%s6 + $0x10] sm:$0xff] %vm1847, %v1800
  %1851 = vst.msk [vmem:[%s6 + $0x18] sm:$0xff] %vm1847, %v1801
  %1852 = vst.msk [vmem:[%s6 + $0x20] sm:$0xff] %vm1847, %v1802
  %1853 = vst.msk [vmem:[%s6 + $0x28] sm:$0xff] %vm1847, %v1803
  %1854 = vst.msk [vmem:[%s6 + $0x30] sm:$0xff] %vm1847, %v1804
  %1855 = vst.msk [vmem:[%s6 + $0x38] sm:$0xff] %vm1847, %v1805
  %1856 = vst.msk [vmem:[%s6 + $0x40] sm:$0xff] %vm1847, %v1806
  %1857 = vst.msk [vmem:[%s6 + $0x48] sm:$0xff] %vm1847, %v1807
  %1858 = vst.msk [vmem:[%s6 + $0x50] sm:$0xff] %vm1847, %v1808
  %1859 = vst.msk [vmem:[%s6 + $0x58] sm:$0xff] %vm1847, %v1809
  %1860 = vst.msk [vmem:[%s6 + $0x60] sm:$0xff] %vm1847, %v1810
  %1861 = vst.msk [vmem:[%s6 + $0x68] sm:$0xff] %vm1847, %v1811
  %1862 = vst.msk [vmem:[%s6 + $0x70] sm:$0xff] %vm1847, %v1812
  %1863 = vst.msk [vmem:[%s6 + $0x78] sm:$0xff] %vm1847, %v1813
  %1864 = vst.msk [vmem:[%s6 + $0x80] sm:$0xff] %vm1847, %v1814
  %1865 = vst.msk [vmem:[%s6 + $0x88] sm:$0xff] %vm1847, %v1815
  %1866 = vst.msk [vmem:[%s6 + $0x90] sm:$0xff] %vm1847, %v1816
  %1867 = vst.msk [vmem:[%s6 + $0x98] sm:$0xff] %vm1847, %v1817
  %1868 = vst.msk [vmem:[%s6 + $0xa0] sm:$0xff] %vm1847, %v1818
  %1869 = vst.msk [vmem:[%s6 + $0xa8] sm:$0xff] %vm1847, %v1819
  %1870 = vst.msk [vmem:[%s6 + $0xb0] sm:$0xff] %vm1847, %v1820
  %1871 = vst.msk [vmem:[%s6 + $0xb8] sm:$0xff] %vm1847, %v1821
  %1872 = vst.msk [vmem:[%s6 + $0xc0] sm:$0xff] %vm1847, %v1822
  %1873 = vst.msk [vmem:[%s6 + $0xc8] sm:$0xff] %vm1847, %v1823
  %1874 = vst.msk [vmem:[%s6 + $0xd0] sm:$0xff] %vm1847, %v1824
  %1875 = vst.msk [vmem:[%s6 + $0xd8] sm:$0xff] %vm1847, %v1825
  %1876 = vst.msk [vmem:[%s6 + $0xe0] sm:$0xff] %vm1847, %v1826
  %1877 = vst.msk [vmem:[%s6 + $0xe8] sm:$0xff] %vm1847, %v1827
  %1878 = vst.msk [vmem:[%s6 + $0xf0] sm:$0xff] %vm1847, %v1828
  %1879 = vst.msk [vmem:[%s6 + $0xf8] sm:$0xff] %vm1847, %v1829
  %1880 = vst.msk [vmem:[%s6 + $0x100] sm:$0xff] %vm1847, %v1830
  %1881 = vst.msk [vmem:[%s6 + $0x108] sm:$0xff] %vm1847, %v1831
  %1882 = vst.msk [vmem:[%s6 + $0x110] sm:$0xff] %vm1847, %v1832
  %1883 = vst.msk [vmem:[%s6 + $0x118] sm:$0xff] %vm1847, %v1833
  %1884 = vst.msk [vmem:[%s6 + $0x120] sm:$0xff] %vm1847, %v1834
  %1885 = vst.msk [vmem:[%s6 + $0x128] sm:$0xff] %vm1847, %v1835
  %1886 = vst.msk [vmem:[%s6 + $0x130] sm:$0xff] %vm1847, %v1836
  %1887 = vst.msk [vmem:[%s6 + $0x138] sm:$0xff] %vm1847, %v1837
  %1888 = vst.msk [vmem:[%s6 + $0x140] sm:$0xff] %vm1847, %v1838
  %1889 = vst.msk [vmem:[%s6 + $0x148] sm:$0xff] %vm1847, %v1839
  %1890 = vst.msk [vmem:[%s6 + $0x150] sm:$0xff] %vm1847, %v1840
  %1891 = vst.msk [vmem:[%s6 + $0x158] sm:$0xff] %vm1847, %v1841
  %1892 = vst.msk [vmem:[%s6 + $0x160] sm:$0xff] %vm1847, %v1842
  %1893 = vst.msk [vmem:[%s6 + $0x168] sm:$0xff] %vm1847, %v1843
  %1894 = vst.msk [vmem:[%s6 + $0x170] sm:$0xff] %vm1847, %v1844
  %1895 = vst.msk [vmem:[%s6 + $0x178] sm:$0xff] %vm1847, %v1845
  %1896 = vst.msk [vmem:[%s6 + $0x180] sm:$0xff] %vm1847, %v1846
  // Predicated region
  $region26: #{convnet_forward.3} parent=0 // pred_check
    _
  $region27: #{convnet_forward.3} parent=0 // pred_check_branch
    %1898 = sbr.rel (0) target = $region29
  $region28: #{convnet_forward.3} parent=0 // pred_region
    _
  $region29: #{convnet_forward.3} parent=0 // pred_fallthru
    _
  // Predicated region
  $region30: #{convnet_forward.3} parent=0 // pred_check
    _
  $region31: #{convnet_forward.3} parent=0 // pred_check_branch
    %1900 = sbr.rel (0) target = $region33
  $region32: #{convnet_forward.3} parent=0 // pred_region
    _
  $region33: #{convnet_forward.3} parent=0 // pred_fallthru
    _

// kernel: convnet_forward.4
$region0: #{convnet_forward.4}
  #allocation0 [shape = 'u32[]', space=smem, size = 0x4, offset = 0x4, fixed_abs, tag = 'smem constant byte address 0x4 - core index']
  #allocation1 [shape = 'u32[144,128]{1,0:T(1,128)}', space=vmem, size = 0x12000, scoped, tag = 'internal scratch']
  %s0 = inlined_call_operand.vmem [shape: f32[50,1600], index: 0, kind: input, shape index: {}]
  %s1 = inlined_call_operand.vmem [shape: f32[50,1600], index: 1, kind: input, shape index: {}]
  %s2 = inlined_call_operand.vmem [shape: f32[50,1600], index: 2, kind: input, shape index: {}]
  %s3 = inlined_call_operand.vmem [shape: f32[50,1600], index: 3, kind: input, shape index: {}]
  %s4 = inlined_call_operand.vmem [shape: bf16[1600,128], index: 4, kind: input, shape index: {}]
  %s5 = inlined_call_operand.vmem [shape: f32[1,128], index: 5, kind: input, shape index: {}]
  %s6 = inlined_call_operand.vmem [shape: f32[50,128], index: 6, kind: output, shape index: {}]
  %s7 = sld [smem:[#allocation0]]
  $region34: #{convnet_forward.4} parent=0
    _
  %s9 = ssub.s32 1, %s7
  %s10 = scalar_select 0, %s9, %s7
  // Predicated region
  $region2: #{convnet_forward.4} parent=0 // pred_check
    _
  $region3: #{convnet_forward.4} parent=0 // pred_check_branch
    %12 = sbr.rel (0) target = $region5
  $region4: #{convnet_forward.4} parent=0 // pred_region
    _
  $region5: #{convnet_forward.4} parent=0 // pred_fallthru
    _
  // Predicated region
  $region6: #{convnet_forward.4} parent=0 // pred_check
    _
  $region7: #{convnet_forward.4} parent=0 // pred_check_branch
    %14 = sbr.rel (0) target = $region9
  $region8: #{convnet_forward.4} parent=0 // pred_region
    _
  $region9: #{convnet_forward.4} parent=0 // pred_fallthru
    _
  // Predicated region
  $region10: #{convnet_forward.4} parent=0 // pred_check
    _
  $region11: #{convnet_forward.4} parent=0 // pred_check_branch
    %16 = sbr.rel (0) target = $region13
  $region12: #{convnet_forward.4} parent=0 // pred_region
    _
  $region13: #{convnet_forward.4} parent=0 // pred_fallthru
    _
  // Predicated region
  $region14: #{convnet_forward.4} parent=0 // pred_check
    _
  $region15: #{convnet_forward.4} parent=0 // pred_check_branch
    %18 = sbr.rel (0) target = $region17
  $region16: #{convnet_forward.4} parent=0 // pred_region
    _
  $region17: #{convnet_forward.4} parent=0 // pred_fallthru
    _
  // Predicated region
  $region18: #{convnet_forward.4} parent=0 // pred_check
    _
  $region19: #{convnet_forward.4} parent=0 // pred_check_branch
    %20 = sbr.rel (0) target = $region21
  $region20: #{convnet_forward.4} parent=0 // pred_region
    _
  $region21: #{convnet_forward.4} parent=0 // pred_fallthru
    _
  // Predicated region
  $region22: #{convnet_forward.4} parent=0 // pred_check
    _
  $region23: #{convnet_forward.4} parent=0 // pred_check_branch
    %22 = sbr.rel (0) target = $region25
  $region24: #{convnet_forward.4} parent=0 // pred_region
    _
  $region25: #{convnet_forward.4} parent=0 // pred_fallthru
    _
  %v24 = vld [vmem:[%s4] sm:$0xf]
  %v25 = vld [vmem:[%s4 + $0x4] sm:$0xf]
  %v26 = vld [vmem:[%s4 + $0x8] sm:$0xf]
  %v27 = vld [vmem:[%s4 + $0xc] sm:$0xf]
  %v28 = vld [vmem:[%s4 + $0x10] sm:$0xf]
  %v29 = vld [vmem:[%s4 + $0x14] sm:$0xf]
  %v30 = vld [vmem:[%s4 + $0x18] sm:$0xf]
  %v31 = vld [vmem:[%s4 + $0x1c] sm:$0xf]
  %v32 = vld [vmem:[%s4 + $0x20] sm:$0xf]
  %v33 = vld [vmem:[%s4 + $0x24] sm:$0xf]
  %v34 = vld [vmem:[%s4 + $0x28] sm:$0xf]
  %v35 = vld [vmem:[%s4 + $0x2c] sm:$0xf]
  %v36 = vld [vmem:[%s4 + $0x30] sm:$0xf]
  %v37 = vld [vmem:[%s4 + $0x34] sm:$0xf]
  %v38 = vld [vmem:[%s4 + $0x38] sm:$0xf]
  %v39 = vld [vmem:[%s4 + $0x3c] sm:$0xf]
  %v40 = vld [vmem:[%s4 + $0x40] sm:$0xf]
  %v41 = vld [vmem:[%s4 + $0x44] sm:$0xf]
  %v42 = vld [vmem:[%s4 + $0x48] sm:$0xf]
  %v43 = vld [vmem:[%s4 + $0x4c] sm:$0xf]
  %v44 = vld [vmem:[%s4 + $0x50] sm:$0xf]
  %v45 = vld [vmem:[%s4 + $0x54] sm:$0xf]
  %v46 = vld [vmem:[%s4 + $0x58] sm:$0xf]
  %v47 = vld [vmem:[%s4 + $0x5c] sm:$0xf]
  %v48 = vld [vmem:[%s4 + $0x60] sm:$0xf]
  %v49 = vld [vmem:[%s4 + $0x64] sm:$0xf]
  %v50 = vld [vmem:[%s4 + $0x68] sm:$0xf]
  %v51 = vld [vmem:[%s4 + $0x6c] sm:$0xf]
  %v52 = vld [vmem:[%s4 + $0x70] sm:$0xf]
  %v53 = vld [vmem:[%s4 + $0x74] sm:$0xf]
  %v54 = vld [vmem:[%s4 + $0x78] sm:$0xf]
  %v55 = vld [vmem:[%s4 + $0x7c] sm:$0xf]
  %v56 = vld [vmem:[%s4 + $0x80] sm:$0xf]
  %v57 = vld [vmem:[%s4 + $0x84] sm:$0xf]
  %v58 = vld [vmem:[%s4 + $0x88] sm:$0xf]
  %v59 = vld [vmem:[%s4 + $0x8c] sm:$0xf]
  %v60 = vld [vmem:[%s4 + $0x90] sm:$0xf]
  %v61 = vld [vmem:[%s4 + $0x94] sm:$0xf]
  %v62 = vld [vmem:[%s4 + $0x98] sm:$0xf]
  %v63 = vld [vmem:[%s4 + $0x9c] sm:$0xf]
  %v64 = vld [vmem:[%s4 + $0xa0] sm:$0xf]
  %v65 = vld [vmem:[%s4 + $0xa4] sm:$0xf]
  %v66 = vld [vmem:[%s4 + $0xa8] sm:$0xf]
  %v67 = vld [vmem:[%s4 + $0xac] sm:$0xf]
  %v68 = vld [vmem:[%s4 + $0xb0] sm:$0xf]
  %v69 = vld [vmem:[%s4 + $0xb4] sm:$0xf]
  %v70 = vld [vmem:[%s4 + $0xb8] sm:$0xf]
  %v71 = vld [vmem:[%s4 + $0xbc] sm:$0xf]
  %v72 = vld [vmem:[%s4 + $0xc0] sm:$0xf]
  %v73 = vld [vmem:[%s4 + $0xc4] sm:$0xf]
  %v74 = vld [vmem:[%s4 + $0xc8] sm:$0xf]
  %v75 = vld [vmem:[%s4 + $0xcc] sm:$0xf]
  %v76 = vld [vmem:[%s4 + $0xd0] sm:$0xf]
  %v77 = vld [vmem:[%s4 + $0xd4] sm:$0xf]
  %v78 = vld [vmem:[%s4 + $0xd8] sm:$0xf]
  %v79 = vld [vmem:[%s4 + $0xdc] sm:$0xf]
  %v80 = vld [vmem:[%s4 + $0xe0] sm:$0xf]
  %v81 = vld [vmem:[%s4 + $0xe4] sm:$0xf]
  %v82 = vld [vmem:[%s4 + $0xe8] sm:$0xf]
  %v83 = vld [vmem:[%s4 + $0xec] sm:$0xf]
  %v84 = vld [vmem:[%s4 + $0xf0] sm:$0xf]
  %v85 = vld [vmem:[%s4 + $0xf4] sm:$0xf]
  %v86 = vld [vmem:[%s4 + $0xf8] sm:$0xf]
  %v87 = vld [vmem:[%s4 + $0xfc] sm:$0xf]
  %v88 = vld [vmem:[%s4 + $0x100] sm:$0xf]
  %v89 = vld [vmem:[%s4 + $0x104] sm:$0xf]
  %v90 = vld [vmem:[%s4 + $0x108] sm:$0xf]
  %v91 = vld [vmem:[%s4 + $0x10c] sm:$0xf]
  %v92 = vld [vmem:[%s4 + $0x110] sm:$0xf]
  %v93 = vld [vmem:[%s4 + $0x114] sm:$0xf]
  %v94 = vld [vmem:[%s4 + $0x118] sm:$0xf]
  %v95 = vld [vmem:[%s4 + $0x11c] sm:$0xf]
  %v96 = vld [vmem:[%s4 + $0x120] sm:$0xf]
  %v97 = vld [vmem:[%s4 + $0x124] sm:$0xf]
  %v98 = vld [vmem:[%s4 + $0x128] sm:$0xf]
  %v99 = vld [vmem:[%s4 + $0x12c] sm:$0xf]
  %v100 = vld [vmem:[%s4 + $0x130] sm:$0xf]
  %v101 = vld [vmem:[%s4 + $0x134] sm:$0xf]
  %v102 = vld [vmem:[%s4 + $0x138] sm:$0xf]
  %v103 = vld [vmem:[%s4 + $0x13c] sm:$0xf]
  %v104 = vld [vmem:[%s4 + $0x140] sm:$0xf]
  %v105 = vld [vmem:[%s4 + $0x144] sm:$0xf]
  %v106 = vld [vmem:[%s4 + $0x148] sm:$0xf]
  %v107 = vld [vmem:[%s4 + $0x14c] sm:$0xf]
  %v108 = vld [vmem:[%s4 + $0x150] sm:$0xf]
  %v109 = vld [vmem:[%s4 + $0x154] sm:$0xf]
  %v110 = vld [vmem:[%s4 + $0x158] sm:$0xf]
  %v111 = vld [vmem:[%s4 + $0x15c] sm:$0xf]
  %v112 = vld [vmem:[%s4 + $0x160] sm:$0xf]
  %v113 = vld [vmem:[%s4 + $0x164] sm:$0xf]
  %v114 = vld [vmem:[%s4 + $0x168] sm:$0xf]
  %v115 = vld [vmem:[%s4 + $0x16c] sm:$0xf]
  %v116 = vld [vmem:[%s4 + $0x170] sm:$0xf]
  %v117 = vld [vmem:[%s4 + $0x174] sm:$0xf]
  %v118 = vld [vmem:[%s4 + $0x178] sm:$0xf]
  %v119 = vld [vmem:[%s4 + $0x17c] sm:$0xf]
  %v120 = vld [vmem:[%s4 + $0x180] sm:$0xf]
  %v121 = vld [vmem:[%s4 + $0x184] sm:$0xf]
  %v122 = vld [vmem:[%s4 + $0x188] sm:$0xf]
  %v123 = vld [vmem:[%s4 + $0x18c] sm:$0xf]
  %v124 = vld [vmem:[%s4 + $0x190] sm:$0xf]
  %v125 = vld [vmem:[%s4 + $0x194] sm:$0xf]
  %v126 = vld [vmem:[%s4 + $0x198] sm:$0xf]
  %v127 = vld [vmem:[%s4 + $0x19c] sm:$0xf]
  %v128 = vld [vmem:[%s4 + $0x1a0] sm:$0xf]
  %v129 = vld [vmem:[%s4 + $0x1a4] sm:$0xf]
  %v130 = vld [vmem:[%s4 + $0x1a8] sm:$0xf]
  %v131 = vld [vmem:[%s4 + $0x1ac] sm:$0xf]
  %v132 = vld [vmem:[%s4 + $0x1b0] sm:$0xf]
  %v133 = vld [vmem:[%s4 + $0x1b4] sm:$0xf]
  %v134 = vld [vmem:[%s4 + $0x1b8] sm:$0xf]
  %v135 = vld [vmem:[%s4 + $0x1bc] sm:$0xf]
  %v136 = vld [vmem:[%s4 + $0x1c0] sm:$0xf]
  %v137 = vld [vmem:[%s4 + $0x1c4] sm:$0xf]
  %v138 = vld [vmem:[%s4 + $0x1c8] sm:$0xf]
  %v139 = vld [vmem:[%s4 + $0x1cc] sm:$0xf]
  %v140 = vld [vmem:[%s4 + $0x1d0] sm:$0xf]
  %v141 = vld [vmem:[%s4 + $0x1d4] sm:$0xf]
  %v142 = vld [vmem:[%s4 + $0x1d8] sm:$0xf]
  %v143 = vld [vmem:[%s4 + $0x1dc] sm:$0xf]
  %v144 = vld [vmem:[%s4 + $0x1e0] sm:$0xf]
  %v145 = vld [vmem:[%s4 + $0x1e4] sm:$0xf]
  %v146 = vld [vmem:[%s4 + $0x1e8] sm:$0xf]
  %v147 = vld [vmem:[%s4 + $0x1ec] sm:$0xf]
  %v148 = vld [vmem:[%s4 + $0x1f0] sm:$0xf]
  %v149 = vld [vmem:[%s4 + $0x1f4] sm:$0xf]
  %v150 = vld [vmem:[%s4 + $0x1f8] sm:$0xf]
  %v151 = vld [vmem:[%s4 + $0x1fc] sm:$0xf]
  %v152 = vld [vmem:[%s4 + $0x200] sm:$0xf]
  %v153 = vld [vmem:[%s4 + $0x204] sm:$0xf]
  %v154 = vld [vmem:[%s4 + $0x208] sm:$0xf]
  %v155 = vld [vmem:[%s4 + $0x20c] sm:$0xf]
  %v156 = vld [vmem:[%s4 + $0x210] sm:$0xf]
  %v157 = vld [vmem:[%s4 + $0x214] sm:$0xf]
  %v158 = vld [vmem:[%s4 + $0x218] sm:$0xf]
  %v159 = vld [vmem:[%s4 + $0x21c] sm:$0xf]
  %v160 = vld [vmem:[%s4 + $0x220] sm:$0xf]
  %v161 = vld [vmem:[%s4 + $0x224] sm:$0xf]
  %v162 = vld [vmem:[%s4 + $0x228] sm:$0xf]
  %v163 = vld [vmem:[%s4 + $0x22c] sm:$0xf]
  %v164 = vld [vmem:[%s4 + $0x230] sm:$0xf]
  %v165 = vld [vmem:[%s4 + $0x234] sm:$0xf]
  %v166 = vld [vmem:[%s4 + $0x238] sm:$0xf]
  %v167 = vld [vmem:[%s4 + $0x23c] sm:$0xf]
  %v168 = vld [vmem:[%s4 + $0x240] sm:$0xf]
  %v169 = vld [vmem:[%s4 + $0x244] sm:$0xf]
  %v170 = vld [vmem:[%s4 + $0x248] sm:$0xf]
  %v171 = vld [vmem:[%s4 + $0x24c] sm:$0xf]
  %v172 = vld [vmem:[%s4 + $0x250] sm:$0xf]
  %v173 = vld [vmem:[%s4 + $0x254] sm:$0xf]
  %v174 = vld [vmem:[%s4 + $0x258] sm:$0xf]
  %v175 = vld [vmem:[%s4 + $0x25c] sm:$0xf]
  %v176 = vld [vmem:[%s4 + $0x260] sm:$0xf]
  %v177 = vld [vmem:[%s4 + $0x264] sm:$0xf]
  %v178 = vld [vmem:[%s4 + $0x268] sm:$0xf]
  %v179 = vld [vmem:[%s4 + $0x26c] sm:$0xf]
  %v180 = vld [vmem:[%s4 + $0x270] sm:$0xf]
  %v181 = vld [vmem:[%s4 + $0x274] sm:$0xf]
  %v182 = vld [vmem:[%s4 + $0x278] sm:$0xf]
  %v183 = vld [vmem:[%s4 + $0x27c] sm:$0xf]
  %v184 = vld [vmem:[%s4 + $0x280] sm:$0xf]
  %v185 = vld [vmem:[%s4 + $0x284] sm:$0xf]
  %v186 = vld [vmem:[%s4 + $0x288] sm:$0xf]
  %v187 = vld [vmem:[%s4 + $0x28c] sm:$0xf]
  %v188 = vld [vmem:[%s4 + $0x290] sm:$0xf]
  %v189 = vld [vmem:[%s4 + $0x294] sm:$0xf]
  %v190 = vld [vmem:[%s4 + $0x298] sm:$0xf]
  %v191 = vld [vmem:[%s4 + $0x29c] sm:$0xf]
  %v192 = vld [vmem:[%s4 + $0x2a0] sm:$0xf]
  %v193 = vld [vmem:[%s4 + $0x2a4] sm:$0xf]
  %v194 = vld [vmem:[%s4 + $0x2a8] sm:$0xf]
  %v195 = vld [vmem:[%s4 + $0x2ac] sm:$0xf]
  %v196 = vld [vmem:[%s4 + $0x2b0] sm:$0xf]
  %v197 = vld [vmem:[%s4 + $0x2b4] sm:$0xf]
  %v198 = vld [vmem:[%s4 + $0x2b8] sm:$0xf]
  %v199 = vld [vmem:[%s4 + $0x2bc] sm:$0xf]
  %v200 = vld [vmem:[%s4 + $0x2c0] sm:$0xf]
  %v201 = vld [vmem:[%s4 + $0x2c4] sm:$0xf]
  %v202 = vld [vmem:[%s4 + $0x2c8] sm:$0xf]
  %v203 = vld [vmem:[%s4 + $0x2cc] sm:$0xf]
  %v204 = vld [vmem:[%s4 + $0x2d0] sm:$0xf]
  %v205 = vld [vmem:[%s4 + $0x2d4] sm:$0xf]
  %v206 = vld [vmem:[%s4 + $0x2d8] sm:$0xf]
  %v207 = vld [vmem:[%s4 + $0x2dc] sm:$0xf]
  %v208 = vld [vmem:[%s4 + $0x2e0] sm:$0xf]
  %v209 = vld [vmem:[%s4 + $0x2e4] sm:$0xf]
  %v210 = vld [vmem:[%s4 + $0x2e8] sm:$0xf]
  %v211 = vld [vmem:[%s4 + $0x2ec] sm:$0xf]
  %v212 = vld [vmem:[%s4 + $0x2f0] sm:$0xf]
  %v213 = vld [vmem:[%s4 + $0x2f4] sm:$0xf]
  %v214 = vld [vmem:[%s4 + $0x2f8] sm:$0xf]
  %v215 = vld [vmem:[%s4 + $0x2fc] sm:$0xf]
  %v216 = vld [vmem:[%s4 + $0x300] sm:$0xf]
  %v217 = vld [vmem:[%s4 + $0x304] sm:$0xf]
  %v218 = vld [vmem:[%s4 + $0x308] sm:$0xf]
  %v219 = vld [vmem:[%s4 + $0x30c] sm:$0xf]
  %v220 = vld [vmem:[%s4 + $0x310] sm:$0xf]
  %v221 = vld [vmem:[%s4 + $0x314] sm:$0xf]
  %v222 = vld [vmem:[%s4 + $0x318] sm:$0xf]
  %v223 = vld [vmem:[%s4 + $0x31c] sm:$0xf]
  %v224 = vld [vmem:[%s0] sm:$0xff]
  %v225 = vld [vmem:[%s0 + $0x8] sm:$0xff]
  %v226 = vld [vmem:[%s0 + $0x10] sm:$0xff]
  %v227 = vld [vmem:[%s0 + $0x18] sm:$0xff]
  %v228 = vld [vmem:[%s0 + $0x20] sm:$0xff]
  %v229 = vld [vmem:[%s0 + $0x28] sm:$0xff]
  %v230 = vld [vmem:[%s0 + $0x30] sm:$0xff]
  %v231 = vld [vmem:[%s0 + $0x38] sm:$0xff]
  %v232 = vld [vmem:[%s0 + $0x40] sm:$0xff]
  %v233 = vld [vmem:[%s0 + $0x48] sm:$0xff]
  %v234 = vld [vmem:[%s0 + $0x50] sm:$0xff]
  %v235 = vld [vmem:[%s0 + $0x58] sm:$0xff]
  %v236 = vld [vmem:[%s0 + $0x60] sm:$0xff]
  %v237 = vld [vmem:[%s0 + $0x68] sm:$0xff]
  %v238 = vld [vmem:[%s0 + $0x70] sm:$0xff]
  %v239 = vld [vmem:[%s0 + $0x78] sm:$0xff]
  %v240 = vld [vmem:[%s0 + $0x80] sm:$0xff]
  %v241 = vld [vmem:[%s0 + $0x88] sm:$0xff]
  %v242 = vld [vmem:[%s0 + $0x90] sm:$0xff]
  %v243 = vld [vmem:[%s0 + $0x98] sm:$0xff]
  %v244 = vld [vmem:[%s0 + $0xa0] sm:$0xff]
  %v245 = vld [vmem:[%s0 + $0xa8] sm:$0xff]
  %v246 = vld [vmem:[%s0 + $0xb0] sm:$0xff]
  %v247 = vld [vmem:[%s0 + $0xb8] sm:$0xff]
  %v248 = vld [vmem:[%s0 + $0xc0] sm:$0xff]
  %v249 = vld [vmem:[%s0 + $0xc8] sm:$0xff]
  %v250 = vld [vmem:[%s0 + $0xd0] sm:$0xff]
  %v251 = vld [vmem:[%s0 + $0xd8] sm:$0xff]
  %v252 = vld [vmem:[%s0 + $0xe0] sm:$0xff]
  %v253 = vld [vmem:[%s0 + $0xe8] sm:$0xff]
  %v254 = vld [vmem:[%s0 + $0xf0] sm:$0xff]
  %v255 = vld [vmem:[%s0 + $0xf8] sm:$0xff]
  %v256 = vld [vmem:[%s0 + $0x100] sm:$0xff]
  %v257 = vld [vmem:[%s0 + $0x108] sm:$0xff]
  %v258 = vld [vmem:[%s0 + $0x110] sm:$0xff]
  %v259 = vld [vmem:[%s0 + $0x118] sm:$0xff]
  %v260 = vld [vmem:[%s0 + $0x120] sm:$0xff]
  %v261 = vld [vmem:[%s0 + $0x128] sm:$0xff]
  %v262 = vld [vmem:[%s0 + $0x130] sm:$0xff]
  %v263 = vld [vmem:[%s0 + $0x138] sm:$0xff]
  %v264 = vld [vmem:[%s0 + $0x140] sm:$0xff]
  %v265 = vld [vmem:[%s0 + $0x148] sm:$0xff]
  %v266 = vld [vmem:[%s0 + $0x150] sm:$0xff]
  %v267 = vld [vmem:[%s0 + $0x158] sm:$0xff]
  %v268 = vld [vmem:[%s0 + $0x160] sm:$0xff]
  %v269 = vld [vmem:[%s0 + $0x168] sm:$0xff]
  %v270 = vld [vmem:[%s0 + $0x170] sm:$0xff]
  %v271 = vld [vmem:[%s0 + $0x178] sm:$0xff]
  %v272 = vld [vmem:[%s0 + $0x180] sm:$0xff]
  %v273 = vld [vmem:[%s0 + $0x188] sm:$0xff]
  %v274 = vld [vmem:[%s0 + $0x190] sm:$0xff]
  %v275 = vld [vmem:[%s0 + $0x198] sm:$0xff]
  %v276 = vld [vmem:[%s0 + $0x1a0] sm:$0xff]
  %v277 = vld [vmem:[%s0 + $0x1a8] sm:$0xff]
  %v278 = vld [vmem:[%s0 + $0x1b0] sm:$0xff]
  %v279 = vld [vmem:[%s0 + $0x1b8] sm:$0xff]
  %v280 = vld [vmem:[%s0 + $0x1c0] sm:$0xff]
  %v281 = vld [vmem:[%s0 + $0x1c8] sm:$0xff]
  %v282 = vld [vmem:[%s0 + $0x1d0] sm:$0xff]
  %v283 = vld [vmem:[%s0 + $0x1d8] sm:$0xff]
  %v284 = vld [vmem:[%s0 + $0x1e0] sm:$0xff]
  %v285 = vld [vmem:[%s0 + $0x1e8] sm:$0xff]
  %v286 = vld [vmem:[%s0 + $0x1f0] sm:$0xff]
  %v287 = vld [vmem:[%s0 + $0x1f8] sm:$0xff]
  %v288 = vld [vmem:[%s0 + $0x200] sm:$0xff]
  %v289 = vld [vmem:[%s0 + $0x208] sm:$0xff]
  %v290 = vld [vmem:[%s0 + $0x210] sm:$0xff]
  %v291 = vld [vmem:[%s0 + $0x218] sm:$0xff]
  %v292 = vld [vmem:[%s0 + $0x220] sm:$0xff]
  %v293 = vld [vmem:[%s0 + $0x228] sm:$0xff]
  %v294 = vld [vmem:[%s0 + $0x230] sm:$0xff]
  %v295 = vld [vmem:[%s0 + $0x238] sm:$0xff]
  %v296 = vld [vmem:[%s0 + $0x240] sm:$0xff]
  %v297 = vld [vmem:[%s0 + $0x248] sm:$0xff]
  %v298 = vld [vmem:[%s0 + $0x250] sm:$0xff]
  %v299 = vld [vmem:[%s0 + $0x258] sm:$0xff]
  %v300 = vld [vmem:[%s0 + $0x260] sm:$0xff]
  %v301 = vld [vmem:[%s0 + $0x268] sm:$0xff]
  %v302 = vld [vmem:[%s0 + $0x270] sm:$0x3]
  %v303 = vld [vmem:[%s0 + $0x278] sm:$0x3]
  %v304 = vld [vmem:[%s0 + $0x280] sm:$0x3]
  %v305 = vld [vmem:[%s0 + $0x288] sm:$0x3]
  %v306 = vld [vmem:[%s0 + $0x290] sm:$0x3]
  %v307 = vld [vmem:[%s0 + $0x298] sm:$0x3]
  %v308 = vld [vmem:[%s0 + $0x2a0] sm:$0x3]
  %v309 = vld [vmem:[%s0 + $0x2a8] sm:$0x3]
  %v310 = vld [vmem:[%s0 + $0x2b0] sm:$0x3]
  %v311 = vld [vmem:[%s0 + $0x2b8] sm:$0x3]
  %v312 = vld [vmem:[%s0 + $0x2c0] sm:$0x3]
  %v313 = vld [vmem:[%s0 + $0x2c8] sm:$0x3]
  %v314 = vld [vmem:[%s0 + $0x2d0] sm:$0x3]
  %v315 = vpack.c.bf16 %v237, %v224
  %v316 = vpack.c.bf16 %v238, %v225
  %v317 = vpack.c.bf16 %v239, %v226
  %v318 = vpack.c.bf16 %v240, %v227
  %v319 = vpack.c.bf16 %v241, %v228
  %v320 = vpack.c.bf16 %v242, %v229
  %v321 = vpack.c.bf16 %v243, %v230
  %v322 = vpack.c.bf16 %v244, %v231
  %v323 = vpack.c.bf16 %v245, %v232
  %v324 = vpack.c.bf16 %v246, %v233
  %v325 = vpack.c.bf16 %v247, %v234
  %v326 = vpack.c.bf16 %v248, %v235
  %v327 = vpack.c.bf16 %v249, %v236
  %v328 = vpack.c.bf16 %v263, %v250
  %v329 = vpack.c.bf16 %v264, %v251
  %v330 = vpack.c.bf16 %v265, %v252
  %v331 = vpack.c.bf16 %v266, %v253
  %v332 = vpack.c.bf16 %v267, %v254
  %v333 = vpack.c.bf16 %v268, %v255
  %v334 = vpack.c.bf16 %v269, %v256
  %v335 = vpack.c.bf16 %v270, %v257
  %v336 = vpack.c.bf16 %v271, %v258
  %v337 = vpack.c.bf16 %v272, %v259
  %v338 = vpack.c.bf16 %v273, %v260
  %v339 = vpack.c.bf16 %v274, %v261
  %v340 = vpack.c.bf16 %v275, %v262
  %v341 = vpack.c.bf16 %v289, %v276
  %v342 = vpack.c.bf16 %v290, %v277
  %v343 = vpack.c.bf16 %v291, %v278
  %v344 = vpack.c.bf16 %v292, %v279
  %v345 = vpack.c.bf16 %v293, %v280
  %v346 = vpack.c.bf16 %v294, %v281
  %v347 = vpack.c.bf16 %v295, %v282
  %v348 = vpack.c.bf16 %v296, %v283
  %v349 = vpack.c.bf16 %v297, %v284
  %v350 = vpack.c.bf16 %v298, %v285
  %v351 = vpack.c.bf16 %v299, %v286
  %v352 = vpack.c.bf16 %v300, %v287
  %v353 = vpack.c.bf16 %v301, %v288
  %v354 = vpack.c.bf16 %v302, %v302
  %v355 = vpack.c.bf16 %v303, %v303
  %v356 = vpack.c.bf16 %v304, %v304
  %v357 = vpack.c.bf16 %v305, %v305
  %v358 = vpack.c.bf16 %v306, %v306
  %v359 = vpack.c.bf16 %v307, %v307
  %v360 = vpack.c.bf16 %v308, %v308
  %v361 = vpack.c.bf16 %v309, %v309
  %v362 = vpack.c.bf16 %v310, %v310
  %v363 = vpack.c.bf16 %v311, %v311
  %v364 = vpack.c.bf16 %v312, %v312
  %v365 = vpack.c.bf16 %v313, %v313
  %v366 = vpack.c.bf16 %v314, %v314
  %v567 = vunpack.c.l.b16 %v24
  %v568 = vunpack.c.l.b16 %v25
  %v569 = vunpack.c.l.b16 %v26
  %v570 = vunpack.c.l.b16 %v27
  %v571 = vunpack.c.l.b16 %v28
  %v572 = vunpack.c.l.b16 %v29
  %v573 = vunpack.c.l.b16 %v30
  %v574 = vunpack.c.l.b16 %v31
  %v575 = vunpack.c.l.b16 %v32
  %v576 = vunpack.c.l.b16 %v33
  %v577 = vunpack.c.l.b16 %v34
  %v578 = vunpack.c.l.b16 %v35
  %v579 = vunpack.c.l.b16 %v36
  %v580 = vunpack.c.l.b16 %v37
  %v581 = vunpack.c.l.b16 %v38
  %v582 = vunpack.c.l.b16 %v39
  %v583 = vunpack.c.l.b16 %v40
  %v584 = vunpack.c.l.b16 %v41
  %v585 = vunpack.c.l.b16 %v42
  %v586 = vunpack.c.l.b16 %v43
  %v587 = vunpack.c.l.b16 %v44
  %v588 = vunpack.c.l.b16 %v45
  %v589 = vunpack.c.l.b16 %v46
  %v590 = vunpack.c.l.b16 %v47
  %v591 = vunpack.c.l.b16 %v48
  %v592 = vunpack.c.l.b16 %v49
  %v593 = vunpack.c.l.b16 %v50
  %v594 = vunpack.c.l.b16 %v51
  %v595 = vunpack.c.l.b16 %v52
  %v596 = vunpack.c.l.b16 %v53
  %v597 = vunpack.c.l.b16 %v54
  %v598 = vunpack.c.l.b16 %v55
  %v599 = vunpack.c.l.b16 %v56
  %v600 = vunpack.c.l.b16 %v57
  %v601 = vunpack.c.l.b16 %v58
  %v602 = vunpack.c.l.b16 %v59
  %v603 = vunpack.c.l.b16 %v60
  %v604 = vunpack.c.l.b16 %v61
  %v605 = vunpack.c.l.b16 %v62
  %v606 = vunpack.c.l.b16 %v63
  %v607 = vunpack.c.l.b16 %v64
  %v608 = vunpack.c.l.b16 %v65
  %v609 = vunpack.c.l.b16 %v66
  %v610 = vunpack.c.l.b16 %v67
  %v611 = vunpack.c.l.b16 %v68
  %v612 = vunpack.c.l.b16 %v69
  %v613 = vunpack.c.l.b16 %v70
  %v614 = vunpack.c.l.b16 %v71
  %v615 = vunpack.c.l.b16 %v72
  %v616 = vunpack.c.l.b16 %v73
  %v617 = vunpack.c.l.b16 %v74
  %v618 = vunpack.c.l.b16 %v75
  %v619 = vunpack.c.l.b16 %v76
  %v620 = vunpack.c.l.b16 %v77
  %v621 = vunpack.c.l.b16 %v78
  %v622 = vunpack.c.l.b16 %v79
  %v623 = vunpack.c.l.b16 %v80
  %v624 = vunpack.c.l.b16 %v81
  %v625 = vunpack.c.l.b16 %v82
  %v626 = vunpack.c.l.b16 %v83
  %v627 = vunpack.c.l.b16 %v84
  %v628 = vunpack.c.l.b16 %v85
  %v629 = vunpack.c.l.b16 %v86
  %v630 = vunpack.c.l.b16 %v87
  %v631 = vunpack.c.l.b16 %v88
  %v632 = vunpack.c.l.b16 %v89
  %v633 = vunpack.c.l.b16 %v90
  %v634 = vunpack.c.l.b16 %v91
  %v635 = vunpack.c.l.b16 %v92
  %v636 = vunpack.c.l.b16 %v93
  %v637 = vunpack.c.l.b16 %v94
  %v638 = vunpack.c.l.b16 %v95
  %v639 = vunpack.c.l.b16 %v96
  %v640 = vunpack.c.l.b16 %v97
  %v641 = vunpack.c.l.b16 %v98
  %v642 = vunpack.c.l.b16 %v99
  %v643 = vunpack.c.l.b16 %v100
  %v644 = vunpack.c.l.b16 %v101
  %v645 = vunpack.c.l.b16 %v102
  %v646 = vunpack.c.l.b16 %v103
  %v647 = vunpack.c.l.b16 %v104
  %v648 = vunpack.c.l.b16 %v105
  %v649 = vunpack.c.l.b16 %v106
  %v650 = vunpack.c.l.b16 %v107
  %v651 = vunpack.c.l.b16 %v108
  %v652 = vunpack.c.l.b16 %v109
  %v653 = vunpack.c.l.b16 %v110
  %v654 = vunpack.c.l.b16 %v111
  %v655 = vunpack.c.l.b16 %v112
  %v656 = vunpack.c.l.b16 %v113
  %v657 = vunpack.c.l.b16 %v114
  %v658 = vunpack.c.l.b16 %v115
  %v659 = vunpack.c.l.b16 %v116
  %v660 = vunpack.c.l.b16 %v117
  %v661 = vunpack.c.l.b16 %v118
  %v662 = vunpack.c.l.b16 %v119
  %v663 = vunpack.c.l.b16 %v120
  %v664 = vunpack.c.l.b16 %v121
  %v665 = vunpack.c.l.b16 %v122
  %v666 = vunpack.c.l.b16 %v123
  %v667 = vunpack.c.l.b16 %v124
  %v668 = vunpack.c.l.b16 %v125
  %v669 = vunpack.c.l.b16 %v126
  %v670 = vunpack.c.l.b16 %v127
  %v671 = vunpack.c.l.b16 %v128
  %v672 = vunpack.c.l.b16 %v129
  %v673 = vunpack.c.l.b16 %v130
  %v674 = vunpack.c.l.b16 %v131
  %v675 = vunpack.c.l.b16 %v132
  %v676 = vunpack.c.l.b16 %v133
  %v677 = vunpack.c.l.b16 %v134
  %v678 = vunpack.c.l.b16 %v135
  %v679 = vunpack.c.l.b16 %v136
  %v680 = vunpack.c.l.b16 %v137
  %v681 = vunpack.c.l.b16 %v138
  %v682 = vunpack.c.l.b16 %v139
  %v683 = vunpack.c.l.b16 %v140
  %v684 = vunpack.c.l.b16 %v141
  %v685 = vunpack.c.l.b16 %v142
  %v686 = vunpack.c.l.b16 %v143
  %v687 = vunpack.c.l.b16 %v144
  %v688 = vunpack.c.l.b16 %v145
  %v689 = vunpack.c.l.b16 %v146
  %v690 = vunpack.c.l.b16 %v147
  %v691 = vunpack.c.l.b16 %v148
  %v692 = vunpack.c.l.b16 %v149
  %v693 = vunpack.c.l.b16 %v150
  %v694 = vunpack.c.l.b16 %v151
  %v695 = vunpack.c.l.b16 %v152
  %v696 = vunpack.c.l.b16 %v153
  %v697 = vunpack.c.l.b16 %v154
  %v698 = vunpack.c.l.b16 %v155
  %v699 = vunpack.c.l.b16 %v156
  %v700 = vunpack.c.l.b16 %v157
  %v701 = vunpack.c.l.b16 %v158
  %v702 = vunpack.c.l.b16 %v159
  %v703 = vunpack.c.l.b16 %v160
  %v704 = vunpack.c.l.b16 %v161
  %v705 = vunpack.c.l.b16 %v162
  %v706 = vunpack.c.l.b16 %v163
  %v707 = vunpack.c.l.b16 %v164
  %v708 = vunpack.c.l.b16 %v165
  %v709 = vunpack.c.l.b16 %v166
  %v710 = vunpack.c.l.b16 %v167
  %v711 = vunpack.c.l.b16 %v168
  %v712 = vunpack.c.l.b16 %v169
  %v713 = vunpack.c.l.b16 %v170
  %v714 = vunpack.c.l.b16 %v171
  %v715 = vunpack.c.l.b16 %v172
  %v716 = vunpack.c.l.b16 %v173
  %v717 = vunpack.c.l.b16 %v174
  %v718 = vunpack.c.l.b16 %v175
  %v719 = vunpack.c.l.b16 %v176
  %v720 = vunpack.c.l.b16 %v177
  %v721 = vunpack.c.l.b16 %v178
  %v722 = vunpack.c.l.b16 %v179
  %v723 = vunpack.c.l.b16 %v180
  %v724 = vunpack.c.l.b16 %v181
  %v725 = vunpack.c.l.b16 %v182
  %v726 = vunpack.c.l.b16 %v183
  %v727 = vunpack.c.l.b16 %v184
  %v728 = vunpack.c.l.b16 %v185
  %v729 = vunpack.c.l.b16 %v186
  %v730 = vunpack.c.l.b16 %v187
  %v731 = vunpack.c.l.b16 %v188
  %v732 = vunpack.c.l.b16 %v189
  %v733 = vunpack.c.l.b16 %v190
  %v734 = vunpack.c.l.b16 %v191
  %v735 = vunpack.c.l.b16 %v192
  %v736 = vunpack.c.l.b16 %v193
  %v737 = vunpack.c.l.b16 %v194
  %v738 = vunpack.c.l.b16 %v195
  %v739 = vunpack.c.l.b16 %v196
  %v740 = vunpack.c.l.b16 %v197
  %v741 = vunpack.c.l.b16 %v198
  %v742 = vunpack.c.l.b16 %v199
  %v743 = vunpack.c.l.b16 %v200
  %v744 = vunpack.c.l.b16 %v201
  %v745 = vunpack.c.l.b16 %v202
  %v746 = vunpack.c.l.b16 %v203
  %v747 = vunpack.c.l.b16 %v204
  %v748 = vunpack.c.l.b16 %v205
  %v749 = vunpack.c.l.b16 %v206
  %v750 = vunpack.c.l.b16 %v207
  %v751 = vunpack.c.l.b16 %v208
  %v752 = vunpack.c.l.b16 %v209
  %v753 = vunpack.c.l.b16 %v210
  %v754 = vunpack.c.l.b16 %v211
  %v755 = vunpack.c.l.b16 %v212
  %v756 = vunpack.c.l.b16 %v213
  %v757 = vunpack.c.l.b16 %v214
  %v758 = vunpack.c.l.b16 %v215
  %v759 = vunpack.c.l.b16 %v216
  %v760 = vunpack.c.l.b16 %v217
  %v761 = vunpack.c.l.b16 %v218
  %v762 = vunpack.c.l.b16 %v219
  %v763 = vunpack.c.l.b16 %v220
  %v764 = vunpack.c.l.b16 %v221
  %v765 = vunpack.c.l.b16 %v222
  %v766 = vunpack.c.l.b16 %v223
  %v767 = vpack.c.b16 %v568, %v567
  %v768 = vpack.c.b16 %v570, %v569
  %v769 = vpack.c.b16 %v572, %v571
  %v770 = vpack.c.b16 %v574, %v573
  %v771 = vpack.c.b16 %v576, %v575
  %v772 = vpack.c.b16 %v578, %v577
  %v773 = vpack.c.b16 %v580, %v579
  %v774 = vpack.c.b16 %v582, %v581
  %v775 = vpack.c.b16 %v584, %v583
  %v776 = vpack.c.b16 %v586, %v585
  %v777 = vpack.c.b16 %v588, %v587
  %v778 = vpack.c.b16 %v590, %v589
  %v779 = vpack.c.b16 %v592, %v591
  %v780 = vpack.c.b16 %v594, %v593
  %v781 = vpack.c.b16 %v596, %v595
  %v782 = vpack.c.b16 %v598, %v597
  %v783 = vpack.c.b16 %v600, %v599
  %v784 = vpack.c.b16 %v602, %v601
  %v785 = vpack.c.b16 %v604, %v603
  %v786 = vpack.c.b16 %v606, %v605
  %v787 = vpack.c.b16 %v608, %v607
  %v788 = vpack.c.b16 %v610, %v609
  %v789 = vpack.c.b16 %v612, %v611
  %v790 = vpack.c.b16 %v614, %v613
  %v791 = vpack.c.b16 %v616, %v615
  %v792 = vpack.c.b16 %v618, %v617
  %v793 = vpack.c.b16 %v620, %v619
  %v794 = vpack.c.b16 %v622, %v621
  %v795 = vpack.c.b16 %v624, %v623
  %v796 = vpack.c.b16 %v626, %v625
  %v797 = vpack.c.b16 %v628, %v627
  %v798 = vpack.c.b16 %v630, %v629
  %v799 = vpack.c.b16 %v632, %v631
  %v800 = vpack.c.b16 %v634, %v633
  %v801 = vpack.c.b16 %v636, %v635
  %v802 = vpack.c.b16 %v638, %v637
  %v803 = vpack.c.b16 %v640, %v639
  %v804 = vpack.c.b16 %v642, %v641
  %v805 = vpack.c.b16 %v644, %v643
  %v806 = vpack.c.b16 %v646, %v645
  %v807 = vpack.c.b16 %v648, %v647
  %v808 = vpack.c.b16 %v650, %v649
  %v809 = vpack.c.b16 %v652, %v651
  %v810 = vpack.c.b16 %v654, %v653
  %v811 = vpack.c.b16 %v656, %v655
  %v812 = vpack.c.b16 %v658, %v657
  %v813 = vpack.c.b16 %v660, %v659
  %v814 = vpack.c.b16 %v662, %v661
  %v815 = vpack.c.b16 %v664, %v663
  %v816 = vpack.c.b16 %v666, %v665
  %v817 = vpack.c.b16 %v668, %v667
  %v818 = vpack.c.b16 %v670, %v669
  %v819 = vpack.c.b16 %v672, %v671
  %v820 = vpack.c.b16 %v674, %v673
  %v821 = vpack.c.b16 %v676, %v675
  %v822 = vpack.c.b16 %v678, %v677
  %v823 = vpack.c.b16 %v680, %v679
  %v824 = vpack.c.b16 %v682, %v681
  %v825 = vpack.c.b16 %v684, %v683
  %v826 = vpack.c.b16 %v686, %v685
  %v827 = vpack.c.b16 %v688, %v687
  %v828 = vpack.c.b16 %v690, %v689
  %v829 = vpack.c.b16 %v692, %v691
  %v830 = vpack.c.b16 %v694, %v693
  %v831 = vpack.c.b16 %v696, %v695
  %v832 = vpack.c.b16 %v698, %v697
  %v833 = vpack.c.b16 %v700, %v699
  %v834 = vpack.c.b16 %v702, %v701
  %v835 = vpack.c.b16 %v704, %v703
  %v836 = vpack.c.b16 %v706, %v705
  %v837 = vpack.c.b16 %v708, %v707
  %v838 = vpack.c.b16 %v710, %v709
  %v839 = vpack.c.b16 %v712, %v711
  %v840 = vpack.c.b16 %v714, %v713
  %v841 = vpack.c.b16 %v716, %v715
  %v842 = vpack.c.b16 %v718, %v717
  %v843 = vpack.c.b16 %v720, %v719
  %v844 = vpack.c.b16 %v722, %v721
  %v845 = vpack.c.b16 %v724, %v723
  %v846 = vpack.c.b16 %v726, %v725
  %v847 = vpack.c.b16 %v728, %v727
  %v848 = vpack.c.b16 %v730, %v729
  %v849 = vpack.c.b16 %v732, %v731
  %v850 = vpack.c.b16 %v734, %v733
  %v851 = vpack.c.b16 %v736, %v735
  %v852 = vpack.c.b16 %v738, %v737
  %v853 = vpack.c.b16 %v740, %v739
  %v854 = vpack.c.b16 %v742, %v741
  %v855 = vpack.c.b16 %v744, %v743
  %v856 = vpack.c.b16 %v746, %v745
  %v857 = vpack.c.b16 %v748, %v747
  %v858 = vpack.c.b16 %v750, %v749
  %v859 = vpack.c.b16 %v752, %v751
  %v860 = vpack.c.b16 %v754, %v753
  %v861 = vpack.c.b16 %v756, %v755
  %v862 = vpack.c.b16 %v758, %v757
  %v863 = vpack.c.b16 %v760, %v759
  %v864 = vpack.c.b16 %v762, %v761
  %v865 = vpack.c.b16 %v764, %v763
  %v866 = vpack.c.b16 %v766, %v765
  %vm967 = vcmask 523264
  %v969 = vsel %vm967, %v327, 0
  %v972 = vsel %vm967, %v340, 0
  %v975 = vsel %vm967, %v353, 0
  %v978 = vsel %vm967, %v366, 0
  %980 = vmatprep.subr.bf16.mxu0 0
  %981 = vmatpush1.bf16.msra.mxu0 %v774
  %982 = vmatprep.subr.bf16.mxu0 0
  %983 = vmatpush1.bf16.msra.mxu0 %v773
  %984 = vmatprep.subr.bf16.mxu0 0
  %985 = vmatpush1.bf16.msra.mxu0 %v772
  %986 = vmatprep.subr.bf16.mxu0 0
  %987 = vmatpush1.bf16.msra.mxu0 %v771
  %988 = vmatprep.subr.bf16.mxu0 0
  %989 = vmatpush1.bf16.msra.mxu0 %v770
  %990 = vmatprep.subr.bf16.mxu0 0
  %991 = vmatpush1.bf16.msra.mxu0 %v769
  %992 = vmatprep.subr.bf16.mxu0 0
  %993 = vmatpush1.bf16.msra.mxu0 %v768
  %994 = vmatprep.subr.bf16.mxu0 0
  %995 = vmatpush1.bf16.msra.mxu0 %v767
  %996 = vmatprep.subr.bf16.mxu0 0
  %997 = vmatpush2.bf16.msra.mxu0 %v782
  %998 = vmatprep.subr.bf16.mxu0 0
  %999 = vmatpush2.bf16.msra.mxu0 %v781
  %1000 = vmatprep.subr.bf16.mxu0 0
  %1001 = vmatpush2.bf16.msra.mxu0 %v780
  %1002 = vmatprep.subr.bf16.mxu0 0
  %1003 = vmatpush2.bf16.msra.mxu0 %v779
  %1004 = vmatprep.subr.bf16.mxu0 0
  %1005 = vmatpush2.bf16.msra.mxu0 %v778
  %1006 = vmatprep.subr.bf16.mxu0 0
  %1007 = vmatpush2.bf16.msra.mxu0 %v777
  %1008 = vmatprep.subr.bf16.mxu0 0
  %1009 = vmatpush2.bf16.msra.mxu0 %v776
  %1010 = vmatprep.subr.bf16.mxu0 0
  %1011 = vmatpush2.bf16.msra.mxu0 %v775
  %1012 = vmatprep.mubr.bf16.mxu0 %v316
  %1013 = vmatmul.mubr.bf16.gmra.mxu0 %v315
  %v1014 = vpop.f32.mrf.mxu0
  %v1015 = vadd.f32 0.0, %v1014
  %v1016 = vpop.f32.mrf.mxu0
  %v1017 = vpop.f32.mrf.mxu0
  %v1018 = vadd.f32 0.0, %v1017
  %v1019 = vpop.f32.mrf.mxu0
  %1020 = vmatprep.mubr.bf16.mxu0 %v329
  %1021 = vmatmul.mubr.bf16.gmra.mxu0 %v328
  %v1022 = vpop.f32.mrf.mxu0
  %v1023 = vadd.f32 0.0, %v1022
  %v1024 = vpop.f32.mrf.mxu0
  %v1025 = vpop.f32.mrf.mxu0
  %v1026 = vadd.f32 0.0, %v1025
  %v1027 = vpop.f32.mrf.mxu0
  %1028 = vmatprep.mubr.bf16.mxu0 %v342
  %1029 = vmatmul.mubr.bf16.gmra.mxu0 %v341
  %v1030 = vpop.f32.mrf.mxu0
  %v1031 = vadd.f32 0.0, %v1030
  %v1032 = vpop.f32.mrf.mxu0
  %v1033 = vpop.f32.mrf.mxu0
  %v1034 = vadd.f32 0.0, %v1033
  %v1035 = vpop.f32.mrf.mxu0
  %1036 = vmatprep.mubr.bf16.mxu0 %v355
  %1037 = vmatmul.mubr.bf16.gmra.mxu0 %v354
  %v1038 = vpop.f32.mrf.mxu0
  %v1039 = vadd.f32 0.0, %v1038
  %v1040 = vpop.f32.mrf.mxu0
  %v1041 = vpop.f32.mrf.mxu0
  %v1042 = vpop.f32.mrf.mxu0
  %1043 = vdwg.mxu0
  %1044 = vmatprep.subr.bf16.mxu0 0
  %1045 = vmatpush1.bf16.msra.mxu0 %v790
  %1046 = vmatprep.subr.bf16.mxu0 0
  %1047 = vmatpush1.bf16.msra.mxu0 %v789
  %1048 = vmatprep.subr.bf16.mxu0 0
  %1049 = vmatpush1.bf16.msra.mxu0 %v788
  %1050 = vmatprep.subr.bf16.mxu0 0
  %1051 = vmatpush1.bf16.msra.mxu0 %v787
  %1052 = vmatprep.subr.bf16.mxu0 0
  %1053 = vmatpush1.bf16.msra.mxu0 %v786
  %1054 = vmatprep.subr.bf16.mxu0 0
  %1055 = vmatpush1.bf16.msra.mxu0 %v785
  %1056 = vmatprep.subr.bf16.mxu0 0
  %1057 = vmatpush1.bf16.msra.mxu0 %v784
  %1058 = vmatprep.subr.bf16.mxu0 0
  %1059 = vmatpush1.bf16.msra.mxu0 %v783
  %1060 = vmatprep.subr.bf16.mxu0 0
  %1061 = vmatpush2.bf16.msra.mxu0 %v798
  %1062 = vmatprep.subr.bf16.mxu0 0
  %1063 = vmatpush2.bf16.msra.mxu0 %v797
  %1064 = vmatprep.subr.bf16.mxu0 0
  %1065 = vmatpush2.bf16.msra.mxu0 %v796
  %1066 = vmatprep.subr.bf16.mxu0 0
  %1067 = vmatpush2.bf16.msra.mxu0 %v795
  %1068 = vmatprep.subr.bf16.mxu0 0
  %1069 = vmatpush2.bf16.msra.mxu0 %v794
  %1070 = vmatprep.subr.bf16.mxu0 0
  %1071 = vmatpush2.bf16.msra.mxu0 %v793
  %1072 = vmatprep.subr.bf16.mxu0 0
  %1073 = vmatpush2.bf16.msra.mxu0 %v792
  %1074 = vmatprep.subr.bf16.mxu0 0
  %1075 = vmatpush2.bf16.msra.mxu0 %v791
  %1076 = vmatprep.mubr.bf16.mxu0 %v318
  %1077 = vmatmul.mubr.bf16.gmra.mxu0 %v317
  %v1078 = vpop.f32.mrf.mxu0
  %v1079 = vadd.f32 %v1015, %v1078
  %v1080 = vpop.f32.mrf.mxu0
  %v1081 = vpop.f32.mrf.mxu0
  %v1082 = vadd.f32 %v1018, %v1081
  %v1083 = vpop.f32.mrf.mxu0
  %1084 = vmatprep.mubr.bf16.mxu0 %v331
  %1085 = vmatmul.mubr.bf16.gmra.mxu0 %v330
  %v1086 = vpop.f32.mrf.mxu0
  %v1087 = vadd.f32 %v1023, %v1086
  %v1088 = vpop.f32.mrf.mxu0
  %v1089 = vpop.f32.mrf.mxu0
  %v1090 = vadd.f32 %v1026, %v1089
  %v1091 = vpop.f32.mrf.mxu0
  %1092 = vmatprep.mubr.bf16.mxu0 %v344
  %1093 = vmatmul.mubr.bf16.gmra.mxu0 %v343
  %v1094 = vpop.f32.mrf.mxu0
  %v1095 = vadd.f32 %v1031, %v1094
  %v1096 = vpop.f32.mrf.mxu0
  %v1097 = vpop.f32.mrf.mxu0
  %v1098 = vadd.f32 %v1034, %v1097
  %v1099 = vpop.f32.mrf.mxu0
  %1100 = vmatprep.mubr.bf16.mxu0 %v357
  %1101 = vmatmul.mubr.bf16.gmra.mxu0 %v356
  %v1102 = vpop.f32.mrf.mxu0
  %v1103 = vadd.f32 %v1039, %v1102
  %v1104 = vpop.f32.mrf.mxu0
  %v1105 = vpop.f32.mrf.mxu0
  %v1106 = vpop.f32.mrf.mxu0
  %1107 = vdwg.mxu0
  %1108 = vmatprep.subr.bf16.mxu0 0
  %1109 = vmatpush1.bf16.msra.mxu0 %v806
  %1110 = vmatprep.subr.bf16.mxu0 0
  %1111 = vmatpush1.bf16.msra.mxu0 %v805
  %1112 = vmatprep.subr.bf16.mxu0 0
  %1113 = vmatpush1.bf16.msra.mxu0 %v804
  %1114 = vmatprep.subr.bf16.mxu0 0
  %1115 = vmatpush1.bf16.msra.mxu0 %v803
  %1116 = vmatprep.subr.bf16.mxu0 0
  %1117 = vmatpush1.bf16.msra.mxu0 %v802
  %1118 = vmatprep.subr.bf16.mxu0 0
  %1119 = vmatpush1.bf16.msra.mxu0 %v801
  %1120 = vmatprep.subr.bf16.mxu0 0
  %1121 = vmatpush1.bf16.msra.mxu0 %v800
  %1122 = vmatprep.subr.bf16.mxu0 0
  %1123 = vmatpush1.bf16.msra.mxu0 %v799
  %1124 = vmatprep.subr.bf16.mxu0 0
  %1125 = vmatpush2.bf16.msra.mxu0 %v814
  %1126 = vmatprep.subr.bf16.mxu0 0
  %1127 = vmatpush2.bf16.msra.mxu0 %v813
  %1128 = vmatprep.subr.bf16.mxu0 0
  %1129 = vmatpush2.bf16.msra.mxu0 %v812
  %1130 = vmatprep.subr.bf16.mxu0 0
  %1131 = vmatpush2.bf16.msra.mxu0 %v811
  %1132 = vmatprep.subr.bf16.mxu0 0
  %1133 = vmatpush2.bf16.msra.mxu0 %v810
  %1134 = vmatprep.subr.bf16.mxu0 0
  %1135 = vmatpush2.bf16.msra.mxu0 %v809
  %1136 = vmatprep.subr.bf16.mxu0 0
  %1137 = vmatpush2.bf16.msra.mxu0 %v808
  %1138 = vmatprep.subr.bf16.mxu0 0
  %1139 = vmatpush2.bf16.msra.mxu0 %v807
  %1140 = vmatprep.mubr.bf16.mxu0 %v320
  %1141 = vmatmul.mubr.bf16.gmra.mxu0 %v319
  %v1142 = vpop.f32.mrf.mxu0
  %v1143 = vadd.f32 %v1079, %v1142
  %v1144 = vpop.f32.mrf.mxu0
  %v1145 = vpop.f32.mrf.mxu0
  %v1146 = vadd.f32 %v1082, %v1145
  %v1147 = vpop.f32.mrf.mxu0
  %1148 = vmatprep.mubr.bf16.mxu0 %v333
  %1149 = vmatmul.mubr.bf16.gmra.mxu0 %v332
  %v1150 = vpop.f32.mrf.mxu0
  %v1151 = vadd.f32 %v1087, %v1150
  %v1152 = vpop.f32.mrf.mxu0
  %v1153 = vpop.f32.mrf.mxu0
  %v1154 = vadd.f32 %v1090, %v1153
  %v1155 = vpop.f32.mrf.mxu0
  %1156 = vmatprep.mubr.bf16.mxu0 %v346
  %1157 = vmatmul.mubr.bf16.gmra.mxu0 %v345
  %v1158 = vpop.f32.mrf.mxu0
  %v1159 = vadd.f32 %v1095, %v1158
  %v1160 = vpop.f32.mrf.mxu0
  %v1161 = vpop.f32.mrf.mxu0
  %v1162 = vadd.f32 %v1098, %v1161
  %v1163 = vpop.f32.mrf.mxu0
  %1164 = vmatprep.mubr.bf16.mxu0 %v359
  %1165 = vmatmul.mubr.bf16.gmra.mxu0 %v358
  %v1166 = vpop.f32.mrf.mxu0
  %v1167 = vadd.f32 %v1103, %v1166
  %v1168 = vpop.f32.mrf.mxu0
  %v1169 = vpop.f32.mrf.mxu0
  %v1170 = vpop.f32.mrf.mxu0
  %1171 = vdwg.mxu0
  %1172 = vmatprep.subr.bf16.mxu0 0
  %1173 = vmatpush1.bf16.msra.mxu0 %v822
  %1174 = vmatprep.subr.bf16.mxu0 0
  %1175 = vmatpush1.bf16.msra.mxu0 %v821
  %1176 = vmatprep.subr.bf16.mxu0 0
  %1177 = vmatpush1.bf16.msra.mxu0 %v820
  %1178 = vmatprep.subr.bf16.mxu0 0
  %1179 = vmatpush1.bf16.msra.mxu0 %v819
  %1180 = vmatprep.subr.bf16.mxu0 0
  %1181 = vmatpush1.bf16.msra.mxu0 %v818
  %1182 = vmatprep.subr.bf16.mxu0 0
  %1183 = vmatpush1.bf16.msra.mxu0 %v817
  %1184 = vmatprep.subr.bf16.mxu0 0
  %1185 = vmatpush1.bf16.msra.mxu0 %v816
  %1186 = vmatprep.subr.bf16.mxu0 0
  %1187 = vmatpush1.bf16.msra.mxu0 %v815
  %1188 = vmatprep.subr.bf16.mxu0 0
  %1189 = vmatpush2.bf16.msra.mxu0 %v830
  %1190 = vmatprep.subr.bf16.mxu0 0
  %1191 = vmatpush2.bf16.msra.mxu0 %v829
  %1192 = vmatprep.subr.bf16.mxu0 0
  %1193 = vmatpush2.bf16.msra.mxu0 %v828
  %1194 = vmatprep.subr.bf16.mxu0 0
  %1195 = vmatpush2.bf16.msra.mxu0 %v827
  %1196 = vmatprep.subr.bf16.mxu0 0
  %1197 = vmatpush2.bf16.msra.mxu0 %v826
  %1198 = vmatprep.subr.bf16.mxu0 0
  %1199 = vmatpush2.bf16.msra.mxu0 %v825
  %1200 = vmatprep.subr.bf16.mxu0 0
  %1201 = vmatpush2.bf16.msra.mxu0 %v824
  %1202 = vmatprep.subr.bf16.mxu0 0
  %1203 = vmatpush2.bf16.msra.mxu0 %v823
  %1204 = vmatprep.mubr.bf16.mxu0 %v322
  %1205 = vmatmul.mubr.bf16.gmra.mxu0 %v321
  %v1206 = vpop.f32.mrf.mxu0
  %v1207 = vadd.f32 %v1143, %v1206
  %v1208 = vpop.f32.mrf.mxu0
  %v1209 = vpop.f32.mrf.mxu0
  %v1210 = vadd.f32 %v1146, %v1209
  %v1211 = vpop.f32.mrf.mxu0
  %1212 = vmatprep.mubr.bf16.mxu0 %v335
  %1213 = vmatmul.mubr.bf16.gmra.mxu0 %v334
  %v1214 = vpop.f32.mrf.mxu0
  %v1215 = vadd.f32 %v1151, %v1214
  %v1216 = vpop.f32.mrf.mxu0
  %v1217 = vpop.f32.mrf.mxu0
  %v1218 = vadd.f32 %v1154, %v1217
  %v1219 = vpop.f32.mrf.mxu0
  %1220 = vmatprep.mubr.bf16.mxu0 %v348
  %1221 = vmatmul.mubr.bf16.gmra.mxu0 %v347
  %v1222 = vpop.f32.mrf.mxu0
  %v1223 = vadd.f32 %v1159, %v1222
  %v1224 = vpop.f32.mrf.mxu0
  %v1225 = vpop.f32.mrf.mxu0
  %v1226 = vadd.f32 %v1162, %v1225
  %v1227 = vpop.f32.mrf.mxu0
  %1228 = vmatprep.mubr.bf16.mxu0 %v361
  %1229 = vmatmul.mubr.bf16.gmra.mxu0 %v360
  %v1230 = vpop.f32.mrf.mxu0
  %v1231 = vadd.f32 %v1167, %v1230
  %v1232 = vpop.f32.mrf.mxu0
  %v1233 = vpop.f32.mrf.mxu0
  %v1234 = vpop.f32.mrf.mxu0
  %1235 = vdwg.mxu0
  %1236 = vmatprep.subr.bf16.mxu0 0
  %1237 = vmatpush1.bf16.msra.mxu0 %v838
  %1238 = vmatprep.subr.bf16.mxu0 0
  %1239 = vmatpush1.bf16.msra.mxu0 %v837
  %1240 = vmatprep.subr.bf16.mxu0 0
  %1241 = vmatpush1.bf16.msra.mxu0 %v836
  %1242 = vmatprep.subr.bf16.mxu0 0
  %1243 = vmatpush1.bf16.msra.mxu0 %v835
  %1244 = vmatprep.subr.bf16.mxu0 0
  %1245 = vmatpush1.bf16.msra.mxu0 %v834
  %1246 = vmatprep.subr.bf16.mxu0 0
  %1247 = vmatpush1.bf16.msra.mxu0 %v833
  %1248 = vmatprep.subr.bf16.mxu0 0
  %1249 = vmatpush1.bf16.msra.mxu0 %v832
  %1250 = vmatprep.subr.bf16.mxu0 0
  %1251 = vmatpush1.bf16.msra.mxu0 %v831
  %1252 = vmatprep.subr.bf16.mxu0 0
  %1253 = vmatpush2.bf16.msra.mxu0 %v846
  %1254 = vmatprep.subr.bf16.mxu0 0
  %1255 = vmatpush2.bf16.msra.mxu0 %v845
  %1256 = vmatprep.subr.bf16.mxu0 0
  %1257 = vmatpush2.bf16.msra.mxu0 %v844
  %1258 = vmatprep.subr.bf16.mxu0 0
  %1259 = vmatpush2.bf16.msra.mxu0 %v843
  %1260 = vmatprep.subr.bf16.mxu0 0
  %1261 = vmatpush2.bf16.msra.mxu0 %v842
  %1262 = vmatprep.subr.bf16.mxu0 0
  %1263 = vmatpush2.bf16.msra.mxu0 %v841
  %1264 = vmatprep.subr.bf16.mxu0 0
  %1265 = vmatpush2.bf16.msra.mxu0 %v840
  %1266 = vmatprep.subr.bf16.mxu0 0
  %1267 = vmatpush2.bf16.msra.mxu0 %v839
  %1268 = vmatprep.mubr.bf16.mxu0 %v324
  %1269 = vmatmul.mubr.bf16.gmra.mxu0 %v323
  %v1270 = vpop.f32.mrf.mxu0
  %v1271 = vadd.f32 %v1207, %v1270
  %v1272 = vpop.f32.mrf.mxu0
  %v1273 = vpop.f32.mrf.mxu0
  %v1274 = vadd.f32 %v1210, %v1273
  %v1275 = vpop.f32.mrf.mxu0
  %1276 = vmatprep.mubr.bf16.mxu0 %v337
  %1277 = vmatmul.mubr.bf16.gmra.mxu0 %v336
  %v1278 = vpop.f32.mrf.mxu0
  %v1279 = vadd.f32 %v1215, %v1278
  %v1280 = vpop.f32.mrf.mxu0
  %v1281 = vpop.f32.mrf.mxu0
  %v1282 = vadd.f32 %v1218, %v1281
  %v1283 = vpop.f32.mrf.mxu0
  %1284 = vmatprep.mubr.bf16.mxu0 %v350
  %1285 = vmatmul.mubr.bf16.gmra.mxu0 %v349
  %v1286 = vpop.f32.mrf.mxu0
  %v1287 = vadd.f32 %v1223, %v1286
  %v1288 = vpop.f32.mrf.mxu0
  %v1289 = vpop.f32.mrf.mxu0
  %v1290 = vadd.f32 %v1226, %v1289
  %v1291 = vpop.f32.mrf.mxu0
  %1292 = vmatprep.mubr.bf16.mxu0 %v363
  %1293 = vmatmul.mubr.bf16.gmra.mxu0 %v362
  %v1294 = vpop.f32.mrf.mxu0
  %v1295 = vadd.f32 %v1231, %v1294
  %v1296 = vpop.f32.mrf.mxu0
  %v1297 = vpop.f32.mrf.mxu0
  %v1298 = vpop.f32.mrf.mxu0
  %1299 = vdwg.mxu0
  %1300 = vmatprep.subr.bf16.mxu0 0
  %1301 = vmatpush1.bf16.msra.mxu0 %v854
  %1302 = vmatprep.subr.bf16.mxu0 0
  %1303 = vmatpush1.bf16.msra.mxu0 %v853
  %1304 = vmatprep.subr.bf16.mxu0 0
  %1305 = vmatpush1.bf16.msra.mxu0 %v852
  %1306 = vmatprep.subr.bf16.mxu0 0
  %1307 = vmatpush1.bf16.msra.mxu0 %v851
  %1308 = vmatprep.subr.bf16.mxu0 0
  %1309 = vmatpush1.bf16.msra.mxu0 %v850
  %1310 = vmatprep.subr.bf16.mxu0 0
  %1311 = vmatpush1.bf16.msra.mxu0 %v849
  %1312 = vmatprep.subr.bf16.mxu0 0
  %1313 = vmatpush1.bf16.msra.mxu0 %v848
  %1314 = vmatprep.subr.bf16.mxu0 0
  %1315 = vmatpush1.bf16.msra.mxu0 %v847
  %1316 = vmatprep.subr.bf16.mxu0 0
  %1317 = vmatpush2.bf16.msra.mxu0 %v862
  %1318 = vmatprep.subr.bf16.mxu0 0
  %1319 = vmatpush2.bf16.msra.mxu0 %v861
  %1320 = vmatprep.subr.bf16.mxu0 0
  %1321 = vmatpush2.bf16.msra.mxu0 %v860
  %1322 = vmatprep.subr.bf16.mxu0 0
  %1323 = vmatpush2.bf16.msra.mxu0 %v859
  %1324 = vmatprep.subr.bf16.mxu0 0
  %1325 = vmatpush2.bf16.msra.mxu0 %v858
  %1326 = vmatprep.subr.bf16.mxu0 0
  %1327 = vmatpush2.bf16.msra.mxu0 %v857
  %1328 = vmatprep.subr.bf16.mxu0 0
  %1329 = vmatpush2.bf16.msra.mxu0 %v856
  %1330 = vmatprep.subr.bf16.mxu0 0
  %1331 = vmatpush2.bf16.msra.mxu0 %v855
  %1332 = vmatprep.mubr.bf16.mxu0 %v326
  %1333 = vmatmul.mubr.bf16.gmra.mxu0 %v325
  %v1334 = vpop.f32.mrf.mxu0
  %v1335 = vadd.f32 %v1271, %v1334
  %v1336 = vpop.f32.mrf.mxu0
  %v1337 = vpop.f32.mrf.mxu0
  %v1338 = vadd.f32 %v1274, %v1337
  %v1339 = vpop.f32.mrf.mxu0
  %1340 = vmatprep.mubr.bf16.mxu0 %v339
  %1341 = vmatmul.mubr.bf16.gmra.mxu0 %v338
  %v1342 = vpop.f32.mrf.mxu0
  %v1343 = vadd.f32 %v1279, %v1342
  %v1344 = vpop.f32.mrf.mxu0
  %v1345 = vpop.f32.mrf.mxu0
  %v1346 = vadd.f32 %v1282, %v1345
  %v1347 = vpop.f32.mrf.mxu0
  %1348 = vmatprep.mubr.bf16.mxu0 %v352
  %1349 = vmatmul.mubr.bf16.gmra.mxu0 %v351
  %v1350 = vpop.f32.mrf.mxu0
  %v1351 = vadd.f32 %v1287, %v1350
  %v1352 = vpop.f32.mrf.mxu0
  %v1353 = vpop.f32.mrf.mxu0
  %v1354 = vadd.f32 %v1290, %v1353
  %v1355 = vpop.f32.mrf.mxu0
  %1356 = vmatprep.mubr.bf16.mxu0 %v365
  %1357 = vmatmul.mubr.bf16.gmra.mxu0 %v364
  %v1358 = vpop.f32.mrf.mxu0
  %v1359 = vadd.f32 %v1295, %v1358
  %v1360 = vpop.f32.mrf.mxu0
  %v1361 = vpop.f32.mrf.mxu0
  %v1362 = vpop.f32.mrf.mxu0
  %1363 = vdwg.mxu0
  %1364 = vmatprep.subr.bf16.mxu0 0
  %1365 = vmatpush1.bf16.msra.mxu0 0
  %1366 = vmatprep.subr.bf16.mxu0 0
  %1367 = vmatpush1.bf16.msra.mxu0 0
  %1368 = vmatprep.subr.bf16.mxu0 0
  %1369 = vmatpush1.bf16.msra.mxu0 0
  %1370 = vmatprep.subr.bf16.mxu0 0
  %1371 = vmatpush1.bf16.msra.mxu0 0
  %1372 = vmatprep.subr.bf16.mxu0 0
  %1373 = vmatpush1.bf16.msra.mxu0 %v866
  %1374 = vmatprep.subr.bf16.mxu0 0
  %1375 = vmatpush1.bf16.msra.mxu0 %v865
  %1376 = vmatprep.subr.bf16.mxu0 0
  %1377 = vmatpush1.bf16.msra.mxu0 %v864
  %1378 = vmatprep.subr.bf16.mxu0 0
  %1379 = vmatpush1.bf16.msra.mxu0 %v863
  %1380 = vmatprep.subr.bf16.mxu0 0
  %1381 = vmatpush2.bf16.msra.mxu0 0
  %1382 = vmatprep.subr.bf16.mxu0 0
  %1383 = vmatpush2.bf16.msra.mxu0 0
  %1384 = vmatprep.subr.bf16.mxu0 0
  %1385 = vmatpush2.bf16.msra.mxu0 0
  %1386 = vmatprep.subr.bf16.mxu0 0
  %1387 = vmatpush2.bf16.msra.mxu0 0
  %1388 = vmatprep.subr.bf16.mxu0 0
  %1389 = vmatpush2.bf16.msra.mxu0 0
  %1390 = vmatprep.subr.bf16.mxu0 0
  %1391 = vmatpush2.bf16.msra.mxu0 0
  %1392 = vmatprep.subr.bf16.mxu0 0
  %1393 = vmatpush2.bf16.msra.mxu0 0
  %1394 = vmatprep.subr.bf16.mxu0 0
  %1395 = vmatpush2.bf16.msra.mxu0 0
  %1396 = vmatprep.mubr.bf16.mxu0 0
  %1397 = vmatmul.mubr.bf16.gmra.mxu0 %v969
  %v1398 = vpop.f32.mrf.mxu0
  %v1399 = vadd.f32 %v1335, %v1398
  %v1400 = vpop.f32.mrf.mxu0
  %v1401 = vpop.f32.mrf.mxu0
  %v1402 = vadd.f32 %v1338, %v1401
  %v1403 = vpop.f32.mrf.mxu0
  %1404 = vmatprep.mubr.bf16.mxu0 0
  %1405 = vmatmul.mubr.bf16.gmra.mxu0 %v972
  %v1406 = vpop.f32.mrf.mxu0
  %v1407 = vadd.f32 %v1343, %v1406
  %v1408 = vpop.f32.mrf.mxu0
  %v1409 = vpop.f32.mrf.mxu0
  %v1410 = vadd.f32 %v1346, %v1409
  %v1411 = vpop.f32.mrf.mxu0
  %1412 = vmatprep.mubr.bf16.mxu0 0
  %1413 = vmatmul.mubr.bf16.gmra.mxu0 %v975
  %v1414 = vpop.f32.mrf.mxu0
  %v1415 = vadd.f32 %v1351, %v1414
  %v1416 = vpop.f32.mrf.mxu0
  %v1417 = vpop.f32.mrf.mxu0
  %v1418 = vadd.f32 %v1354, %v1417
  %v1419 = vpop.f32.mrf.mxu0
  %1420 = vmatprep.mubr.bf16.mxu0 0
  %1421 = vmatmul.mubr.bf16.gmra.mxu0 %v978
  %v1422 = vpop.f32.mrf.mxu0
  %v1423 = vadd.f32 %v1359, %v1422
  %v1424 = vpop.f32.mrf.mxu0
  %v1425 = vpop.f32.mrf.mxu0
  %v1426 = vpop.f32.mrf.mxu0
  %1427 = vdwg.mxu0
  %v1428 = vld [vmem:[%s1] sm:$0xff]
  %v1429 = vld [vmem:[%s1 + $0x8] sm:$0xff]
  %v1430 = vld [vmem:[%s1 + $0x10] sm:$0xff]
  %v1431 = vld [vmem:[%s1 + $0x18] sm:$0xff]
  %v1432 = vld [vmem:[%s1 + $0x20] sm:$0xff]
  %v1433 = vld [vmem:[%s1 + $0x28] sm:$0xff]
  %v1434 = vld [vmem:[%s1 + $0x30] sm:$0xff]
  %v1435 = vld [vmem:[%s1 + $0x38] sm:$0xff]
  %v1436 = vld [vmem:[%s1 + $0x40] sm:$0xff]
  %v1437 = vld [vmem:[%s1 + $0x48] sm:$0xff]
  %v1438 = vld [vmem:[%s1 + $0x50] sm:$0xff]
  %v1439 = vld [vmem:[%s1 + $0x58] sm:$0xff]
  %v1440 = vld [vmem:[%s1 + $0x60] sm:$0xff]
  %v1441 = vld [vmem:[%s1 + $0x68] sm:$0xff]
  %v1442 = vld [vmem:[%s1 + $0x70] sm:$0xff]
  %v1443 = vld [vmem:[%s1 + $0x78] sm:$0xff]
  %v1444 = vld [vmem:[%s1 + $0x80] sm:$0xff]
  %v1445 = vld [vmem:[%s1 + $0x88] sm:$0xff]
  %v1446 = vld [vmem:[%s1 + $0x90] sm:$0xff]
  %v1447 = vld [vmem:[%s1 + $0x98] sm:$0xff]
  %v1448 = vld [vmem:[%s1 + $0xa0] sm:$0xff]
  %v1449 = vld [vmem:[%s1 + $0xa8] sm:$0xff]
  %v1450 = vld [vmem:[%s1 + $0xb0] sm:$0xff]
  %v1451 = vld [vmem:[%s1 + $0xb8] sm:$0xff]
  %v1452 = vld [vmem:[%s1 + $0xc0] sm:$0xff]
  %v1453 = vld [vmem:[%s1 + $0xc8] sm:$0xff]
  %v1454 = vld [vmem:[%s1 + $0xd0] sm:$0xff]
  %v1455 = vld [vmem:[%s1 + $0xd8] sm:$0xff]
  %v1456 = vld [vmem:[%s1 + $0xe0] sm:$0xff]
  %v1457 = vld [vmem:[%s1 + $0xe8] sm:$0xff]
  %v1458 = vld [vmem:[%s1 + $0xf0] sm:$0xff]
  %v1459 = vld [vmem:[%s1 + $0xf8] sm:$0xff]
  %v1460 = vld [vmem:[%s1 + $0x100] sm:$0xff]
  %v1461 = vld [vmem:[%s1 + $0x108] sm:$0xff]
  %v1462 = vld [vmem:[%s1 + $0x110] sm:$0xff]
  %v1463 = vld [vmem:[%s1 + $0x118] sm:$0xff]
  %v1464 = vld [vmem:[%s1 + $0x120] sm:$0xff]
  %v1465 = vld [vmem:[%s1 + $0x128] sm:$0xff]
  %v1466 = vld [vmem:[%s1 + $0x130] sm:$0xff]
  %v1467 = vld [vmem:[%s1 + $0x138] sm:$0xff]
  %v1468 = vld [vmem:[%s1 + $0x140] sm:$0xff]
  %v1469 = vld [vmem:[%s1 + $0x148] sm:$0xff]
  %v1470 = vld [vmem:[%s1 + $0x150] sm:$0xff]
  %v1471 = vld [vmem:[%s1 + $0x158] sm:$0xff]
  %v1472 = vld [vmem:[%s1 + $0x160] sm:$0xff]
  %v1473 = vld [vmem:[%s1 + $0x168] sm:$0xff]
  %v1474 = vld [vmem:[%s1 + $0x170] sm:$0xff]
  %v1475 = vld [vmem:[%s1 + $0x178] sm:$0xff]
  %v1476 = vld [vmem:[%s1 + $0x180] sm:$0xff]
  %v1477 = vld [vmem:[%s1 + $0x188] sm:$0xff]
  %v1478 = vld [vmem:[%s1 + $0x190] sm:$0xff]
  %v1479 = vld [vmem:[%s1 + $0x198] sm:$0xff]
  %v1480 = vld [vmem:[%s1 + $0x1a0] sm:$0xff]
  %v1481 = vld [vmem:[%s1 + $0x1a8] sm:$0xff]
  %v1482 = vld [vmem:[%s1 + $0x1b0] sm:$0xff]
  %v1483 = vld [vmem:[%s1 + $0x1b8] sm:$0xff]
  %v1484 = vld [vmem:[%s1 + $0x1c0] sm:$0xff]
  %v1485 = vld [vmem:[%s1 + $0x1c8] sm:$0xff]
  %v1486 = vld [vmem:[%s1 + $0x1d0] sm:$0xff]
  %v1487 = vld [vmem:[%s1 + $0x1d8] sm:$0xff]
  %v1488 = vld [vmem:[%s1 + $0x1e0] sm:$0xff]
  %v1489 = vld [vmem:[%s1 + $0x1e8] sm:$0xff]
  %v1490 = vld [vmem:[%s1 + $0x1f0] sm:$0xff]
  %v1491 = vld [vmem:[%s1 + $0x1f8] sm:$0xff]
  %v1492 = vld [vmem:[%s1 + $0x200] sm:$0xff]
  %v1493 = vld [vmem:[%s1 + $0x208] sm:$0xff]
  %v1494 = vld [vmem:[%s1 + $0x210] sm:$0xff]
  %v1495 = vld [vmem:[%s1 + $0x218] sm:$0xff]
  %v1496 = vld [vmem:[%s1 + $0x220] sm:$0xff]
  %v1497 = vld [vmem:[%s1 + $0x228] sm:$0xff]
  %v1498 = vld [vmem:[%s1 + $0x230] sm:$0xff]
  %v1499 = vld [vmem:[%s1 + $0x238] sm:$0xff]
  %v1500 = vld [vmem:[%s1 + $0x240] sm:$0xff]
  %v1501 = vld [vmem:[%s1 + $0x248] sm:$0xff]
  %v1502 = vld [vmem:[%s1 + $0x250] sm:$0xff]
  %v1503 = vld [vmem:[%s1 + $0x258] sm:$0xff]
  %v1504 = vld [vmem:[%s1 + $0x260] sm:$0xff]
  %v1505 = vld [vmem:[%s1 + $0x268] sm:$0xff]
  %v1506 = vld [vmem:[%s1 + $0x270] sm:$0x3]
  %v1507 = vld [vmem:[%s1 + $0x278] sm:$0x3]
  %v1508 = vld [vmem:[%s1 + $0x280] sm:$0x3]
  %v1509 = vld [vmem:[%s1 + $0x288] sm:$0x3]
  %v1510 = vld [vmem:[%s1 + $0x290] sm:$0x3]
  %v1511 = vld [vmem:[%s1 + $0x298] sm:$0x3]
  %v1512 = vld [vmem:[%s1 + $0x2a0] sm:$0x3]
  %v1513 = vld [vmem:[%s1 + $0x2a8] sm:$0x3]
  %v1514 = vld [vmem:[%s1 + $0x2b0] sm:$0x3]
  %v1515 = vld [vmem:[%s1 + $0x2b8] sm:$0x3]
  %v1516 = vld [vmem:[%s1 + $0x2c0] sm:$0x3]
  %v1517 = vld [vmem:[%s1 + $0x2c8] sm:$0x3]
  %v1518 = vld [vmem:[%s1 + $0x2d0] sm:$0x3]
  %v1519 = vpack.c.bf16 %v1441, %v1428
  %v1520 = vpack.c.bf16 %v1442, %v1429
  %v1521 = vpack.c.bf16 %v1443, %v1430
  %v1522 = vpack.c.bf16 %v1444, %v1431
  %v1523 = vpack.c.bf16 %v1445, %v1432
  %v1524 = vpack.c.bf16 %v1446, %v1433
  %v1525 = vpack.c.bf16 %v1447, %v1434
  %v1526 = vpack.c.bf16 %v1448, %v1435
  %v1527 = vpack.c.bf16 %v1449, %v1436
  %v1528 = vpack.c.bf16 %v1450, %v1437
  %v1529 = vpack.c.bf16 %v1451, %v1438
  %v1530 = vpack.c.bf16 %v1452, %v1439
  %v1531 = vpack.c.bf16 %v1453, %v1440
  %v1532 = vpack.c.bf16 %v1467, %v1454
  %v1533 = vpack.c.bf16 %v1468, %v1455
  %v1534 = vpack.c.bf16 %v1469, %v1456
  %v1535 = vpack.c.bf16 %v1470, %v1457
  %v1536 = vpack.c.bf16 %v1471, %v1458
  %v1537 = vpack.c.bf16 %v1472, %v1459
  %v1538 = vpack.c.bf16 %v1473, %v1460
  %v1539 = vpack.c.bf16 %v1474, %v1461
  %v1540 = vpack.c.bf16 %v1475, %v1462
  %v1541 = vpack.c.bf16 %v1476, %v1463
  %v1542 = vpack.c.bf16 %v1477, %v1464
  %v1543 = vpack.c.bf16 %v1478, %v1465
  %v1544 = vpack.c.bf16 %v1479, %v1466
  %v1545 = vpack.c.bf16 %v1493, %v1480
  %v1546 = vpack.c.bf16 %v1494, %v1481
  %v1547 = vpack.c.bf16 %v1495, %v1482
  %v1548 = vpack.c.bf16 %v1496, %v1483
  %v1549 = vpack.c.bf16 %v1497, %v1484
  %v1550 = vpack.c.bf16 %v1498, %v1485
  %v1551 = vpack.c.bf16 %v1499, %v1486
  %v1552 = vpack.c.bf16 %v1500, %v1487
  %v1553 = vpack.c.bf16 %v1501, %v1488
  %v1554 = vpack.c.bf16 %v1502, %v1489
  %v1555 = vpack.c.bf16 %v1503, %v1490
  %v1556 = vpack.c.bf16 %v1504, %v1491
  %v1557 = vpack.c.bf16 %v1505, %v1492
  %v1558 = vpack.c.bf16 %v1506, %v1506
  %v1559 = vpack.c.bf16 %v1507, %v1507
  %v1560 = vpack.c.bf16 %v1508, %v1508
  %v1561 = vpack.c.bf16 %v1509, %v1509
  %v1562 = vpack.c.bf16 %v1510, %v1510
  %v1563 = vpack.c.bf16 %v1511, %v1511
  %v1564 = vpack.c.bf16 %v1512, %v1512
  %v1565 = vpack.c.bf16 %v1513, %v1513
  %v1566 = vpack.c.bf16 %v1514, %v1514
  %v1567 = vpack.c.bf16 %v1515, %v1515
  %v1568 = vpack.c.bf16 %v1516, %v1516
  %v1569 = vpack.c.bf16 %v1517, %v1517
  %v1570 = vpack.c.bf16 %v1518, %v1518
  %v1572 = vsel %vm967, %v1531, 0
  %v1575 = vsel %vm967, %v1544, 0
  %v1578 = vsel %vm967, %v1557, 0
  %v1581 = vsel %vm967, %v1570, 0
  %1583 = vmatprep.subr.bf16.mxu0 0
  %1584 = vmatpush1.bf16.msra.mxu0 %v774
  %1585 = vmatprep.subr.bf16.mxu0 0
  %1586 = vmatpush1.bf16.msra.mxu0 %v773
  %1587 = vmatprep.subr.bf16.mxu0 0
  %1588 = vmatpush1.bf16.msra.mxu0 %v772
  %1589 = vmatprep.subr.bf16.mxu0 0
  %1590 = vmatpush1.bf16.msra.mxu0 %v771
  %1591 = vmatprep.subr.bf16.mxu0 0
  %1592 = vmatpush1.bf16.msra.mxu0 %v770
  %1593 = vmatprep.subr.bf16.mxu0 0
  %1594 = vmatpush1.bf16.msra.mxu0 %v769
  %1595 = vmatprep.subr.bf16.mxu0 0
  %1596 = vmatpush1.bf16.msra.mxu0 %v768
  %1597 = vmatprep.subr.bf16.mxu0 0
  %1598 = vmatpush1.bf16.msra.mxu0 %v767
  %1599 = vmatprep.subr.bf16.mxu0 0
  %1600 = vmatpush2.bf16.msra.mxu0 %v782
  %1601 = vmatprep.subr.bf16.mxu0 0
  %1602 = vmatpush2.bf16.msra.mxu0 %v781
  %1603 = vmatprep.subr.bf16.mxu0 0
  %1604 = vmatpush2.bf16.msra.mxu0 %v780
  %1605 = vmatprep.subr.bf16.mxu0 0
  %1606 = vmatpush2.bf16.msra.mxu0 %v779
  %1607 = vmatprep.subr.bf16.mxu0 0
  %1608 = vmatpush2.bf16.msra.mxu0 %v778
  %1609 = vmatprep.subr.bf16.mxu0 0
  %1610 = vmatpush2.bf16.msra.mxu0 %v777
  %1611 = vmatprep.subr.bf16.mxu0 0
  %1612 = vmatpush2.bf16.msra.mxu0 %v776
  %1613 = vmatprep.subr.bf16.mxu0 0
  %1614 = vmatpush2.bf16.msra.mxu0 %v775
  %1615 = vmatprep.mubr.bf16.mxu0 %v1520
  %1616 = vmatmul.mubr.bf16.gmra.mxu0 %v1519
  %v1617 = vpop.f32.mrf.mxu0
  %v1618 = vadd.f32 0.0, %v1617
  %v1619 = vpop.f32.mrf.mxu0
  %v1620 = vpop.f32.mrf.mxu0
  %v1621 = vadd.f32 0.0, %v1620
  %v1622 = vpop.f32.mrf.mxu0
  %1623 = vmatprep.mubr.bf16.mxu0 %v1533
  %1624 = vmatmul.mubr.bf16.gmra.mxu0 %v1532
  %v1625 = vpop.f32.mrf.mxu0
  %v1626 = vadd.f32 0.0, %v1625
  %v1627 = vpop.f32.mrf.mxu0
  %v1628 = vpop.f32.mrf.mxu0
  %v1629 = vadd.f32 0.0, %v1628
  %v1630 = vpop.f32.mrf.mxu0
  %1631 = vmatprep.mubr.bf16.mxu0 %v1546
  %1632 = vmatmul.mubr.bf16.gmra.mxu0 %v1545
  %v1633 = vpop.f32.mrf.mxu0
  %v1634 = vadd.f32 0.0, %v1633
  %v1635 = vpop.f32.mrf.mxu0
  %v1636 = vpop.f32.mrf.mxu0
  %v1637 = vadd.f32 0.0, %v1636
  %v1638 = vpop.f32.mrf.mxu0
  %1639 = vmatprep.mubr.bf16.mxu0 %v1559
  %1640 = vmatmul.mubr.bf16.gmra.mxu0 %v1558
  %v1641 = vpop.f32.mrf.mxu0
  %v1642 = vadd.f32 0.0, %v1641
  %v1643 = vpop.f32.mrf.mxu0
  %v1644 = vpop.f32.mrf.mxu0
  %v1645 = vpop.f32.mrf.mxu0
  %1646 = vdwg.mxu0
  %1647 = vmatprep.subr.bf16.mxu0 0
  %1648 = vmatpush1.bf16.msra.mxu0 %v790
  %1649 = vmatprep.subr.bf16.mxu0 0
  %1650 = vmatpush1.bf16.msra.mxu0 %v789
  %1651 = vmatprep.subr.bf16.mxu0 0
  %1652 = vmatpush1.bf16.msra.mxu0 %v788
  %1653 = vmatprep.subr.bf16.mxu0 0
  %1654 = vmatpush1.bf16.msra.mxu0 %v787
  %1655 = vmatprep.subr.bf16.mxu0 0
  %1656 = vmatpush1.bf16.msra.mxu0 %v786
  %1657 = vmatprep.subr.bf16.mxu0 0
  %1658 = vmatpush1.bf16.msra.mxu0 %v785
  %1659 = vmatprep.subr.bf16.mxu0 0
  %1660 = vmatpush1.bf16.msra.mxu0 %v784
  %1661 = vmatprep.subr.bf16.mxu0 0
  %1662 = vmatpush1.bf16.msra.mxu0 %v783
  %1663 = vmatprep.subr.bf16.mxu0 0
  %1664 = vmatpush2.bf16.msra.mxu0 %v798
  %1665 = vmatprep.subr.bf16.mxu0 0
  %1666 = vmatpush2.bf16.msra.mxu0 %v797
  %1667 = vmatprep.subr.bf16.mxu0 0
  %1668 = vmatpush2.bf16.msra.mxu0 %v796
  %1669 = vmatprep.subr.bf16.mxu0 0
  %1670 = vmatpush2.bf16.msra.mxu0 %v795
  %1671 = vmatprep.subr.bf16.mxu0 0
  %1672 = vmatpush2.bf16.msra.mxu0 %v794
  %1673 = vmatprep.subr.bf16.mxu0 0
  %1674 = vmatpush2.bf16.msra.mxu0 %v793
  %1675 = vmatprep.subr.bf16.mxu0 0
  %1676 = vmatpush2.bf16.msra.mxu0 %v792
  %1677 = vmatprep.subr.bf16.mxu0 0
  %1678 = vmatpush2.bf16.msra.mxu0 %v791
  %1679 = vmatprep.mubr.bf16.mxu0 %v1522
  %1680 = vmatmul.mubr.bf16.gmra.mxu0 %v1521
  %v1681 = vpop.f32.mrf.mxu0
  %v1682 = vadd.f32 %v1618, %v1681
  %v1683 = vpop.f32.mrf.mxu0
  %v1684 = vpop.f32.mrf.mxu0
  %v1685 = vadd.f32 %v1621, %v1684
  %v1686 = vpop.f32.mrf.mxu0
  %1687 = vmatprep.mubr.bf16.mxu0 %v1535
  %1688 = vmatmul.mubr.bf16.gmra.mxu0 %v1534
  %v1689 = vpop.f32.mrf.mxu0
  %v1690 = vadd.f32 %v1626, %v1689
  %v1691 = vpop.f32.mrf.mxu0
  %v1692 = vpop.f32.mrf.mxu0
  %v1693 = vadd.f32 %v1629, %v1692
  %v1694 = vpop.f32.mrf.mxu0
  %1695 = vmatprep.mubr.bf16.mxu0 %v1548
  %1696 = vmatmul.mubr.bf16.gmra.mxu0 %v1547
  %v1697 = vpop.f32.mrf.mxu0
  %v1698 = vadd.f32 %v1634, %v1697
  %v1699 = vpop.f32.mrf.mxu0
  %v1700 = vpop.f32.mrf.mxu0
  %v1701 = vadd.f32 %v1637, %v1700
  %v1702 = vpop.f32.mrf.mxu0
  %1703 = vmatprep.mubr.bf16.mxu0 %v1561
  %1704 = vmatmul.mubr.bf16.gmra.mxu0 %v1560
  %v1705 = vpop.f32.mrf.mxu0
  %v1706 = vadd.f32 %v1642, %v1705
  %v1707 = vpop.f32.mrf.mxu0
  %v1708 = vpop.f32.mrf.mxu0
  %v1709 = vpop.f32.mrf.mxu0
  %1710 = vdwg.mxu0
  %1711 = vmatprep.subr.bf16.mxu0 0
  %1712 = vmatpush1.bf16.msra.mxu0 %v806
  %1713 = vmatprep.subr.bf16.mxu0 0
  %1714 = vmatpush1.bf16.msra.mxu0 %v805
  %1715 = vmatprep.subr.bf16.mxu0 0
  %1716 = vmatpush1.bf16.msra.mxu0 %v804
  %1717 = vmatprep.subr.bf16.mxu0 0
  %1718 = vmatpush1.bf16.msra.mxu0 %v803
  %1719 = vmatprep.subr.bf16.mxu0 0
  %1720 = vmatpush1.bf16.msra.mxu0 %v802
  %1721 = vmatprep.subr.bf16.mxu0 0
  %1722 = vmatpush1.bf16.msra.mxu0 %v801
  %1723 = vmatprep.subr.bf16.mxu0 0
  %1724 = vmatpush1.bf16.msra.mxu0 %v800
  %1725 = vmatprep.subr.bf16.mxu0 0
  %1726 = vmatpush1.bf16.msra.mxu0 %v799
  %1727 = vmatprep.subr.bf16.mxu0 0
  %1728 = vmatpush2.bf16.msra.mxu0 %v814
  %1729 = vmatprep.subr.bf16.mxu0 0
  %1730 = vmatpush2.bf16.msra.mxu0 %v813
  %1731 = vmatprep.subr.bf16.mxu0 0
  %1732 = vmatpush2.bf16.msra.mxu0 %v812
  %1733 = vmatprep.subr.bf16.mxu0 0
  %1734 = vmatpush2.bf16.msra.mxu0 %v811
  %1735 = vmatprep.subr.bf16.mxu0 0
  %1736 = vmatpush2.bf16.msra.mxu0 %v810
  %1737 = vmatprep.subr.bf16.mxu0 0
  %1738 = vmatpush2.bf16.msra.mxu0 %v809
  %1739 = vmatprep.subr.bf16.mxu0 0
  %1740 = vmatpush2.bf16.msra.mxu0 %v808
  %1741 = vmatprep.subr.bf16.mxu0 0
  %1742 = vmatpush2.bf16.msra.mxu0 %v807
  %1743 = vmatprep.mubr.bf16.mxu0 %v1524
  %1744 = vmatmul.mubr.bf16.gmra.mxu0 %v1523
  %v1745 = vpop.f32.mrf.mxu0
  %v1746 = vadd.f32 %v1682, %v1745
  %v1747 = vpop.f32.mrf.mxu0
  %v1748 = vpop.f32.mrf.mxu0
  %v1749 = vadd.f32 %v1685, %v1748
  %v1750 = vpop.f32.mrf.mxu0
  %1751 = vmatprep.mubr.bf16.mxu0 %v1537
  %1752 = vmatmul.mubr.bf16.gmra.mxu0 %v1536
  %v1753 = vpop.f32.mrf.mxu0
  %v1754 = vadd.f32 %v1690, %v1753
  %v1755 = vpop.f32.mrf.mxu0
  %v1756 = vpop.f32.mrf.mxu0
  %v1757 = vadd.f32 %v1693, %v1756
  %v1758 = vpop.f32.mrf.mxu0
  %1759 = vmatprep.mubr.bf16.mxu0 %v1550
  %1760 = vmatmul.mubr.bf16.gmra.mxu0 %v1549
  %v1761 = vpop.f32.mrf.mxu0
  %v1762 = vadd.f32 %v1698, %v1761
  %v1763 = vpop.f32.mrf.mxu0
  %v1764 = vpop.f32.mrf.mxu0
  %v1765 = vadd.f32 %v1701, %v1764
  %v1766 = vpop.f32.mrf.mxu0
  %1767 = vmatprep.mubr.bf16.mxu0 %v1563
  %1768 = vmatmul.mubr.bf16.gmra.mxu0 %v1562
  %v1769 = vpop.f32.mrf.mxu0
  %v1770 = vadd.f32 %v1706, %v1769
  %v1771 = vpop.f32.mrf.mxu0
  %v1772 = vpop.f32.mrf.mxu0
  %v1773 = vpop.f32.mrf.mxu0
  %1774 = vdwg.mxu0
  %1775 = vmatprep.subr.bf16.mxu0 0
  %1776 = vmatpush1.bf16.msra.mxu0 %v822
  %1777 = vmatprep.subr.bf16.mxu0 0
  %1778 = vmatpush1.bf16.msra.mxu0 %v821
  %1779 = vmatprep.subr.bf16.mxu0 0
  %1780 = vmatpush1.bf16.msra.mxu0 %v820
  %1781 = vmatprep.subr.bf16.mxu0 0
  %1782 = vmatpush1.bf16.msra.mxu0 %v819
  %1783 = vmatprep.subr.bf16.mxu0 0
  %1784 = vmatpush1.bf16.msra.mxu0 %v818
  %1785 = vmatprep.subr.bf16.mxu0 0
  %1786 = vmatpush1.bf16.msra.mxu0 %v817
  %1787 = vmatprep.subr.bf16.mxu0 0
  %1788 = vmatpush1.bf16.msra.mxu0 %v816
  %1789 = vmatprep.subr.bf16.mxu0 0
  %1790 = vmatpush1.bf16.msra.mxu0 %v815
  %1791 = vmatprep.subr.bf16.mxu0 0
  %1792 = vmatpush2.bf16.msra.mxu0 %v830
  %1793 = vmatprep.subr.bf16.mxu0 0
  %1794 = vmatpush2.bf16.msra.mxu0 %v829
  %1795 = vmatprep.subr.bf16.mxu0 0
  %1796 = vmatpush2.bf16.msra.mxu0 %v828
  %1797 = vmatprep.subr.bf16.mxu0 0
  %1798 = vmatpush2.bf16.msra.mxu0 %v827
  %1799 = vmatprep.subr.bf16.mxu0 0
  %1800 = vmatpush2.bf16.msra.mxu0 %v826
  %1801 = vmatprep.subr.bf16.mxu0 0
  %1802 = vmatpush2.bf16.msra.mxu0 %v825
  %1803 = vmatprep.subr.bf16.mxu0 0
  %1804 = vmatpush2.bf16.msra.mxu0 %v824
  %1805 = vmatprep.subr.bf16.mxu0 0
  %1806 = vmatpush2.bf16.msra.mxu0 %v823
  %1807 = vmatprep.mubr.bf16.mxu0 %v1526
  %1808 = vmatmul.mubr.bf16.gmra.mxu0 %v1525
  %v1809 = vpop.f32.mrf.mxu0
  %v1810 = vadd.f32 %v1746, %v1809
  %v1811 = vpop.f32.mrf.mxu0
  %v1812 = vpop.f32.mrf.mxu0
  %v1813 = vadd.f32 %v1749, %v1812
  %v1814 = vpop.f32.mrf.mxu0
  %1815 = vmatprep.mubr.bf16.mxu0 %v1539
  %1816 = vmatmul.mubr.bf16.gmra.mxu0 %v1538
  %v1817 = vpop.f32.mrf.mxu0
  %v1818 = vadd.f32 %v1754, %v1817
  %v1819 = vpop.f32.mrf.mxu0
  %v1820 = vpop.f32.mrf.mxu0
  %v1821 = vadd.f32 %v1757, %v1820
  %v1822 = vpop.f32.mrf.mxu0
  %1823 = vmatprep.mubr.bf16.mxu0 %v1552
  %1824 = vmatmul.mubr.bf16.gmra.mxu0 %v1551
  %v1825 = vpop.f32.mrf.mxu0
  %v1826 = vadd.f32 %v1762, %v1825
  %v1827 = vpop.f32.mrf.mxu0
  %v1828 = vpop.f32.mrf.mxu0
  %v1829 = vadd.f32 %v1765, %v1828
  %v1830 = vpop.f32.mrf.mxu0
  %1831 = vmatprep.mubr.bf16.mxu0 %v1565
  %1832 = vmatmul.mubr.bf16.gmra.mxu0 %v1564
  %v1833 = vpop.f32.mrf.mxu0
  %v1834 = vadd.f32 %v1770, %v1833
  %v1835 = vpop.f32.mrf.mxu0
  %v1836 = vpop.f32.mrf.mxu0
  %v1837 = vpop.f32.mrf.mxu0
  %1838 = vdwg.mxu0
  %1839 = vmatprep.subr.bf16.mxu0 0
  %1840 = vmatpush1.bf16.msra.mxu0 %v838
  %1841 = vmatprep.subr.bf16.mxu0 0
  %1842 = vmatpush1.bf16.msra.mxu0 %v837
  %1843 = vmatprep.subr.bf16.mxu0 0
  %1844 = vmatpush1.bf16.msra.mxu0 %v836
  %1845 = vmatprep.subr.bf16.mxu0 0
  %1846 = vmatpush1.bf16.msra.mxu0 %v835
  %1847 = vmatprep.subr.bf16.mxu0 0
  %1848 = vmatpush1.bf16.msra.mxu0 %v834
  %1849 = vmatprep.subr.bf16.mxu0 0
  %1850 = vmatpush1.bf16.msra.mxu0 %v833
  %1851 = vmatprep.subr.bf16.mxu0 0
  %1852 = vmatpush1.bf16.msra.mxu0 %v832
  %1853 = vmatprep.subr.bf16.mxu0 0
  %1854 = vmatpush1.bf16.msra.mxu0 %v831
  %1855 = vmatprep.subr.bf16.mxu0 0
  %1856 = vmatpush2.bf16.msra.mxu0 %v846
  %1857 = vmatprep.subr.bf16.mxu0 0
  %1858 = vmatpush2.bf16.msra.mxu0 %v845
  %1859 = vmatprep.subr.bf16.mxu0 0
  %1860 = vmatpush2.bf16.msra.mxu0 %v844
  %1861 = vmatprep.subr.bf16.mxu0 0
  %1862 = vmatpush2.bf16.msra.mxu0 %v843
  %1863 = vmatprep.subr.bf16.mxu0 0
  %1864 = vmatpush2.bf16.msra.mxu0 %v842
  %1865 = vmatprep.subr.bf16.mxu0 0
  %1866 = vmatpush2.bf16.msra.mxu0 %v841
  %1867 = vmatprep.subr.bf16.mxu0 0
  %1868 = vmatpush2.bf16.msra.mxu0 %v840
  %1869 = vmatprep.subr.bf16.mxu0 0
  %1870 = vmatpush2.bf16.msra.mxu0 %v839
  %1871 = vmatprep.mubr.bf16.mxu0 %v1528
  %1872 = vmatmul.mubr.bf16.gmra.mxu0 %v1527
  %v1873 = vpop.f32.mrf.mxu0
  %v1874 = vadd.f32 %v1810, %v1873
  %v1875 = vpop.f32.mrf.mxu0
  %v1876 = vpop.f32.mrf.mxu0
  %v1877 = vadd.f32 %v1813, %v1876
  %v1878 = vpop.f32.mrf.mxu0
  %1879 = vmatprep.mubr.bf16.mxu0 %v1541
  %1880 = vmatmul.mubr.bf16.gmra.mxu0 %v1540
  %v1881 = vpop.f32.mrf.mxu0
  %v1882 = vadd.f32 %v1818, %v1881
  %v1883 = vpop.f32.mrf.mxu0
  %v1884 = vpop.f32.mrf.mxu0
  %v1885 = vadd.f32 %v1821, %v1884
  %v1886 = vpop.f32.mrf.mxu0
  %1887 = vmatprep.mubr.bf16.mxu0 %v1554
  %1888 = vmatmul.mubr.bf16.gmra.mxu0 %v1553
  %v1889 = vpop.f32.mrf.mxu0
  %v1890 = vadd.f32 %v1826, %v1889
  %v1891 = vpop.f32.mrf.mxu0
  %v1892 = vpop.f32.mrf.mxu0
  %v1893 = vadd.f32 %v1829, %v1892
  %v1894 = vpop.f32.mrf.mxu0
  %1895 = vmatprep.mubr.bf16.mxu0 %v1567
  %1896 = vmatmul.mubr.bf16.gmra.mxu0 %v1566
  %v1897 = vpop.f32.mrf.mxu0
  %v1898 = vadd.f32 %v1834, %v1897
  %v1899 = vpop.f32.mrf.mxu0
  %v1900 = vpop.f32.mrf.mxu0
  %v1901 = vpop.f32.mrf.mxu0
  %1902 = vdwg.mxu0
  %1903 = vmatprep.subr.bf16.mxu0 0
  %1904 = vmatpush1.bf16.msra.mxu0 %v854
  %1905 = vmatprep.subr.bf16.mxu0 0
  %1906 = vmatpush1.bf16.msra.mxu0 %v853
  %1907 = vmatprep.subr.bf16.mxu0 0
  %1908 = vmatpush1.bf16.msra.mxu0 %v852
  %1909 = vmatprep.subr.bf16.mxu0 0
  %1910 = vmatpush1.bf16.msra.mxu0 %v851
  %1911 = vmatprep.subr.bf16.mxu0 0
  %1912 = vmatpush1.bf16.msra.mxu0 %v850
  %1913 = vmatprep.subr.bf16.mxu0 0
  %1914 = vmatpush1.bf16.msra.mxu0 %v849
  %1915 = vmatprep.subr.bf16.mxu0 0
  %1916 = vmatpush1.bf16.msra.mxu0 %v848
  %1917 = vmatprep.subr.bf16.mxu0 0
  %1918 = vmatpush1.bf16.msra.mxu0 %v847
  %1919 = vmatprep.subr.bf16.mxu0 0
  %1920 = vmatpush2.bf16.msra.mxu0 %v862
  %1921 = vmatprep.subr.bf16.mxu0 0
  %1922 = vmatpush2.bf16.msra.mxu0 %v861
  %1923 = vmatprep.subr.bf16.mxu0 0
  %1924 = vmatpush2.bf16.msra.mxu0 %v860
  %1925 = vmatprep.subr.bf16.mxu0 0
  %1926 = vmatpush2.bf16.msra.mxu0 %v859
  %1927 = vmatprep.subr.bf16.mxu0 0
  %1928 = vmatpush2.bf16.msra.mxu0 %v858
  %1929 = vmatprep.subr.bf16.mxu0 0
  %1930 = vmatpush2.bf16.msra.mxu0 %v857
  %1931 = vmatprep.subr.bf16.mxu0 0
  %1932 = vmatpush2.bf16.msra.mxu0 %v856
  %1933 = vmatprep.subr.bf16.mxu0 0
  %1934 = vmatpush2.bf16.msra.mxu0 %v855
  %1935 = vmatprep.mubr.bf16.mxu0 %v1530
  %1936 = vmatmul.mubr.bf16.gmra.mxu0 %v1529
  %v1937 = vpop.f32.mrf.mxu0
  %v1938 = vadd.f32 %v1874, %v1937
  %v1939 = vpop.f32.mrf.mxu0
  %v1940 = vpop.f32.mrf.mxu0
  %v1941 = vadd.f32 %v1877, %v1940
  %v1942 = vpop.f32.mrf.mxu0
  %1943 = vmatprep.mubr.bf16.mxu0 %v1543
  %1944 = vmatmul.mubr.bf16.gmra.mxu0 %v1542
  %v1945 = vpop.f32.mrf.mxu0
  %v1946 = vadd.f32 %v1882, %v1945
  %v1947 = vpop.f32.mrf.mxu0
  %v1948 = vpop.f32.mrf.mxu0
  %v1949 = vadd.f32 %v1885, %v1948
  %v1950 = vpop.f32.mrf.mxu0
  %1951 = vmatprep.mubr.bf16.mxu0 %v1556
  %1952 = vmatmul.mubr.bf16.gmra.mxu0 %v1555
  %v1953 = vpop.f32.mrf.mxu0
  %v1954 = vadd.f32 %v1890, %v1953
  %v1955 = vpop.f32.mrf.mxu0
  %v1956 = vpop.f32.mrf.mxu0
  %v1957 = vadd.f32 %v1893, %v1956
  %v1958 = vpop.f32.mrf.mxu0
  %1959 = vmatprep.mubr.bf16.mxu0 %v1569
  %1960 = vmatmul.mubr.bf16.gmra.mxu0 %v1568
  %v1961 = vpop.f32.mrf.mxu0
  %v1962 = vadd.f32 %v1898, %v1961
  %v1963 = vpop.f32.mrf.mxu0
  %v1964 = vpop.f32.mrf.mxu0
  %v1965 = vpop.f32.mrf.mxu0
  %1966 = vdwg.mxu0
  %1967 = vmatprep.subr.bf16.mxu0 0
  %1968 = vmatpush1.bf16.msra.mxu0 0
  %1969 = vmatprep.subr.bf16.mxu0 0
  %1970 = vmatpush1.bf16.msra.mxu0 0
  %1971 = vmatprep.subr.bf16.mxu0 0
  %1972 = vmatpush1.bf16.msra.mxu0 0
  %1973 = vmatprep.subr.bf16.mxu0 0
  %1974 = vmatpush1.bf16.msra.mxu0 0
  %1975 = vmatprep.subr.bf16.mxu0 0
  %1976 = vmatpush1.bf16.msra.mxu0 %v866
  %1977 = vmatprep.subr.bf16.mxu0 0
  %1978 = vmatpush1.bf16.msra.mxu0 %v865
  %1979 = vmatprep.subr.bf16.mxu0 0
  %1980 = vmatpush1.bf16.msra.mxu0 %v864
  %1981 = vmatprep.subr.bf16.mxu0 0
  %1982 = vmatpush1.bf16.msra.mxu0 %v863
  %1983 = vmatprep.subr.bf16.mxu0 0
  %1984 = vmatpush2.bf16.msra.mxu0 0
  %1985 = vmatprep.subr.bf16.mxu0 0
  %1986 = vmatpush2.bf16.msra.mxu0 0
  %1987 = vmatprep.subr.bf16.mxu0 0
  %1988 = vmatpush2.bf16.msra.mxu0 0
  %1989 = vmatprep.subr.bf16.mxu0 0
  %1990 = vmatpush2.bf16.msra.mxu0 0
  %1991 = vmatprep.subr.bf16.mxu0 0
  %1992 = vmatpush2.bf16.msra.mxu0 0
  %1993 = vmatprep.subr.bf16.mxu0 0
  %1994 = vmatpush2.bf16.msra.mxu0 0
  %1995 = vmatprep.subr.bf16.mxu0 0
  %1996 = vmatpush2.bf16.msra.mxu0 0
  %1997 = vmatprep.subr.bf16.mxu0 0
  %1998 = vmatpush2.bf16.msra.mxu0 0
  %1999 = vmatprep.mubr.bf16.mxu0 0
  %2000 = vmatmul.mubr.bf16.gmra.mxu0 %v1572
  %v2001 = vpop.f32.mrf.mxu0
  %v2002 = vadd.f32 %v1938, %v2001
  %v2003 = vpop.f32.mrf.mxu0
  %v2004 = vpop.f32.mrf.mxu0
  %v2005 = vadd.f32 %v1941, %v2004
  %v2006 = vpop.f32.mrf.mxu0
  %2007 = vmatprep.mubr.bf16.mxu0 0
  %2008 = vmatmul.mubr.bf16.gmra.mxu0 %v1575
  %v2009 = vpop.f32.mrf.mxu0
  %v2010 = vadd.f32 %v1946, %v2009
  %v2011 = vpop.f32.mrf.mxu0
  %v2012 = vpop.f32.mrf.mxu0
  %v2013 = vadd.f32 %v1949, %v2012
  %v2014 = vpop.f32.mrf.mxu0
  %2015 = vmatprep.mubr.bf16.mxu0 0
  %2016 = vmatmul.mubr.bf16.gmra.mxu0 %v1578
  %v2017 = vpop.f32.mrf.mxu0
  %v2018 = vadd.f32 %v1954, %v2017
  %v2019 = vpop.f32.mrf.mxu0
  %v2020 = vpop.f32.mrf.mxu0
  %v2021 = vadd.f32 %v1957, %v2020
  %v2022 = vpop.f32.mrf.mxu0
  %2023 = vmatprep.mubr.bf16.mxu0 0
  %2024 = vmatmul.mubr.bf16.gmra.mxu0 %v1581
  %v2025 = vpop.f32.mrf.mxu0
  %v2026 = vadd.f32 %v1962, %v2025
  %v2027 = vpop.f32.mrf.mxu0
  %v2028 = vpop.f32.mrf.mxu0
  %v2029 = vpop.f32.mrf.mxu0
  %2030 = vdwg.mxu0
  %v2031 = vmax.f32 %v1399, %v2002
  %v2032 = vmax.f32 %v1402, %v2005
  %v2033 = vmax.f32 %v1407, %v2010
  %v2034 = vmax.f32 %v1410, %v2013
  %v2035 = vmax.f32 %v1415, %v2018
  %v2036 = vmax.f32 %v1418, %v2021
  %v2037 = vmax.f32 %v1423, %v2026
  %v2038 = vld [vmem:[%s2] sm:$0xff]
  %v2039 = vld [vmem:[%s2 + $0x8] sm:$0xff]
  %v2040 = vld [vmem:[%s2 + $0x10] sm:$0xff]
  %v2041 = vld [vmem:[%s2 + $0x18] sm:$0xff]
  %v2042 = vld [vmem:[%s2 + $0x20] sm:$0xff]
  %v2043 = vld [vmem:[%s2 + $0x28] sm:$0xff]
  %v2044 = vld [vmem:[%s2 + $0x30] sm:$0xff]
  %v2045 = vld [vmem:[%s2 + $0x38] sm:$0xff]
  %v2046 = vld [vmem:[%s2 + $0x40] sm:$0xff]
  %v2047 = vld [vmem:[%s2 + $0x48] sm:$0xff]
  %v2048 = vld [vmem:[%s2 + $0x50] sm:$0xff]
  %v2049 = vld [vmem:[%s2 + $0x58] sm:$0xff]
  %v2050 = vld [vmem:[%s2 + $0x60] sm:$0xff]
  %v2051 = vld [vmem:[%s2 + $0x68] sm:$0xff]
  %v2052 = vld [vmem:[%s2 + $0x70] sm:$0xff]
  %v2053 = vld [vmem:[%s2 + $0x78] sm:$0xff]
  %v2054 = vld [vmem:[%s2 + $0x80] sm:$0xff]
  %v2055 = vld [vmem:[%s2 + $0x88] sm:$0xff]
  %v2056 = vld [vmem:[%s2 + $0x90] sm:$0xff]
  %v2057 = vld [vmem:[%s2 + $0x98] sm:$0xff]
  %v2058 = vld [vmem:[%s2 + $0xa0] sm:$0xff]
  %v2059 = vld [vmem:[%s2 + $0xa8] sm:$0xff]
  %v2060 = vld [vmem:[%s2 + $0xb0] sm:$0xff]
  %v2061 = vld [vmem:[%s2 + $0xb8] sm:$0xff]
  %v2062 = vld [vmem:[%s2 + $0xc0] sm:$0xff]
  %v2063 = vld [vmem:[%s2 + $0xc8] sm:$0xff]
  %v2064 = vld [vmem:[%s2 + $0xd0] sm:$0xff]
  %v2065 = vld [vmem:[%s2 + $0xd8] sm:$0xff]
  %v2066 = vld [vmem:[%s2 + $0xe0] sm:$0xff]
  %v2067 = vld [vmem:[%s2 + $0xe8] sm:$0xff]
  %v2068 = vld [vmem:[%s2 + $0xf0] sm:$0xff]
  %v2069 = vld [vmem:[%s2 + $0xf8] sm:$0xff]
  %v2070 = vld [vmem:[%s2 + $0x100] sm:$0xff]
  %v2071 = vld [vmem:[%s2 + $0x108] sm:$0xff]
  %v2072 = vld [vmem:[%s2 + $0x110] sm:$0xff]
  %v2073 = vld [vmem:[%s2 + $0x118] sm:$0xff]
  %v2074 = vld [vmem:[%s2 + $0x120] sm:$0xff]
  %v2075 = vld [vmem:[%s2 + $0x128] sm:$0xff]
  %v2076 = vld [vmem:[%s2 + $0x130] sm:$0xff]
  %v2077 = vld [vmem:[%s2 + $0x138] sm:$0xff]
  %v2078 = vld [vmem:[%s2 + $0x140] sm:$0xff]
  %v2079 = vld [vmem:[%s2 + $0x148] sm:$0xff]
  %v2080 = vld [vmem:[%s2 + $0x150] sm:$0xff]
  %v2081 = vld [vmem:[%s2 + $0x158] sm:$0xff]
  %v2082 = vld [vmem:[%s2 + $0x160] sm:$0xff]
  %v2083 = vld [vmem:[%s2 + $0x168] sm:$0xff]
  %v2084 = vld [vmem:[%s2 + $0x170] sm:$0xff]
  %v2085 = vld [vmem:[%s2 + $0x178] sm:$0xff]
  %v2086 = vld [vmem:[%s2 + $0x180] sm:$0xff]
  %v2087 = vld [vmem:[%s2 + $0x188] sm:$0xff]
  %v2088 = vld [vmem:[%s2 + $0x190] sm:$0xff]
  %v2089 = vld [vmem:[%s2 + $0x198] sm:$0xff]
  %v2090 = vld [vmem:[%s2 + $0x1a0] sm:$0xff]
  %v2091 = vld [vmem:[%s2 + $0x1a8] sm:$0xff]
  %v2092 = vld [vmem:[%s2 + $0x1b0] sm:$0xff]
  %v2093 = vld [vmem:[%s2 + $0x1b8] sm:$0xff]
  %v2094 = vld [vmem:[%s2 + $0x1c0] sm:$0xff]
  %v2095 = vld [vmem:[%s2 + $0x1c8] sm:$0xff]
  %v2096 = vld [vmem:[%s2 + $0x1d0] sm:$0xff]
  %v2097 = vld [vmem:[%s2 + $0x1d8] sm:$0xff]
  %v2098 = vld [vmem:[%s2 + $0x1e0] sm:$0xff]
  %v2099 = vld [vmem:[%s2 + $0x1e8] sm:$0xff]
  %v2100 = vld [vmem:[%s2 + $0x1f0] sm:$0xff]
  %v2101 = vld [vmem:[%s2 + $0x1f8] sm:$0xff]
  %v2102 = vld [vmem:[%s2 + $0x200] sm:$0xff]
  %v2103 = vld [vmem:[%s2 + $0x208] sm:$0xff]
  %v2104 = vld [vmem:[%s2 + $0x210] sm:$0xff]
  %v2105 = vld [vmem:[%s2 + $0x218] sm:$0xff]
  %v2106 = vld [vmem:[%s2 + $0x220] sm:$0xff]
  %v2107 = vld [vmem:[%s2 + $0x228] sm:$0xff]
  %v2108 = vld [vmem:[%s2 + $0x230] sm:$0xff]
  %v2109 = vld [vmem:[%s2 + $0x238] sm:$0xff]
  %v2110 = vld [vmem:[%s2 + $0x240] sm:$0xff]
  %v2111 = vld [vmem:[%s2 + $0x248] sm:$0xff]
  %v2112 = vld [vmem:[%s2 + $0x250] sm:$0xff]
  %v2113 = vld [vmem:[%s2 + $0x258] sm:$0xff]
  %v2114 = vld [vmem:[%s2 + $0x260] sm:$0xff]
  %v2115 = vld [vmem:[%s2 + $0x268] sm:$0xff]
  %v2116 = vld [vmem:[%s2 + $0x270] sm:$0x3]
  %v2117 = vld [vmem:[%s2 + $0x278] sm:$0x3]
  %v2118 = vld [vmem:[%s2 + $0x280] sm:$0x3]
  %v2119 = vld [vmem:[%s2 + $0x288] sm:$0x3]
  %v2120 = vld [vmem:[%s2 + $0x290] sm:$0x3]
  %v2121 = vld [vmem:[%s2 + $0x298] sm:$0x3]
  %v2122 = vld [vmem:[%s2 + $0x2a0] sm:$0x3]
  %v2123 = vld [vmem:[%s2 + $0x2a8] sm:$0x3]
  %v2124 = vld [vmem:[%s2 + $0x2b0] sm:$0x3]
  %v2125 = vld [vmem:[%s2 + $0x2b8] sm:$0x3]
  %v2126 = vld [vmem:[%s2 + $0x2c0] sm:$0x3]
  %v2127 = vld [vmem:[%s2 + $0x2c8] sm:$0x3]
  %v2128 = vld [vmem:[%s2 + $0x2d0] sm:$0x3]
  %v2129 = vpack.c.bf16 %v2051, %v2038
  %v2130 = vpack.c.bf16 %v2052, %v2039
  %v2131 = vpack.c.bf16 %v2053, %v2040
  %v2132 = vpack.c.bf16 %v2054, %v2041
  %v2133 = vpack.c.bf16 %v2055, %v2042
  %v2134 = vpack.c.bf16 %v2056, %v2043
  %v2135 = vpack.c.bf16 %v2057, %v2044
  %v2136 = vpack.c.bf16 %v2058, %v2045
  %v2137 = vpack.c.bf16 %v2059, %v2046
  %v2138 = vpack.c.bf16 %v2060, %v2047
  %v2139 = vpack.c.bf16 %v2061, %v2048
  %v2140 = vpack.c.bf16 %v2062, %v2049
  %v2141 = vpack.c.bf16 %v2063, %v2050
  %v2142 = vpack.c.bf16 %v2077, %v2064
  %v2143 = vpack.c.bf16 %v2078, %v2065
  %v2144 = vpack.c.bf16 %v2079, %v2066
  %v2145 = vpack.c.bf16 %v2080, %v2067
  %v2146 = vpack.c.bf16 %v2081, %v2068
  %v2147 = vpack.c.bf16 %v2082, %v2069
  %v2148 = vpack.c.bf16 %v2083, %v2070
  %v2149 = vpack.c.bf16 %v2084, %v2071
  %v2150 = vpack.c.bf16 %v2085, %v2072
  %v2151 = vpack.c.bf16 %v2086, %v2073
  %v2152 = vpack.c.bf16 %v2087, %v2074
  %v2153 = vpack.c.bf16 %v2088, %v2075
  %v2154 = vpack.c.bf16 %v2089, %v2076
  %v2155 = vpack.c.bf16 %v2103, %v2090
  %v2156 = vpack.c.bf16 %v2104, %v2091
  %v2157 = vpack.c.bf16 %v2105, %v2092
  %v2158 = vpack.c.bf16 %v2106, %v2093
  %v2159 = vpack.c.bf16 %v2107, %v2094
  %v2160 = vpack.c.bf16 %v2108, %v2095
  %v2161 = vpack.c.bf16 %v2109, %v2096
  %v2162 = vpack.c.bf16 %v2110, %v2097
  %v2163 = vpack.c.bf16 %v2111, %v2098
  %v2164 = vpack.c.bf16 %v2112, %v2099
  %v2165 = vpack.c.bf16 %v2113, %v2100
  %v2166 = vpack.c.bf16 %v2114, %v2101
  %v2167 = vpack.c.bf16 %v2115, %v2102
  %v2168 = vpack.c.bf16 %v2116, %v2116
  %v2169 = vpack.c.bf16 %v2117, %v2117
  %v2170 = vpack.c.bf16 %v2118, %v2118
  %v2171 = vpack.c.bf16 %v2119, %v2119
  %v2172 = vpack.c.bf16 %v2120, %v2120
  %v2173 = vpack.c.bf16 %v2121, %v2121
  %v2174 = vpack.c.bf16 %v2122, %v2122
  %v2175 = vpack.c.bf16 %v2123, %v2123
  %v2176 = vpack.c.bf16 %v2124, %v2124
  %v2177 = vpack.c.bf16 %v2125, %v2125
  %v2178 = vpack.c.bf16 %v2126, %v2126
  %v2179 = vpack.c.bf16 %v2127, %v2127
  %v2180 = vpack.c.bf16 %v2128, %v2128
  %v2182 = vsel %vm967, %v2141, 0
  %v2185 = vsel %vm967, %v2154, 0
  %v2188 = vsel %vm967, %v2167, 0
  %v2191 = vsel %vm967, %v2180, 0
  %2193 = vmatprep.subr.bf16.mxu0 0
  %2194 = vmatpush1.bf16.msra.mxu0 %v774
  %2195 = vmatprep.subr.bf16.mxu0 0
  %2196 = vmatpush1.bf16.msra.mxu0 %v773
  %2197 = vmatprep.subr.bf16.mxu0 0
  %2198 = vmatpush1.bf16.msra.mxu0 %v772
  %2199 = vmatprep.subr.bf16.mxu0 0
  %2200 = vmatpush1.bf16.msra.mxu0 %v771
  %2201 = vmatprep.subr.bf16.mxu0 0
  %2202 = vmatpush1.bf16.msra.mxu0 %v770
  %2203 = vmatprep.subr.bf16.mxu0 0
  %2204 = vmatpush1.bf16.msra.mxu0 %v769
  %2205 = vmatprep.subr.bf16.mxu0 0
  %2206 = vmatpush1.bf16.msra.mxu0 %v768
  %2207 = vmatprep.subr.bf16.mxu0 0
  %2208 = vmatpush1.bf16.msra.mxu0 %v767
  %2209 = vmatprep.subr.bf16.mxu0 0
  %2210 = vmatpush2.bf16.msra.mxu0 %v782
  %2211 = vmatprep.subr.bf16.mxu0 0
  %2212 = vmatpush2.bf16.msra.mxu0 %v781
  %2213 = vmatprep.subr.bf16.mxu0 0
  %2214 = vmatpush2.bf16.msra.mxu0 %v780
  %2215 = vmatprep.subr.bf16.mxu0 0
  %2216 = vmatpush2.bf16.msra.mxu0 %v779
  %2217 = vmatprep.subr.bf16.mxu0 0
  %2218 = vmatpush2.bf16.msra.mxu0 %v778
  %2219 = vmatprep.subr.bf16.mxu0 0
  %2220 = vmatpush2.bf16.msra.mxu0 %v777
  %2221 = vmatprep.subr.bf16.mxu0 0
  %2222 = vmatpush2.bf16.msra.mxu0 %v776
  %2223 = vmatprep.subr.bf16.mxu0 0
  %2224 = vmatpush2.bf16.msra.mxu0 %v775
  %2225 = vmatprep.mubr.bf16.mxu0 %v2130
  %2226 = vmatmul.mubr.bf16.gmra.mxu0 %v2129
  %v2227 = vpop.f32.mrf.mxu0
  %v2228 = vadd.f32 0.0, %v2227
  %v2229 = vpop.f32.mrf.mxu0
  %v2230 = vpop.f32.mrf.mxu0
  %v2231 = vadd.f32 0.0, %v2230
  %v2232 = vpop.f32.mrf.mxu0
  %2233 = vmatprep.mubr.bf16.mxu0 %v2143
  %2234 = vmatmul.mubr.bf16.gmra.mxu0 %v2142
  %v2235 = vpop.f32.mrf.mxu0
  %v2236 = vadd.f32 0.0, %v2235
  %v2237 = vpop.f32.mrf.mxu0
  %v2238 = vpop.f32.mrf.mxu0
  %v2239 = vadd.f32 0.0, %v2238
  %v2240 = vpop.f32.mrf.mxu0
  %2241 = vmatprep.mubr.bf16.mxu0 %v2156
  %2242 = vmatmul.mubr.bf16.gmra.mxu0 %v2155
  %v2243 = vpop.f32.mrf.mxu0
  %v2244 = vadd.f32 0.0, %v2243
  %v2245 = vpop.f32.mrf.mxu0
  %v2246 = vpop.f32.mrf.mxu0
  %v2247 = vadd.f32 0.0, %v2246
  %v2248 = vpop.f32.mrf.mxu0
  %2249 = vmatprep.mubr.bf16.mxu0 %v2169
  %2250 = vmatmul.mubr.bf16.gmra.mxu0 %v2168
  %v2251 = vpop.f32.mrf.mxu0
  %v2252 = vadd.f32 0.0, %v2251
  %v2253 = vpop.f32.mrf.mxu0
  %v2254 = vpop.f32.mrf.mxu0
  %v2255 = vpop.f32.mrf.mxu0
  %2256 = vdwg.mxu0
  %2257 = vmatprep.subr.bf16.mxu0 0
  %2258 = vmatpush1.bf16.msra.mxu0 %v790
  %2259 = vmatprep.subr.bf16.mxu0 0
  %2260 = vmatpush1.bf16.msra.mxu0 %v789
  %2261 = vmatprep.subr.bf16.mxu0 0
  %2262 = vmatpush1.bf16.msra.mxu0 %v788
  %2263 = vmatprep.subr.bf16.mxu0 0
  %2264 = vmatpush1.bf16.msra.mxu0 %v787
  %2265 = vmatprep.subr.bf16.mxu0 0
  %2266 = vmatpush1.bf16.msra.mxu0 %v786
  %2267 = vmatprep.subr.bf16.mxu0 0
  %2268 = vmatpush1.bf16.msra.mxu0 %v785
  %2269 = vmatprep.subr.bf16.mxu0 0
  %2270 = vmatpush1.bf16.msra.mxu0 %v784
  %2271 = vmatprep.subr.bf16.mxu0 0
  %2272 = vmatpush1.bf16.msra.mxu0 %v783
  %2273 = vmatprep.subr.bf16.mxu0 0
  %2274 = vmatpush2.bf16.msra.mxu0 %v798
  %2275 = vmatprep.subr.bf16.mxu0 0
  %2276 = vmatpush2.bf16.msra.mxu0 %v797
  %2277 = vmatprep.subr.bf16.mxu0 0
  %2278 = vmatpush2.bf16.msra.mxu0 %v796
  %2279 = vmatprep.subr.bf16.mxu0 0
  %2280 = vmatpush2.bf16.msra.mxu0 %v795
  %2281 = vmatprep.subr.bf16.mxu0 0
  %2282 = vmatpush2.bf16.msra.mxu0 %v794
  %2283 = vmatprep.subr.bf16.mxu0 0
  %2284 = vmatpush2.bf16.msra.mxu0 %v793
  %2285 = vmatprep.subr.bf16.mxu0 0
  %2286 = vmatpush2.bf16.msra.mxu0 %v792
  %2287 = vmatprep.subr.bf16.mxu0 0
  %2288 = vmatpush2.bf16.msra.mxu0 %v791
  %2289 = vmatprep.mubr.bf16.mxu0 %v2132
  %2290 = vmatmul.mubr.bf16.gmra.mxu0 %v2131
  %v2291 = vpop.f32.mrf.mxu0
  %v2292 = vadd.f32 %v2228, %v2291
  %v2293 = vpop.f32.mrf.mxu0
  %v2294 = vpop.f32.mrf.mxu0
  %v2295 = vadd.f32 %v2231, %v2294
  %v2296 = vpop.f32.mrf.mxu0
  %2297 = vmatprep.mubr.bf16.mxu0 %v2145
  %2298 = vmatmul.mubr.bf16.gmra.mxu0 %v2144
  %v2299 = vpop.f32.mrf.mxu0
  %v2300 = vadd.f32 %v2236, %v2299
  %v2301 = vpop.f32.mrf.mxu0
  %v2302 = vpop.f32.mrf.mxu0
  %v2303 = vadd.f32 %v2239, %v2302
  %v2304 = vpop.f32.mrf.mxu0
  %2305 = vmatprep.mubr.bf16.mxu0 %v2158
  %2306 = vmatmul.mubr.bf16.gmra.mxu0 %v2157
  %v2307 = vpop.f32.mrf.mxu0
  %v2308 = vadd.f32 %v2244, %v2307
  %v2309 = vpop.f32.mrf.mxu0
  %v2310 = vpop.f32.mrf.mxu0
  %v2311 = vadd.f32 %v2247, %v2310
  %v2312 = vpop.f32.mrf.mxu0
  %2313 = vmatprep.mubr.bf16.mxu0 %v2171
  %2314 = vmatmul.mubr.bf16.gmra.mxu0 %v2170
  %v2315 = vpop.f32.mrf.mxu0
  %v2316 = vadd.f32 %v2252, %v2315
  %v2317 = vpop.f32.mrf.mxu0
  %v2318 = vpop.f32.mrf.mxu0
  %v2319 = vpop.f32.mrf.mxu0
  %2320 = vdwg.mxu0
  %2321 = vmatprep.subr.bf16.mxu0 0
  %2322 = vmatpush1.bf16.msra.mxu0 %v806
  %2323 = vmatprep.subr.bf16.mxu0 0
  %2324 = vmatpush1.bf16.msra.mxu0 %v805
  %2325 = vmatprep.subr.bf16.mxu0 0
  %2326 = vmatpush1.bf16.msra.mxu0 %v804
  %2327 = vmatprep.subr.bf16.mxu0 0
  %2328 = vmatpush1.bf16.msra.mxu0 %v803
  %2329 = vmatprep.subr.bf16.mxu0 0
  %2330 = vmatpush1.bf16.msra.mxu0 %v802
  %2331 = vmatprep.subr.bf16.mxu0 0
  %2332 = vmatpush1.bf16.msra.mxu0 %v801
  %2333 = vmatprep.subr.bf16.mxu0 0
  %2334 = vmatpush1.bf16.msra.mxu0 %v800
  %2335 = vmatprep.subr.bf16.mxu0 0
  %2336 = vmatpush1.bf16.msra.mxu0 %v799
  %2337 = vmatprep.subr.bf16.mxu0 0
  %2338 = vmatpush2.bf16.msra.mxu0 %v814
  %2339 = vmatprep.subr.bf16.mxu0 0
  %2340 = vmatpush2.bf16.msra.mxu0 %v813
  %2341 = vmatprep.subr.bf16.mxu0 0
  %2342 = vmatpush2.bf16.msra.mxu0 %v812
  %2343 = vmatprep.subr.bf16.mxu0 0
  %2344 = vmatpush2.bf16.msra.mxu0 %v811
  %2345 = vmatprep.subr.bf16.mxu0 0
  %2346 = vmatpush2.bf16.msra.mxu0 %v810
  %2347 = vmatprep.subr.bf16.mxu0 0
  %2348 = vmatpush2.bf16.msra.mxu0 %v809
  %2349 = vmatprep.subr.bf16.mxu0 0
  %2350 = vmatpush2.bf16.msra.mxu0 %v808
  %2351 = vmatprep.subr.bf16.mxu0 0
  %2352 = vmatpush2.bf16.msra.mxu0 %v807
  %2353 = vmatprep.mubr.bf16.mxu0 %v2134
  %2354 = vmatmul.mubr.bf16.gmra.mxu0 %v2133
  %v2355 = vpop.f32.mrf.mxu0
  %v2356 = vadd.f32 %v2292, %v2355
  %v2357 = vpop.f32.mrf.mxu0
  %v2358 = vpop.f32.mrf.mxu0
  %v2359 = vadd.f32 %v2295, %v2358
  %v2360 = vpop.f32.mrf.mxu0
  %2361 = vmatprep.mubr.bf16.mxu0 %v2147
  %2362 = vmatmul.mubr.bf16.gmra.mxu0 %v2146
  %v2363 = vpop.f32.mrf.mxu0
  %v2364 = vadd.f32 %v2300, %v2363
  %v2365 = vpop.f32.mrf.mxu0
  %v2366 = vpop.f32.mrf.mxu0
  %v2367 = vadd.f32 %v2303, %v2366
  %v2368 = vpop.f32.mrf.mxu0
  %2369 = vmatprep.mubr.bf16.mxu0 %v2160
  %2370 = vmatmul.mubr.bf16.gmra.mxu0 %v2159
  %v2371 = vpop.f32.mrf.mxu0
  %v2372 = vadd.f32 %v2308, %v2371
  %v2373 = vpop.f32.mrf.mxu0
  %v2374 = vpop.f32.mrf.mxu0
  %v2375 = vadd.f32 %v2311, %v2374
  %v2376 = vpop.f32.mrf.mxu0
  %2377 = vmatprep.mubr.bf16.mxu0 %v2173
  %2378 = vmatmul.mubr.bf16.gmra.mxu0 %v2172
  %v2379 = vpop.f32.mrf.mxu0
  %v2380 = vadd.f32 %v2316, %v2379
  %v2381 = vpop.f32.mrf.mxu0
  %v2382 = vpop.f32.mrf.mxu0
  %v2383 = vpop.f32.mrf.mxu0
  %2384 = vdwg.mxu0
  %2385 = vmatprep.subr.bf16.mxu0 0
  %2386 = vmatpush1.bf16.msra.mxu0 %v822
  %2387 = vmatprep.subr.bf16.mxu0 0
  %2388 = vmatpush1.bf16.msra.mxu0 %v821
  %2389 = vmatprep.subr.bf16.mxu0 0
  %2390 = vmatpush1.bf16.msra.mxu0 %v820
  %2391 = vmatprep.subr.bf16.mxu0 0
  %2392 = vmatpush1.bf16.msra.mxu0 %v819
  %2393 = vmatprep.subr.bf16.mxu0 0
  %2394 = vmatpush1.bf16.msra.mxu0 %v818
  %2395 = vmatprep.subr.bf16.mxu0 0
  %2396 = vmatpush1.bf16.msra.mxu0 %v817
  %2397 = vmatprep.subr.bf16.mxu0 0
  %2398 = vmatpush1.bf16.msra.mxu0 %v816
  %2399 = vmatprep.subr.bf16.mxu0 0
  %2400 = vmatpush1.bf16.msra.mxu0 %v815
  %2401 = vmatprep.subr.bf16.mxu0 0
  %2402 = vmatpush2.bf16.msra.mxu0 %v830
  %2403 = vmatprep.subr.bf16.mxu0 0
  %2404 = vmatpush2.bf16.msra.mxu0 %v829
  %2405 = vmatprep.subr.bf16.mxu0 0
  %2406 = vmatpush2.bf16.msra.mxu0 %v828
  %2407 = vmatprep.subr.bf16.mxu0 0
  %2408 = vmatpush2.bf16.msra.mxu0 %v827
  %2409 = vmatprep.subr.bf16.mxu0 0
  %2410 = vmatpush2.bf16.msra.mxu0 %v826
  %2411 = vmatprep.subr.bf16.mxu0 0
  %2412 = vmatpush2.bf16.msra.mxu0 %v825
  %2413 = vmatprep.subr.bf16.mxu0 0
  %2414 = vmatpush2.bf16.msra.mxu0 %v824
  %2415 = vmatprep.subr.bf16.mxu0 0
  %2416 = vmatpush2.bf16.msra.mxu0 %v823
  %2417 = vmatprep.mubr.bf16.mxu0 %v2136
  %2418 = vmatmul.mubr.bf16.gmra.mxu0 %v2135
  %v2419 = vpop.f32.mrf.mxu0
  %v2420 = vadd.f32 %v2356, %v2419
  %v2421 = vpop.f32.mrf.mxu0
  %v2422 = vpop.f32.mrf.mxu0
  %v2423 = vadd.f32 %v2359, %v2422
  %v2424 = vpop.f32.mrf.mxu0
  %2425 = vmatprep.mubr.bf16.mxu0 %v2149
  %2426 = vmatmul.mubr.bf16.gmra.mxu0 %v2148
  %v2427 = vpop.f32.mrf.mxu0
  %v2428 = vadd.f32 %v2364, %v2427
  %v2429 = vpop.f32.mrf.mxu0
  %v2430 = vpop.f32.mrf.mxu0
  %v2431 = vadd.f32 %v2367, %v2430
  %v2432 = vpop.f32.mrf.mxu0
  %2433 = vmatprep.mubr.bf16.mxu0 %v2162
  %2434 = vmatmul.mubr.bf16.gmra.mxu0 %v2161
  %v2435 = vpop.f32.mrf.mxu0
  %v2436 = vadd.f32 %v2372, %v2435
  %v2437 = vpop.f32.mrf.mxu0
  %v2438 = vpop.f32.mrf.mxu0
  %v2439 = vadd.f32 %v2375, %v2438
  %v2440 = vpop.f32.mrf.mxu0
  %2441 = vmatprep.mubr.bf16.mxu0 %v2175
  %2442 = vmatmul.mubr.bf16.gmra.mxu0 %v2174
  %v2443 = vpop.f32.mrf.mxu0
  %v2444 = vadd.f32 %v2380, %v2443
  %v2445 = vpop.f32.mrf.mxu0
  %v2446 = vpop.f32.mrf.mxu0
  %v2447 = vpop.f32.mrf.mxu0
  %2448 = vdwg.mxu0
  %2449 = vmatprep.subr.bf16.mxu0 0
  %2450 = vmatpush1.bf16.msra.mxu0 %v838
  %2451 = vmatprep.subr.bf16.mxu0 0
  %2452 = vmatpush1.bf16.msra.mxu0 %v837
  %2453 = vmatprep.subr.bf16.mxu0 0
  %2454 = vmatpush1.bf16.msra.mxu0 %v836
  %2455 = vmatprep.subr.bf16.mxu0 0
  %2456 = vmatpush1.bf16.msra.mxu0 %v835
  %2457 = vmatprep.subr.bf16.mxu0 0
  %2458 = vmatpush1.bf16.msra.mxu0 %v834
  %2459 = vmatprep.subr.bf16.mxu0 0
  %2460 = vmatpush1.bf16.msra.mxu0 %v833
  %2461 = vmatprep.subr.bf16.mxu0 0
  %2462 = vmatpush1.bf16.msra.mxu0 %v832
  %2463 = vmatprep.subr.bf16.mxu0 0
  %2464 = vmatpush1.bf16.msra.mxu0 %v831
  %2465 = vmatprep.subr.bf16.mxu0 0
  %2466 = vmatpush2.bf16.msra.mxu0 %v846
  %2467 = vmatprep.subr.bf16.mxu0 0
  %2468 = vmatpush2.bf16.msra.mxu0 %v845
  %2469 = vmatprep.subr.bf16.mxu0 0
  %2470 = vmatpush2.bf16.msra.mxu0 %v844
  %2471 = vmatprep.subr.bf16.mxu0 0
  %2472 = vmatpush2.bf16.msra.mxu0 %v843
  %2473 = vmatprep.subr.bf16.mxu0 0
  %2474 = vmatpush2.bf16.msra.mxu0 %v842
  %2475 = vmatprep.subr.bf16.mxu0 0
  %2476 = vmatpush2.bf16.msra.mxu0 %v841
  %2477 = vmatprep.subr.bf16.mxu0 0
  %2478 = vmatpush2.bf16.msra.mxu0 %v840
  %2479 = vmatprep.subr.bf16.mxu0 0
  %2480 = vmatpush2.bf16.msra.mxu0 %v839
  %2481 = vmatprep.mubr.bf16.mxu0 %v2138
  %2482 = vmatmul.mubr.bf16.gmra.mxu0 %v2137
  %v2483 = vpop.f32.mrf.mxu0
  %v2484 = vadd.f32 %v2420, %v2483
  %v2485 = vpop.f32.mrf.mxu0
  %v2486 = vpop.f32.mrf.mxu0
  %v2487 = vadd.f32 %v2423, %v2486
  %v2488 = vpop.f32.mrf.mxu0
  %2489 = vmatprep.mubr.bf16.mxu0 %v2151
  %2490 = vmatmul.mubr.bf16.gmra.mxu0 %v2150
  %v2491 = vpop.f32.mrf.mxu0
  %v2492 = vadd.f32 %v2428, %v2491
  %v2493 = vpop.f32.mrf.mxu0
  %v2494 = vpop.f32.mrf.mxu0
  %v2495 = vadd.f32 %v2431, %v2494
  %v2496 = vpop.f32.mrf.mxu0
  %2497 = vmatprep.mubr.bf16.mxu0 %v2164
  %2498 = vmatmul.mubr.bf16.gmra.mxu0 %v2163
  %v2499 = vpop.f32.mrf.mxu0
  %v2500 = vadd.f32 %v2436, %v2499
  %v2501 = vpop.f32.mrf.mxu0
  %v2502 = vpop.f32.mrf.mxu0
  %v2503 = vadd.f32 %v2439, %v2502
  %v2504 = vpop.f32.mrf.mxu0
  %2505 = vmatprep.mubr.bf16.mxu0 %v2177
  %2506 = vmatmul.mubr.bf16.gmra.mxu0 %v2176
  %v2507 = vpop.f32.mrf.mxu0
  %v2508 = vadd.f32 %v2444, %v2507
  %v2509 = vpop.f32.mrf.mxu0
  %v2510 = vpop.f32.mrf.mxu0
  %v2511 = vpop.f32.mrf.mxu0
  %2512 = vdwg.mxu0
  %2513 = vmatprep.subr.bf16.mxu0 0
  %2514 = vmatpush1.bf16.msra.mxu0 %v854
  %2515 = vmatprep.subr.bf16.mxu0 0
  %2516 = vmatpush1.bf16.msra.mxu0 %v853
  %2517 = vmatprep.subr.bf16.mxu0 0
  %2518 = vmatpush1.bf16.msra.mxu0 %v852
  %2519 = vmatprep.subr.bf16.mxu0 0
  %2520 = vmatpush1.bf16.msra.mxu0 %v851
  %2521 = vmatprep.subr.bf16.mxu0 0
  %2522 = vmatpush1.bf16.msra.mxu0 %v850
  %2523 = vmatprep.subr.bf16.mxu0 0
  %2524 = vmatpush1.bf16.msra.mxu0 %v849
  %2525 = vmatprep.subr.bf16.mxu0 0
  %2526 = vmatpush1.bf16.msra.mxu0 %v848
  %2527 = vmatprep.subr.bf16.mxu0 0
  %2528 = vmatpush1.bf16.msra.mxu0 %v847
  %2529 = vmatprep.subr.bf16.mxu0 0
  %2530 = vmatpush2.bf16.msra.mxu0 %v862
  %2531 = vmatprep.subr.bf16.mxu0 0
  %2532 = vmatpush2.bf16.msra.mxu0 %v861
  %2533 = vmatprep.subr.bf16.mxu0 0
  %2534 = vmatpush2.bf16.msra.mxu0 %v860
  %2535 = vmatprep.subr.bf16.mxu0 0
  %2536 = vmatpush2.bf16.msra.mxu0 %v859
  %2537 = vmatprep.subr.bf16.mxu0 0
  %2538 = vmatpush2.bf16.msra.mxu0 %v858
  %2539 = vmatprep.subr.bf16.mxu0 0
  %2540 = vmatpush2.bf16.msra.mxu0 %v857
  %2541 = vmatprep.subr.bf16.mxu0 0
  %2542 = vmatpush2.bf16.msra.mxu0 %v856
  %2543 = vmatprep.subr.bf16.mxu0 0
  %2544 = vmatpush2.bf16.msra.mxu0 %v855
  %2545 = vmatprep.mubr.bf16.mxu0 %v2140
  %2546 = vmatmul.mubr.bf16.gmra.mxu0 %v2139
  %v2547 = vpop.f32.mrf.mxu0
  %v2548 = vadd.f32 %v2484, %v2547
  %v2549 = vpop.f32.mrf.mxu0
  %v2550 = vpop.f32.mrf.mxu0
  %v2551 = vadd.f32 %v2487, %v2550
  %v2552 = vpop.f32.mrf.mxu0
  %2553 = vmatprep.mubr.bf16.mxu0 %v2153
  %2554 = vmatmul.mubr.bf16.gmra.mxu0 %v2152
  %v2555 = vpop.f32.mrf.mxu0
  %v2556 = vadd.f32 %v2492, %v2555
  %v2557 = vpop.f32.mrf.mxu0
  %v2558 = vpop.f32.mrf.mxu0
  %v2559 = vadd.f32 %v2495, %v2558
  %v2560 = vpop.f32.mrf.mxu0
  %2561 = vmatprep.mubr.bf16.mxu0 %v2166
  %2562 = vmatmul.mubr.bf16.gmra.mxu0 %v2165
  %v2563 = vpop.f32.mrf.mxu0
  %v2564 = vadd.f32 %v2500, %v2563
  %v2565 = vpop.f32.mrf.mxu0
  %v2566 = vpop.f32.mrf.mxu0
  %v2567 = vadd.f32 %v2503, %v2566
  %v2568 = vpop.f32.mrf.mxu0
  %2569 = vmatprep.mubr.bf16.mxu0 %v2179
  %2570 = vmatmul.mubr.bf16.gmra.mxu0 %v2178
  %v2571 = vpop.f32.mrf.mxu0
  %v2572 = vadd.f32 %v2508, %v2571
  %v2573 = vpop.f32.mrf.mxu0
  %v2574 = vpop.f32.mrf.mxu0
  %v2575 = vpop.f32.mrf.mxu0
  %2576 = vdwg.mxu0
  %2577 = vmatprep.subr.bf16.mxu0 0
  %2578 = vmatpush1.bf16.msra.mxu0 0
  %2579 = vmatprep.subr.bf16.mxu0 0
  %2580 = vmatpush1.bf16.msra.mxu0 0
  %2581 = vmatprep.subr.bf16.mxu0 0
  %2582 = vmatpush1.bf16.msra.mxu0 0
  %2583 = vmatprep.subr.bf16.mxu0 0
  %2584 = vmatpush1.bf16.msra.mxu0 0
  %2585 = vmatprep.subr.bf16.mxu0 0
  %2586 = vmatpush1.bf16.msra.mxu0 %v866
  %2587 = vmatprep.subr.bf16.mxu0 0
  %2588 = vmatpush1.bf16.msra.mxu0 %v865
  %2589 = vmatprep.subr.bf16.mxu0 0
  %2590 = vmatpush1.bf16.msra.mxu0 %v864
  %2591 = vmatprep.subr.bf16.mxu0 0
  %2592 = vmatpush1.bf16.msra.mxu0 %v863
  %2593 = vmatprep.subr.bf16.mxu0 0
  %2594 = vmatpush2.bf16.msra.mxu0 0
  %2595 = vmatprep.subr.bf16.mxu0 0
  %2596 = vmatpush2.bf16.msra.mxu0 0
  %2597 = vmatprep.subr.bf16.mxu0 0
  %2598 = vmatpush2.bf16.msra.mxu0 0
  %2599 = vmatprep.subr.bf16.mxu0 0
  %2600 = vmatpush2.bf16.msra.mxu0 0
  %2601 = vmatprep.subr.bf16.mxu0 0
  %2602 = vmatpush2.bf16.msra.mxu0 0
  %2603 = vmatprep.subr.bf16.mxu0 0
  %2604 = vmatpush2.bf16.msra.mxu0 0
  %2605 = vmatprep.subr.bf16.mxu0 0
  %2606 = vmatpush2.bf16.msra.mxu0 0
  %2607 = vmatprep.subr.bf16.mxu0 0
  %2608 = vmatpush2.bf16.msra.mxu0 0
  %2609 = vmatprep.mubr.bf16.mxu0 0
  %2610 = vmatmul.mubr.bf16.gmra.mxu0 %v2182
  %v2611 = vpop.f32.mrf.mxu0
  %v2612 = vadd.f32 %v2548, %v2611
  %v2613 = vpop.f32.mrf.mxu0
  %v2614 = vpop.f32.mrf.mxu0
  %v2615 = vadd.f32 %v2551, %v2614
  %v2616 = vpop.f32.mrf.mxu0
  %2617 = vmatprep.mubr.bf16.mxu0 0
  %2618 = vmatmul.mubr.bf16.gmra.mxu0 %v2185
  %v2619 = vpop.f32.mrf.mxu0
  %v2620 = vadd.f32 %v2556, %v2619
  %v2621 = vpop.f32.mrf.mxu0
  %v2622 = vpop.f32.mrf.mxu0
  %v2623 = vadd.f32 %v2559, %v2622
  %v2624 = vpop.f32.mrf.mxu0
  %2625 = vmatprep.mubr.bf16.mxu0 0
  %2626 = vmatmul.mubr.bf16.gmra.mxu0 %v2188
  %v2627 = vpop.f32.mrf.mxu0
  %v2628 = vadd.f32 %v2564, %v2627
  %v2629 = vpop.f32.mrf.mxu0
  %v2630 = vpop.f32.mrf.mxu0
  %v2631 = vadd.f32 %v2567, %v2630
  %v2632 = vpop.f32.mrf.mxu0
  %2633 = vmatprep.mubr.bf16.mxu0 0
  %2634 = vmatmul.mubr.bf16.gmra.mxu0 %v2191
  %v2635 = vpop.f32.mrf.mxu0
  %v2636 = vadd.f32 %v2572, %v2635
  %v2637 = vpop.f32.mrf.mxu0
  %v2638 = vpop.f32.mrf.mxu0
  %v2639 = vpop.f32.mrf.mxu0
  %2640 = vdwg.mxu0
  %v2641 = vld [vmem:[%s3] sm:$0xff]
  %v2642 = vld [vmem:[%s3 + $0x8] sm:$0xff]
  %v2643 = vld [vmem:[%s3 + $0x10] sm:$0xff]
  %v2644 = vld [vmem:[%s3 + $0x18] sm:$0xff]
  %v2645 = vld [vmem:[%s3 + $0x20] sm:$0xff]
  %v2646 = vld [vmem:[%s3 + $0x28] sm:$0xff]
  %v2647 = vld [vmem:[%s3 + $0x30] sm:$0xff]
  %v2648 = vld [vmem:[%s3 + $0x38] sm:$0xff]
  %v2649 = vld [vmem:[%s3 + $0x40] sm:$0xff]
  %v2650 = vld [vmem:[%s3 + $0x48] sm:$0xff]
  %v2651 = vld [vmem:[%s3 + $0x50] sm:$0xff]
  %v2652 = vld [vmem:[%s3 + $0x58] sm:$0xff]
  %v2653 = vld [vmem:[%s3 + $0x60] sm:$0xff]
  %v2654 = vld [vmem:[%s3 + $0x68] sm:$0xff]
  %v2655 = vld [vmem:[%s3 + $0x70] sm:$0xff]
  %v2656 = vld [vmem:[%s3 + $0x78] sm:$0xff]
  %v2657 = vld [vmem:[%s3 + $0x80] sm:$0xff]
  %v2658 = vld [vmem:[%s3 + $0x88] sm:$0xff]
  %v2659 = vld [vmem:[%s3 + $0x90] sm:$0xff]
  %v2660 = vld [vmem:[%s3 + $0x98] sm:$0xff]
  %v2661 = vld [vmem:[%s3 + $0xa0] sm:$0xff]
  %v2662 = vld [vmem:[%s3 + $0xa8] sm:$0xff]
  %v2663 = vld [vmem:[%s3 + $0xb0] sm:$0xff]
  %v2664 = vld [vmem:[%s3 + $0xb8] sm:$0xff]
  %v2665 = vld [vmem:[%s3 + $0xc0] sm:$0xff]
  %v2666 = vld [vmem:[%s3 + $0xc8] sm:$0xff]
  %v2667 = vld [vmem:[%s3 + $0xd0] sm:$0xff]
  %v2668 = vld [vmem:[%s3 + $0xd8] sm:$0xff]
  %v2669 = vld [vmem:[%s3 + $0xe0] sm:$0xff]
  %v2670 = vld [vmem:[%s3 + $0xe8] sm:$0xff]
  %v2671 = vld [vmem:[%s3 + $0xf0] sm:$0xff]
  %v2672 = vld [vmem:[%s3 + $0xf8] sm:$0xff]
  %v2673 = vld [vmem:[%s3 + $0x100] sm:$0xff]
  %v2674 = vld [vmem:[%s3 + $0x108] sm:$0xff]
  %v2675 = vld [vmem:[%s3 + $0x110] sm:$0xff]
  %v2676 = vld [vmem:[%s3 + $0x118] sm:$0xff]
  %v2677 = vld [vmem:[%s3 + $0x120] sm:$0xff]
  %v2678 = vld [vmem:[%s3 + $0x128] sm:$0xff]
  %v2679 = vld [vmem:[%s3 + $0x130] sm:$0xff]
  %v2680 = vld [vmem:[%s3 + $0x138] sm:$0xff]
  %v2681 = vld [vmem:[%s3 + $0x140] sm:$0xff]
  %v2682 = vld [vmem:[%s3 + $0x148] sm:$0xff]
  %v2683 = vld [vmem:[%s3 + $0x150] sm:$0xff]
  %v2684 = vld [vmem:[%s3 + $0x158] sm:$0xff]
  %v2685 = vld [vmem:[%s3 + $0x160] sm:$0xff]
  %v2686 = vld [vmem:[%s3 + $0x168] sm:$0xff]
  %v2687 = vld [vmem:[%s3 + $0x170] sm:$0xff]
  %v2688 = vld [vmem:[%s3 + $0x178] sm:$0xff]
  %v2689 = vld [vmem:[%s3 + $0x180] sm:$0xff]
  %v2690 = vld [vmem:[%s3 + $0x188] sm:$0xff]
  %v2691 = vld [vmem:[%s3 + $0x190] sm:$0xff]
  %v2692 = vld [vmem:[%s3 + $0x198] sm:$0xff]
  %v2693 = vld [vmem:[%s3 + $0x1a0] sm:$0xff]
  %v2694 = vld [vmem:[%s3 + $0x1a8] sm:$0xff]
  %v2695 = vld [vmem:[%s3 + $0x1b0] sm:$0xff]
  %v2696 = vld [vmem:[%s3 + $0x1b8] sm:$0xff]
  %v2697 = vld [vmem:[%s3 + $0x1c0] sm:$0xff]
  %v2698 = vld [vmem:[%s3 + $0x1c8] sm:$0xff]
  %v2699 = vld [vmem:[%s3 + $0x1d0] sm:$0xff]
  %v2700 = vld [vmem:[%s3 + $0x1d8] sm:$0xff]
  %v2701 = vld [vmem:[%s3 + $0x1e0] sm:$0xff]
  %v2702 = vld [vmem:[%s3 + $0x1e8] sm:$0xff]
  %v2703 = vld [vmem:[%s3 + $0x1f0] sm:$0xff]
  %v2704 = vld [vmem:[%s3 + $0x1f8] sm:$0xff]
  %v2705 = vld [vmem:[%s3 + $0x200] sm:$0xff]
  %v2706 = vld [vmem:[%s3 + $0x208] sm:$0xff]
  %v2707 = vld [vmem:[%s3 + $0x210] sm:$0xff]
  %v2708 = vld [vmem:[%s3 + $0x218] sm:$0xff]
  %v2709 = vld [vmem:[%s3 + $0x220] sm:$0xff]
  %v2710 = vld [vmem:[%s3 + $0x228] sm:$0xff]
  %v2711 = vld [vmem:[%s3 + $0x230] sm:$0xff]
  %v2712 = vld [vmem:[%s3 + $0x238] sm:$0xff]
  %v2713 = vld [vmem:[%s3 + $0x240] sm:$0xff]
  %v2714 = vld [vmem:[%s3 + $0x248] sm:$0xff]
  %v2715 = vld [vmem:[%s3 + $0x250] sm:$0xff]
  %v2716 = vld [vmem:[%s3 + $0x258] sm:$0xff]
  %v2717 = vld [vmem:[%s3 + $0x260] sm:$0xff]
  %v2718 = vld [vmem:[%s3 + $0x268] sm:$0xff]
  %v2719 = vld [vmem:[%s3 + $0x270] sm:$0x3]
  %v2720 = vld [vmem:[%s3 + $0x278] sm:$0x3]
  %v2721 = vld [vmem:[%s3 + $0x280] sm:$0x3]
  %v2722 = vld [vmem:[%s3 + $0x288] sm:$0x3]
  %v2723 = vld [vmem:[%s3 + $0x290] sm:$0x3]
  %v2724 = vld [vmem:[%s3 + $0x298] sm:$0x3]
  %v2725 = vld [vmem:[%s3 + $0x2a0] sm:$0x3]
  %v2726 = vld [vmem:[%s3 + $0x2a8] sm:$0x3]
  %v2727 = vld [vmem:[%s3 + $0x2b0] sm:$0x3]
  %v2728 = vld [vmem:[%s3 + $0x2b8] sm:$0x3]
  %v2729 = vld [vmem:[%s3 + $0x2c0] sm:$0x3]
  %v2730 = vld [vmem:[%s3 + $0x2c8] sm:$0x3]
  %v2731 = vld [vmem:[%s3 + $0x2d0] sm:$0x3]
  %v2732 = vpack.c.bf16 %v2654, %v2641
  %v2733 = vpack.c.bf16 %v2655, %v2642
  %v2734 = vpack.c.bf16 %v2656, %v2643
  %v2735 = vpack.c.bf16 %v2657, %v2644
  %v2736 = vpack.c.bf16 %v2658, %v2645
  %v2737 = vpack.c.bf16 %v2659, %v2646
  %v2738 = vpack.c.bf16 %v2660, %v2647
  %v2739 = vpack.c.bf16 %v2661, %v2648
  %v2740 = vpack.c.bf16 %v2662, %v2649
  %v2741 = vpack.c.bf16 %v2663, %v2650
  %v2742 = vpack.c.bf16 %v2664, %v2651
  %v2743 = vpack.c.bf16 %v2665, %v2652
  %v2744 = vpack.c.bf16 %v2666, %v2653
  %v2745 = vpack.c.bf16 %v2680, %v2667
  %v2746 = vpack.c.bf16 %v2681, %v2668
  %v2747 = vpack.c.bf16 %v2682, %v2669
  %v2748 = vpack.c.bf16 %v2683, %v2670
  %v2749 = vpack.c.bf16 %v2684, %v2671
  %v2750 = vpack.c.bf16 %v2685, %v2672
  %v2751 = vpack.c.bf16 %v2686, %v2673
  %v2752 = vpack.c.bf16 %v2687, %v2674
  %v2753 = vpack.c.bf16 %v2688, %v2675
  %v2754 = vpack.c.bf16 %v2689, %v2676
  %v2755 = vpack.c.bf16 %v2690, %v2677
  %v2756 = vpack.c.bf16 %v2691, %v2678
  %v2757 = vpack.c.bf16 %v2692, %v2679
  %v2758 = vpack.c.bf16 %v2706, %v2693
  %v2759 = vpack.c.bf16 %v2707, %v2694
  %v2760 = vpack.c.bf16 %v2708, %v2695
  %v2761 = vpack.c.bf16 %v2709, %v2696
  %v2762 = vpack.c.bf16 %v2710, %v2697
  %v2763 = vpack.c.bf16 %v2711, %v2698
  %v2764 = vpack.c.bf16 %v2712, %v2699
  %v2765 = vpack.c.bf16 %v2713, %v2700
  %v2766 = vpack.c.bf16 %v2714, %v2701
  %v2767 = vpack.c.bf16 %v2715, %v2702
  %v2768 = vpack.c.bf16 %v2716, %v2703
  %v2769 = vpack.c.bf16 %v2717, %v2704
  %v2770 = vpack.c.bf16 %v2718, %v2705
  %v2771 = vpack.c.bf16 %v2719, %v2719
  %v2772 = vpack.c.bf16 %v2720, %v2720
  %v2773 = vpack.c.bf16 %v2721, %v2721
  %v2774 = vpack.c.bf16 %v2722, %v2722
  %v2775 = vpack.c.bf16 %v2723, %v2723
  %v2776 = vpack.c.bf16 %v2724, %v2724
  %v2777 = vpack.c.bf16 %v2725, %v2725
  %v2778 = vpack.c.bf16 %v2726, %v2726
  %v2779 = vpack.c.bf16 %v2727, %v2727
  %v2780 = vpack.c.bf16 %v2728, %v2728
  %v2781 = vpack.c.bf16 %v2729, %v2729
  %v2782 = vpack.c.bf16 %v2730, %v2730
  %v2783 = vpack.c.bf16 %v2731, %v2731
  %v2785 = vsel %vm967, %v2744, 0
  %v2788 = vsel %vm967, %v2757, 0
  %v2791 = vsel %vm967, %v2770, 0
  %v2794 = vsel %vm967, %v2783, 0
  %2796 = vmatprep.subr.bf16.mxu0 0
  %2797 = vmatpush1.bf16.msra.mxu0 %v774
  %2798 = vmatprep.subr.bf16.mxu0 0
  %2799 = vmatpush1.bf16.msra.mxu0 %v773
  %2800 = vmatprep.subr.bf16.mxu0 0
  %2801 = vmatpush1.bf16.msra.mxu0 %v772
  %2802 = vmatprep.subr.bf16.mxu0 0
  %2803 = vmatpush1.bf16.msra.mxu0 %v771
  %2804 = vmatprep.subr.bf16.mxu0 0
  %2805 = vmatpush1.bf16.msra.mxu0 %v770
  %2806 = vmatprep.subr.bf16.mxu0 0
  %2807 = vmatpush1.bf16.msra.mxu0 %v769
  %2808 = vmatprep.subr.bf16.mxu0 0
  %2809 = vmatpush1.bf16.msra.mxu0 %v768
  %2810 = vmatprep.subr.bf16.mxu0 0
  %2811 = vmatpush1.bf16.msra.mxu0 %v767
  %2812 = vmatprep.subr.bf16.mxu0 0
  %2813 = vmatpush2.bf16.msra.mxu0 %v782
  %2814 = vmatprep.subr.bf16.mxu0 0
  %2815 = vmatpush2.bf16.msra.mxu0 %v781
  %2816 = vmatprep.subr.bf16.mxu0 0
  %2817 = vmatpush2.bf16.msra.mxu0 %v780
  %2818 = vmatprep.subr.bf16.mxu0 0
  %2819 = vmatpush2.bf16.msra.mxu0 %v779
  %2820 = vmatprep.subr.bf16.mxu0 0
  %2821 = vmatpush2.bf16.msra.mxu0 %v778
  %2822 = vmatprep.subr.bf16.mxu0 0
  %2823 = vmatpush2.bf16.msra.mxu0 %v777
  %2824 = vmatprep.subr.bf16.mxu0 0
  %2825 = vmatpush2.bf16.msra.mxu0 %v776
  %2826 = vmatprep.subr.bf16.mxu0 0
  %2827 = vmatpush2.bf16.msra.mxu0 %v775
  %2828 = vmatprep.mubr.bf16.mxu0 %v2733
  %2829 = vmatmul.mubr.bf16.gmra.mxu0 %v2732
  %v2830 = vpop.f32.mrf.mxu0
  %v2831 = vadd.f32 0.0, %v2830
  %v2832 = vpop.f32.mrf.mxu0
  %v2833 = vpop.f32.mrf.mxu0
  %v2834 = vadd.f32 0.0, %v2833
  %v2835 = vpop.f32.mrf.mxu0
  %2836 = vmatprep.mubr.bf16.mxu0 %v2746
  %2837 = vmatmul.mubr.bf16.gmra.mxu0 %v2745
  %v2838 = vpop.f32.mrf.mxu0
  %v2839 = vadd.f32 0.0, %v2838
  %v2840 = vpop.f32.mrf.mxu0
  %v2841 = vpop.f32.mrf.mxu0
  %v2842 = vadd.f32 0.0, %v2841
  %v2843 = vpop.f32.mrf.mxu0
  %2844 = vmatprep.mubr.bf16.mxu0 %v2759
  %2845 = vmatmul.mubr.bf16.gmra.mxu0 %v2758
  %v2846 = vpop.f32.mrf.mxu0
  %v2847 = vadd.f32 0.0, %v2846
  %v2848 = vpop.f32.mrf.mxu0
  %v2849 = vpop.f32.mrf.mxu0
  %v2850 = vadd.f32 0.0, %v2849
  %v2851 = vpop.f32.mrf.mxu0
  %2852 = vmatprep.mubr.bf16.mxu0 %v2772
  %2853 = vmatmul.mubr.bf16.gmra.mxu0 %v2771
  %v2854 = vpop.f32.mrf.mxu0
  %v2855 = vadd.f32 0.0, %v2854
  %v2856 = vpop.f32.mrf.mxu0
  %v2857 = vpop.f32.mrf.mxu0
  %v2858 = vpop.f32.mrf.mxu0
  %2859 = vdwg.mxu0
  %2860 = vmatprep.subr.bf16.mxu0 0
  %2861 = vmatpush1.bf16.msra.mxu0 %v790
  %2862 = vmatprep.subr.bf16.mxu0 0
  %2863 = vmatpush1.bf16.msra.mxu0 %v789
  %2864 = vmatprep.subr.bf16.mxu0 0
  %2865 = vmatpush1.bf16.msra.mxu0 %v788
  %2866 = vmatprep.subr.bf16.mxu0 0
  %2867 = vmatpush1.bf16.msra.mxu0 %v787
  %2868 = vmatprep.subr.bf16.mxu0 0
  %2869 = vmatpush1.bf16.msra.mxu0 %v786
  %2870 = vmatprep.subr.bf16.mxu0 0
  %2871 = vmatpush1.bf16.msra.mxu0 %v785
  %2872 = vmatprep.subr.bf16.mxu0 0
  %2873 = vmatpush1.bf16.msra.mxu0 %v784
  %2874 = vmatprep.subr.bf16.mxu0 0
  %2875 = vmatpush1.bf16.msra.mxu0 %v783
  %2876 = vmatprep.subr.bf16.mxu0 0
  %2877 = vmatpush2.bf16.msra.mxu0 %v798
  %2878 = vmatprep.subr.bf16.mxu0 0
  %2879 = vmatpush2.bf16.msra.mxu0 %v797
  %2880 = vmatprep.subr.bf16.mxu0 0
  %2881 = vmatpush2.bf16.msra.mxu0 %v796
  %2882 = vmatprep.subr.bf16.mxu0 0
  %2883 = vmatpush2.bf16.msra.mxu0 %v795
  %2884 = vmatprep.subr.bf16.mxu0 0
  %2885 = vmatpush2.bf16.msra.mxu0 %v794
  %2886 = vmatprep.subr.bf16.mxu0 0
  %2887 = vmatpush2.bf16.msra.mxu0 %v793
  %2888 = vmatprep.subr.bf16.mxu0 0
  %2889 = vmatpush2.bf16.msra.mxu0 %v792
  %2890 = vmatprep.subr.bf16.mxu0 0
  %2891 = vmatpush2.bf16.msra.mxu0 %v791
  %2892 = vmatprep.mubr.bf16.mxu0 %v2735
  %2893 = vmatmul.mubr.bf16.gmra.mxu0 %v2734
  %v2894 = vpop.f32.mrf.mxu0
  %v2895 = vadd.f32 %v2831, %v2894
  %v2896 = vpop.f32.mrf.mxu0
  %v2897 = vpop.f32.mrf.mxu0
  %v2898 = vadd.f32 %v2834, %v2897
  %v2899 = vpop.f32.mrf.mxu0
  %2900 = vmatprep.mubr.bf16.mxu0 %v2748
  %2901 = vmatmul.mubr.bf16.gmra.mxu0 %v2747
  %v2902 = vpop.f32.mrf.mxu0
  %v2903 = vadd.f32 %v2839, %v2902
  %v2904 = vpop.f32.mrf.mxu0
  %v2905 = vpop.f32.mrf.mxu0
  %v2906 = vadd.f32 %v2842, %v2905
  %v2907 = vpop.f32.mrf.mxu0
  %2908 = vmatprep.mubr.bf16.mxu0 %v2761
  %2909 = vmatmul.mubr.bf16.gmra.mxu0 %v2760
  %v2910 = vpop.f32.mrf.mxu0
  %v2911 = vadd.f32 %v2847, %v2910
  %v2912 = vpop.f32.mrf.mxu0
  %v2913 = vpop.f32.mrf.mxu0
  %v2914 = vadd.f32 %v2850, %v2913
  %v2915 = vpop.f32.mrf.mxu0
  %2916 = vmatprep.mubr.bf16.mxu0 %v2774
  %2917 = vmatmul.mubr.bf16.gmra.mxu0 %v2773
  %v2918 = vpop.f32.mrf.mxu0
  %v2919 = vadd.f32 %v2855, %v2918
  %v2920 = vpop.f32.mrf.mxu0
  %v2921 = vpop.f32.mrf.mxu0
  %v2922 = vpop.f32.mrf.mxu0
  %2923 = vdwg.mxu0
  %2924 = vmatprep.subr.bf16.mxu0 0
  %2925 = vmatpush1.bf16.msra.mxu0 %v806
  %2926 = vmatprep.subr.bf16.mxu0 0
  %2927 = vmatpush1.bf16.msra.mxu0 %v805
  %2928 = vmatprep.subr.bf16.mxu0 0
  %2929 = vmatpush1.bf16.msra.mxu0 %v804
  %2930 = vmatprep.subr.bf16.mxu0 0
  %2931 = vmatpush1.bf16.msra.mxu0 %v803
  %2932 = vmatprep.subr.bf16.mxu0 0
  %2933 = vmatpush1.bf16.msra.mxu0 %v802
  %2934 = vmatprep.subr.bf16.mxu0 0
  %2935 = vmatpush1.bf16.msra.mxu0 %v801
  %2936 = vmatprep.subr.bf16.mxu0 0
  %2937 = vmatpush1.bf16.msra.mxu0 %v800
  %2938 = vmatprep.subr.bf16.mxu0 0
  %2939 = vmatpush1.bf16.msra.mxu0 %v799
  %2940 = vmatprep.subr.bf16.mxu0 0
  %2941 = vmatpush2.bf16.msra.mxu0 %v814
  %2942 = vmatprep.subr.bf16.mxu0 0
  %2943 = vmatpush2.bf16.msra.mxu0 %v813
  %2944 = vmatprep.subr.bf16.mxu0 0
  %2945 = vmatpush2.bf16.msra.mxu0 %v812
  %2946 = vmatprep.subr.bf16.mxu0 0
  %2947 = vmatpush2.bf16.msra.mxu0 %v811
  %2948 = vmatprep.subr.bf16.mxu0 0
  %2949 = vmatpush2.bf16.msra.mxu0 %v810
  %2950 = vmatprep.subr.bf16.mxu0 0
  %2951 = vmatpush2.bf16.msra.mxu0 %v809
  %2952 = vmatprep.subr.bf16.mxu0 0
  %2953 = vmatpush2.bf16.msra.mxu0 %v808
  %2954 = vmatprep.subr.bf16.mxu0 0
  %2955 = vmatpush2.bf16.msra.mxu0 %v807
  %2956 = vmatprep.mubr.bf16.mxu0 %v2737
  %2957 = vmatmul.mubr.bf16.gmra.mxu0 %v2736
  %v2958 = vpop.f32.mrf.mxu0
  %v2959 = vadd.f32 %v2895, %v2958
  %v2960 = vpop.f32.mrf.mxu0
  %v2961 = vpop.f32.mrf.mxu0
  %v2962 = vadd.f32 %v2898, %v2961
  %v2963 = vpop.f32.mrf.mxu0
  %2964 = vmatprep.mubr.bf16.mxu0 %v2750
  %2965 = vmatmul.mubr.bf16.gmra.mxu0 %v2749
  %v2966 = vpop.f32.mrf.mxu0
  %v2967 = vadd.f32 %v2903, %v2966
  %v2968 = vpop.f32.mrf.mxu0
  %v2969 = vpop.f32.mrf.mxu0
  %v2970 = vadd.f32 %v2906, %v2969
  %v2971 = vpop.f32.mrf.mxu0
  %2972 = vmatprep.mubr.bf16.mxu0 %v2763
  %2973 = vmatmul.mubr.bf16.gmra.mxu0 %v2762
  %v2974 = vpop.f32.mrf.mxu0
  %v2975 = vadd.f32 %v2911, %v2974
  %v2976 = vpop.f32.mrf.mxu0
  %v2977 = vpop.f32.mrf.mxu0
  %v2978 = vadd.f32 %v2914, %v2977
  %v2979 = vpop.f32.mrf.mxu0
  %2980 = vmatprep.mubr.bf16.mxu0 %v2776
  %2981 = vmatmul.mubr.bf16.gmra.mxu0 %v2775
  %v2982 = vpop.f32.mrf.mxu0
  %v2983 = vadd.f32 %v2919, %v2982
  %v2984 = vpop.f32.mrf.mxu0
  %v2985 = vpop.f32.mrf.mxu0
  %v2986 = vpop.f32.mrf.mxu0
  %2987 = vdwg.mxu0
  %2988 = vmatprep.subr.bf16.mxu0 0
  %2989 = vmatpush1.bf16.msra.mxu0 %v822
  %2990 = vmatprep.subr.bf16.mxu0 0
  %2991 = vmatpush1.bf16.msra.mxu0 %v821
  %2992 = vmatprep.subr.bf16.mxu0 0
  %2993 = vmatpush1.bf16.msra.mxu0 %v820
  %2994 = vmatprep.subr.bf16.mxu0 0
  %2995 = vmatpush1.bf16.msra.mxu0 %v819
  %2996 = vmatprep.subr.bf16.mxu0 0
  %2997 = vmatpush1.bf16.msra.mxu0 %v818
  %2998 = vmatprep.subr.bf16.mxu0 0
  %2999 = vmatpush1.bf16.msra.mxu0 %v817
  %3000 = vmatprep.subr.bf16.mxu0 0
  %3001 = vmatpush1.bf16.msra.mxu0 %v816
  %3002 = vmatprep.subr.bf16.mxu0 0
  %3003 = vmatpush1.bf16.msra.mxu0 %v815
  %3004 = vmatprep.subr.bf16.mxu0 0
  %3005 = vmatpush2.bf16.msra.mxu0 %v830
  %3006 = vmatprep.subr.bf16.mxu0 0
  %3007 = vmatpush2.bf16.msra.mxu0 %v829
  %3008 = vmatprep.subr.bf16.mxu0 0
  %3009 = vmatpush2.bf16.msra.mxu0 %v828
  %3010 = vmatprep.subr.bf16.mxu0 0
  %3011 = vmatpush2.bf16.msra.mxu0 %v827
  %3012 = vmatprep.subr.bf16.mxu0 0
  %3013 = vmatpush2.bf16.msra.mxu0 %v826
  %3014 = vmatprep.subr.bf16.mxu0 0
  %3015 = vmatpush2.bf16.msra.mxu0 %v825
  %3016 = vmatprep.subr.bf16.mxu0 0
  %3017 = vmatpush2.bf16.msra.mxu0 %v824
  %3018 = vmatprep.subr.bf16.mxu0 0
  %3019 = vmatpush2.bf16.msra.mxu0 %v823
  %3020 = vmatprep.mubr.bf16.mxu0 %v2739
  %3021 = vmatmul.mubr.bf16.gmra.mxu0 %v2738
  %v3022 = vpop.f32.mrf.mxu0
  %v3023 = vadd.f32 %v2959, %v3022
  %v3024 = vpop.f32.mrf.mxu0
  %v3025 = vpop.f32.mrf.mxu0
  %v3026 = vadd.f32 %v2962, %v3025
  %v3027 = vpop.f32.mrf.mxu0
  %3028 = vmatprep.mubr.bf16.mxu0 %v2752
  %3029 = vmatmul.mubr.bf16.gmra.mxu0 %v2751
  %v3030 = vpop.f32.mrf.mxu0
  %v3031 = vadd.f32 %v2967, %v3030
  %v3032 = vpop.f32.mrf.mxu0
  %v3033 = vpop.f32.mrf.mxu0
  %v3034 = vadd.f32 %v2970, %v3033
  %v3035 = vpop.f32.mrf.mxu0
  %3036 = vmatprep.mubr.bf16.mxu0 %v2765
  %3037 = vmatmul.mubr.bf16.gmra.mxu0 %v2764
  %v3038 = vpop.f32.mrf.mxu0
  %v3039 = vadd.f32 %v2975, %v3038
  %v3040 = vpop.f32.mrf.mxu0
  %v3041 = vpop.f32.mrf.mxu0
  %v3042 = vadd.f32 %v2978, %v3041
  %v3043 = vpop.f32.mrf.mxu0
  %3044 = vmatprep.mubr.bf16.mxu0 %v2778
  %3045 = vmatmul.mubr.bf16.gmra.mxu0 %v2777
  %v3046 = vpop.f32.mrf.mxu0
  %v3047 = vadd.f32 %v2983, %v3046
  %v3048 = vpop.f32.mrf.mxu0
  %v3049 = vpop.f32.mrf.mxu0
  %v3050 = vpop.f32.mrf.mxu0
  %3051 = vdwg.mxu0
  %3052 = vmatprep.subr.bf16.mxu0 0
  %3053 = vmatpush1.bf16.msra.mxu0 %v838
  %3054 = vmatprep.subr.bf16.mxu0 0
  %3055 = vmatpush1.bf16.msra.mxu0 %v837
  %3056 = vmatprep.subr.bf16.mxu0 0
  %3057 = vmatpush1.bf16.msra.mxu0 %v836
  %3058 = vmatprep.subr.bf16.mxu0 0
  %3059 = vmatpush1.bf16.msra.mxu0 %v835
  %3060 = vmatprep.subr.bf16.mxu0 0
  %3061 = vmatpush1.bf16.msra.mxu0 %v834
  %3062 = vmatprep.subr.bf16.mxu0 0
  %3063 = vmatpush1.bf16.msra.mxu0 %v833
  %3064 = vmatprep.subr.bf16.mxu0 0
  %3065 = vmatpush1.bf16.msra.mxu0 %v832
  %3066 = vmatprep.subr.bf16.mxu0 0
  %3067 = vmatpush1.bf16.msra.mxu0 %v831
  %3068 = vmatprep.subr.bf16.mxu0 0
  %3069 = vmatpush2.bf16.msra.mxu0 %v846
  %3070 = vmatprep.subr.bf16.mxu0 0
  %3071 = vmatpush2.bf16.msra.mxu0 %v845
  %3072 = vmatprep.subr.bf16.mxu0 0
  %3073 = vmatpush2.bf16.msra.mxu0 %v844
  %3074 = vmatprep.subr.bf16.mxu0 0
  %3075 = vmatpush2.bf16.msra.mxu0 %v843
  %3076 = vmatprep.subr.bf16.mxu0 0
  %3077 = vmatpush2.bf16.msra.mxu0 %v842
  %3078 = vmatprep.subr.bf16.mxu0 0
  %3079 = vmatpush2.bf16.msra.mxu0 %v841
  %3080 = vmatprep.subr.bf16.mxu0 0
  %3081 = vmatpush2.bf16.msra.mxu0 %v840
  %3082 = vmatprep.subr.bf16.mxu0 0
  %3083 = vmatpush2.bf16.msra.mxu0 %v839
  %3084 = vmatprep.mubr.bf16.mxu0 %v2741
  %3085 = vmatmul.mubr.bf16.gmra.mxu0 %v2740
  %v3086 = vpop.f32.mrf.mxu0
  %v3087 = vadd.f32 %v3023, %v3086
  %v3088 = vpop.f32.mrf.mxu0
  %v3089 = vpop.f32.mrf.mxu0
  %v3090 = vadd.f32 %v3026, %v3089
  %v3091 = vpop.f32.mrf.mxu0
  %3092 = vmatprep.mubr.bf16.mxu0 %v2754
  %3093 = vmatmul.mubr.bf16.gmra.mxu0 %v2753
  %v3094 = vpop.f32.mrf.mxu0
  %v3095 = vadd.f32 %v3031, %v3094
  %v3096 = vpop.f32.mrf.mxu0
  %v3097 = vpop.f32.mrf.mxu0
  %v3098 = vadd.f32 %v3034, %v3097
  %v3099 = vpop.f32.mrf.mxu0
  %3100 = vmatprep.mubr.bf16.mxu0 %v2767
  %3101 = vmatmul.mubr.bf16.gmra.mxu0 %v2766
  %v3102 = vpop.f32.mrf.mxu0
  %v3103 = vadd.f32 %v3039, %v3102
  %v3104 = vpop.f32.mrf.mxu0
  %v3105 = vpop.f32.mrf.mxu0
  %v3106 = vadd.f32 %v3042, %v3105
  %v3107 = vpop.f32.mrf.mxu0
  %3108 = vmatprep.mubr.bf16.mxu0 %v2780
  %3109 = vmatmul.mubr.bf16.gmra.mxu0 %v2779
  %v3110 = vpop.f32.mrf.mxu0
  %v3111 = vadd.f32 %v3047, %v3110
  %v3112 = vpop.f32.mrf.mxu0
  %v3113 = vpop.f32.mrf.mxu0
  %v3114 = vpop.f32.mrf.mxu0
  %3115 = vdwg.mxu0
  %3116 = vmatprep.subr.bf16.mxu0 0
  %3117 = vmatpush1.bf16.msra.mxu0 %v854
  %3118 = vmatprep.subr.bf16.mxu0 0
  %3119 = vmatpush1.bf16.msra.mxu0 %v853
  %3120 = vmatprep.subr.bf16.mxu0 0
  %3121 = vmatpush1.bf16.msra.mxu0 %v852
  %3122 = vmatprep.subr.bf16.mxu0 0
  %3123 = vmatpush1.bf16.msra.mxu0 %v851
  %3124 = vmatprep.subr.bf16.mxu0 0
  %3125 = vmatpush1.bf16.msra.mxu0 %v850
  %3126 = vmatprep.subr.bf16.mxu0 0
  %3127 = vmatpush1.bf16.msra.mxu0 %v849
  %3128 = vmatprep.subr.bf16.mxu0 0
  %3129 = vmatpush1.bf16.msra.mxu0 %v848
  %3130 = vmatprep.subr.bf16.mxu0 0
  %3131 = vmatpush1.bf16.msra.mxu0 %v847
  %3132 = vmatprep.subr.bf16.mxu0 0
  %3133 = vmatpush2.bf16.msra.mxu0 %v862
  %3134 = vmatprep.subr.bf16.mxu0 0
  %3135 = vmatpush2.bf16.msra.mxu0 %v861
  %3136 = vmatprep.subr.bf16.mxu0 0
  %3137 = vmatpush2.bf16.msra.mxu0 %v860
  %3138 = vmatprep.subr.bf16.mxu0 0
  %3139 = vmatpush2.bf16.msra.mxu0 %v859
  %3140 = vmatprep.subr.bf16.mxu0 0
  %3141 = vmatpush2.bf16.msra.mxu0 %v858
  %3142 = vmatprep.subr.bf16.mxu0 0
  %3143 = vmatpush2.bf16.msra.mxu0 %v857
  %3144 = vmatprep.subr.bf16.mxu0 0
  %3145 = vmatpush2.bf16.msra.mxu0 %v856
  %3146 = vmatprep.subr.bf16.mxu0 0
  %3147 = vmatpush2.bf16.msra.mxu0 %v855
  %3148 = vmatprep.mubr.bf16.mxu0 %v2743
  %3149 = vmatmul.mubr.bf16.gmra.mxu0 %v2742
  %v3150 = vpop.f32.mrf.mxu0
  %v3151 = vadd.f32 %v3087, %v3150
  %v3152 = vpop.f32.mrf.mxu0
  %v3153 = vpop.f32.mrf.mxu0
  %v3154 = vadd.f32 %v3090, %v3153
  %v3155 = vpop.f32.mrf.mxu0
  %3156 = vmatprep.mubr.bf16.mxu0 %v2756
  %3157 = vmatmul.mubr.bf16.gmra.mxu0 %v2755
  %v3158 = vpop.f32.mrf.mxu0
  %v3159 = vadd.f32 %v3095, %v3158
  %v3160 = vpop.f32.mrf.mxu0
  %v3161 = vpop.f32.mrf.mxu0
  %v3162 = vadd.f32 %v3098, %v3161
  %v3163 = vpop.f32.mrf.mxu0
  %3164 = vmatprep.mubr.bf16.mxu0 %v2769
  %3165 = vmatmul.mubr.bf16.gmra.mxu0 %v2768
  %v3166 = vpop.f32.mrf.mxu0
  %v3167 = vadd.f32 %v3103, %v3166
  %v3168 = vpop.f32.mrf.mxu0
  %v3169 = vpop.f32.mrf.mxu0
  %v3170 = vadd.f32 %v3106, %v3169
  %v3171 = vpop.f32.mrf.mxu0
  %3172 = vmatprep.mubr.bf16.mxu0 %v2782
  %3173 = vmatmul.mubr.bf16.gmra.mxu0 %v2781
  %v3174 = vpop.f32.mrf.mxu0
  %v3175 = vadd.f32 %v3111, %v3174
  %v3176 = vpop.f32.mrf.mxu0
  %v3177 = vpop.f32.mrf.mxu0
  %v3178 = vpop.f32.mrf.mxu0
  %3179 = vdwg.mxu0
  %3180 = vmatprep.subr.bf16.mxu0 0
  %3181 = vmatpush1.bf16.msra.mxu0 0
  %3182 = vmatprep.subr.bf16.mxu0 0
  %3183 = vmatpush1.bf16.msra.mxu0 0
  %3184 = vmatprep.subr.bf16.mxu0 0
  %3185 = vmatpush1.bf16.msra.mxu0 0
  %3186 = vmatprep.subr.bf16.mxu0 0
  %3187 = vmatpush1.bf16.msra.mxu0 0
  %3188 = vmatprep.subr.bf16.mxu0 0
  %3189 = vmatpush1.bf16.msra.mxu0 %v866
  %3190 = vmatprep.subr.bf16.mxu0 0
  %3191 = vmatpush1.bf16.msra.mxu0 %v865
  %3192 = vmatprep.subr.bf16.mxu0 0
  %3193 = vmatpush1.bf16.msra.mxu0 %v864
  %3194 = vmatprep.subr.bf16.mxu0 0
  %3195 = vmatpush1.bf16.msra.mxu0 %v863
  %3196 = vmatprep.subr.bf16.mxu0 0
  %3197 = vmatpush2.bf16.msra.mxu0 0
  %3198 = vmatprep.subr.bf16.mxu0 0
  %3199 = vmatpush2.bf16.msra.mxu0 0
  %3200 = vmatprep.subr.bf16.mxu0 0
  %3201 = vmatpush2.bf16.msra.mxu0 0
  %3202 = vmatprep.subr.bf16.mxu0 0
  %3203 = vmatpush2.bf16.msra.mxu0 0
  %3204 = vmatprep.subr.bf16.mxu0 0
  %3205 = vmatpush2.bf16.msra.mxu0 0
  %3206 = vmatprep.subr.bf16.mxu0 0
  %3207 = vmatpush2.bf16.msra.mxu0 0
  %3208 = vmatprep.subr.bf16.mxu0 0
  %3209 = vmatpush2.bf16.msra.mxu0 0
  %3210 = vmatprep.subr.bf16.mxu0 0
  %3211 = vmatpush2.bf16.msra.mxu0 0
  %3212 = vmatprep.mubr.bf16.mxu0 0
  %3213 = vmatmul.mubr.bf16.gmra.mxu0 %v2785
  %v3214 = vpop.f32.mrf.mxu0
  %v3215 = vadd.f32 %v3151, %v3214
  %v3216 = vpop.f32.mrf.mxu0
  %v3217 = vpop.f32.mrf.mxu0
  %v3218 = vadd.f32 %v3154, %v3217
  %v3219 = vpop.f32.mrf.mxu0
  %3220 = vmatprep.mubr.bf16.mxu0 0
  %3221 = vmatmul.mubr.bf16.gmra.mxu0 %v2788
  %v3222 = vpop.f32.mrf.mxu0
  %v3223 = vadd.f32 %v3159, %v3222
  %v3224 = vpop.f32.mrf.mxu0
  %v3225 = vpop.f32.mrf.mxu0
  %v3226 = vadd.f32 %v3162, %v3225
  %v3227 = vpop.f32.mrf.mxu0
  %3228 = vmatprep.mubr.bf16.mxu0 0
  %3229 = vmatmul.mubr.bf16.gmra.mxu0 %v2791
  %v3230 = vpop.f32.mrf.mxu0
  %v3231 = vadd.f32 %v3167, %v3230
  %v3232 = vpop.f32.mrf.mxu0
  %v3233 = vpop.f32.mrf.mxu0
  %v3234 = vadd.f32 %v3170, %v3233
  %v3235 = vpop.f32.mrf.mxu0
  %3236 = vmatprep.mubr.bf16.mxu0 0
  %3237 = vmatmul.mubr.bf16.gmra.mxu0 %v2794
  %v3238 = vpop.f32.mrf.mxu0
  %v3239 = vadd.f32 %v3175, %v3238
  %v3240 = vpop.f32.mrf.mxu0
  %v3241 = vpop.f32.mrf.mxu0
  %v3242 = vpop.f32.mrf.mxu0
  %3243 = vdwg.mxu0
  %v3244 = vmax.f32 %v2612, %v3215
  %v3245 = vmax.f32 %v2615, %v3218
  %v3246 = vmax.f32 %v2620, %v3223
  %v3247 = vmax.f32 %v2623, %v3226
  %v3248 = vmax.f32 %v2628, %v3231
  %v3249 = vmax.f32 %v2631, %v3234
  %v3250 = vmax.f32 %v2636, %v3239
  %v3251 = vmax.f32 %v2031, %v3244
  %v3252 = vmax.f32 %v2032, %v3245
  %v3253 = vmax.f32 %v2033, %v3246
  %v3254 = vmax.f32 %v2034, %v3247
  %v3255 = vmax.f32 %v2035, %v3248
  %v3256 = vmax.f32 %v2036, %v3249
  %v3257 = vmax.f32 %v2037, %v3250
  %v3258 = vld [vmem:[%s5] sm:$0x1]
  %v3260 = vlaneseq
  %v3261 = vshrl.u32 %v3260, 7
  %v3262 = vsub.s32 0, %v3261
  %v3263 = vrot.slane %v3258, %v3262
  %v3265 = vadd.f32 %v3251, %v3263
  %v3266 = vadd.f32 %v3252, %v3263
  %v3267 = vadd.f32 %v3253, %v3263
  %v3268 = vadd.f32 %v3254, %v3263
  %v3269 = vadd.f32 %v3255, %v3263
  %v3270 = vadd.f32 %v3256, %v3263
  %v3271 = vadd.f32 %v3257, %v3263
  %v3272 = vmax.f32 %v3265, 0.0
  %v3273 = vmax.f32 %v3266, 0.0
  %v3274 = vmax.f32 %v3267, 0.0
  %v3275 = vmax.f32 %v3268, 0.0
  %v3276 = vmax.f32 %v3269, 0.0
  %v3277 = vmax.f32 %v3270, 0.0
  %v3278 = vmax.f32 %v3271, 0.0
  %3279 = vst [vmem:[%s6] sm:$0xff] %v3272
  %3280 = vst [vmem:[%s6 + $0x8] sm:$0xff] %v3273
  %3281 = vst [vmem:[%s6 + $0x10] sm:$0xff] %v3274
  %3282 = vst [vmem:[%s6 + $0x18] sm:$0xff] %v3275
  %3283 = vst [vmem:[%s6 + $0x20] sm:$0xff] %v3276
  %3284 = vst [vmem:[%s6 + $0x28] sm:$0xff] %v3277
  %3285 = vst [vmem:[%s6 + $0x30] sm:$0x3] %v3278
  // Predicated region
  $region26: #{convnet_forward.4} parent=0 // pred_check
    _
  $region27: #{convnet_forward.4} parent=0 // pred_check_branch
    %3287 = sbr.rel (0) target = $region29
  $region28: #{convnet_forward.4} parent=0 // pred_region
    _
  $region29: #{convnet_forward.4} parent=0 // pred_fallthru
    _
  // Predicated region
  $region30: #{convnet_forward.4} parent=0 // pred_check
    _
  $region31: #{convnet_forward.4} parent=0 // pred_check_branch
    %3289 = sbr.rel (0) target = $region33
  $region32: #{convnet_forward.4} parent=0 // pred_region
    _
  $region33: #{convnet_forward.4} parent=0 // pred_fallthru
    _

// kernel: convnet_forward.5
$region0: #{convnet_forward.5}
  #allocation0 [shape = 'u32[]', space=smem, size = 0x4, offset = 0x4, fixed_abs, tag = 'smem constant byte address 0x4 - core index']
  #allocation1 [shape = 'u32[144,128]{1,0:T(1,128)}', space=vmem, size = 0x12000, scoped, tag = 'internal scratch']
  #allocation2 [shape = 'f32[2,1024]{1,0:T(2,128)}', space=vmem, size = 0x2000, scoped, tag = 'scratch operand']
  %s0 = inlined_call_operand.vmem [shape: f32[2,3200], index: 0, kind: input, shape index: {}]
  %s1 = inlined_call_operand.vmem [shape: bf16[3200,1024], index: 1, kind: input, shape index: {}]
  %s2 = inlined_call_operand.vmem [shape: f32[1,1024], index: 2, kind: input, shape index: {}]
  %s3 = inlined_call_operand.vmem [shape: bf16[1024,1024], index: 3, kind: input, shape index: {}]
  %s4 = inlined_call_operand.vmem [shape: f32[1,1024], index: 4, kind: input, shape index: {}]
  %s5 = inlined_call_operand.hbm [shape: f32[2,1024], index: 5, kind: output, shape index: {}]
  %s6 = sld [smem:[#allocation0]]
  $region99: #{convnet_forward.5} parent=0
    _
  %s8 = ssub.s32 1, %s6
  %s9 = scalar_select 0, %s8, %s6
  $region1: #{convnet_forward.5} parent=0
    #allocation3 [shape = 'u8[3276800]{0}', space=vmem, size = 0x320000, scoped, tag = 'input window, operand 1']
    #allocation4 [shape = 'u8[8192]{0}', space=vmem, size = 0x2000, scoped, tag = 'output window, operand 0, single buffered']
    #allocation5 [shape = 's32[2]{0}', space=sflag, size = 0x8, scoped, tag = 'scoped memory for convnet_forward.5']
    %10 = vsyncpa [#allocation5], 0
    loop: start=0, step=1, limit=6
    $region2: #{convnet_forward.5} parent=1 // loop_pre_header
      _
    $region3: #{convnet_forward.5} parent=1 // loop_header
      %s12 = sphi 0, %s16
      %p13 = scmp.ge.s32.totalorder %s12, 6
      %s20 = sphi 0, %s20
      %s22 = sphi 0, %s20
      %s23 = sphi 0, %s22
      %s37 = sphi 0, %s23
      %s43 = sphi 0, %s45
      %s46 = sphi 0, %s43
      %s47 = sphi 0, %s46
      %s63 = sphi 0, %s47
      %s69 = sphi 0, %s71
      %s72 = sphi 0, %s69
      %s73 = sphi 0, %s72
      %s89 = sphi 0, %s73
      %s95 = sphi 0, %s97
      %s98 = sphi 0, %s95
      %s99 = sphi 0, %s98
      %s115 = sphi 0, %s99
      %s119 = sphi 0, %s119
      %s121 = sphi 0, %s119
      %s122 = sphi 0, %s121
      %s136 = sphi 0, %s122
      %s140 = sphi 0, %s140
      %s142 = sphi 0, %s140
      %s143 = sphi 0, %s142
      %s157 = sphi 0, %s143
    $region4: #{convnet_forward.5} parent=1 // loop_header_branch
      %15 = sbr.rel (%p13) target = $region8
    $region5: #{convnet_forward.5} parent=1 // loop_body
      %s17 = ssub.s32 %s12, 1
      %s18 = ssub.s32 %s12, 2
      %s19 = sadd.s32 %s12, 1
      %s21 = sadd.s32 %s20, 1
      %p24 = scmp.eq.s32.totalorder %s12, 3
      %p25 = scmp.ne.s32.totalorder %s20, %s22
      %p26 = scmp.eq.s32.totalorder %s12, 0
      %p27 = por %p25, %p26
      %p28 = scmp.ne.s32.totalorder %s20, %s22
      %p29 = scmp.eq.s32.totalorder %s17, 3
      %p30 = por %p28, %p29
      %p31 = scmp.ne.s32.totalorder %s22, %s23
      %p32 = scmp.eq.s32.totalorder %s17, 0
      %p33 = por %p31, %p32
      %p34 = scmp.ne.s32.totalorder %s22, %s23
      %p35 = scmp.eq.s32.totalorder %s18, 3
      %p36 = por %p34, %p35
      %p38 = scmp.ne.s32.totalorder %s23, %s37
      %p39 = scmp.eq.s32.totalorder %s18, 0
      %p40 = por %p38, %p39
      %s41 = ssub.s32 %s12, %s19
      %p42 = scmp.eq.s32.totalorder %s41, 0
      %s44 = sadd.s32 %s43, 1
      %s45 = scalar_select %p42, %s43, %s44
      %p48 = pneg %p42
      %p49 = scmp.eq.s32.totalorder %s12, 3
      %p50 = por %p48, %p49
      %p51 = scmp.ne.s32.totalorder %s43, %s46
      %p52 = scmp.eq.s32.totalorder %s12, 0
      %p53 = por %p51, %p52
      %p54 = scmp.ne.s32.totalorder %s43, %s46
      %p55 = scmp.eq.s32.totalorder %s17, 3
      %p56 = por %p54, %p55
      %p57 = scmp.ne.s32.totalorder %s46, %s47
      %p58 = scmp.eq.s32.totalorder %s17, 0
      %p59 = por %p57, %p58
      %p60 = scmp.ne.s32.totalorder %s46, %s47
      %p61 = scmp.eq.s32.totalorder %s18, 3
      %p62 = por %p60, %p61
      %p64 = scmp.ne.s32.totalorder %s47, %s63
      %p65 = scmp.eq.s32.totalorder %s18, 0
      %p66 = por %p64, %p65
      %s67 = ssub.s32 %s12, %s19
      %p68 = scmp.eq.s32.totalorder %s67, 0
      %s70 = sadd.s32 %s69, 1
      %s71 = scalar_select %p68, %s69, %s70
      %p74 = pneg %p68
      %p75 = scmp.eq.s32.totalorder %s12, 3
      %p76 = por %p74, %p75
      %p77 = scmp.ne.s32.totalorder %s69, %s72
      %p78 = scmp.eq.s32.totalorder %s12, 0
      %p79 = por %p77, %p78
      %p80 = scmp.ne.s32.totalorder %s69, %s72
      %p81 = scmp.eq.s32.totalorder %s17, 3
      %p82 = por %p80, %p81
      %p83 = scmp.ne.s32.totalorder %s72, %s73
      %p84 = scmp.eq.s32.totalorder %s17, 0
      %p85 = por %p83, %p84
      %p86 = scmp.ne.s32.totalorder %s72, %s73
      %p87 = scmp.eq.s32.totalorder %s18, 3
      %p88 = por %p86, %p87
      %p90 = scmp.ne.s32.totalorder %s73, %s89
      %p91 = scmp.eq.s32.totalorder %s18, 0
      %p92 = por %p90, %p91
      %s93 = ssub.s32 %s12, %s19
      %p94 = scmp.eq.s32.totalorder %s93, 0
      %s96 = sadd.s32 %s95, 1
      %s97 = scalar_select %p94, %s95, %s96
      %p100 = pneg %p94
      %p101 = scmp.eq.s32.totalorder %s12, 3
      %p102 = por %p100, %p101
      %p103 = scmp.ne.s32.totalorder %s95, %s98
      %p104 = scmp.eq.s32.totalorder %s12, 0
      %p105 = por %p103, %p104
      %p106 = scmp.ne.s32.totalorder %s95, %s98
      %p107 = scmp.eq.s32.totalorder %s17, 3
      %p108 = por %p106, %p107
      %p109 = scmp.ne.s32.totalorder %s98, %s99
      %p110 = scmp.eq.s32.totalorder %s17, 0
      %p111 = por %p109, %p110
      %p112 = scmp.ne.s32.totalorder %s98, %s99
      %p113 = scmp.eq.s32.totalorder %s18, 3
      %p114 = por %p112, %p113
      %p116 = scmp.ne.s32.totalorder %s99, %s115
      %p117 = scmp.eq.s32.totalorder %s18, 0
      %p118 = por %p116, %p117
      %s120 = sadd.s32 %s119, 1
      %p123 = scmp.eq.s32.totalorder %s12, 3
      %p124 = scmp.ne.s32.totalorder %s119, %s121
      %p125 = scmp.eq.s32.totalorder %s12, 0
      %p126 = por %p124, %p125
      %p127 = scmp.ne.s32.totalorder %s119, %s121
      %p128 = scmp.eq.s32.totalorder %s17, 3
      %p129 = por %p127, %p128
      %p130 = scmp.ne.s32.totalorder %s121, %s122
      %p131 = scmp.eq.s32.totalorder %s17, 0
      %p132 = por %p130, %p131
      %p133 = scmp.ne.s32.totalorder %s121, %s122
      %p134 = scmp.eq.s32.totalorder %s18, 3
      %p135 = por %p133, %p134
      %p137 = scmp.ne.s32.totalorder %s122, %s136
      %p138 = scmp.eq.s32.totalorder %s18, 0
      %p139 = por %p137, %p138
      %s141 = sadd.s32 %s140, 1
      %p144 = scmp.eq.s32.totalorder %s12, 3
      %p145 = scmp.ne.s32.totalorder %s140, %s142
      %p146 = scmp.eq.s32.totalorder %s12, 0
      %p147 = por %p145, %p146
      %p148 = scmp.ne.s32.totalorder %s140, %s142
      %p149 = scmp.eq.s32.totalorder %s17, 3
      %p150 = por %p148, %p149
      %p151 = scmp.ne.s32.totalorder %s142, %s143
      %p152 = scmp.eq.s32.totalorder %s17, 0
      %p153 = por %p151, %p152
      %p154 = scmp.ne.s32.totalorder %s142, %s143
      %p155 = scmp.eq.s32.totalorder %s18, 3
      %p156 = por %p154, %p155
      %p158 = scmp.ne.s32.totalorder %s143, %s157
      %p159 = scmp.eq.s32.totalorder %s18, 0
      %p160 = por %p158, %p159
      %p161 = scmp.le.s32.totalorder 1, %s12
      %p162 = scmp.lt.s32.totalorder %s12, 5
      %p163 = pnand %p161, %p162
      %p164 = pneg %p163
      // Predicated region
      $region9: #{convnet_forward.5} parent=5 // pred_check
        _
      $region10: #{convnet_forward.5} parent=5 // pred_check_branch
        %166 = sbr.rel (%p163) target = $region12
      $region11: #{convnet_forward.5} parent=5 // pred_region
        %s167 = ssub.s32 %s12, 1
        // Predicated region
        $region13: #{convnet_forward.5} parent=11 // pred_check
          %p168 = pneg %p33
        $region14: #{convnet_forward.5} parent=11 // pred_check_branch
          %170 = sbr.rel (%p168) target = $region16
        $region15: #{convnet_forward.5} parent=11 // pred_region
          _
        $region16: #{convnet_forward.5} parent=11 // pred_fallthru
          _
        // Predicated region
        $region17: #{convnet_forward.5} parent=11 // pred_check
          %p171 = pneg %p132
        $region18: #{convnet_forward.5} parent=11 // pred_check_branch
          %173 = sbr.rel (%p171) target = $region20
        $region19: #{convnet_forward.5} parent=11 // pred_region
          _
        $region20: #{convnet_forward.5} parent=11 // pred_fallthru
          _
      $region12: #{convnet_forward.5} parent=5 // pred_fallthru
        _
      %p174 = scmp.lt.s32.totalorder %s12, 4
      // Predicated region
      $region21: #{convnet_forward.5} parent=5 // pred_check
        %p175 = pneg %p174
      $region22: #{convnet_forward.5} parent=5 // pred_check_branch
        %177 = sbr.rel (%p175) target = $region24
      $region23: #{convnet_forward.5} parent=5 // pred_region
        // Predicated region
        $region25: #{convnet_forward.5} parent=23 // pred_check
          %p178 = pneg %p53
        $region26: #{convnet_forward.5} parent=23 // pred_check_branch
          %180 = sbr.rel (%p178) target = $region28
        $region27: #{convnet_forward.5} parent=23 // pred_region
          %s181 = sand.u32 %s43, 1
          %s182 = sand.u32 %s43, 1
          %s183 = smul.addr %s182, 3200
          %s184 = scalar_lea.vmem [#allocation3], %s183
          %s185 = smul.u32 2, %s12
          %s186 = smul.addr %s185, 4
          %s187 = scalar_lea.vmem %s1, %s186
          // Predicated region
          $region29: #{convnet_forward.5} parent=27 // pred_check
            _
          $region30: #{convnet_forward.5} parent=27 // pred_check_branch
            %189 = sbr.rel (0) target = $region32
          $region31: #{convnet_forward.5} parent=27 // pred_region
            // Predicated region
            $region33: #{convnet_forward.5} parent=31 // pred_check
              _
            $region34: #{convnet_forward.5} parent=31 // pred_check_branch
              %191 = sbr.rel (0) target = $region36
            $region35: #{convnet_forward.5} parent=31 // pred_region
              // Predicated region
              $region48: #{convnet_forward.5} parent=35 // pred_check
                _
              $region49: #{convnet_forward.5} parent=35 // pred_check_branch
                %1005 = sbr.rel (0) target = $region51
              $region50: #{convnet_forward.5} parent=35 // pred_region
                loop: start=0, step=1, limit=1
                $region52: #{convnet_forward.5} parent=50 // loop_pre_header
                  _
                $region53: #{convnet_forward.5} parent=50 // loop_header
                  %s1007 = sphi 0, %s1011
                  %p1008 = scmp.ge.s32.totalorder %s1007, 1
                  %s1012 = sphi %s187, %s187
                  %s1013 = sphi %s184, %s184
                $region54: #{convnet_forward.5} parent=50 // loop_header_branch
                  %1010 = sbr.rel (%p1008) target = $region58
                $region55: #{convnet_forward.5} parent=50 // loop_body
                  %v1014 = vld [vmem:[%s1012] sm:$0xff]
                  %1015 = vst [vmem:[%s1013] sm:$0xff] %v1014
                  %v1016 = vld [vmem:[%s1012 + $0x20] sm:$0xff]
                  %1017 = vst [vmem:[%s1013 + $0x8] sm:$0xff] %v1016
                  %v1018 = vld [vmem:[%s1012 + $0x40] sm:$0xff]
                  %1019 = vst [vmem:[%s1013 + $0x10] sm:$0xff] %v1018
                  %v1020 = vld [vmem:[%s1012 + $0x60] sm:$0xff]
                  %1021 = vst [vmem:[%s1013 + $0x18] sm:$0xff] %v1020
                  %v1022 = vld [vmem:[%s1012 + $0x80] sm:$0xff]
                  %1023 = vst [vmem:[%s1013 + $0x20] sm:$0xff] %v1022
                  %v1024 = vld [vmem:[%s1012 + $0xa0] sm:$0xff]
                  %1025 = vst [vmem:[%s1013 + $0x28] sm:$0xff] %v1024
                  %v1026 = vld [vmem:[%s1012 + $0xc0] sm:$0xff]
                  %1027 = vst [vmem:[%s1013 + $0x30] sm:$0xff] %v1026
                  %v1028 = vld [vmem:[%s1012 + $0xe0] sm:$0xff]
                  %1029 = vst [vmem:[%s1013 + $0x38] sm:$0xff] %v1028
                  %v1030 = vld [vmem:[%s1012 + $0x100] sm:$0xff]
                  %1031 = vst [vmem:[%s1013 + $0x40] sm:$0xff] %v1030
                  %v1032 = vld [vmem:[%s1012 + $0x120] sm:$0xff]
                  %1033 = vst [vmem:[%s1013 + $0x48] sm:$0xff] %v1032
                  %v1034 = vld [vmem:[%s1012 + $0x140] sm:$0xff]
                  %1035 = vst [vmem:[%s1013 + $0x50] sm:$0xff] %v1034
                  %v1036 = vld [vmem:[%s1012 + $0x160] sm:$0xff]
                  %1037 = vst [vmem:[%s1013 + $0x58] sm:$0xff] %v1036
                  %v1038 = vld [vmem:[%s1012 + $0x180] sm:$0xff]
                  %1039 = vst [vmem:[%s1013 + $0x60] sm:$0xff] %v1038
                  %v1040 = vld [vmem:[%s1012 + $0x1a0] sm:$0xff]
                  %1041 = vst [vmem:[%s1013 + $0x68] sm:$0xff] %v1040
                  %v1042 = vld [vmem:[%s1012 + $0x1c0] sm:$0xff]
                  %1043 = vst [vmem:[%s1013 + $0x70] sm:$0xff] %v1042
                  %v1044 = vld [vmem:[%s1012 + $0x1e0] sm:$0xff]
                  %1045 = vst [vmem:[%s1013 + $0x78] sm:$0xff] %v1044
                  %v1046 = vld [vmem:[%s1012 + $0x200] sm:$0xff]
                  %1047 = vst [vmem:[%s1013 + $0x80] sm:$0xff] %v1046
                  %v1048 = vld [vmem:[%s1012 + $0x220] sm:$0xff]
                  %1049 = vst [vmem:[%s1013 + $0x88] sm:$0xff] %v1048
                  %v1050 = vld [vmem:[%s1012 + $0x240] sm:$0xff]
                  %1051 = vst [vmem:[%s1013 + $0x90] sm:$0xff] %v1050
                  %v1052 = vld [vmem:[%s1012 + $0x260] sm:$0xff]
                  %1053 = vst [vmem:[%s1013 + $0x98] sm:$0xff] %v1052
                  %v1054 = vld [vmem:[%s1012 + $0x280] sm:$0xff]
                  %1055 = vst [vmem:[%s1013 + $0xa0] sm:$0xff] %v1054
                  %v1056 = vld [vmem:[%s1012 + $0x2a0] sm:$0xff]
                  %1057 = vst [vmem:[%s1013 + $0xa8] sm:$0xff] %v1056
                  %v1058 = vld [vmem:[%s1012 + $0x2c0] sm:$0xff]
                  %1059 = vst [vmem:[%s1013 + $0xb0] sm:$0xff] %v1058
                  %v1060 = vld [vmem:[%s1012 + $0x2e0] sm:$0xff]
                  %1061 = vst [vmem:[%s1013 + $0xb8] sm:$0xff] %v1060
                  %v1062 = vld [vmem:[%s1012 + $0x300] sm:$0xff]
                  %1063 = vst [vmem:[%s1013 + $0xc0] sm:$0xff] %v1062
                  %v1064 = vld [vmem:[%s1012 + $0x320] sm:$0xff]
                  %1065 = vst [vmem:[%s1013 + $0xc8] sm:$0xff] %v1064
                  %v1066 = vld [vmem:[%s1012 + $0x340] sm:$0xff]
                  %1067 = vst [vmem:[%s1013 + $0xd0] sm:$0xff] %v1066
                  %v1068 = vld [vmem:[%s1012 + $0x360] sm:$0xff]
                  %1069 = vst [vmem:[%s1013 + $0xd8] sm:$0xff] %v1068
                  %v1070 = vld [vmem:[%s1012 + $0x380] sm:$0xff]
                  %1071 = vst [vmem:[%s1013 + $0xe0] sm:$0xff] %v1070
                  %v1072 = vld [vmem:[%s1012 + $0x3a0] sm:$0xff]
                  %1073 = vst [vmem:[%s1013 + $0xe8] sm:$0xff] %v1072
                  %v1074 = vld [vmem:[%s1012 + $0x3c0] sm:$0xff]
                  %1075 = vst [vmem:[%s1013 + $0xf0] sm:$0xff] %v1074
                  %v1076 = vld [vmem:[%s1012 + $0x3e0] sm:$0xff]
                  %1077 = vst [vmem:[%s1013 + $0xf8] sm:$0xff] %v1076
                  %v1078 = vld [vmem:[%s1012 + $0x400] sm:$0xff]
                  %1079 = vst [vmem:[%s1013 + $0x100] sm:$0xff] %v1078
                  %v1080 = vld [vmem:[%s1012 + $0x420] sm:$0xff]
                  %1081 = vst [vmem:[%s1013 + $0x108] sm:$0xff] %v1080
                  %v1082 = vld [vmem:[%s1012 + $0x440] sm:$0xff]
                  %1083 = vst [vmem:[%s1013 + $0x110] sm:$0xff] %v1082
                  %v1084 = vld [vmem:[%s1012 + $0x460] sm:$0xff]
                  %1085 = vst [vmem:[%s1013 + $0x118] sm:$0xff] %v1084
                  %v1086 = vld [vmem:[%s1012 + $0x480] sm:$0xff]
                  %1087 = vst [vmem:[%s1013 + $0x120] sm:$0xff] %v1086
                  %v1088 = vld [vmem:[%s1012 + $0x4a0] sm:$0xff]
                  %1089 = vst [vmem:[%s1013 + $0x128] sm:$0xff] %v1088
                  %v1090 = vld [vmem:[%s1012 + $0x4c0] sm:$0xff]
                  %1091 = vst [vmem:[%s1013 + $0x130] sm:$0xff] %v1090
                  %v1092 = vld [vmem:[%s1012 + $0x4e0] sm:$0xff]
                  %1093 = vst [vmem:[%s1013 + $0x138] sm:$0xff] %v1092
                  %v1094 = vld [vmem:[%s1012 + $0x500] sm:$0xff]
                  %1095 = vst [vmem:[%s1013 + $0x140] sm:$0xff] %v1094
                  %v1096 = vld [vmem:[%s1012 + $0x520] sm:$0xff]
                  %1097 = vst [vmem:[%s1013 + $0x148] sm:$0xff] %v1096
                  %v1098 = vld [vmem:[%s1012 + $0x540] sm:$0xff]
                  %1099 = vst [vmem:[%s1013 + $0x150] sm:$0xff] %v1098
                  %v1100 = vld [vmem:[%s1012 + $0x560] sm:$0xff]
                  %1101 = vst [vmem:[%s1013 + $0x158] sm:$0xff] %v1100
                  %v1102 = vld [vmem:[%s1012 + $0x580] sm:$0xff]
                  %1103 = vst [vmem:[%s1013 + $0x160] sm:$0xff] %v1102
                  %v1104 = vld [vmem:[%s1012 + $0x5a0] sm:$0xff]
                  %1105 = vst [vmem:[%s1013 + $0x168] sm:$0xff] %v1104
                  %v1106 = vld [vmem:[%s1012 + $0x5c0] sm:$0xff]
                  %1107 = vst [vmem:[%s1013 + $0x170] sm:$0xff] %v1106
                  %v1108 = vld [vmem:[%s1012 + $0x5e0] sm:$0xff]
                  %1109 = vst [vmem:[%s1013 + $0x178] sm:$0xff] %v1108
                  %v1110 = vld [vmem:[%s1012 + $0x600] sm:$0xff]
                  %1111 = vst [vmem:[%s1013 + $0x180] sm:$0xff] %v1110
                  %v1112 = vld [vmem:[%s1012 + $0x620] sm:$0xff]
                  %1113 = vst [vmem:[%s1013 + $0x188] sm:$0xff] %v1112
                  %v1114 = vld [vmem:[%s1012 + $0x640] sm:$0xff]
                  %1115 = vst [vmem:[%s1013 + $0x190] sm:$0xff] %v1114
                  %v1116 = vld [vmem:[%s1012 + $0x660] sm:$0xff]
                  %1117 = vst [vmem:[%s1013 + $0x198] sm:$0xff] %v1116
                  %v1118 = vld [vmem:[%s1012 + $0x680] sm:$0xff]
                  %1119 = vst [vmem:[%s1013 + $0x1a0] sm:$0xff] %v1118
                  %v1120 = vld [vmem:[%s1012 + $0x6a0] sm:$0xff]
                  %1121 = vst [vmem:[%s1013 + $0x1a8] sm:$0xff] %v1120
                  %v1122 = vld [vmem:[%s1012 + $0x6c0] sm:$0xff]
                  %1123 = vst [vmem:[%s1013 + $0x1b0] sm:$0xff] %v1122
                  %v1124 = vld [vmem:[%s1012 + $0x6e0] sm:$0xff]
                  %1125 = vst [vmem:[%s1013 + $0x1b8] sm:$0xff] %v1124
                  %v1126 = vld [vmem:[%s1012 + $0x700] sm:$0xff]
                  %1127 = vst [vmem:[%s1013 + $0x1c0] sm:$0xff] %v1126
                  %v1128 = vld [vmem:[%s1012 + $0x720] sm:$0xff]
                  %1129 = vst [vmem:[%s1013 + $0x1c8] sm:$0xff] %v1128
                  %v1130 = vld [vmem:[%s1012 + $0x740] sm:$0xff]
                  %1131 = vst [vmem:[%s1013 + $0x1d0] sm:$0xff] %v1130
                  %v1132 = vld [vmem:[%s1012 + $0x760] sm:$0xff]
                  %1133 = vst [vmem:[%s1013 + $0x1d8] sm:$0xff] %v1132
                  %v1134 = vld [vmem:[%s1012 + $0x780] sm:$0xff]
                  %1135 = vst [vmem:[%s1013 + $0x1e0] sm:$0xff] %v1134
                  %v1136 = vld [vmem:[%s1012 + $0x7a0] sm:$0xff]
                  %1137 = vst [vmem:[%s1013 + $0x1e8] sm:$0xff] %v1136
                  %v1138 = vld [vmem:[%s1012 + $0x7c0] sm:$0xff]
                  %1139 = vst [vmem:[%s1013 + $0x1f0] sm:$0xff] %v1138
                  %v1140 = vld [vmem:[%s1012 + $0x7e0] sm:$0xff]
                  %1141 = vst [vmem:[%s1013 + $0x1f8] sm:$0xff] %v1140
                  %v1142 = vld [vmem:[%s1012 + $0x800] sm:$0xff]
                  %1143 = vst [vmem:[%s1013 + $0x200] sm:$0xff] %v1142
                  %v1144 = vld [vmem:[%s1012 + $0x820] sm:$0xff]
                  %1145 = vst [vmem:[%s1013 + $0x208] sm:$0xff] %v1144
                  %v1146 = vld [vmem:[%s1012 + $0x840] sm:$0xff]
                  %1147 = vst [vmem:[%s1013 + $0x210] sm:$0xff] %v1146
                  %v1148 = vld [vmem:[%s1012 + $0x860] sm:$0xff]
                  %1149 = vst [vmem:[%s1013 + $0x218] sm:$0xff] %v1148
                  %v1150 = vld [vmem:[%s1012 + $0x880] sm:$0xff]
                  %1151 = vst [vmem:[%s1013 + $0x220] sm:$0xff] %v1150
                  %v1152 = vld [vmem:[%s1012 + $0x8a0] sm:$0xff]
                  %1153 = vst [vmem:[%s1013 + $0x228] sm:$0xff] %v1152
                  %v1154 = vld [vmem:[%s1012 + $0x8c0] sm:$0xff]
                  %1155 = vst [vmem:[%s1013 + $0x230] sm:$0xff] %v1154
                  %v1156 = vld [vmem:[%s1012 + $0x8e0] sm:$0xff]
                  %1157 = vst [vmem:[%s1013 + $0x238] sm:$0xff] %v1156
                  %v1158 = vld [vmem:[%s1012 + $0x900] sm:$0xff]
                  %1159 = vst [vmem:[%s1013 + $0x240] sm:$0xff] %v1158
                  %v1160 = vld [vmem:[%s1012 + $0x920] sm:$0xff]
                  %1161 = vst [vmem:[%s1013 + $0x248] sm:$0xff] %v1160
                  %v1162 = vld [vmem:[%s1012 + $0x940] sm:$0xff]
                  %1163 = vst [vmem:[%s1013 + $0x250] sm:$0xff] %v1162
                  %v1164 = vld [vmem:[%s1012 + $0x960] sm:$0xff]
                  %1165 = vst [vmem:[%s1013 + $0x258] sm:$0xff] %v1164
                  %v1166 = vld [vmem:[%s1012 + $0x980] sm:$0xff]
                  %1167 = vst [vmem:[%s1013 + $0x260] sm:$0xff] %v1166
                  %v1168 = vld [vmem:[%s1012 + $0x9a0] sm:$0xff]
                  %1169 = vst [vmem:[%s1013 + $0x268] sm:$0xff] %v1168
                  %v1170 = vld [vmem:[%s1012 + $0x9c0] sm:$0xff]
                  %1171 = vst [vmem:[%s1013 + $0x270] sm:$0xff] %v1170
                  %v1172 = vld [vmem:[%s1012 + $0x9e0] sm:$0xff]
                  %1173 = vst [vmem:[%s1013 + $0x278] sm:$0xff] %v1172
                  %v1174 = vld [vmem:[%s1012 + $0xa00] sm:$0xff]
                  %1175 = vst [vmem:[%s1013 + $0x280] sm:$0xff] %v1174
                  %v1176 = vld [vmem:[%s1012 + $0xa20] sm:$0xff]
                  %1177 = vst [vmem:[%s1013 + $0x288] sm:$0xff] %v1176
                  %v1178 = vld [vmem:[%s1012 + $0xa40] sm:$0xff]
                  %1179 = vst [vmem:[%s1013 + $0x290] sm:$0xff] %v1178
                  %v1180 = vld [vmem:[%s1012 + $0xa60] sm:$0xff]
                  %1181 = vst [vmem:[%s1013 + $0x298] sm:$0xff] %v1180
                  %v1182 = vld [vmem:[%s1012 + $0xa80] sm:$0xff]
                  %1183 = vst [vmem:[%s1013 + $0x2a0] sm:$0xff] %v1182
                  %v1184 = vld [vmem:[%s1012 + $0xaa0] sm:$0xff]
                  %1185 = vst [vmem:[%s1013 + $0x2a8] sm:$0xff] %v1184
                  %v1186 = vld [vmem:[%s1012 + $0xac0] sm:$0xff]
                  %1187 = vst [vmem:[%s1013 + $0x2b0] sm:$0xff] %v1186
                  %v1188 = vld [vmem:[%s1012 + $0xae0] sm:$0xff]
                  %1189 = vst [vmem:[%s1013 + $0x2b8] sm:$0xff] %v1188
                  %v1190 = vld [vmem:[%s1012 + $0xb00] sm:$0xff]
                  %1191 = vst [vmem:[%s1013 + $0x2c0] sm:$0xff] %v1190
                  %v1192 = vld [vmem:[%s1012 + $0xb20] sm:$0xff]
                  %1193 = vst [vmem:[%s1013 + $0x2c8] sm:$0xff] %v1192
                  %v1194 = vld [vmem:[%s1012 + $0xb40] sm:$0xff]
                  %1195 = vst [vmem:[%s1013 + $0x2d0] sm:$0xff] %v1194
                  %v1196 = vld [vmem:[%s1012 + $0xb60] sm:$0xff]
                  %1197 = vst [vmem:[%s1013 + $0x2d8] sm:$0xff] %v1196
                  %v1198 = vld [vmem:[%s1012 + $0xb80] sm:$0xff]
                  %1199 = vst [vmem:[%s1013 + $0x2e0] sm:$0xff] %v1198
                  %v1200 = vld [vmem:[%s1012 + $0xba0] sm:$0xff]
                  %1201 = vst [vmem:[%s1013 + $0x2e8] sm:$0xff] %v1200
                  %v1202 = vld [vmem:[%s1012 + $0xbc0] sm:$0xff]
                  %1203 = vst [vmem:[%s1013 + $0x2f0] sm:$0xff] %v1202
                  %v1204 = vld [vmem:[%s1012 + $0xbe0] sm:$0xff]
                  %1205 = vst [vmem:[%s1013 + $0x2f8] sm:$0xff] %v1204
                  %v1206 = vld [vmem:[%s1012 + $0xc00] sm:$0xff]
                  %1207 = vst [vmem:[%s1013 + $0x300] sm:$0xff] %v1206
                  %v1208 = vld [vmem:[%s1012 + $0xc20] sm:$0xff]
                  %1209 = vst [vmem:[%s1013 + $0x308] sm:$0xff] %v1208
                  %v1210 = vld [vmem:[%s1012 + $0xc40] sm:$0xff]
                  %1211 = vst [vmem:[%s1013 + $0x310] sm:$0xff] %v1210
                  %v1212 = vld [vmem:[%s1012 + $0xc60] sm:$0xff]
                  %1213 = vst [vmem:[%s1013 + $0x318] sm:$0xff] %v1212
                  %v1214 = vld [vmem:[%s1012 + $0xc80] sm:$0xff]
                  %1215 = vst [vmem:[%s1013 + $0x320] sm:$0xff] %v1214
                  %v1216 = vld [vmem:[%s1012 + $0xca0] sm:$0xff]
                  %1217 = vst [vmem:[%s1013 + $0x328] sm:$0xff] %v1216
                  %v1218 = vld [vmem:[%s1012 + $0xcc0] sm:$0xff]
                  %1219 = vst [vmem:[%s1013 + $0x330] sm:$0xff] %v1218
                  %v1220 = vld [vmem:[%s1012 + $0xce0] sm:$0xff]
                  %1221 = vst [vmem:[%s1013 + $0x338] sm:$0xff] %v1220
                  %v1222 = vld [vmem:[%s1012 + $0xd00] sm:$0xff]
                  %1223 = vst [vmem:[%s1013 + $0x340] sm:$0xff] %v1222
                  %v1224 = vld [vmem:[%s1012 + $0xd20] sm:$0xff]
                  %1225 = vst [vmem:[%s1013 + $0x348] sm:$0xff] %v1224
                  %v1226 = vld [vmem:[%s1012 + $0xd40] sm:$0xff]
                  %1227 = vst [vmem:[%s1013 + $0x350] sm:$0xff] %v1226
                  %v1228 = vld [vmem:[%s1012 + $0xd60] sm:$0xff]
                  %1229 = vst [vmem:[%s1013 + $0x358] sm:$0xff] %v1228
                  %v1230 = vld [vmem:[%s1012 + $0xd80] sm:$0xff]
                  %1231 = vst [vmem:[%s1013 + $0x360] sm:$0xff] %v1230
                  %v1232 = vld [vmem:[%s1012 + $0xda0] sm:$0xff]
                  %1233 = vst [vmem:[%s1013 + $0x368] sm:$0xff] %v1232
                  %v1234 = vld [vmem:[%s1012 + $0xdc0] sm:$0xff]
                  %1235 = vst [vmem:[%s1013 + $0x370] sm:$0xff] %v1234
                  %v1236 = vld [vmem:[%s1012 + $0xde0] sm:$0xff]
                  %1237 = vst [vmem:[%s1013 + $0x378] sm:$0xff] %v1236
                  %v1238 = vld [vmem:[%s1012 + $0xe00] sm:$0xff]
                  %1239 = vst [vmem:[%s1013 + $0x380] sm:$0xff] %v1238
                  %v1240 = vld [vmem:[%s1012 + $0xe20] sm:$0xff]
                  %1241 = vst [vmem:[%s1013 + $0x388] sm:$0xff] %v1240
                  %v1242 = vld [vmem:[%s1012 + $0xe40] sm:$0xff]
                  %1243 = vst [vmem:[%s1013 + $0x390] sm:$0xff] %v1242
                  %v1244 = vld [vmem:[%s1012 + $0xe60] sm:$0xff]
                  %1245 = vst [vmem:[%s1013 + $0x398] sm:$0xff] %v1244
                  %v1246 = vld [vmem:[%s1012 + $0xe80] sm:$0xff]
                  %1247 = vst [vmem:[%s1013 + $0x3a0] sm:$0xff] %v1246
                  %v1248 = vld [vmem:[%s1012 + $0xea0] sm:$0xff]
                  %1249 = vst [vmem:[%s1013 + $0x3a8] sm:$0xff] %v1248
                  %v1250 = vld [vmem:[%s1012 + $0xec0] sm:$0xff]
                  %1251 = vst [vmem:[%s1013 + $0x3b0] sm:$0xff] %v1250
                  %v1252 = vld [vmem:[%s1012 + $0xee0] sm:$0xff]
                  %1253 = vst [vmem:[%s1013 + $0x3b8] sm:$0xff] %v1252
                  %v1254 = vld [vmem:[%s1012 + $0xf00] sm:$0xff]
                  %1255 = vst [vmem:[%s1013 + $0x3c0] sm:$0xff] %v1254
                  %v1256 = vld [vmem:[%s1012 + $0xf20] sm:$0xff]
                  %1257 = vst [vmem:[%s1013 + $0x3c8] sm:$0xff] %v1256
                  %v1258 = vld [vmem:[%s1012 + $0xf40] sm:$0xff]
                  %1259 = vst [vmem:[%s1013 + $0x3d0] sm:$0xff] %v1258
                  %v1260 = vld [vmem:[%s1012 + $0xf60] sm:$0xff]
                  %1261 = vst [vmem:[%s1013 + $0x3d8] sm:$0xff] %v1260
                  %v1262 = vld [vmem:[%s1012 + $0xf80] sm:$0xff]
                  %1263 = vst [vmem:[%s1013 + $0x3e0] sm:$0xff] %v1262
                  %v1264 = vld [vmem:[%s1012 + $0xfa0] sm:$0xff]
                  %1265 = vst [vmem:[%s1013 + $0x3e8] sm:$0xff] %v1264
                  %v1266 = vld [vmem:[%s1012 + $0xfc0] sm:$0xff]
                  %1267 = vst [vmem:[%s1013 + $0x3f0] sm:$0xff] %v1266
                  %v1268 = vld [vmem:[%s1012 + $0xfe0] sm:$0xff]
                  %1269 = vst [vmem:[%s1013 + $0x3f8] sm:$0xff] %v1268
                  %v1270 = vld [vmem:[%s1012 + $0x1000] sm:$0xff]
                  %1271 = vst [vmem:[%s1013 + $0x400] sm:$0xff] %v1270
                  %v1272 = vld [vmem:[%s1012 + $0x1020] sm:$0xff]
                  %1273 = vst [vmem:[%s1013 + $0x408] sm:$0xff] %v1272
                  %v1274 = vld [vmem:[%s1012 + $0x1040] sm:$0xff]
                  %1275 = vst [vmem:[%s1013 + $0x410] sm:$0xff] %v1274
                  %v1276 = vld [vmem:[%s1012 + $0x1060] sm:$0xff]
                  %1277 = vst [vmem:[%s1013 + $0x418] sm:$0xff] %v1276
                  %v1278 = vld [vmem:[%s1012 + $0x1080] sm:$0xff]
                  %1279 = vst [vmem:[%s1013 + $0x420] sm:$0xff] %v1278
                  %v1280 = vld [vmem:[%s1012 + $0x10a0] sm:$0xff]
                  %1281 = vst [vmem:[%s1013 + $0x428] sm:$0xff] %v1280
                  %v1282 = vld [vmem:[%s1012 + $0x10c0] sm:$0xff]
                  %1283 = vst [vmem:[%s1013 + $0x430] sm:$0xff] %v1282
                  %v1284 = vld [vmem:[%s1012 + $0x10e0] sm:$0xff]
                  %1285 = vst [vmem:[%s1013 + $0x438] sm:$0xff] %v1284
                  %v1286 = vld [vmem:[%s1012 + $0x1100] sm:$0xff]
                  %1287 = vst [vmem:[%s1013 + $0x440] sm:$0xff] %v1286
                  %v1288 = vld [vmem:[%s1012 + $0x1120] sm:$0xff]
                  %1289 = vst [vmem:[%s1013 + $0x448] sm:$0xff] %v1288
                  %v1290 = vld [vmem:[%s1012 + $0x1140] sm:$0xff]
                  %1291 = vst [vmem:[%s1013 + $0x450] sm:$0xff] %v1290
                  %v1292 = vld [vmem:[%s1012 + $0x1160] sm:$0xff]
                  %1293 = vst [vmem:[%s1013 + $0x458] sm:$0xff] %v1292
                  %v1294 = vld [vmem:[%s1012 + $0x1180] sm:$0xff]
                  %1295 = vst [vmem:[%s1013 + $0x460] sm:$0xff] %v1294
                  %v1296 = vld [vmem:[%s1012 + $0x11a0] sm:$0xff]
                  %1297 = vst [vmem:[%s1013 + $0x468] sm:$0xff] %v1296
                  %v1298 = vld [vmem:[%s1012 + $0x11c0] sm:$0xff]
                  %1299 = vst [vmem:[%s1013 + $0x470] sm:$0xff] %v1298
                  %v1300 = vld [vmem:[%s1012 + $0x11e0] sm:$0xff]
                  %1301 = vst [vmem:[%s1013 + $0x478] sm:$0xff] %v1300
                  %v1302 = vld [vmem:[%s1012 + $0x1200] sm:$0xff]
                  %1303 = vst [vmem:[%s1013 + $0x480] sm:$0xff] %v1302
                  %v1304 = vld [vmem:[%s1012 + $0x1220] sm:$0xff]
                  %1305 = vst [vmem:[%s1013 + $0x488] sm:$0xff] %v1304
                  %v1306 = vld [vmem:[%s1012 + $0x1240] sm:$0xff]
                  %1307 = vst [vmem:[%s1013 + $0x490] sm:$0xff] %v1306
                  %v1308 = vld [vmem:[%s1012 + $0x1260] sm:$0xff]
                  %1309 = vst [vmem:[%s1013 + $0x498] sm:$0xff] %v1308
                  %v1310 = vld [vmem:[%s1012 + $0x1280] sm:$0xff]
                  %1311 = vst [vmem:[%s1013 + $0x4a0] sm:$0xff] %v1310
                  %v1312 = vld [vmem:[%s1012 + $0x12a0] sm:$0xff]
                  %1313 = vst [vmem:[%s1013 + $0x4a8] sm:$0xff] %v1312
                  %v1314 = vld [vmem:[%s1012 + $0x12c0] sm:$0xff]
                  %1315 = vst [vmem:[%s1013 + $0x4b0] sm:$0xff] %v1314
                  %v1316 = vld [vmem:[%s1012 + $0x12e0] sm:$0xff]
                  %1317 = vst [vmem:[%s1013 + $0x4b8] sm:$0xff] %v1316
                  %v1318 = vld [vmem:[%s1012 + $0x1300] sm:$0xff]
                  %1319 = vst [vmem:[%s1013 + $0x4c0] sm:$0xff] %v1318
                  %v1320 = vld [vmem:[%s1012 + $0x1320] sm:$0xff]
                  %1321 = vst [vmem:[%s1013 + $0x4c8] sm:$0xff] %v1320
                  %v1322 = vld [vmem:[%s1012 + $0x1340] sm:$0xff]
                  %1323 = vst [vmem:[%s1013 + $0x4d0] sm:$0xff] %v1322
                  %v1324 = vld [vmem:[%s1012 + $0x1360] sm:$0xff]
                  %1325 = vst [vmem:[%s1013 + $0x4d8] sm:$0xff] %v1324
                  %v1326 = vld [vmem:[%s1012 + $0x1380] sm:$0xff]
                  %1327 = vst [vmem:[%s1013 + $0x4e0] sm:$0xff] %v1326
                  %v1328 = vld [vmem:[%s1012 + $0x13a0] sm:$0xff]
                  %1329 = vst [vmem:[%s1013 + $0x4e8] sm:$0xff] %v1328
                  %v1330 = vld [vmem:[%s1012 + $0x13c0] sm:$0xff]
                  %1331 = vst [vmem:[%s1013 + $0x4f0] sm:$0xff] %v1330
                  %v1332 = vld [vmem:[%s1012 + $0x13e0] sm:$0xff]
                  %1333 = vst [vmem:[%s1013 + $0x4f8] sm:$0xff] %v1332
                  %v1334 = vld [vmem:[%s1012 + $0x1400] sm:$0xff]
                  %1335 = vst [vmem:[%s1013 + $0x500] sm:$0xff] %v1334
                  %v1336 = vld [vmem:[%s1012 + $0x1420] sm:$0xff]
                  %1337 = vst [vmem:[%s1013 + $0x508] sm:$0xff] %v1336
                  %v1338 = vld [vmem:[%s1012 + $0x1440] sm:$0xff]
                  %1339 = vst [vmem:[%s1013 + $0x510] sm:$0xff] %v1338
                  %v1340 = vld [vmem:[%s1012 + $0x1460] sm:$0xff]
                  %1341 = vst [vmem:[%s1013 + $0x518] sm:$0xff] %v1340
                  %v1342 = vld [vmem:[%s1012 + $0x1480] sm:$0xff]
                  %1343 = vst [vmem:[%s1013 + $0x520] sm:$0xff] %v1342
                  %v1344 = vld [vmem:[%s1012 + $0x14a0] sm:$0xff]
                  %1345 = vst [vmem:[%s1013 + $0x528] sm:$0xff] %v1344
                  %v1346 = vld [vmem:[%s1012 + $0x14c0] sm:$0xff]
                  %1347 = vst [vmem:[%s1013 + $0x530] sm:$0xff] %v1346
                  %v1348 = vld [vmem:[%s1012 + $0x14e0] sm:$0xff]
                  %1349 = vst [vmem:[%s1013 + $0x538] sm:$0xff] %v1348
                  %v1350 = vld [vmem:[%s1012 + $0x1500] sm:$0xff]
                  %1351 = vst [vmem:[%s1013 + $0x540] sm:$0xff] %v1350
                  %v1352 = vld [vmem:[%s1012 + $0x1520] sm:$0xff]
                  %1353 = vst [vmem:[%s1013 + $0x548] sm:$0xff] %v1352
                  %v1354 = vld [vmem:[%s1012 + $0x1540] sm:$0xff]
                  %1355 = vst [vmem:[%s1013 + $0x550] sm:$0xff] %v1354
                  %v1356 = vld [vmem:[%s1012 + $0x1560] sm:$0xff]
                  %1357 = vst [vmem:[%s1013 + $0x558] sm:$0xff] %v1356
                  %v1358 = vld [vmem:[%s1012 + $0x1580] sm:$0xff]
                  %1359 = vst [vmem:[%s1013 + $0x560] sm:$0xff] %v1358
                  %v1360 = vld [vmem:[%s1012 + $0x15a0] sm:$0xff]
                  %1361 = vst [vmem:[%s1013 + $0x568] sm:$0xff] %v1360
                  %v1362 = vld [vmem:[%s1012 + $0x15c0] sm:$0xff]
                  %1363 = vst [vmem:[%s1013 + $0x570] sm:$0xff] %v1362
                  %v1364 = vld [vmem:[%s1012 + $0x15e0] sm:$0xff]
                  %1365 = vst [vmem:[%s1013 + $0x578] sm:$0xff] %v1364
                  %v1366 = vld [vmem:[%s1012 + $0x1600] sm:$0xff]
                  %1367 = vst [vmem:[%s1013 + $0x580] sm:$0xff] %v1366
                  %v1368 = vld [vmem:[%s1012 + $0x1620] sm:$0xff]
                  %1369 = vst [vmem:[%s1013 + $0x588] sm:$0xff] %v1368
                  %v1370 = vld [vmem:[%s1012 + $0x1640] sm:$0xff]
                  %1371 = vst [vmem:[%s1013 + $0x590] sm:$0xff] %v1370
                  %v1372 = vld [vmem:[%s1012 + $0x1660] sm:$0xff]
                  %1373 = vst [vmem:[%s1013 + $0x598] sm:$0xff] %v1372
                  %v1374 = vld [vmem:[%s1012 + $0x1680] sm:$0xff]
                  %1375 = vst [vmem:[%s1013 + $0x5a0] sm:$0xff] %v1374
                  %v1376 = vld [vmem:[%s1012 + $0x16a0] sm:$0xff]
                  %1377 = vst [vmem:[%s1013 + $0x5a8] sm:$0xff] %v1376
                  %v1378 = vld [vmem:[%s1012 + $0x16c0] sm:$0xff]
                  %1379 = vst [vmem:[%s1013 + $0x5b0] sm:$0xff] %v1378
                  %v1380 = vld [vmem:[%s1012 + $0x16e0] sm:$0xff]
                  %1381 = vst [vmem:[%s1013 + $0x5b8] sm:$0xff] %v1380
                  %v1382 = vld [vmem:[%s1012 + $0x1700] sm:$0xff]
                  %1383 = vst [vmem:[%s1013 + $0x5c0] sm:$0xff] %v1382
                  %v1384 = vld [vmem:[%s1012 + $0x1720] sm:$0xff]
                  %1385 = vst [vmem:[%s1013 + $0x5c8] sm:$0xff] %v1384
                  %v1386 = vld [vmem:[%s1012 + $0x1740] sm:$0xff]
                  %1387 = vst [vmem:[%s1013 + $0x5d0] sm:$0xff] %v1386
                  %v1388 = vld [vmem:[%s1012 + $0x1760] sm:$0xff]
                  %1389 = vst [vmem:[%s1013 + $0x5d8] sm:$0xff] %v1388
                  %v1390 = vld [vmem:[%s1012 + $0x1780] sm:$0xff]
                  %1391 = vst [vmem:[%s1013 + $0x5e0] sm:$0xff] %v1390
                  %v1392 = vld [vmem:[%s1012 + $0x17a0] sm:$0xff]
                  %1393 = vst [vmem:[%s1013 + $0x5e8] sm:$0xff] %v1392
                  %v1394 = vld [vmem:[%s1012 + $0x17c0] sm:$0xff]
                  %1395 = vst [vmem:[%s1013 + $0x5f0] sm:$0xff] %v1394
                  %v1396 = vld [vmem:[%s1012 + $0x17e0] sm:$0xff]
                  %1397 = vst [vmem:[%s1013 + $0x5f8] sm:$0xff] %v1396
                  %v1398 = vld [vmem:[%s1012 + $0x1800] sm:$0xff]
                  %1399 = vst [vmem:[%s1013 + $0x600] sm:$0xff] %v1398
                  %v1400 = vld [vmem:[%s1012 + $0x1820] sm:$0xff]
                  %1401 = vst [vmem:[%s1013 + $0x608] sm:$0xff] %v1400
                  %v1402 = vld [vmem:[%s1012 + $0x1840] sm:$0xff]
                  %1403 = vst [vmem:[%s1013 + $0x610] sm:$0xff] %v1402
                  %v1404 = vld [vmem:[%s1012 + $0x1860] sm:$0xff]
                  %1405 = vst [vmem:[%s1013 + $0x618] sm:$0xff] %v1404
                  %v1406 = vld [vmem:[%s1012 + $0x1880] sm:$0xff]
                  %1407 = vst [vmem:[%s1013 + $0x620] sm:$0xff] %v1406
                  %v1408 = vld [vmem:[%s1012 + $0x18a0] sm:$0xff]
                  %1409 = vst [vmem:[%s1013 + $0x628] sm:$0xff] %v1408
                  %v1410 = vld [vmem:[%s1012 + $0x18c0] sm:$0xff]
                  %1411 = vst [vmem:[%s1013 + $0x630] sm:$0xff] %v1410
                  %v1412 = vld [vmem:[%s1012 + $0x18e0] sm:$0xff]
                  %1413 = vst [vmem:[%s1013 + $0x638] sm:$0xff] %v1412
                  %v1414 = vld [vmem:[%s1012 + $0x1900] sm:$0xff]
                  %1415 = vst [vmem:[%s1013 + $0x640] sm:$0xff] %v1414
                  %v1416 = vld [vmem:[%s1012 + $0x1920] sm:$0xff]
                  %1417 = vst [vmem:[%s1013 + $0x648] sm:$0xff] %v1416
                  %v1418 = vld [vmem:[%s1012 + $0x1940] sm:$0xff]
                  %1419 = vst [vmem:[%s1013 + $0x650] sm:$0xff] %v1418
                  %v1420 = vld [vmem:[%s1012 + $0x1960] sm:$0xff]
                  %1421 = vst [vmem:[%s1013 + $0x658] sm:$0xff] %v1420
                  %v1422 = vld [vmem:[%s1012 + $0x1980] sm:$0xff]
                  %1423 = vst [vmem:[%s1013 + $0x660] sm:$0xff] %v1422
                  %v1424 = vld [vmem:[%s1012 + $0x19a0] sm:$0xff]
                  %1425 = vst [vmem:[%s1013 + $0x668] sm:$0xff] %v1424
                  %v1426 = vld [vmem:[%s1012 + $0x19c0] sm:$0xff]
                  %1427 = vst [vmem:[%s1013 + $0x670] sm:$0xff] %v1426
                  %v1428 = vld [vmem:[%s1012 + $0x19e0] sm:$0xff]
                  %1429 = vst [vmem:[%s1013 + $0x678] sm:$0xff] %v1428
                  %v1430 = vld [vmem:[%s1012 + $0x1a00] sm:$0xff]
                  %1431 = vst [vmem:[%s1013 + $0x680] sm:$0xff] %v1430
                  %v1432 = vld [vmem:[%s1012 + $0x1a20] sm:$0xff]
                  %1433 = vst [vmem:[%s1013 + $0x688] sm:$0xff] %v1432
                  %v1434 = vld [vmem:[%s1012 + $0x1a40] sm:$0xff]
                  %1435 = vst [vmem:[%s1013 + $0x690] sm:$0xff] %v1434
                  %v1436 = vld [vmem:[%s1012 + $0x1a60] sm:$0xff]
                  %1437 = vst [vmem:[%s1013 + $0x698] sm:$0xff] %v1436
                  %v1438 = vld [vmem:[%s1012 + $0x1a80] sm:$0xff]
                  %1439 = vst [vmem:[%s1013 + $0x6a0] sm:$0xff] %v1438
                  %v1440 = vld [vmem:[%s1012 + $0x1aa0] sm:$0xff]
                  %1441 = vst [vmem:[%s1013 + $0x6a8] sm:$0xff] %v1440
                  %v1442 = vld [vmem:[%s1012 + $0x1ac0] sm:$0xff]
                  %1443 = vst [vmem:[%s1013 + $0x6b0] sm:$0xff] %v1442
                  %v1444 = vld [vmem:[%s1012 + $0x1ae0] sm:$0xff]
                  %1445 = vst [vmem:[%s1013 + $0x6b8] sm:$0xff] %v1444
                  %v1446 = vld [vmem:[%s1012 + $0x1b00] sm:$0xff]
                  %1447 = vst [vmem:[%s1013 + $0x6c0] sm:$0xff] %v1446
                  %v1448 = vld [vmem:[%s1012 + $0x1b20] sm:$0xff]
                  %1449 = vst [vmem:[%s1013 + $0x6c8] sm:$0xff] %v1448
                  %v1450 = vld [vmem:[%s1012 + $0x1b40] sm:$0xff]
                  %1451 = vst [vmem:[%s1013 + $0x6d0] sm:$0xff] %v1450
                  %v1452 = vld [vmem:[%s1012 + $0x1b60] sm:$0xff]
                  %1453 = vst [vmem:[%s1013 + $0x6d8] sm:$0xff] %v1452
                  %v1454 = vld [vmem:[%s1012 + $0x1b80] sm:$0xff]
                  %1455 = vst [vmem:[%s1013 + $0x6e0] sm:$0xff] %v1454
                  %v1456 = vld [vmem:[%s1012 + $0x1ba0] sm:$0xff]
                  %1457 = vst [vmem:[%s1013 + $0x6e8] sm:$0xff] %v1456
                  %v1458 = vld [vmem:[%s1012 + $0x1bc0] sm:$0xff]
                  %1459 = vst [vmem:[%s1013 + $0x6f0] sm:$0xff] %v1458
                  %v1460 = vld [vmem:[%s1012 + $0x1be0] sm:$0xff]
                  %1461 = vst [vmem:[%s1013 + $0x6f8] sm:$0xff] %v1460
                  %v1462 = vld [vmem:[%s1012 + $0x1c00] sm:$0xff]
                  %1463 = vst [vmem:[%s1013 + $0x700] sm:$0xff] %v1462
                  %v1464 = vld [vmem:[%s1012 + $0x1c20] sm:$0xff]
                  %1465 = vst [vmem:[%s1013 + $0x708] sm:$0xff] %v1464
                  %v1466 = vld [vmem:[%s1012 + $0x1c40] sm:$0xff]
                  %1467 = vst [vmem:[%s1013 + $0x710] sm:$0xff] %v1466
                  %v1468 = vld [vmem:[%s1012 + $0x1c60] sm:$0xff]
                  %1469 = vst [vmem:[%s1013 + $0x718] sm:$0xff] %v1468
                  %v1470 = vld [vmem:[%s1012 + $0x1c80] sm:$0xff]
                  %1471 = vst [vmem:[%s1013 + $0x720] sm:$0xff] %v1470
                  %v1472 = vld [vmem:[%s1012 + $0x1ca0] sm:$0xff]
                  %1473 = vst [vmem:[%s1013 + $0x728] sm:$0xff] %v1472
                  %v1474 = vld [vmem:[%s1012 + $0x1cc0] sm:$0xff]
                  %1475 = vst [vmem:[%s1013 + $0x730] sm:$0xff] %v1474
                  %v1476 = vld [vmem:[%s1012 + $0x1ce0] sm:$0xff]
                  %1477 = vst [vmem:[%s1013 + $0x738] sm:$0xff] %v1476
                  %v1478 = vld [vmem:[%s1012 + $0x1d00] sm:$0xff]
                  %1479 = vst [vmem:[%s1013 + $0x740] sm:$0xff] %v1478
                  %v1480 = vld [vmem:[%s1012 + $0x1d20] sm:$0xff]
                  %1481 = vst [vmem:[%s1013 + $0x748] sm:$0xff] %v1480
                  %v1482 = vld [vmem:[%s1012 + $0x1d40] sm:$0xff]
                  %1483 = vst [vmem:[%s1013 + $0x750] sm:$0xff] %v1482
                  %v1484 = vld [vmem:[%s1012 + $0x1d60] sm:$0xff]
                  %1485 = vst [vmem:[%s1013 + $0x758] sm:$0xff] %v1484
                  %v1486 = vld [vmem:[%s1012 + $0x1d80] sm:$0xff]
                  %1487 = vst [vmem:[%s1013 + $0x760] sm:$0xff] %v1486
                  %v1488 = vld [vmem:[%s1012 + $0x1da0] sm:$0xff]
                  %1489 = vst [vmem:[%s1013 + $0x768] sm:$0xff] %v1488
                  %v1490 = vld [vmem:[%s1012 + $0x1dc0] sm:$0xff]
                  %1491 = vst [vmem:[%s1013 + $0x770] sm:$0xff] %v1490
                  %v1492 = vld [vmem:[%s1012 + $0x1de0] sm:$0xff]
                  %1493 = vst [vmem:[%s1013 + $0x778] sm:$0xff] %v1492
                  %v1494 = vld [vmem:[%s1012 + $0x1e00] sm:$0xff]
                  %1495 = vst [vmem:[%s1013 + $0x780] sm:$0xff] %v1494
                  %v1496 = vld [vmem:[%s1012 + $0x1e20] sm:$0xff]
                  %1497 = vst [vmem:[%s1013 + $0x788] sm:$0xff] %v1496
                  %v1498 = vld [vmem:[%s1012 + $0x1e40] sm:$0xff]
                  %1499 = vst [vmem:[%s1013 + $0x790] sm:$0xff] %v1498
                  %v1500 = vld [vmem:[%s1012 + $0x1e60] sm:$0xff]
                  %1501 = vst [vmem:[%s1013 + $0x798] sm:$0xff] %v1500
                  %v1502 = vld [vmem:[%s1012 + $0x1e80] sm:$0xff]
                  %1503 = vst [vmem:[%s1013 + $0x7a0] sm:$0xff] %v1502
                  %v1504 = vld [vmem:[%s1012 + $0x1ea0] sm:$0xff]
                  %1505 = vst [vmem:[%s1013 + $0x7a8] sm:$0xff] %v1504
                  %v1506 = vld [vmem:[%s1012 + $0x1ec0] sm:$0xff]
                  %1507 = vst [vmem:[%s1013 + $0x7b0] sm:$0xff] %v1506
                  %v1508 = vld [vmem:[%s1012 + $0x1ee0] sm:$0xff]
                  %1509 = vst [vmem:[%s1013 + $0x7b8] sm:$0xff] %v1508
                  %v1510 = vld [vmem:[%s1012 + $0x1f00] sm:$0xff]
                  %1511 = vst [vmem:[%s1013 + $0x7c0] sm:$0xff] %v1510
                  %v1512 = vld [vmem:[%s1012 + $0x1f20] sm:$0xff]
                  %1513 = vst [vmem:[%s1013 + $0x7c8] sm:$0xff] %v1512
                  %v1514 = vld [vmem:[%s1012 + $0x1f40] sm:$0xff]
                  %1515 = vst [vmem:[%s1013 + $0x7d0] sm:$0xff] %v1514
                  %v1516 = vld [vmem:[%s1012 + $0x1f60] sm:$0xff]
                  %1517 = vst [vmem:[%s1013 + $0x7d8] sm:$0xff] %v1516
                  %v1518 = vld [vmem:[%s1012 + $0x1f80] sm:$0xff]
                  %1519 = vst [vmem:[%s1013 + $0x7e0] sm:$0xff] %v1518
                  %v1520 = vld [vmem:[%s1012 + $0x1fa0] sm:$0xff]
                  %1521 = vst [vmem:[%s1013 + $0x7e8] sm:$0xff] %v1520
                  %v1522 = vld [vmem:[%s1012 + $0x1fc0] sm:$0xff]
                  %1523 = vst [vmem:[%s1013 + $0x7f0] sm:$0xff] %v1522
                  %v1524 = vld [vmem:[%s1012 + $0x1fe0] sm:$0xff]
                  %1525 = vst [vmem:[%s1013 + $0x7f8] sm:$0xff] %v1524
                  %v1526 = vld [vmem:[%s1012 + $0x2000] sm:$0xff]
                  %1527 = vst [vmem:[%s1013 + $0x800] sm:$0xff] %v1526
                  %v1528 = vld [vmem:[%s1012 + $0x2020] sm:$0xff]
                  %1529 = vst [vmem:[%s1013 + $0x808] sm:$0xff] %v1528
                  %v1530 = vld [vmem:[%s1012 + $0x2040] sm:$0xff]
                  %1531 = vst [vmem:[%s1013 + $0x810] sm:$0xff] %v1530
                  %v1532 = vld [vmem:[%s1012 + $0x2060] sm:$0xff]
                  %1533 = vst [vmem:[%s1013 + $0x818] sm:$0xff] %v1532
                  %v1534 = vld [vmem:[%s1012 + $0x2080] sm:$0xff]
                  %1535 = vst [vmem:[%s1013 + $0x820] sm:$0xff] %v1534
                  %v1536 = vld [vmem:[%s1012 + $0x20a0] sm:$0xff]
                  %1537 = vst [vmem:[%s1013 + $0x828] sm:$0xff] %v1536
                  %v1538 = vld [vmem:[%s1012 + $0x20c0] sm:$0xff]
                  %1539 = vst [vmem:[%s1013 + $0x830] sm:$0xff] %v1538
                  %v1540 = vld [vmem:[%s1012 + $0x20e0] sm:$0xff]
                  %1541 = vst [vmem:[%s1013 + $0x838] sm:$0xff] %v1540
                  %v1542 = vld [vmem:[%s1012 + $0x2100] sm:$0xff]
                  %1543 = vst [vmem:[%s1013 + $0x840] sm:$0xff] %v1542
                  %v1544 = vld [vmem:[%s1012 + $0x2120] sm:$0xff]
                  %1545 = vst [vmem:[%s1013 + $0x848] sm:$0xff] %v1544
                  %v1546 = vld [vmem:[%s1012 + $0x2140] sm:$0xff]
                  %1547 = vst [vmem:[%s1013 + $0x850] sm:$0xff] %v1546
                  %v1548 = vld [vmem:[%s1012 + $0x2160] sm:$0xff]
                  %1549 = vst [vmem:[%s1013 + $0x858] sm:$0xff] %v1548
                  %v1550 = vld [vmem:[%s1012 + $0x2180] sm:$0xff]
                  %1551 = vst [vmem:[%s1013 + $0x860] sm:$0xff] %v1550
                  %v1552 = vld [vmem:[%s1012 + $0x21a0] sm:$0xff]
                  %1553 = vst [vmem:[%s1013 + $0x868] sm:$0xff] %v1552
                  %v1554 = vld [vmem:[%s1012 + $0x21c0] sm:$0xff]
                  %1555 = vst [vmem:[%s1013 + $0x870] sm:$0xff] %v1554
                  %v1556 = vld [vmem:[%s1012 + $0x21e0] sm:$0xff]
                  %1557 = vst [vmem:[%s1013 + $0x878] sm:$0xff] %v1556
                  %v1558 = vld [vmem:[%s1012 + $0x2200] sm:$0xff]
                  %1559 = vst [vmem:[%s1013 + $0x880] sm:$0xff] %v1558
                  %v1560 = vld [vmem:[%s1012 + $0x2220] sm:$0xff]
                  %1561 = vst [vmem:[%s1013 + $0x888] sm:$0xff] %v1560
                  %v1562 = vld [vmem:[%s1012 + $0x2240] sm:$0xff]
                  %1563 = vst [vmem:[%s1013 + $0x890] sm:$0xff] %v1562
                  %v1564 = vld [vmem:[%s1012 + $0x2260] sm:$0xff]
                  %1565 = vst [vmem:[%s1013 + $0x898] sm:$0xff] %v1564
                  %v1566 = vld [vmem:[%s1012 + $0x2280] sm:$0xff]
                  %1567 = vst [vmem:[%s1013 + $0x8a0] sm:$0xff] %v1566
                  %v1568 = vld [vmem:[%s1012 + $0x22a0] sm:$0xff]
                  %1569 = vst [vmem:[%s1013 + $0x8a8] sm:$0xff] %v1568
                  %v1570 = vld [vmem:[%s1012 + $0x22c0] sm:$0xff]
                  %1571 = vst [vmem:[%s1013 + $0x8b0] sm:$0xff] %v1570
                  %v1572 = vld [vmem:[%s1012 + $0x22e0] sm:$0xff]
                  %1573 = vst [vmem:[%s1013 + $0x8b8] sm:$0xff] %v1572
                  %v1574 = vld [vmem:[%s1012 + $0x2300] sm:$0xff]
                  %1575 = vst [vmem:[%s1013 + $0x8c0] sm:$0xff] %v1574
                  %v1576 = vld [vmem:[%s1012 + $0x2320] sm:$0xff]
                  %1577 = vst [vmem:[%s1013 + $0x8c8] sm:$0xff] %v1576
                  %v1578 = vld [vmem:[%s1012 + $0x2340] sm:$0xff]
                  %1579 = vst [vmem:[%s1013 + $0x8d0] sm:$0xff] %v1578
                  %v1580 = vld [vmem:[%s1012 + $0x2360] sm:$0xff]
                  %1581 = vst [vmem:[%s1013 + $0x8d8] sm:$0xff] %v1580
                  %v1582 = vld [vmem:[%s1012 + $0x2380] sm:$0xff]
                  %1583 = vst [vmem:[%s1013 + $0x8e0] sm:$0xff] %v1582
                  %v1584 = vld [vmem:[%s1012 + $0x23a0] sm:$0xff]
                  %1585 = vst [vmem:[%s1013 + $0x8e8] sm:$0xff] %v1584
                  %v1586 = vld [vmem:[%s1012 + $0x23c0] sm:$0xff]
                  %1587 = vst [vmem:[%s1013 + $0x8f0] sm:$0xff] %v1586
                  %v1588 = vld [vmem:[%s1012 + $0x23e0] sm:$0xff]
                  %1589 = vst [vmem:[%s1013 + $0x8f8] sm:$0xff] %v1588
                  %v1590 = vld [vmem:[%s1012 + $0x2400] sm:$0xff]
                  %1591 = vst [vmem:[%s1013 + $0x900] sm:$0xff] %v1590
                  %v1592 = vld [vmem:[%s1012 + $0x2420] sm:$0xff]
                  %1593 = vst [vmem:[%s1013 + $0x908] sm:$0xff] %v1592
                  %v1594 = vld [vmem:[%s1012 + $0x2440] sm:$0xff]
                  %1595 = vst [vmem:[%s1013 + $0x910] sm:$0xff] %v1594
                  %v1596 = vld [vmem:[%s1012 + $0x2460] sm:$0xff]
                  %1597 = vst [vmem:[%s1013 + $0x918] sm:$0xff] %v1596
                  %v1598 = vld [vmem:[%s1012 + $0x2480] sm:$0xff]
                  %1599 = vst [vmem:[%s1013 + $0x920] sm:$0xff] %v1598
                  %v1600 = vld [vmem:[%s1012 + $0x24a0] sm:$0xff]
                  %1601 = vst [vmem:[%s1013 + $0x928] sm:$0xff] %v1600
                  %v1602 = vld [vmem:[%s1012 + $0x24c0] sm:$0xff]
                  %1603 = vst [vmem:[%s1013 + $0x930] sm:$0xff] %v1602
                  %v1604 = vld [vmem:[%s1012 + $0x24e0] sm:$0xff]
                  %1605 = vst [vmem:[%s1013 + $0x938] sm:$0xff] %v1604
                  %v1606 = vld [vmem:[%s1012 + $0x2500] sm:$0xff]
                  %1607 = vst [vmem:[%s1013 + $0x940] sm:$0xff] %v1606
                  %v1608 = vld [vmem:[%s1012 + $0x2520] sm:$0xff]
                  %1609 = vst [vmem:[%s1013 + $0x948] sm:$0xff] %v1608
                  %v1610 = vld [vmem:[%s1012 + $0x2540] sm:$0xff]
                  %1611 = vst [vmem:[%s1013 + $0x950] sm:$0xff] %v1610
                  %v1612 = vld [vmem:[%s1012 + $0x2560] sm:$0xff]
                  %1613 = vst [vmem:[%s1013 + $0x958] sm:$0xff] %v1612
                  %v1614 = vld [vmem:[%s1012 + $0x2580] sm:$0xff]
                  %1615 = vst [vmem:[%s1013 + $0x960] sm:$0xff] %v1614
                  %v1616 = vld [vmem:[%s1012 + $0x25a0] sm:$0xff]
                  %1617 = vst [vmem:[%s1013 + $0x968] sm:$0xff] %v1616
                  %v1618 = vld [vmem:[%s1012 + $0x25c0] sm:$0xff]
                  %1619 = vst [vmem:[%s1013 + $0x970] sm:$0xff] %v1618
                  %v1620 = vld [vmem:[%s1012 + $0x25e0] sm:$0xff]
                  %1621 = vst [vmem:[%s1013 + $0x978] sm:$0xff] %v1620
                  %v1622 = vld [vmem:[%s1012 + $0x2600] sm:$0xff]
                  %1623 = vst [vmem:[%s1013 + $0x980] sm:$0xff] %v1622
                  %v1624 = vld [vmem:[%s1012 + $0x2620] sm:$0xff]
                  %1625 = vst [vmem:[%s1013 + $0x988] sm:$0xff] %v1624
                  %v1626 = vld [vmem:[%s1012 + $0x2640] sm:$0xff]
                  %1627 = vst [vmem:[%s1013 + $0x990] sm:$0xff] %v1626
                  %v1628 = vld [vmem:[%s1012 + $0x2660] sm:$0xff]
                  %1629 = vst [vmem:[%s1013 + $0x998] sm:$0xff] %v1628
                  %v1630 = vld [vmem:[%s1012 + $0x2680] sm:$0xff]
                  %1631 = vst [vmem:[%s1013 + $0x9a0] sm:$0xff] %v1630
                  %v1632 = vld [vmem:[%s1012 + $0x26a0] sm:$0xff]
                  %1633 = vst [vmem:[%s1013 + $0x9a8] sm:$0xff] %v1632
                  %v1634 = vld [vmem:[%s1012 + $0x26c0] sm:$0xff]
                  %1635 = vst [vmem:[%s1013 + $0x9b0] sm:$0xff] %v1634
                  %v1636 = vld [vmem:[%s1012 + $0x26e0] sm:$0xff]
                  %1637 = vst [vmem:[%s1013 + $0x9b8] sm:$0xff] %v1636
                  %v1638 = vld [vmem:[%s1012 + $0x2700] sm:$0xff]
                  %1639 = vst [vmem:[%s1013 + $0x9c0] sm:$0xff] %v1638
                  %v1640 = vld [vmem:[%s1012 + $0x2720] sm:$0xff]
                  %1641 = vst [vmem:[%s1013 + $0x9c8] sm:$0xff] %v1640
                  %v1642 = vld [vmem:[%s1012 + $0x2740] sm:$0xff]
                  %1643 = vst [vmem:[%s1013 + $0x9d0] sm:$0xff] %v1642
                  %v1644 = vld [vmem:[%s1012 + $0x2760] sm:$0xff]
                  %1645 = vst [vmem:[%s1013 + $0x9d8] sm:$0xff] %v1644
                  %v1646 = vld [vmem:[%s1012 + $0x2780] sm:$0xff]
                  %1647 = vst [vmem:[%s1013 + $0x9e0] sm:$0xff] %v1646
                  %v1648 = vld [vmem:[%s1012 + $0x27a0] sm:$0xff]
                  %1649 = vst [vmem:[%s1013 + $0x9e8] sm:$0xff] %v1648
                  %v1650 = vld [vmem:[%s1012 + $0x27c0] sm:$0xff]
                  %1651 = vst [vmem:[%s1013 + $0x9f0] sm:$0xff] %v1650
                  %v1652 = vld [vmem:[%s1012 + $0x27e0] sm:$0xff]
                  %1653 = vst [vmem:[%s1013 + $0x9f8] sm:$0xff] %v1652
                  %v1654 = vld [vmem:[%s1012 + $0x2800] sm:$0xff]
                  %1655 = vst [vmem:[%s1013 + $0xa00] sm:$0xff] %v1654
                  %v1656 = vld [vmem:[%s1012 + $0x2820] sm:$0xff]
                  %1657 = vst [vmem:[%s1013 + $0xa08] sm:$0xff] %v1656
                  %v1658 = vld [vmem:[%s1012 + $0x2840] sm:$0xff]
                  %1659 = vst [vmem:[%s1013 + $0xa10] sm:$0xff] %v1658
                  %v1660 = vld [vmem:[%s1012 + $0x2860] sm:$0xff]
                  %1661 = vst [vmem:[%s1013 + $0xa18] sm:$0xff] %v1660
                  %v1662 = vld [vmem:[%s1012 + $0x2880] sm:$0xff]
                  %1663 = vst [vmem:[%s1013 + $0xa20] sm:$0xff] %v1662
                  %v1664 = vld [vmem:[%s1012 + $0x28a0] sm:$0xff]
                  %1665 = vst [vmem:[%s1013 + $0xa28] sm:$0xff] %v1664
                  %v1666 = vld [vmem:[%s1012 + $0x28c0] sm:$0xff]
                  %1667 = vst [vmem:[%s1013 + $0xa30] sm:$0xff] %v1666
                  %v1668 = vld [vmem:[%s1012 + $0x28e0] sm:$0xff]
                  %1669 = vst [vmem:[%s1013 + $0xa38] sm:$0xff] %v1668
                  %v1670 = vld [vmem:[%s1012 + $0x2900] sm:$0xff]
                  %1671 = vst [vmem:[%s1013 + $0xa40] sm:$0xff] %v1670
                  %v1672 = vld [vmem:[%s1012 + $0x2920] sm:$0xff]
                  %1673 = vst [vmem:[%s1013 + $0xa48] sm:$0xff] %v1672
                  %v1674 = vld [vmem:[%s1012 + $0x2940] sm:$0xff]
                  %1675 = vst [vmem:[%s1013 + $0xa50] sm:$0xff] %v1674
                  %v1676 = vld [vmem:[%s1012 + $0x2960] sm:$0xff]
                  %1677 = vst [vmem:[%s1013 + $0xa58] sm:$0xff] %v1676
                  %v1678 = vld [vmem:[%s1012 + $0x2980] sm:$0xff]
                  %1679 = vst [vmem:[%s1013 + $0xa60] sm:$0xff] %v1678
                  %v1680 = vld [vmem:[%s1012 + $0x29a0] sm:$0xff]
                  %1681 = vst [vmem:[%s1013 + $0xa68] sm:$0xff] %v1680
                  %v1682 = vld [vmem:[%s1012 + $0x29c0] sm:$0xff]
                  %1683 = vst [vmem:[%s1013 + $0xa70] sm:$0xff] %v1682
                  %v1684 = vld [vmem:[%s1012 + $0x29e0] sm:$0xff]
                  %1685 = vst [vmem:[%s1013 + $0xa78] sm:$0xff] %v1684
                  %v1686 = vld [vmem:[%s1012 + $0x2a00] sm:$0xff]
                  %1687 = vst [vmem:[%s1013 + $0xa80] sm:$0xff] %v1686
                  %v1688 = vld [vmem:[%s1012 + $0x2a20] sm:$0xff]
                  %1689 = vst [vmem:[%s1013 + $0xa88] sm:$0xff] %v1688
                  %v1690 = vld [vmem:[%s1012 + $0x2a40] sm:$0xff]
                  %1691 = vst [vmem:[%s1013 + $0xa90] sm:$0xff] %v1690
                  %v1692 = vld [vmem:[%s1012 + $0x2a60] sm:$0xff]
                  %1693 = vst [vmem:[%s1013 + $0xa98] sm:$0xff] %v1692
                  %v1694 = vld [vmem:[%s1012 + $0x2a80] sm:$0xff]
                  %1695 = vst [vmem:[%s1013 + $0xaa0] sm:$0xff] %v1694
                  %v1696 = vld [vmem:[%s1012 + $0x2aa0] sm:$0xff]
                  %1697 = vst [vmem:[%s1013 + $0xaa8] sm:$0xff] %v1696
                  %v1698 = vld [vmem:[%s1012 + $0x2ac0] sm:$0xff]
                  %1699 = vst [vmem:[%s1013 + $0xab0] sm:$0xff] %v1698
                  %v1700 = vld [vmem:[%s1012 + $0x2ae0] sm:$0xff]
                  %1701 = vst [vmem:[%s1013 + $0xab8] sm:$0xff] %v1700
                  %v1702 = vld [vmem:[%s1012 + $0x2b00] sm:$0xff]
                  %1703 = vst [vmem:[%s1013 + $0xac0] sm:$0xff] %v1702
                  %v1704 = vld [vmem:[%s1012 + $0x2b20] sm:$0xff]
                  %1705 = vst [vmem:[%s1013 + $0xac8] sm:$0xff] %v1704
                  %v1706 = vld [vmem:[%s1012 + $0x2b40] sm:$0xff]
                  %1707 = vst [vmem:[%s1013 + $0xad0] sm:$0xff] %v1706
                  %v1708 = vld [vmem:[%s1012 + $0x2b60] sm:$0xff]
                  %1709 = vst [vmem:[%s1013 + $0xad8] sm:$0xff] %v1708
                  %v1710 = vld [vmem:[%s1012 + $0x2b80] sm:$0xff]
                  %1711 = vst [vmem:[%s1013 + $0xae0] sm:$0xff] %v1710
                  %v1712 = vld [vmem:[%s1012 + $0x2ba0] sm:$0xff]
                  %1713 = vst [vmem:[%s1013 + $0xae8] sm:$0xff] %v1712
                  %v1714 = vld [vmem:[%s1012 + $0x2bc0] sm:$0xff]
                  %1715 = vst [vmem:[%s1013 + $0xaf0] sm:$0xff] %v1714
                  %v1716 = vld [vmem:[%s1012 + $0x2be0] sm:$0xff]
                  %1717 = vst [vmem:[%s1013 + $0xaf8] sm:$0xff] %v1716
                  %v1718 = vld [vmem:[%s1012 + $0x2c00] sm:$0xff]
                  %1719 = vst [vmem:[%s1013 + $0xb00] sm:$0xff] %v1718
                  %v1720 = vld [vmem:[%s1012 + $0x2c20] sm:$0xff]
                  %1721 = vst [vmem:[%s1013 + $0xb08] sm:$0xff] %v1720
                  %v1722 = vld [vmem:[%s1012 + $0x2c40] sm:$0xff]
                  %1723 = vst [vmem:[%s1013 + $0xb10] sm:$0xff] %v1722
                  %v1724 = vld [vmem:[%s1012 + $0x2c60] sm:$0xff]
                  %1725 = vst [vmem:[%s1013 + $0xb18] sm:$0xff] %v1724
                  %v1726 = vld [vmem:[%s1012 + $0x2c80] sm:$0xff]
                  %1727 = vst [vmem:[%s1013 + $0xb20] sm:$0xff] %v1726
                  %v1728 = vld [vmem:[%s1012 + $0x2ca0] sm:$0xff]
                  %1729 = vst [vmem:[%s1013 + $0xb28] sm:$0xff] %v1728
                  %v1730 = vld [vmem:[%s1012 + $0x2cc0] sm:$0xff]
                  %1731 = vst [vmem:[%s1013 + $0xb30] sm:$0xff] %v1730
                  %v1732 = vld [vmem:[%s1012 + $0x2ce0] sm:$0xff]
                  %1733 = vst [vmem:[%s1013 + $0xb38] sm:$0xff] %v1732
                  %v1734 = vld [vmem:[%s1012 + $0x2d00] sm:$0xff]
                  %1735 = vst [vmem:[%s1013 + $0xb40] sm:$0xff] %v1734
                  %v1736 = vld [vmem:[%s1012 + $0x2d20] sm:$0xff]
                  %1737 = vst [vmem:[%s1013 + $0xb48] sm:$0xff] %v1736
                  %v1738 = vld [vmem:[%s1012 + $0x2d40] sm:$0xff]
                  %1739 = vst [vmem:[%s1013 + $0xb50] sm:$0xff] %v1738
                  %v1740 = vld [vmem:[%s1012 + $0x2d60] sm:$0xff]
                  %1741 = vst [vmem:[%s1013 + $0xb58] sm:$0xff] %v1740
                  %v1742 = vld [vmem:[%s1012 + $0x2d80] sm:$0xff]
                  %1743 = vst [vmem:[%s1013 + $0xb60] sm:$0xff] %v1742
                  %v1744 = vld [vmem:[%s1012 + $0x2da0] sm:$0xff]
                  %1745 = vst [vmem:[%s1013 + $0xb68] sm:$0xff] %v1744
                  %v1746 = vld [vmem:[%s1012 + $0x2dc0] sm:$0xff]
                  %1747 = vst [vmem:[%s1013 + $0xb70] sm:$0xff] %v1746
                  %v1748 = vld [vmem:[%s1012 + $0x2de0] sm:$0xff]
                  %1749 = vst [vmem:[%s1013 + $0xb78] sm:$0xff] %v1748
                  %v1750 = vld [vmem:[%s1012 + $0x2e00] sm:$0xff]
                  %1751 = vst [vmem:[%s1013 + $0xb80] sm:$0xff] %v1750
                  %v1752 = vld [vmem:[%s1012 + $0x2e20] sm:$0xff]
                  %1753 = vst [vmem:[%s1013 + $0xb88] sm:$0xff] %v1752
                  %v1754 = vld [vmem:[%s1012 + $0x2e40] sm:$0xff]
                  %1755 = vst [vmem:[%s1013 + $0xb90] sm:$0xff] %v1754
                  %v1756 = vld [vmem:[%s1012 + $0x2e60] sm:$0xff]
                  %1757 = vst [vmem:[%s1013 + $0xb98] sm:$0xff] %v1756
                  %v1758 = vld [vmem:[%s1012 + $0x2e80] sm:$0xff]
                  %1759 = vst [vmem:[%s1013 + $0xba0] sm:$0xff] %v1758
                  %v1760 = vld [vmem:[%s1012 + $0x2ea0] sm:$0xff]
                  %1761 = vst [vmem:[%s1013 + $0xba8] sm:$0xff] %v1760
                  %v1762 = vld [vmem:[%s1012 + $0x2ec0] sm:$0xff]
                  %1763 = vst [vmem:[%s1013 + $0xbb0] sm:$0xff] %v1762
                  %v1764 = vld [vmem:[%s1012 + $0x2ee0] sm:$0xff]
                  %1765 = vst [vmem:[%s1013 + $0xbb8] sm:$0xff] %v1764
                  %v1766 = vld [vmem:[%s1012 + $0x2f00] sm:$0xff]
                  %1767 = vst [vmem:[%s1013 + $0xbc0] sm:$0xff] %v1766
                  %v1768 = vld [vmem:[%s1012 + $0x2f20] sm:$0xff]
                  %1769 = vst [vmem:[%s1013 + $0xbc8] sm:$0xff] %v1768
                  %v1770 = vld [vmem:[%s1012 + $0x2f40] sm:$0xff]
                  %1771 = vst [vmem:[%s1013 + $0xbd0] sm:$0xff] %v1770
                  %v1772 = vld [vmem:[%s1012 + $0x2f60] sm:$0xff]
                  %1773 = vst [vmem:[%s1013 + $0xbd8] sm:$0xff] %v1772
                  %v1774 = vld [vmem:[%s1012 + $0x2f80] sm:$0xff]
                  %1775 = vst [vmem:[%s1013 + $0xbe0] sm:$0xff] %v1774
                  %v1776 = vld [vmem:[%s1012 + $0x2fa0] sm:$0xff]
                  %1777 = vst [vmem:[%s1013 + $0xbe8] sm:$0xff] %v1776
                  %v1778 = vld [vmem:[%s1012 + $0x2fc0] sm:$0xff]
                  %1779 = vst [vmem:[%s1013 + $0xbf0] sm:$0xff] %v1778
                  %v1780 = vld [vmem:[%s1012 + $0x2fe0] sm:$0xff]
                  %1781 = vst [vmem:[%s1013 + $0xbf8] sm:$0xff] %v1780
                  %v1782 = vld [vmem:[%s1012 + $0x3000] sm:$0xff]
                  %1783 = vst [vmem:[%s1013 + $0xc00] sm:$0xff] %v1782
                  %v1784 = vld [vmem:[%s1012 + $0x3020] sm:$0xff]
                  %1785 = vst [vmem:[%s1013 + $0xc08] sm:$0xff] %v1784
                  %v1786 = vld [vmem:[%s1012 + $0x3040] sm:$0xff]
                  %1787 = vst [vmem:[%s1013 + $0xc10] sm:$0xff] %v1786
                  %v1788 = vld [vmem:[%s1012 + $0x3060] sm:$0xff]
                  %1789 = vst [vmem:[%s1013 + $0xc18] sm:$0xff] %v1788
                  %v1790 = vld [vmem:[%s1012 + $0x3080] sm:$0xff]
                  %1791 = vst [vmem:[%s1013 + $0xc20] sm:$0xff] %v1790
                  %v1792 = vld [vmem:[%s1012 + $0x30a0] sm:$0xff]
                  %1793 = vst [vmem:[%s1013 + $0xc28] sm:$0xff] %v1792
                  %v1794 = vld [vmem:[%s1012 + $0x30c0] sm:$0xff]
                  %1795 = vst [vmem:[%s1013 + $0xc30] sm:$0xff] %v1794
                  %v1796 = vld [vmem:[%s1012 + $0x30e0] sm:$0xff]
                  %1797 = vst [vmem:[%s1013 + $0xc38] sm:$0xff] %v1796
                  %v1798 = vld [vmem:[%s1012 + $0x3100] sm:$0xff]
                  %1799 = vst [vmem:[%s1013 + $0xc40] sm:$0xff] %v1798
                  %v1800 = vld [vmem:[%s1012 + $0x3120] sm:$0xff]
                  %1801 = vst [vmem:[%s1013 + $0xc48] sm:$0xff] %v1800
                  %v1802 = vld [vmem:[%s1012 + $0x3140] sm:$0xff]
                  %1803 = vst [vmem:[%s1013 + $0xc50] sm:$0xff] %v1802
                  %v1804 = vld [vmem:[%s1012 + $0x3160] sm:$0xff]
                  %1805 = vst [vmem:[%s1013 + $0xc58] sm:$0xff] %v1804
                  %v1806 = vld [vmem:[%s1012 + $0x3180] sm:$0xff]
                  %1807 = vst [vmem:[%s1013 + $0xc60] sm:$0xff] %v1806
                  %v1808 = vld [vmem:[%s1012 + $0x31a0] sm:$0xff]
                  %1809 = vst [vmem:[%s1013 + $0xc68] sm:$0xff] %v1808
                  %v1810 = vld [vmem:[%s1012 + $0x31c0] sm:$0xff]
                  %1811 = vst [vmem:[%s1013 + $0xc70] sm:$0xff] %v1810
                  %v1812 = vld [vmem:[%s1012 + $0x31e0] sm:$0xff]
                  %1813 = vst [vmem:[%s1013 + $0xc78] sm:$0xff] %v1812
                $region56: #{convnet_forward.5} parent=50 // loop_footer
                  %s1011 = sadd.s32 1, %s1007
                $region57: #{convnet_forward.5} parent=50 // loop_footer_branch
                  %1006 = sbr.rel target = $region53
                $region58: #{convnet_forward.5} parent=50 // loop_exit
                  _
              $region51: #{convnet_forward.5} parent=35 // pred_fallthru
                _
              // Predicated region
              $region59: #{convnet_forward.5} parent=35 // pred_check
                _
              $region60: #{convnet_forward.5} parent=35 // pred_check_branch
                %1815 = sbr.rel target = $region62
              $region61: #{convnet_forward.5} parent=35 // pred_region
                _
              $region62: #{convnet_forward.5} parent=35 // pred_fallthru
                _
            $region36: #{convnet_forward.5} parent=31 // pred_fallthru
              _
            // Predicated region
            $region37: #{convnet_forward.5} parent=31 // pred_check
              _
            $region38: #{convnet_forward.5} parent=31 // pred_check_branch
              %193 = sbr.rel target = $region40
            $region39: #{convnet_forward.5} parent=31 // pred_region
              %s195 = ssub.s32 256, 1
              loop: start=0, step=1, limit=1
              $region41: #{convnet_forward.5} parent=39 // loop_pre_header
                _
              $region42: #{convnet_forward.5} parent=39 // loop_header
                %s197 = sphi 0, %s201
                %p198 = scmp.ge.s32.totalorder %s197, 1
                %s202 = sphi %s187, %s187
                %s203 = sphi %s184, %s184
              $region43: #{convnet_forward.5} parent=39 // loop_header_branch
                %200 = sbr.rel (%p198) target = $region47
              $region44: #{convnet_forward.5} parent=39 // loop_body
                %v204 = vld [vmem:[%s202] sm:%s195]
                %205 = vst [vmem:[%s203] sm:%s195] %v204
                %v206 = vld [vmem:[%s202 + $0x20] sm:%s195]
                %207 = vst [vmem:[%s203 + $0x8] sm:%s195] %v206
                %v208 = vld [vmem:[%s202 + $0x40] sm:%s195]
                %209 = vst [vmem:[%s203 + $0x10] sm:%s195] %v208
                %v210 = vld [vmem:[%s202 + $0x60] sm:%s195]
                %211 = vst [vmem:[%s203 + $0x18] sm:%s195] %v210
                %v212 = vld [vmem:[%s202 + $0x80] sm:%s195]
                %213 = vst [vmem:[%s203 + $0x20] sm:%s195] %v212
                %v214 = vld [vmem:[%s202 + $0xa0] sm:%s195]
                %215 = vst [vmem:[%s203 + $0x28] sm:%s195] %v214
                %v216 = vld [vmem:[%s202 + $0xc0] sm:%s195]
                %217 = vst [vmem:[%s203 + $0x30] sm:%s195] %v216
                %v218 = vld [vmem:[%s202 + $0xe0] sm:%s195]
                %219 = vst [vmem:[%s203 + $0x38] sm:%s195] %v218
                %v220 = vld [vmem:[%s202 + $0x100] sm:%s195]
                %221 = vst [vmem:[%s203 + $0x40] sm:%s195] %v220
                %v222 = vld [vmem:[%s202 + $0x120] sm:%s195]
                %223 = vst [vmem:[%s203 + $0x48] sm:%s195] %v222
                %v224 = vld [vmem:[%s202 + $0x140] sm:%s195]
                %225 = vst [vmem:[%s203 + $0x50] sm:%s195] %v224
                %v226 = vld [vmem:[%s202 + $0x160] sm:%s195]
                %227 = vst [vmem:[%s203 + $0x58] sm:%s195] %v226
                %v228 = vld [vmem:[%s202 + $0x180] sm:%s195]
                %229 = vst [vmem:[%s203 + $0x60] sm:%s195] %v228
                %v230 = vld [vmem:[%s202 + $0x1a0] sm:%s195]
                %231 = vst [vmem:[%s203 + $0x68] sm:%s195] %v230
                %v232 = vld [vmem:[%s202 + $0x1c0] sm:%s195]
                %233 = vst [vmem:[%s203 + $0x70] sm:%s195] %v232
                %v234 = vld [vmem:[%s202 + $0x1e0] sm:%s195]
                %235 = vst [vmem:[%s203 + $0x78] sm:%s195] %v234
                %v236 = vld [vmem:[%s202 + $0x200] sm:%s195]
                %237 = vst [vmem:[%s203 + $0x80] sm:%s195] %v236
                %v238 = vld [vmem:[%s202 + $0x220] sm:%s195]
                %239 = vst [vmem:[%s203 + $0x88] sm:%s195] %v238
                %v240 = vld [vmem:[%s202 + $0x240] sm:%s195]
                %241 = vst [vmem:[%s203 + $0x90] sm:%s195] %v240
                %v242 = vld [vmem:[%s202 + $0x260] sm:%s195]
                %243 = vst [vmem:[%s203 + $0x98] sm:%s195] %v242
                %v244 = vld [vmem:[%s202 + $0x280] sm:%s195]
                %245 = vst [vmem:[%s203 + $0xa0] sm:%s195] %v244
                %v246 = vld [vmem:[%s202 + $0x2a0] sm:%s195]
                %247 = vst [vmem:[%s203 + $0xa8] sm:%s195] %v246
                %v248 = vld [vmem:[%s202 + $0x2c0] sm:%s195]
                %249 = vst [vmem:[%s203 + $0xb0] sm:%s195] %v248
                %v250 = vld [vmem:[%s202 + $0x2e0] sm:%s195]
                %251 = vst [vmem:[%s203 + $0xb8] sm:%s195] %v250
                %v252 = vld [vmem:[%s202 + $0x300] sm:%s195]
                %253 = vst [vmem:[%s203 + $0xc0] sm:%s195] %v252
                %v254 = vld [vmem:[%s202 + $0x320] sm:%s195]
                %255 = vst [vmem:[%s203 + $0xc8] sm:%s195] %v254
                %v256 = vld [vmem:[%s202 + $0x340] sm:%s195]
                %257 = vst [vmem:[%s203 + $0xd0] sm:%s195] %v256
                %v258 = vld [vmem:[%s202 + $0x360] sm:%s195]
                %259 = vst [vmem:[%s203 + $0xd8] sm:%s195] %v258
                %v260 = vld [vmem:[%s202 + $0x380] sm:%s195]
                %261 = vst [vmem:[%s203 + $0xe0] sm:%s195] %v260
                %v262 = vld [vmem:[%s202 + $0x3a0] sm:%s195]
                %263 = vst [vmem:[%s203 + $0xe8] sm:%s195] %v262
                %v264 = vld [vmem:[%s202 + $0x3c0] sm:%s195]
                %265 = vst [vmem:[%s203 + $0xf0] sm:%s195] %v264
                %v266 = vld [vmem:[%s202 + $0x3e0] sm:%s195]
                %267 = vst [vmem:[%s203 + $0xf8] sm:%s195] %v266
                %v268 = vld [vmem:[%s202 + $0x400] sm:%s195]
                %269 = vst [vmem:[%s203 + $0x100] sm:%s195] %v268
                %v270 = vld [vmem:[%s202 + $0x420] sm:%s195]
                %271 = vst [vmem:[%s203 + $0x108] sm:%s195] %v270
                %v272 = vld [vmem:[%s202 + $0x440] sm:%s195]
                %273 = vst [vmem:[%s203 + $0x110] sm:%s195] %v272
                %v274 = vld [vmem:[%s202 + $0x460] sm:%s195]
                %275 = vst [vmem:[%s203 + $0x118] sm:%s195] %v274
                %v276 = vld [vmem:[%s202 + $0x480] sm:%s195]
                %277 = vst [vmem:[%s203 + $0x120] sm:%s195] %v276
                %v278 = vld [vmem:[%s202 + $0x4a0] sm:%s195]
                %279 = vst [vmem:[%s203 + $0x128] sm:%s195] %v278
                %v280 = vld [vmem:[%s202 + $0x4c0] sm:%s195]
                %281 = vst [vmem:[%s203 + $0x130] sm:%s195] %v280
                %v282 = vld [vmem:[%s202 + $0x4e0] sm:%s195]
                %283 = vst [vmem:[%s203 + $0x138] sm:%s195] %v282
                %v284 = vld [vmem:[%s202 + $0x500] sm:%s195]
                %285 = vst [vmem:[%s203 + $0x140] sm:%s195] %v284
                %v286 = vld [vmem:[%s202 + $0x520] sm:%s195]
                %287 = vst [vmem:[%s203 + $0x148] sm:%s195] %v286
                %v288 = vld [vmem:[%s202 + $0x540] sm:%s195]
                %289 = vst [vmem:[%s203 + $0x150] sm:%s195] %v288
                %v290 = vld [vmem:[%s202 + $0x560] sm:%s195]
                %291 = vst [vmem:[%s203 + $0x158] sm:%s195] %v290
                %v292 = vld [vmem:[%s202 + $0x580] sm:%s195]
                %293 = vst [vmem:[%s203 + $0x160] sm:%s195] %v292
                %v294 = vld [vmem:[%s202 + $0x5a0] sm:%s195]
                %295 = vst [vmem:[%s203 + $0x168] sm:%s195] %v294
                %v296 = vld [vmem:[%s202 + $0x5c0] sm:%s195]
                %297 = vst [vmem:[%s203 + $0x170] sm:%s195] %v296
                %v298 = vld [vmem:[%s202 + $0x5e0] sm:%s195]
                %299 = vst [vmem:[%s203 + $0x178] sm:%s195] %v298
                %v300 = vld [vmem:[%s202 + $0x600] sm:%s195]
                %301 = vst [vmem:[%s203 + $0x180] sm:%s195] %v300
                %v302 = vld [vmem:[%s202 + $0x620] sm:%s195]
                %303 = vst [vmem:[%s203 + $0x188] sm:%s195] %v302
                %v304 = vld [vmem:[%s202 + $0x640] sm:%s195]
                %305 = vst [vmem:[%s203 + $0x190] sm:%s195] %v304
                %v306 = vld [vmem:[%s202 + $0x660] sm:%s195]
                %307 = vst [vmem:[%s203 + $0x198] sm:%s195] %v306
                %v308 = vld [vmem:[%s202 + $0x680] sm:%s195]
                %309 = vst [vmem:[%s203 + $0x1a0] sm:%s195] %v308
                %v310 = vld [vmem:[%s202 + $0x6a0] sm:%s195]
                %311 = vst [vmem:[%s203 + $0x1a8] sm:%s195] %v310
                %v312 = vld [vmem:[%s202 + $0x6c0] sm:%s195]
                %313 = vst [vmem:[%s203 + $0x1b0] sm:%s195] %v312
                %v314 = vld [vmem:[%s202 + $0x6e0] sm:%s195]
                %315 = vst [vmem:[%s203 + $0x1b8] sm:%s195] %v314
                %v316 = vld [vmem:[%s202 + $0x700] sm:%s195]
                %317 = vst [vmem:[%s203 + $0x1c0] sm:%s195] %v316
                %v318 = vld [vmem:[%s202 + $0x720] sm:%s195]
                %319 = vst [vmem:[%s203 + $0x1c8] sm:%s195] %v318
                %v320 = vld [vmem:[%s202 + $0x740] sm:%s195]
                %321 = vst [vmem:[%s203 + $0x1d0] sm:%s195] %v320
                %v322 = vld [vmem:[%s202 + $0x760] sm:%s195]
                %323 = vst [vmem:[%s203 + $0x1d8] sm:%s195] %v322
                %v324 = vld [vmem:[%s202 + $0x780] sm:%s195]
                %325 = vst [vmem:[%s203 + $0x1e0] sm:%s195] %v324
                %v326 = vld [vmem:[%s202 + $0x7a0] sm:%s195]
                %327 = vst [vmem:[%s203 + $0x1e8] sm:%s195] %v326
                %v328 = vld [vmem:[%s202 + $0x7c0] sm:%s195]
                %329 = vst [vmem:[%s203 + $0x1f0] sm:%s195] %v328
                %v330 = vld [vmem:[%s202 + $0x7e0] sm:%s195]
                %331 = vst [vmem:[%s203 + $0x1f8] sm:%s195] %v330
                %v332 = vld [vmem:[%s202 + $0x800] sm:%s195]
                %333 = vst [vmem:[%s203 + $0x200] sm:%s195] %v332
                %v334 = vld [vmem:[%s202 + $0x820] sm:%s195]
                %335 = vst [vmem:[%s203 + $0x208] sm:%s195] %v334
                %v336 = vld [vmem:[%s202 + $0x840] sm:%s195]
                %337 = vst [vmem:[%s203 + $0x210] sm:%s195] %v336
                %v338 = vld [vmem:[%s202 + $0x860] sm:%s195]
                %339 = vst [vmem:[%s203 + $0x218] sm:%s195] %v338
                %v340 = vld [vmem:[%s202 + $0x880] sm:%s195]
                %341 = vst [vmem:[%s203 + $0x220] sm:%s195] %v340
                %v342 = vld [vmem:[%s202 + $0x8a0] sm:%s195]
                %343 = vst [vmem:[%s203 + $0x228] sm:%s195] %v342
                %v344 = vld [vmem:[%s202 + $0x8c0] sm:%s195]
                %345 = vst [vmem:[%s203 + $0x230] sm:%s195] %v344
                %v346 = vld [vmem:[%s202 + $0x8e0] sm:%s195]
                %347 = vst [vmem:[%s203 + $0x238] sm:%s195] %v346
                %v348 = vld [vmem:[%s202 + $0x900] sm:%s195]
                %349 = vst [vmem:[%s203 + $0x240] sm:%s195] %v348
                %v350 = vld [vmem:[%s202 + $0x920] sm:%s195]
                %351 = vst [vmem:[%s203 + $0x248] sm:%s195] %v350
                %v352 = vld [vmem:[%s202 + $0x940] sm:%s195]
                %353 = vst [vmem:[%s203 + $0x250] sm:%s195] %v352
                %v354 = vld [vmem:[%s202 + $0x960] sm:%s195]
                %355 = vst [vmem:[%s203 + $0x258] sm:%s195] %v354
                %v356 = vld [vmem:[%s202 + $0x980] sm:%s195]
                %357 = vst [vmem:[%s203 + $0x260] sm:%s195] %v356
                %v358 = vld [vmem:[%s202 + $0x9a0] sm:%s195]
                %359 = vst [vmem:[%s203 + $0x268] sm:%s195] %v358
                %v360 = vld [vmem:[%s202 + $0x9c0] sm:%s195]
                %361 = vst [vmem:[%s203 + $0x270] sm:%s195] %v360
                %v362 = vld [vmem:[%s202 + $0x9e0] sm:%s195]
                %363 = vst [vmem:[%s203 + $0x278] sm:%s195] %v362
                %v364 = vld [vmem:[%s202 + $0xa00] sm:%s195]
                %365 = vst [vmem:[%s203 + $0x280] sm:%s195] %v364
                %v366 = vld [vmem:[%s202 + $0xa20] sm:%s195]
                %367 = vst [vmem:[%s203 + $0x288] sm:%s195] %v366
                %v368 = vld [vmem:[%s202 + $0xa40] sm:%s195]
                %369 = vst [vmem:[%s203 + $0x290] sm:%s195] %v368
                %v370 = vld [vmem:[%s202 + $0xa60] sm:%s195]
                %371 = vst [vmem:[%s203 + $0x298] sm:%s195] %v370
                %v372 = vld [vmem:[%s202 + $0xa80] sm:%s195]
                %373 = vst [vmem:[%s203 + $0x2a0] sm:%s195] %v372
                %v374 = vld [vmem:[%s202 + $0xaa0] sm:%s195]
                %375 = vst [vmem:[%s203 + $0x2a8] sm:%s195] %v374
                %v376 = vld [vmem:[%s202 + $0xac0] sm:%s195]
                %377 = vst [vmem:[%s203 + $0x2b0] sm:%s195] %v376
                %v378 = vld [vmem:[%s202 + $0xae0] sm:%s195]
                %379 = vst [vmem:[%s203 + $0x2b8] sm:%s195] %v378
                %v380 = vld [vmem:[%s202 + $0xb00] sm:%s195]
                %381 = vst [vmem:[%s203 + $0x2c0] sm:%s195] %v380
                %v382 = vld [vmem:[%s202 + $0xb20] sm:%s195]
                %383 = vst [vmem:[%s203 + $0x2c8] sm:%s195] %v382
                %v384 = vld [vmem:[%s202 + $0xb40] sm:%s195]
                %385 = vst [vmem:[%s203 + $0x2d0] sm:%s195] %v384
                %v386 = vld [vmem:[%s202 + $0xb60] sm:%s195]
                %387 = vst [vmem:[%s203 + $0x2d8] sm:%s195] %v386
                %v388 = vld [vmem:[%s202 + $0xb80] sm:%s195]
                %389 = vst [vmem:[%s203 + $0x2e0] sm:%s195] %v388
                %v390 = vld [vmem:[%s202 + $0xba0] sm:%s195]
                %391 = vst [vmem:[%s203 + $0x2e8] sm:%s195] %v390
                %v392 = vld [vmem:[%s202 + $0xbc0] sm:%s195]
                %393 = vst [vmem:[%s203 + $0x2f0] sm:%s195] %v392
                %v394 = vld [vmem:[%s202 + $0xbe0] sm:%s195]
                %395 = vst [vmem:[%s203 + $0x2f8] sm:%s195] %v394
                %v396 = vld [vmem:[%s202 + $0xc00] sm:%s195]
                %397 = vst [vmem:[%s203 + $0x300] sm:%s195] %v396
                %v398 = vld [vmem:[%s202 + $0xc20] sm:%s195]
                %399 = vst [vmem:[%s203 + $0x308] sm:%s195] %v398
                %v400 = vld [vmem:[%s202 + $0xc40] sm:%s195]
                %401 = vst [vmem:[%s203 + $0x310] sm:%s195] %v400
                %v402 = vld [vmem:[%s202 + $0xc60] sm:%s195]
                %403 = vst [vmem:[%s203 + $0x318] sm:%s195] %v402
                %v404 = vld [vmem:[%s202 + $0xc80] sm:%s195]
                %405 = vst [vmem:[%s203 + $0x320] sm:%s195] %v404
                %v406 = vld [vmem:[%s202 + $0xca0] sm:%s195]
                %407 = vst [vmem:[%s203 + $0x328] sm:%s195] %v406
                %v408 = vld [vmem:[%s202 + $0xcc0] sm:%s195]
                %409 = vst [vmem:[%s203 + $0x330] sm:%s195] %v408
                %v410 = vld [vmem:[%s202 + $0xce0] sm:%s195]
                %411 = vst [vmem:[%s203 + $0x338] sm:%s195] %v410
                %v412 = vld [vmem:[%s202 + $0xd00] sm:%s195]
                %413 = vst [vmem:[%s203 + $0x340] sm:%s195] %v412
                %v414 = vld [vmem:[%s202 + $0xd20] sm:%s195]
                %415 = vst [vmem:[%s203 + $0x348] sm:%s195] %v414
                %v416 = vld [vmem:[%s202 + $0xd40] sm:%s195]
                %417 = vst [vmem:[%s203 + $0x350] sm:%s195] %v416
                %v418 = vld [vmem:[%s202 + $0xd60] sm:%s195]
                %419 = vst [vmem:[%s203 + $0x358] sm:%s195] %v418
                %v420 = vld [vmem:[%s202 + $0xd80] sm:%s195]
                %421 = vst [vmem:[%s203 + $0x360] sm:%s195] %v420
                %v422 = vld [vmem:[%s202 + $0xda0] sm:%s195]
                %423 = vst [vmem:[%s203 + $0x368] sm:%s195] %v422
                %v424 = vld [vmem:[%s202 + $0xdc0] sm:%s195]
                %425 = vst [vmem:[%s203 + $0x370] sm:%s195] %v424
                %v426 = vld [vmem:[%s202 + $0xde0] sm:%s195]
                %427 = vst [vmem:[%s203 + $0x378] sm:%s195] %v426
                %v428 = vld [vmem:[%s202 + $0xe00] sm:%s195]
                %429 = vst [vmem:[%s203 + $0x380] sm:%s195] %v428
                %v430 = vld [vmem:[%s202 + $0xe20] sm:%s195]
                %431 = vst [vmem:[%s203 + $0x388] sm:%s195] %v430
                %v432 = vld [vmem:[%s202 + $0xe40] sm:%s195]
                %433 = vst [vmem:[%s203 + $0x390] sm:%s195] %v432
                %v434 = vld [vmem:[%s202 + $0xe60] sm:%s195]
                %435 = vst [vmem:[%s203 + $0x398] sm:%s195] %v434
                %v436 = vld [vmem:[%s202 + $0xe80] sm:%s195]
                %437 = vst [vmem:[%s203 + $0x3a0] sm:%s195] %v436
                %v438 = vld [vmem:[%s202 + $0xea0] sm:%s195]
                %439 = vst [vmem:[%s203 + $0x3a8] sm:%s195] %v438
                %v440 = vld [vmem:[%s202 + $0xec0] sm:%s195]
                %441 = vst [vmem:[%s203 + $0x3b0] sm:%s195] %v440
                %v442 = vld [vmem:[%s202 + $0xee0] sm:%s195]
                %443 = vst [vmem:[%s203 + $0x3b8] sm:%s195] %v442
                %v444 = vld [vmem:[%s202 + $0xf00] sm:%s195]
                %445 = vst [vmem:[%s203 + $0x3c0] sm:%s195] %v444
                %v446 = vld [vmem:[%s202 + $0xf20] sm:%s195]
                %447 = vst [vmem:[%s203 + $0x3c8] sm:%s195] %v446
                %v448 = vld [vmem:[%s202 + $0xf40] sm:%s195]
                %449 = vst [vmem:[%s203 + $0x3d0] sm:%s195] %v448
                %v450 = vld [vmem:[%s202 + $0xf60] sm:%s195]
                %451 = vst [vmem:[%s203 + $0x3d8] sm:%s195] %v450
                %v452 = vld [vmem:[%s202 + $0xf80] sm:%s195]
                %453 = vst [vmem:[%s203 + $0x3e0] sm:%s195] %v452
                %v454 = vld [vmem:[%s202 + $0xfa0] sm:%s195]
                %455 = vst [vmem:[%s203 + $0x3e8] sm:%s195] %v454
                %v456 = vld [vmem:[%s202 + $0xfc0] sm:%s195]
                %457 = vst [vmem:[%s203 + $0x3f0] sm:%s195] %v456
                %v458 = vld [vmem:[%s202 + $0xfe0] sm:%s195]
                %459 = vst [vmem:[%s203 + $0x3f8] sm:%s195] %v458
                %v460 = vld [vmem:[%s202 + $0x1000] sm:%s195]
                %461 = vst [vmem:[%s203 + $0x400] sm:%s195] %v460
                %v462 = vld [vmem:[%s202 + $0x1020] sm:%s195]
                %463 = vst [vmem:[%s203 + $0x408] sm:%s195] %v462
                %v464 = vld [vmem:[%s202 + $0x1040] sm:%s195]
                %465 = vst [vmem:[%s203 + $0x410] sm:%s195] %v464
                %v466 = vld [vmem:[%s202 + $0x1060] sm:%s195]
                %467 = vst [vmem:[%s203 + $0x418] sm:%s195] %v466
                %v468 = vld [vmem:[%s202 + $0x1080] sm:%s195]
                %469 = vst [vmem:[%s203 + $0x420] sm:%s195] %v468
                %v470 = vld [vmem:[%s202 + $0x10a0] sm:%s195]
                %471 = vst [vmem:[%s203 + $0x428] sm:%s195] %v470
                %v472 = vld [vmem:[%s202 + $0x10c0] sm:%s195]
                %473 = vst [vmem:[%s203 + $0x430] sm:%s195] %v472
                %v474 = vld [vmem:[%s202 + $0x10e0] sm:%s195]
                %475 = vst [vmem:[%s203 + $0x438] sm:%s195] %v474
                %v476 = vld [vmem:[%s202 + $0x1100] sm:%s195]
                %477 = vst [vmem:[%s203 + $0x440] sm:%s195] %v476
                %v478 = vld [vmem:[%s202 + $0x1120] sm:%s195]
                %479 = vst [vmem:[%s203 + $0x448] sm:%s195] %v478
                %v480 = vld [vmem:[%s202 + $0x1140] sm:%s195]
                %481 = vst [vmem:[%s203 + $0x450] sm:%s195] %v480
                %v482 = vld [vmem:[%s202 + $0x1160] sm:%s195]
                %483 = vst [vmem:[%s203 + $0x458] sm:%s195] %v482
                %v484 = vld [vmem:[%s202 + $0x1180] sm:%s195]
                %485 = vst [vmem:[%s203 + $0x460] sm:%s195] %v484
                %v486 = vld [vmem:[%s202 + $0x11a0] sm:%s195]
                %487 = vst [vmem:[%s203 + $0x468] sm:%s195] %v486
                %v488 = vld [vmem:[%s202 + $0x11c0] sm:%s195]
                %489 = vst [vmem:[%s203 + $0x470] sm:%s195] %v488
                %v490 = vld [vmem:[%s202 + $0x11e0] sm:%s195]
                %491 = vst [vmem:[%s203 + $0x478] sm:%s195] %v490
                %v492 = vld [vmem:[%s202 + $0x1200] sm:%s195]
                %493 = vst [vmem:[%s203 + $0x480] sm:%s195] %v492
                %v494 = vld [vmem:[%s202 + $0x1220] sm:%s195]
                %495 = vst [vmem:[%s203 + $0x488] sm:%s195] %v494
                %v496 = vld [vmem:[%s202 + $0x1240] sm:%s195]
                %497 = vst [vmem:[%s203 + $0x490] sm:%s195] %v496
                %v498 = vld [vmem:[%s202 + $0x1260] sm:%s195]
                %499 = vst [vmem:[%s203 + $0x498] sm:%s195] %v498
                %v500 = vld [vmem:[%s202 + $0x1280] sm:%s195]
                %501 = vst [vmem:[%s203 + $0x4a0] sm:%s195] %v500
                %v502 = vld [vmem:[%s202 + $0x12a0] sm:%s195]
                %503 = vst [vmem:[%s203 + $0x4a8] sm:%s195] %v502
                %v504 = vld [vmem:[%s202 + $0x12c0] sm:%s195]
                %505 = vst [vmem:[%s203 + $0x4b0] sm:%s195] %v504
                %v506 = vld [vmem:[%s202 + $0x12e0] sm:%s195]
                %507 = vst [vmem:[%s203 + $0x4b8] sm:%s195] %v506
                %v508 = vld [vmem:[%s202 + $0x1300] sm:%s195]
                %509 = vst [vmem:[%s203 + $0x4c0] sm:%s195] %v508
                %v510 = vld [vmem:[%s202 + $0x1320] sm:%s195]
                %511 = vst [vmem:[%s203 + $0x4c8] sm:%s195] %v510
                %v512 = vld [vmem:[%s202 + $0x1340] sm:%s195]
                %513 = vst [vmem:[%s203 + $0x4d0] sm:%s195] %v512
                %v514 = vld [vmem:[%s202 + $0x1360] sm:%s195]
                %515 = vst [vmem:[%s203 + $0x4d8] sm:%s195] %v514
                %v516 = vld [vmem:[%s202 + $0x1380] sm:%s195]
                %517 = vst [vmem:[%s203 + $0x4e0] sm:%s195] %v516
                %v518 = vld [vmem:[%s202 + $0x13a0] sm:%s195]
                %519 = vst [vmem:[%s203 + $0x4e8] sm:%s195] %v518
                %v520 = vld [vmem:[%s202 + $0x13c0] sm:%s195]
                %521 = vst [vmem:[%s203 + $0x4f0] sm:%s195] %v520
                %v522 = vld [vmem:[%s202 + $0x13e0] sm:%s195]
                %523 = vst [vmem:[%s203 + $0x4f8] sm:%s195] %v522
                %v524 = vld [vmem:[%s202 + $0x1400] sm:%s195]
                %525 = vst [vmem:[%s203 + $0x500] sm:%s195] %v524
                %v526 = vld [vmem:[%s202 + $0x1420] sm:%s195]
                %527 = vst [vmem:[%s203 + $0x508] sm:%s195] %v526
                %v528 = vld [vmem:[%s202 + $0x1440] sm:%s195]
                %529 = vst [vmem:[%s203 + $0x510] sm:%s195] %v528
                %v530 = vld [vmem:[%s202 + $0x1460] sm:%s195]
                %531 = vst [vmem:[%s203 + $0x518] sm:%s195] %v530
                %v532 = vld [vmem:[%s202 + $0x1480] sm:%s195]
                %533 = vst [vmem:[%s203 + $0x520] sm:%s195] %v532
                %v534 = vld [vmem:[%s202 + $0x14a0] sm:%s195]
                %535 = vst [vmem:[%s203 + $0x528] sm:%s195] %v534
                %v536 = vld [vmem:[%s202 + $0x14c0] sm:%s195]
                %537 = vst [vmem:[%s203 + $0x530] sm:%s195] %v536
                %v538 = vld [vmem:[%s202 + $0x14e0] sm:%s195]
                %539 = vst [vmem:[%s203 + $0x538] sm:%s195] %v538
                %v540 = vld [vmem:[%s202 + $0x1500] sm:%s195]
                %541 = vst [vmem:[%s203 + $0x540] sm:%s195] %v540
                %v542 = vld [vmem:[%s202 + $0x1520] sm:%s195]
                %543 = vst [vmem:[%s203 + $0x548] sm:%s195] %v542
                %v544 = vld [vmem:[%s202 + $0x1540] sm:%s195]
                %545 = vst [vmem:[%s203 + $0x550] sm:%s195] %v544
                %v546 = vld [vmem:[%s202 + $0x1560] sm:%s195]
                %547 = vst [vmem:[%s203 + $0x558] sm:%s195] %v546
                %v548 = vld [vmem:[%s202 + $0x1580] sm:%s195]
                %549 = vst [vmem:[%s203 + $0x560] sm:%s195] %v548
                %v550 = vld [vmem:[%s202 + $0x15a0] sm:%s195]
                %551 = vst [vmem:[%s203 + $0x568] sm:%s195] %v550
                %v552 = vld [vmem:[%s202 + $0x15c0] sm:%s195]
                %553 = vst [vmem:[%s203 + $0x570] sm:%s195] %v552
                %v554 = vld [vmem:[%s202 + $0x15e0] sm:%s195]
                %555 = vst [vmem:[%s203 + $0x578] sm:%s195] %v554
                %v556 = vld [vmem:[%s202 + $0x1600] sm:%s195]
                %557 = vst [vmem:[%s203 + $0x580] sm:%s195] %v556
                %v558 = vld [vmem:[%s202 + $0x1620] sm:%s195]
                %559 = vst [vmem:[%s203 + $0x588] sm:%s195] %v558
                %v560 = vld [vmem:[%s202 + $0x1640] sm:%s195]
                %561 = vst [vmem:[%s203 + $0x590] sm:%s195] %v560
                %v562 = vld [vmem:[%s202 + $0x1660] sm:%s195]
                %563 = vst [vmem:[%s203 + $0x598] sm:%s195] %v562
                %v564 = vld [vmem:[%s202 + $0x1680] sm:%s195]
                %565 = vst [vmem:[%s203 + $0x5a0] sm:%s195] %v564
                %v566 = vld [vmem:[%s202 + $0x16a0] sm:%s195]
                %567 = vst [vmem:[%s203 + $0x5a8] sm:%s195] %v566
                %v568 = vld [vmem:[%s202 + $0x16c0] sm:%s195]
                %569 = vst [vmem:[%s203 + $0x5b0] sm:%s195] %v568
                %v570 = vld [vmem:[%s202 + $0x16e0] sm:%s195]
                %571 = vst [vmem:[%s203 + $0x5b8] sm:%s195] %v570
                %v572 = vld [vmem:[%s202 + $0x1700] sm:%s195]
                %573 = vst [vmem:[%s203 + $0x5c0] sm:%s195] %v572
                %v574 = vld [vmem:[%s202 + $0x1720] sm:%s195]
                %575 = vst [vmem:[%s203 + $0x5c8] sm:%s195] %v574
                %v576 = vld [vmem:[%s202 + $0x1740] sm:%s195]
                %577 = vst [vmem:[%s203 + $0x5d0] sm:%s195] %v576
                %v578 = vld [vmem:[%s202 + $0x1760] sm:%s195]
                %579 = vst [vmem:[%s203 + $0x5d8] sm:%s195] %v578
                %v580 = vld [vmem:[%s202 + $0x1780] sm:%s195]
                %581 = vst [vmem:[%s203 + $0x5e0] sm:%s195] %v580
                %v582 = vld [vmem:[%s202 + $0x17a0] sm:%s195]
                %583 = vst [vmem:[%s203 + $0x5e8] sm:%s195] %v582
                %v584 = vld [vmem:[%s202 + $0x17c0] sm:%s195]
                %585 = vst [vmem:[%s203 + $0x5f0] sm:%s195] %v584
                %v586 = vld [vmem:[%s202 + $0x17e0] sm:%s195]
                %587 = vst [vmem:[%s203 + $0x5f8] sm:%s195] %v586
                %v588 = vld [vmem:[%s202 + $0x1800] sm:%s195]
                %589 = vst [vmem:[%s203 + $0x600] sm:%s195] %v588
                %v590 = vld [vmem:[%s202 + $0x1820] sm:%s195]
                %591 = vst [vmem:[%s203 + $0x608] sm:%s195] %v590
                %v592 = vld [vmem:[%s202 + $0x1840] sm:%s195]
                %593 = vst [vmem:[%s203 + $0x610] sm:%s195] %v592
                %v594 = vld [vmem:[%s202 + $0x1860] sm:%s195]
                %595 = vst [vmem:[%s203 + $0x618] sm:%s195] %v594
                %v596 = vld [vmem:[%s202 + $0x1880] sm:%s195]
                %597 = vst [vmem:[%s203 + $0x620] sm:%s195] %v596
                %v598 = vld [vmem:[%s202 + $0x18a0] sm:%s195]
                %599 = vst [vmem:[%s203 + $0x628] sm:%s195] %v598
                %v600 = vld [vmem:[%s202 + $0x18c0] sm:%s195]
                %601 = vst [vmem:[%s203 + $0x630] sm:%s195] %v600
                %v602 = vld [vmem:[%s202 + $0x18e0] sm:%s195]
                %603 = vst [vmem:[%s203 + $0x638] sm:%s195] %v602
                %v604 = vld [vmem:[%s202 + $0x1900] sm:%s195]
                %605 = vst [vmem:[%s203 + $0x640] sm:%s195] %v604
                %v606 = vld [vmem:[%s202 + $0x1920] sm:%s195]
                %607 = vst [vmem:[%s203 + $0x648] sm:%s195] %v606
                %v608 = vld [vmem:[%s202 + $0x1940] sm:%s195]
                %609 = vst [vmem:[%s203 + $0x650] sm:%s195] %v608
                %v610 = vld [vmem:[%s202 + $0x1960] sm:%s195]
                %611 = vst [vmem:[%s203 + $0x658] sm:%s195] %v610
                %v612 = vld [vmem:[%s202 + $0x1980] sm:%s195]
                %613 = vst [vmem:[%s203 + $0x660] sm:%s195] %v612
                %v614 = vld [vmem:[%s202 + $0x19a0] sm:%s195]
                %615 = vst [vmem:[%s203 + $0x668] sm:%s195] %v614
                %v616 = vld [vmem:[%s202 + $0x19c0] sm:%s195]
                %617 = vst [vmem:[%s203 + $0x670] sm:%s195] %v616
                %v618 = vld [vmem:[%s202 + $0x19e0] sm:%s195]
                %619 = vst [vmem:[%s203 + $0x678] sm:%s195] %v618
                %v620 = vld [vmem:[%s202 + $0x1a00] sm:%s195]
                %621 = vst [vmem:[%s203 + $0x680] sm:%s195] %v620
                %v622 = vld [vmem:[%s202 + $0x1a20] sm:%s195]
                %623 = vst [vmem:[%s203 + $0x688] sm:%s195] %v622
                %v624 = vld [vmem:[%s202 + $0x1a40] sm:%s195]
                %625 = vst [vmem:[%s203 + $0x690] sm:%s195] %v624
                %v626 = vld [vmem:[%s202 + $0x1a60] sm:%s195]
                %627 = vst [vmem:[%s203 + $0x698] sm:%s195] %v626
                %v628 = vld [vmem:[%s202 + $0x1a80] sm:%s195]
                %629 = vst [vmem:[%s203 + $0x6a0] sm:%s195] %v628
                %v630 = vld [vmem:[%s202 + $0x1aa0] sm:%s195]
                %631 = vst [vmem:[%s203 + $0x6a8] sm:%s195] %v630
                %v632 = vld [vmem:[%s202 + $0x1ac0] sm:%s195]
                %633 = vst [vmem:[%s203 + $0x6b0] sm:%s195] %v632
                %v634 = vld [vmem:[%s202 + $0x1ae0] sm:%s195]
                %635 = vst [vmem:[%s203 + $0x6b8] sm:%s195] %v634
                %v636 = vld [vmem:[%s202 + $0x1b00] sm:%s195]
                %637 = vst [vmem:[%s203 + $0x6c0] sm:%s195] %v636
                %v638 = vld [vmem:[%s202 + $0x1b20] sm:%s195]
                %639 = vst [vmem:[%s203 + $0x6c8] sm:%s195] %v638
                %v640 = vld [vmem:[%s202 + $0x1b40] sm:%s195]
                %641 = vst [vmem:[%s203 + $0x6d0] sm:%s195] %v640
                %v642 = vld [vmem:[%s202 + $0x1b60] sm:%s195]
                %643 = vst [vmem:[%s203 + $0x6d8] sm:%s195] %v642
                %v644 = vld [vmem:[%s202 + $0x1b80] sm:%s195]
                %645 = vst [vmem:[%s203 + $0x6e0] sm:%s195] %v644
                %v646 = vld [vmem:[%s202 + $0x1ba0] sm:%s195]
                %647 = vst [vmem:[%s203 + $0x6e8] sm:%s195] %v646
                %v648 = vld [vmem:[%s202 + $0x1bc0] sm:%s195]
                %649 = vst [vmem:[%s203 + $0x6f0] sm:%s195] %v648
                %v650 = vld [vmem:[%s202 + $0x1be0] sm:%s195]
                %651 = vst [vmem:[%s203 + $0x6f8] sm:%s195] %v650
                %v652 = vld [vmem:[%s202 + $0x1c00] sm:%s195]
                %653 = vst [vmem:[%s203 + $0x700] sm:%s195] %v652
                %v654 = vld [vmem:[%s202 + $0x1c20] sm:%s195]
                %655 = vst [vmem:[%s203 + $0x708] sm:%s195] %v654
                %v656 = vld [vmem:[%s202 + $0x1c40] sm:%s195]
                %657 = vst [vmem:[%s203 + $0x710] sm:%s195] %v656
                %v658 = vld [vmem:[%s202 + $0x1c60] sm:%s195]
                %659 = vst [vmem:[%s203 + $0x718] sm:%s195] %v658
                %v660 = vld [vmem:[%s202 + $0x1c80] sm:%s195]
                %661 = vst [vmem:[%s203 + $0x720] sm:%s195] %v660
                %v662 = vld [vmem:[%s202 + $0x1ca0] sm:%s195]
                %663 = vst [vmem:[%s203 + $0x728] sm:%s195] %v662
                %v664 = vld [vmem:[%s202 + $0x1cc0] sm:%s195]
                %665 = vst [vmem:[%s203 + $0x730] sm:%s195] %v664
                %v666 = vld [vmem:[%s202 + $0x1ce0] sm:%s195]
                %667 = vst [vmem:[%s203 + $0x738] sm:%s195] %v666
                %v668 = vld [vmem:[%s202 + $0x1d00] sm:%s195]
                %669 = vst [vmem:[%s203 + $0x740] sm:%s195] %v668
                %v670 = vld [vmem:[%s202 + $0x1d20] sm:%s195]
                %671 = vst [vmem:[%s203 + $0x748] sm:%s195] %v670
                %v672 = vld [vmem:[%s202 + $0x1d40] sm:%s195]
                %673 = vst [vmem:[%s203 + $0x750] sm:%s195] %v672
                %v674 = vld [vmem:[%s202 + $0x1d60] sm:%s195]
                %675 = vst [vmem:[%s203 + $0x758] sm:%s195] %v674
                %v676 = vld [vmem:[%s202 + $0x1d80] sm:%s195]
                %677 = vst [vmem:[%s203 + $0x760] sm:%s195] %v676
                %v678 = vld [vmem:[%s202 + $0x1da0] sm:%s195]
                %679 = vst [vmem:[%s203 + $0x768] sm:%s195] %v678
                %v680 = vld [vmem:[%s202 + $0x1dc0] sm:%s195]
                %681 = vst [vmem:[%s203 + $0x770] sm:%s195] %v680
                %v682 = vld [vmem:[%s202 + $0x1de0] sm:%s195]
                %683 = vst [vmem:[%s203 + $0x778] sm:%s195] %v682
                %v684 = vld [vmem:[%s202 + $0x1e00] sm:%s195]
                %685 = vst [vmem:[%s203 + $0x780] sm:%s195] %v684
                %v686 = vld [vmem:[%s202 + $0x1e20] sm:%s195]
                %687 = vst [vmem:[%s203 + $0x788] sm:%s195] %v686
                %v688 = vld [vmem:[%s202 + $0x1e40] sm:%s195]
                %689 = vst [vmem:[%s203 + $0x790] sm:%s195] %v688
                %v690 = vld [vmem:[%s202 + $0x1e60] sm:%s195]
                %691 = vst [vmem:[%s203 + $0x798] sm:%s195] %v690
                %v692 = vld [vmem:[%s202 + $0x1e80] sm:%s195]
                %693 = vst [vmem:[%s203 + $0x7a0] sm:%s195] %v692
                %v694 = vld [vmem:[%s202 + $0x1ea0] sm:%s195]
                %695 = vst [vmem:[%s203 + $0x7a8] sm:%s195] %v694
                %v696 = vld [vmem:[%s202 + $0x1ec0] sm:%s195]
                %697 = vst [vmem:[%s203 + $0x7b0] sm:%s195] %v696
                %v698 = vld [vmem:[%s202 + $0x1ee0] sm:%s195]
                %699 = vst [vmem:[%s203 + $0x7b8] sm:%s195] %v698
                %v700 = vld [vmem:[%s202 + $0x1f00] sm:%s195]
                %701 = vst [vmem:[%s203 + $0x7c0] sm:%s195] %v700
                %v702 = vld [vmem:[%s202 + $0x1f20] sm:%s195]
                %703 = vst [vmem:[%s203 + $0x7c8] sm:%s195] %v702
                %v704 = vld [vmem:[%s202 + $0x1f40] sm:%s195]
                %705 = vst [vmem:[%s203 + $0x7d0] sm:%s195] %v704
                %v706 = vld [vmem:[%s202 + $0x1f60] sm:%s195]
                %707 = vst [vmem:[%s203 + $0x7d8] sm:%s195] %v706
                %v708 = vld [vmem:[%s202 + $0x1f80] sm:%s195]
                %709 = vst [vmem:[%s203 + $0x7e0] sm:%s195] %v708
                %v710 = vld [vmem:[%s202 + $0x1fa0] sm:%s195]
                %711 = vst [vmem:[%s203 + $0x7e8] sm:%s195] %v710
                %v712 = vld [vmem:[%s202 + $0x1fc0] sm:%s195]
                %713 = vst [vmem:[%s203 + $0x7f0] sm:%s195] %v712
                %v714 = vld [vmem:[%s202 + $0x1fe0] sm:%s195]
                %715 = vst [vmem:[%s203 + $0x7f8] sm:%s195] %v714
                %v716 = vld [vmem:[%s202 + $0x2000] sm:%s195]
                %717 = vst [vmem:[%s203 + $0x800] sm:%s195] %v716
                %v718 = vld [vmem:[%s202 + $0x2020] sm:%s195]
                %719 = vst [vmem:[%s203 + $0x808] sm:%s195] %v718
                %v720 = vld [vmem:[%s202 + $0x2040] sm:%s195]
                %721 = vst [vmem:[%s203 + $0x810] sm:%s195] %v720
                %v722 = vld [vmem:[%s202 + $0x2060] sm:%s195]
                %723 = vst [vmem:[%s203 + $0x818] sm:%s195] %v722
                %v724 = vld [vmem:[%s202 + $0x2080] sm:%s195]
                %725 = vst [vmem:[%s203 + $0x820] sm:%s195] %v724
                %v726 = vld [vmem:[%s202 + $0x20a0] sm:%s195]
                %727 = vst [vmem:[%s203 + $0x828] sm:%s195] %v726
                %v728 = vld [vmem:[%s202 + $0x20c0] sm:%s195]
                %729 = vst [vmem:[%s203 + $0x830] sm:%s195] %v728
                %v730 = vld [vmem:[%s202 + $0x20e0] sm:%s195]
                %731 = vst [vmem:[%s203 + $0x838] sm:%s195] %v730
                %v732 = vld [vmem:[%s202 + $0x2100] sm:%s195]
                %733 = vst [vmem:[%s203 + $0x840] sm:%s195] %v732
                %v734 = vld [vmem:[%s202 + $0x2120] sm:%s195]
                %735 = vst [vmem:[%s203 + $0x848] sm:%s195] %v734
                %v736 = vld [vmem:[%s202 + $0x2140] sm:%s195]
                %737 = vst [vmem:[%s203 + $0x850] sm:%s195] %v736
                %v738 = vld [vmem:[%s202 + $0x2160] sm:%s195]
                %739 = vst [vmem:[%s203 + $0x858] sm:%s195] %v738
                %v740 = vld [vmem:[%s202 + $0x2180] sm:%s195]
                %741 = vst [vmem:[%s203 + $0x860] sm:%s195] %v740
                %v742 = vld [vmem:[%s202 + $0x21a0] sm:%s195]
                %743 = vst [vmem:[%s203 + $0x868] sm:%s195] %v742
                %v744 = vld [vmem:[%s202 + $0x21c0] sm:%s195]
                %745 = vst [vmem:[%s203 + $0x870] sm:%s195] %v744
                %v746 = vld [vmem:[%s202 + $0x21e0] sm:%s195]
                %747 = vst [vmem:[%s203 + $0x878] sm:%s195] %v746
                %v748 = vld [vmem:[%s202 + $0x2200] sm:%s195]
                %749 = vst [vmem:[%s203 + $0x880] sm:%s195] %v748
                %v750 = vld [vmem:[%s202 + $0x2220] sm:%s195]
                %751 = vst [vmem:[%s203 + $0x888] sm:%s195] %v750
                %v752 = vld [vmem:[%s202 + $0x2240] sm:%s195]
                %753 = vst [vmem:[%s203 + $0x890] sm:%s195] %v752
                %v754 = vld [vmem:[%s202 + $0x2260] sm:%s195]
                %755 = vst [vmem:[%s203 + $0x898] sm:%s195] %v754
                %v756 = vld [vmem:[%s202 + $0x2280] sm:%s195]
                %757 = vst [vmem:[%s203 + $0x8a0] sm:%s195] %v756
                %v758 = vld [vmem:[%s202 + $0x22a0] sm:%s195]
                %759 = vst [vmem:[%s203 + $0x8a8] sm:%s195] %v758
                %v760 = vld [vmem:[%s202 + $0x22c0] sm:%s195]
                %761 = vst [vmem:[%s203 + $0x8b0] sm:%s195] %v760
                %v762 = vld [vmem:[%s202 + $0x22e0] sm:%s195]
                %763 = vst [vmem:[%s203 + $0x8b8] sm:%s195] %v762
                %v764 = vld [vmem:[%s202 + $0x2300] sm:%s195]
                %765 = vst [vmem:[%s203 + $0x8c0] sm:%s195] %v764
                %v766 = vld [vmem:[%s202 + $0x2320] sm:%s195]
                %767 = vst [vmem:[%s203 + $0x8c8] sm:%s195] %v766
                %v768 = vld [vmem:[%s202 + $0x2340] sm:%s195]
                %769 = vst [vmem:[%s203 + $0x8d0] sm:%s195] %v768
                %v770 = vld [vmem:[%s202 + $0x2360] sm:%s195]
                %771 = vst [vmem:[%s203 + $0x8d8] sm:%s195] %v770
                %v772 = vld [vmem:[%s202 + $0x2380] sm:%s195]
                %773 = vst [vmem:[%s203 + $0x8e0] sm:%s195] %v772
                %v774 = vld [vmem:[%s202 + $0x23a0] sm:%s195]
                %775 = vst [vmem:[%s203 + $0x8e8] sm:%s195] %v774
                %v776 = vld [vmem:[%s202 + $0x23c0] sm:%s195]
                %777 = vst [vmem:[%s203 + $0x8f0] sm:%s195] %v776
                %v778 = vld [vmem:[%s202 + $0x23e0] sm:%s195]
                %779 = vst [vmem:[%s203 + $0x8f8] sm:%s195] %v778
                %v780 = vld [vmem:[%s202 + $0x2400] sm:%s195]
                %781 = vst [vmem:[%s203 + $0x900] sm:%s195] %v780
                %v782 = vld [vmem:[%s202 + $0x2420] sm:%s195]
                %783 = vst [vmem:[%s203 + $0x908] sm:%s195] %v782
                %v784 = vld [vmem:[%s202 + $0x2440] sm:%s195]
                %785 = vst [vmem:[%s203 + $0x910] sm:%s195] %v784
                %v786 = vld [vmem:[%s202 + $0x2460] sm:%s195]
                %787 = vst [vmem:[%s203 + $0x918] sm:%s195] %v786
                %v788 = vld [vmem:[%s202 + $0x2480] sm:%s195]
                %789 = vst [vmem:[%s203 + $0x920] sm:%s195] %v788
                %v790 = vld [vmem:[%s202 + $0x24a0] sm:%s195]
                %791 = vst [vmem:[%s203 + $0x928] sm:%s195] %v790
                %v792 = vld [vmem:[%s202 + $0x24c0] sm:%s195]
                %793 = vst [vmem:[%s203 + $0x930] sm:%s195] %v792
                %v794 = vld [vmem:[%s202 + $0x24e0] sm:%s195]
                %795 = vst [vmem:[%s203 + $0x938] sm:%s195] %v794
                %v796 = vld [vmem:[%s202 + $0x2500] sm:%s195]
                %797 = vst [vmem:[%s203 + $0x940] sm:%s195] %v796
                %v798 = vld [vmem:[%s202 + $0x2520] sm:%s195]
                %799 = vst [vmem:[%s203 + $0x948] sm:%s195] %v798
                %v800 = vld [vmem:[%s202 + $0x2540] sm:%s195]
                %801 = vst [vmem:[%s203 + $0x950] sm:%s195] %v800
                %v802 = vld [vmem:[%s202 + $0x2560] sm:%s195]
                %803 = vst [vmem:[%s203 + $0x958] sm:%s195] %v802
                %v804 = vld [vmem:[%s202 + $0x2580] sm:%s195]
                %805 = vst [vmem:[%s203 + $0x960] sm:%s195] %v804
                %v806 = vld [vmem:[%s202 + $0x25a0] sm:%s195]
                %807 = vst [vmem:[%s203 + $0x968] sm:%s195] %v806
                %v808 = vld [vmem:[%s202 + $0x25c0] sm:%s195]
                %809 = vst [vmem:[%s203 + $0x970] sm:%s195] %v808
                %v810 = vld [vmem:[%s202 + $0x25e0] sm:%s195]
                %811 = vst [vmem:[%s203 + $0x978] sm:%s195] %v810
                %v812 = vld [vmem:[%s202 + $0x2600] sm:%s195]
                %813 = vst [vmem:[%s203 + $0x980] sm:%s195] %v812
                %v814 = vld [vmem:[%s202 + $0x2620] sm:%s195]
                %815 = vst [vmem:[%s203 + $0x988] sm:%s195] %v814
                %v816 = vld [vmem:[%s202 + $0x2640] sm:%s195]
                %817 = vst [vmem:[%s203 + $0x990] sm:%s195] %v816
                %v818 = vld [vmem:[%s202 + $0x2660] sm:%s195]
                %819 = vst [vmem:[%s203 + $0x998] sm:%s195] %v818
                %v820 = vld [vmem:[%s202 + $0x2680] sm:%s195]
                %821 = vst [vmem:[%s203 + $0x9a0] sm:%s195] %v820
                %v822 = vld [vmem:[%s202 + $0x26a0] sm:%s195]
                %823 = vst [vmem:[%s203 + $0x9a8] sm:%s195] %v822
                %v824 = vld [vmem:[%s202 + $0x26c0] sm:%s195]
                %825 = vst [vmem:[%s203 + $0x9b0] sm:%s195] %v824
                %v826 = vld [vmem:[%s202 + $0x26e0] sm:%s195]
                %827 = vst [vmem:[%s203 + $0x9b8] sm:%s195] %v826
                %v828 = vld [vmem:[%s202 + $0x2700] sm:%s195]
                %829 = vst [vmem:[%s203 + $0x9c0] sm:%s195] %v828
                %v830 = vld [vmem:[%s202 + $0x2720] sm:%s195]
                %831 = vst [vmem:[%s203 + $0x9c8] sm:%s195] %v830
                %v832 = vld [vmem:[%s202 + $0x2740] sm:%s195]
                %833 = vst [vmem:[%s203 + $0x9d0] sm:%s195] %v832
                %v834 = vld [vmem:[%s202 + $0x2760] sm:%s195]
                %835 = vst [vmem:[%s203 + $0x9d8] sm:%s195] %v834
                %v836 = vld [vmem:[%s202 + $0x2780] sm:%s195]
                %837 = vst [vmem:[%s203 + $0x9e0] sm:%s195] %v836
                %v838 = vld [vmem:[%s202 + $0x27a0] sm:%s195]
                %839 = vst [vmem:[%s203 + $0x9e8] sm:%s195] %v838
                %v840 = vld [vmem:[%s202 + $0x27c0] sm:%s195]
                %841 = vst [vmem:[%s203 + $0x9f0] sm:%s195] %v840
                %v842 = vld [vmem:[%s202 + $0x27e0] sm:%s195]
                %843 = vst [vmem:[%s203 + $0x9f8] sm:%s195] %v842
                %v844 = vld [vmem:[%s202 + $0x2800] sm:%s195]
                %845 = vst [vmem:[%s203 + $0xa00] sm:%s195] %v844
                %v846 = vld [vmem:[%s202 + $0x2820] sm:%s195]
                %847 = vst [vmem:[%s203 + $0xa08] sm:%s195] %v846
                %v848 = vld [vmem:[%s202 + $0x2840] sm:%s195]
                %849 = vst [vmem:[%s203 + $0xa10] sm:%s195] %v848
                %v850 = vld [vmem:[%s202 + $0x2860] sm:%s195]
                %851 = vst [vmem:[%s203 + $0xa18] sm:%s195] %v850
                %v852 = vld [vmem:[%s202 + $0x2880] sm:%s195]
                %853 = vst [vmem:[%s203 + $0xa20] sm:%s195] %v852
                %v854 = vld [vmem:[%s202 + $0x28a0] sm:%s195]
                %855 = vst [vmem:[%s203 + $0xa28] sm:%s195] %v854
                %v856 = vld [vmem:[%s202 + $0x28c0] sm:%s195]
                %857 = vst [vmem:[%s203 + $0xa30] sm:%s195] %v856
                %v858 = vld [vmem:[%s202 + $0x28e0] sm:%s195]
                %859 = vst [vmem:[%s203 + $0xa38] sm:%s195] %v858
                %v860 = vld [vmem:[%s202 + $0x2900] sm:%s195]
                %861 = vst [vmem:[%s203 + $0xa40] sm:%s195] %v860
                %v862 = vld [vmem:[%s202 + $0x2920] sm:%s195]
                %863 = vst [vmem:[%s203 + $0xa48] sm:%s195] %v862
                %v864 = vld [vmem:[%s202 + $0x2940] sm:%s195]
                %865 = vst [vmem:[%s203 + $0xa50] sm:%s195] %v864
                %v866 = vld [vmem:[%s202 + $0x2960] sm:%s195]
                %867 = vst [vmem:[%s203 + $0xa58] sm:%s195] %v866
                %v868 = vld [vmem:[%s202 + $0x2980] sm:%s195]
                %869 = vst [vmem:[%s203 + $0xa60] sm:%s195] %v868
                %v870 = vld [vmem:[%s202 + $0x29a0] sm:%s195]
                %871 = vst [vmem:[%s203 + $0xa68] sm:%s195] %v870
                %v872 = vld [vmem:[%s202 + $0x29c0] sm:%s195]
                %873 = vst [vmem:[%s203 + $0xa70] sm:%s195] %v872
                %v874 = vld [vmem:[%s202 + $0x29e0] sm:%s195]
                %875 = vst [vmem:[%s203 + $0xa78] sm:%s195] %v874
                %v876 = vld [vmem:[%s202 + $0x2a00] sm:%s195]
                %877 = vst [vmem:[%s203 + $0xa80] sm:%s195] %v876
                %v878 = vld [vmem:[%s202 + $0x2a20] sm:%s195]
                %879 = vst [vmem:[%s203 + $0xa88] sm:%s195] %v878
                %v880 = vld [vmem:[%s202 + $0x2a40] sm:%s195]
                %881 = vst [vmem:[%s203 + $0xa90] sm:%s195] %v880
                %v882 = vld [vmem:[%s202 + $0x2a60] sm:%s195]
                %883 = vst [vmem:[%s203 + $0xa98] sm:%s195] %v882
                %v884 = vld [vmem:[%s202 + $0x2a80] sm:%s195]
                %885 = vst [vmem:[%s203 + $0xaa0] sm:%s195] %v884
                %v886 = vld [vmem:[%s202 + $0x2aa0] sm:%s195]
                %887 = vst [vmem:[%s203 + $0xaa8] sm:%s195] %v886
                %v888 = vld [vmem:[%s202 + $0x2ac0] sm:%s195]
                %889 = vst [vmem:[%s203 + $0xab0] sm:%s195] %v888
                %v890 = vld [vmem:[%s202 + $0x2ae0] sm:%s195]
                %891 = vst [vmem:[%s203 + $0xab8] sm:%s195] %v890
                %v892 = vld [vmem:[%s202 + $0x2b00] sm:%s195]
                %893 = vst [vmem:[%s203 + $0xac0] sm:%s195] %v892
                %v894 = vld [vmem:[%s202 + $0x2b20] sm:%s195]
                %895 = vst [vmem:[%s203 + $0xac8] sm:%s195] %v894
                %v896 = vld [vmem:[%s202 + $0x2b40] sm:%s195]
                %897 = vst [vmem:[%s203 + $0xad0] sm:%s195] %v896
                %v898 = vld [vmem:[%s202 + $0x2b60] sm:%s195]
                %899 = vst [vmem:[%s203 + $0xad8] sm:%s195] %v898
                %v900 = vld [vmem:[%s202 + $0x2b80] sm:%s195]
                %901 = vst [vmem:[%s203 + $0xae0] sm:%s195] %v900
                %v902 = vld [vmem:[%s202 + $0x2ba0] sm:%s195]
                %903 = vst [vmem:[%s203 + $0xae8] sm:%s195] %v902
                %v904 = vld [vmem:[%s202 + $0x2bc0] sm:%s195]
                %905 = vst [vmem:[%s203 + $0xaf0] sm:%s195] %v904
                %v906 = vld [vmem:[%s202 + $0x2be0] sm:%s195]
                %907 = vst [vmem:[%s203 + $0xaf8] sm:%s195] %v906
                %v908 = vld [vmem:[%s202 + $0x2c00] sm:%s195]
                %909 = vst [vmem:[%s203 + $0xb00] sm:%s195] %v908
                %v910 = vld [vmem:[%s202 + $0x2c20] sm:%s195]
                %911 = vst [vmem:[%s203 + $0xb08] sm:%s195] %v910
                %v912 = vld [vmem:[%s202 + $0x2c40] sm:%s195]
                %913 = vst [vmem:[%s203 + $0xb10] sm:%s195] %v912
                %v914 = vld [vmem:[%s202 + $0x2c60] sm:%s195]
                %915 = vst [vmem:[%s203 + $0xb18] sm:%s195] %v914
                %v916 = vld [vmem:[%s202 + $0x2c80] sm:%s195]
                %917 = vst [vmem:[%s203 + $0xb20] sm:%s195] %v916
                %v918 = vld [vmem:[%s202 + $0x2ca0] sm:%s195]
                %919 = vst [vmem:[%s203 + $0xb28] sm:%s195] %v918
                %v920 = vld [vmem:[%s202 + $0x2cc0] sm:%s195]
                %921 = vst [vmem:[%s203 + $0xb30] sm:%s195] %v920
                %v922 = vld [vmem:[%s202 + $0x2ce0] sm:%s195]
                %923 = vst [vmem:[%s203 + $0xb38] sm:%s195] %v922
                %v924 = vld [vmem:[%s202 + $0x2d00] sm:%s195]
                %925 = vst [vmem:[%s203 + $0xb40] sm:%s195] %v924
                %v926 = vld [vmem:[%s202 + $0x2d20] sm:%s195]
                %927 = vst [vmem:[%s203 + $0xb48] sm:%s195] %v926
                %v928 = vld [vmem:[%s202 + $0x2d40] sm:%s195]
                %929 = vst [vmem:[%s203 + $0xb50] sm:%s195] %v928
                %v930 = vld [vmem:[%s202 + $0x2d60] sm:%s195]
                %931 = vst [vmem:[%s203 + $0xb58] sm:%s195] %v930
                %v932 = vld [vmem:[%s202 + $0x2d80] sm:%s195]
                %933 = vst [vmem:[%s203 + $0xb60] sm:%s195] %v932
                %v934 = vld [vmem:[%s202 + $0x2da0] sm:%s195]
                %935 = vst [vmem:[%s203 + $0xb68] sm:%s195] %v934
                %v936 = vld [vmem:[%s202 + $0x2dc0] sm:%s195]
                %937 = vst [vmem:[%s203 + $0xb70] sm:%s195] %v936
                %v938 = vld [vmem:[%s202 + $0x2de0] sm:%s195]
                %939 = vst [vmem:[%s203 + $0xb78] sm:%s195] %v938
                %v940 = vld [vmem:[%s202 + $0x2e00] sm:%s195]
                %941 = vst [vmem:[%s203 + $0xb80] sm:%s195] %v940
                %v942 = vld [vmem:[%s202 + $0x2e20] sm:%s195]
                %943 = vst [vmem:[%s203 + $0xb88] sm:%s195] %v942
                %v944 = vld [vmem:[%s202 + $0x2e40] sm:%s195]
                %945 = vst [vmem:[%s203 + $0xb90] sm:%s195] %v944
                %v946 = vld [vmem:[%s202 + $0x2e60] sm:%s195]
                %947 = vst [vmem:[%s203 + $0xb98] sm:%s195] %v946
                %v948 = vld [vmem:[%s202 + $0x2e80] sm:%s195]
                %949 = vst [vmem:[%s203 + $0xba0] sm:%s195] %v948
                %v950 = vld [vmem:[%s202 + $0x2ea0] sm:%s195]
                %951 = vst [vmem:[%s203 + $0xba8] sm:%s195] %v950
                %v952 = vld [vmem:[%s202 + $0x2ec0] sm:%s195]
                %953 = vst [vmem:[%s203 + $0xbb0] sm:%s195] %v952
                %v954 = vld [vmem:[%s202 + $0x2ee0] sm:%s195]
                %955 = vst [vmem:[%s203 + $0xbb8] sm:%s195] %v954
                %v956 = vld [vmem:[%s202 + $0x2f00] sm:%s195]
                %957 = vst [vmem:[%s203 + $0xbc0] sm:%s195] %v956
                %v958 = vld [vmem:[%s202 + $0x2f20] sm:%s195]
                %959 = vst [vmem:[%s203 + $0xbc8] sm:%s195] %v958
                %v960 = vld [vmem:[%s202 + $0x2f40] sm:%s195]
                %961 = vst [vmem:[%s203 + $0xbd0] sm:%s195] %v960
                %v962 = vld [vmem:[%s202 + $0x2f60] sm:%s195]
                %963 = vst [vmem:[%s203 + $0xbd8] sm:%s195] %v962
                %v964 = vld [vmem:[%s202 + $0x2f80] sm:%s195]
                %965 = vst [vmem:[%s203 + $0xbe0] sm:%s195] %v964
                %v966 = vld [vmem:[%s202 + $0x2fa0] sm:%s195]
                %967 = vst [vmem:[%s203 + $0xbe8] sm:%s195] %v966
                %v968 = vld [vmem:[%s202 + $0x2fc0] sm:%s195]
                %969 = vst [vmem:[%s203 + $0xbf0] sm:%s195] %v968
                %v970 = vld [vmem:[%s202 + $0x2fe0] sm:%s195]
                %971 = vst [vmem:[%s203 + $0xbf8] sm:%s195] %v970
                %v972 = vld [vmem:[%s202 + $0x3000] sm:%s195]
                %973 = vst [vmem:[%s203 + $0xc00] sm:%s195] %v972
                %v974 = vld [vmem:[%s202 + $0x3020] sm:%s195]
                %975 = vst [vmem:[%s203 + $0xc08] sm:%s195] %v974
                %v976 = vld [vmem:[%s202 + $0x3040] sm:%s195]
                %977 = vst [vmem:[%s203 + $0xc10] sm:%s195] %v976
                %v978 = vld [vmem:[%s202 + $0x3060] sm:%s195]
                %979 = vst [vmem:[%s203 + $0xc18] sm:%s195] %v978
                %v980 = vld [vmem:[%s202 + $0x3080] sm:%s195]
                %981 = vst [vmem:[%s203 + $0xc20] sm:%s195] %v980
                %v982 = vld [vmem:[%s202 + $0x30a0] sm:%s195]
                %983 = vst [vmem:[%s203 + $0xc28] sm:%s195] %v982
                %v984 = vld [vmem:[%s202 + $0x30c0] sm:%s195]
                %985 = vst [vmem:[%s203 + $0xc30] sm:%s195] %v984
                %v986 = vld [vmem:[%s202 + $0x30e0] sm:%s195]
                %987 = vst [vmem:[%s203 + $0xc38] sm:%s195] %v986
                %v988 = vld [vmem:[%s202 + $0x3100] sm:%s195]
                %989 = vst [vmem:[%s203 + $0xc40] sm:%s195] %v988
                %v990 = vld [vmem:[%s202 + $0x3120] sm:%s195]
                %991 = vst [vmem:[%s203 + $0xc48] sm:%s195] %v990
                %v992 = vld [vmem:[%s202 + $0x3140] sm:%s195]
                %993 = vst [vmem:[%s203 + $0xc50] sm:%s195] %v992
                %v994 = vld [vmem:[%s202 + $0x3160] sm:%s195]
                %995 = vst [vmem:[%s203 + $0xc58] sm:%s195] %v994
                %v996 = vld [vmem:[%s202 + $0x3180] sm:%s195]
                %997 = vst [vmem:[%s203 + $0xc60] sm:%s195] %v996
                %v998 = vld [vmem:[%s202 + $0x31a0] sm:%s195]
                %999 = vst [vmem:[%s203 + $0xc68] sm:%s195] %v998
                %v1000 = vld [vmem:[%s202 + $0x31c0] sm:%s195]
                %1001 = vst [vmem:[%s203 + $0xc70] sm:%s195] %v1000
                %v1002 = vld [vmem:[%s202 + $0x31e0] sm:%s195]
                %1003 = vst [vmem:[%s203 + $0xc78] sm:%s195] %v1002
              $region45: #{convnet_forward.5} parent=39 // loop_footer
                %s201 = sadd.s32 1, %s197
              $region46: #{convnet_forward.5} parent=39 // loop_footer_branch
                %196 = sbr.rel target = $region42
              $region47: #{convnet_forward.5} parent=39 // loop_exit
                _
            $region40: #{convnet_forward.5} parent=31 // pred_fallthru
              _
          $region32: #{convnet_forward.5} parent=27 // pred_fallthru
            _
          %1816 = vnop
        $region28: #{convnet_forward.5} parent=23 // pred_fallthru
          _
        // Predicated region
        $region63: #{convnet_forward.5} parent=23 // pred_check
          %p1817 = pneg %p79
        $region64: #{convnet_forward.5} parent=23 // pred_check_branch
          %1819 = sbr.rel (%p1817) target = $region66
        $region65: #{convnet_forward.5} parent=23 // pred_region
          %s1820 = smul.u32 2, %s12
          %p1821 = scmp.lt.s32.totalorder %s1820, 7
          %s1822 = scalar_select %p1821, %s1820, 7
          %s1823 = scalar_lea.vmem %s2, %s1822
          %s1824 = smul.u32 2, %s12
        $region66: #{convnet_forward.5} parent=23 // pred_fallthru
          _
        // Predicated region
        $region67: #{convnet_forward.5} parent=23 // pred_check
          %p1825 = pneg %p105
        $region68: #{convnet_forward.5} parent=23 // pred_check_branch
          %1827 = sbr.rel (%p1825) target = $region70
        $region69: #{convnet_forward.5} parent=23 // pred_region
          %s1828 = smul.u32 32, %s12
          %p1829 = scmp.lt.s32.totalorder %s1828, 127
          %s1830 = scalar_select %p1829, %s1828, 127
          %s1831 = smul.addr %s1830, 8
          %s1832 = smul.addr %s1831, 4
          %s1833 = scalar_lea.vmem %s3, %s1832
          %s1834 = smul.u32 32, %s12
        $region70: #{convnet_forward.5} parent=23 // pred_fallthru
          _
      $region24: #{convnet_forward.5} parent=5 // pred_fallthru
        _
      %p1835 = scmp.le.s32.totalorder 1, %s12
      %p1836 = scmp.lt.s32.totalorder %s12, 5
      %p1837 = pnand %p1835, %p1836
      %p1838 = pneg %p1837
      // Predicated region
      $region71: #{convnet_forward.5} parent=5 // pred_check
        _
      $region72: #{convnet_forward.5} parent=5 // pred_check_branch
        %1840 = sbr.rel (%p1837) target = $region74
      $region73: #{convnet_forward.5} parent=5 // pred_region
        %s1841 = ssub.s32 %s12, 1
        %s1842 = sand.u32 %s46, 1
        %s1843 = sand.u32 %s46, 1
        %s1844 = smul.addr %s1843, 3200
        %s1845 = scalar_lea.vmem [#allocation3], %s1844
        // Predicated region
        $region75: #{convnet_forward.5} parent=73 // pred_check
          %p1846 = pneg %p59
        $region76: #{convnet_forward.5} parent=73 // pred_check_branch
          %1848 = sbr.rel (%p1846) target = $region78
        $region77: #{convnet_forward.5} parent=73 // pred_region
          _
        $region78: #{convnet_forward.5} parent=73 // pred_fallthru
          _
        %p1849 = pneg %p33
        %p1850 = pneg %p30
        %s1851 = sand.u32 %s46, 1
        %s1852 = sand.u32 %s46, 1
        %s1853 = smul.addr %s1852, 3200
        %s1854 = scalar_lea.vmem [#allocation3], %s1853
        %p1855 = pneg %p59
        %p1856 = pneg %p56
        %s1857 = smul.u32 2, %s17
        %p1858 = scmp.lt.s32.totalorder %s1857, 7
        %s1859 = scalar_select %p1858, %s1857, 7
        %s1860 = scalar_lea.vmem %s2, %s1859
        %p1861 = pneg %p85
        %p1862 = pneg %p82
        %s1863 = smul.u32 32, %s17
        %p1864 = scmp.lt.s32.totalorder %s1863, 127
        %s1865 = scalar_select %p1864, %s1863, 127
        %s1866 = smul.addr %s1865, 8
        %s1867 = smul.addr %s1866, 4
        %s1868 = scalar_lea.vmem %s3, %s1867
        %p1869 = pneg %p111
        %p1870 = pneg %p108
        %p1871 = pneg %p132
        %p1872 = pneg %p129
        %p1873 = pneg %p153
        %p1874 = pneg %p150
        %s1875 = smul.u32 2, %s17
        %s1876 = smul.u32 2, %s17
        %p1877 = scmp.lt.s32.totalorder %s1876, 7
        %s1878 = scalar_select %p1877, %s1876, 7
        %s1879 = scalar_lea.vmem %s2, %s1878
        %s1880 = smul.u32 2, %s17
        %s1881 = smul.u32 32, %s17
        %p1882 = scmp.lt.s32.totalorder %s1881, 127
        %s1883 = scalar_select %p1882, %s1881, 127
        %s1884 = smul.addr %s1883, 8
        %s1885 = smul.addr %s1884, 4
        %s1886 = scalar_lea.vmem %s3, %s1885
        %s1887 = smul.u32 32, %s17
        %p1889 = scmp.eq.s32.totalorder %s17, 0
        // Predicated region
        $region79: #{convnet_forward.5} parent=73 // pred_check
          %p1890 = pneg %p1889
        $region80: #{convnet_forward.5} parent=73 // pred_check_branch
          %1892 = sbr.rel (%p1890) target = $region82
        $region81: #{convnet_forward.5} parent=73 // pred_region
          %1893 = vst [vmem:[#allocation2] sm:$0xff] 0.0
          %1894 = vst [vmem:[#allocation2 + $0x8] sm:$0xff] 0.0
        $region82: #{convnet_forward.5} parent=73 // pred_fallthru
          _
        %v1895 = vld [vmem:[%s0] sm:$0xff]
        %v1896 = vld [vmem:[%s0 + $0x8] sm:$0xff]
        %v1897 = vld [vmem:[%s0 + $0x10] sm:$0xff]
        %v1898 = vld [vmem:[%s0 + $0x18] sm:$0xff]
        %v1899 = vld [vmem:[%s0 + $0x20] sm:$0xff]
        %v1900 = vld [vmem:[%s0 + $0x28] sm:$0xff]
        %v1901 = vld [vmem:[%s0 + $0x30] sm:$0x3]
        %v1909 = vcombine.high %v1895, %v1895
        %v1911 = vunpack.c.l.s4 1983009808
        %v1912 = vunpack.c.0.s8 %v1911
        %v1913 = vlaneseq
        %v1914 = vshrl.u32 %v1913, 7
        %v1915 = vsub.s32 %v1912, %v1914
        %v1916 = vrot.slane %v1895, %v1915
        %v1918 = vunpack.c.l.s4 1983009808
        %v1919 = vunpack.c.0.s8 %v1918
        %v1920 = vlaneseq
        %v1921 = vshrl.u32 %v1920, 7
        %v1922 = vsub.s32 %v1919, %v1921
        %v1923 = vrot.slane %v1909, %v1922
        %v1924 = vcombine.high %v1916, %v1916
        %v1925 = vcombine.high %v1923, %v1923
        %v1926 = vcombine.high %v1896, %v1896
        %v1928 = vunpack.c.l.s4 1983009808
        %v1929 = vunpack.c.0.s8 %v1928
        %v1930 = vlaneseq
        %v1931 = vshrl.u32 %v1930, 7
        %v1932 = vsub.s32 %v1929, %v1931
        %v1933 = vrot.slane %v1896, %v1932
        %v1935 = vunpack.c.l.s4 1983009808
        %v1936 = vunpack.c.0.s8 %v1935
        %v1937 = vlaneseq
        %v1938 = vshrl.u32 %v1937, 7
        %v1939 = vsub.s32 %v1936, %v1938
        %v1940 = vrot.slane %v1926, %v1939
        %v1941 = vcombine.high %v1933, %v1933
        %v1942 = vcombine.high %v1940, %v1940
        %v1943 = vcombine.high %v1897, %v1897
        %v1945 = vunpack.c.l.s4 1983009808
        %v1946 = vunpack.c.0.s8 %v1945
        %v1947 = vlaneseq
        %v1948 = vshrl.u32 %v1947, 7
        %v1949 = vsub.s32 %v1946, %v1948
        %v1950 = vrot.slane %v1897, %v1949
        %v1952 = vunpack.c.l.s4 1983009808
        %v1953 = vunpack.c.0.s8 %v1952
        %v1954 = vlaneseq
        %v1955 = vshrl.u32 %v1954, 7
        %v1956 = vsub.s32 %v1953, %v1955
        %v1957 = vrot.slane %v1943, %v1956
        %v1958 = vcombine.high %v1950, %v1950
        %v1959 = vcombine.high %v1957, %v1957
        %v1960 = vcombine.high %v1898, %v1898
        %v1962 = vunpack.c.l.s4 1983009808
        %v1963 = vunpack.c.0.s8 %v1962
        %v1964 = vlaneseq
        %v1965 = vshrl.u32 %v1964, 7
        %v1966 = vsub.s32 %v1963, %v1965
        %v1967 = vrot.slane %v1898, %v1966
        %v1969 = vunpack.c.l.s4 1983009808
        %v1970 = vunpack.c.0.s8 %v1969
        %v1971 = vlaneseq
        %v1972 = vshrl.u32 %v1971, 7
        %v1973 = vsub.s32 %v1970, %v1972
        %v1974 = vrot.slane %v1960, %v1973
        %v1975 = vcombine.high %v1967, %v1967
        %v1976 = vcombine.high %v1974, %v1974
        %v1977 = vcombine.high %v1899, %v1899
        %v1979 = vunpack.c.l.s4 1983009808
        %v1980 = vunpack.c.0.s8 %v1979
        %v1981 = vlaneseq
        %v1982 = vshrl.u32 %v1981, 7
        %v1983 = vsub.s32 %v1980, %v1982
        %v1984 = vrot.slane %v1899, %v1983
        %v1986 = vunpack.c.l.s4 1983009808
        %v1987 = vunpack.c.0.s8 %v1986
        %v1988 = vlaneseq
        %v1989 = vshrl.u32 %v1988, 7
        %v1990 = vsub.s32 %v1987, %v1989
        %v1991 = vrot.slane %v1977, %v1990
        %v1992 = vcombine.high %v1984, %v1984
        %v1993 = vcombine.high %v1991, %v1991
        %v1994 = vcombine.high %v1900, %v1900
        %v1996 = vunpack.c.l.s4 1983009808
        %v1997 = vunpack.c.0.s8 %v1996
        %v1998 = vlaneseq
        %v1999 = vshrl.u32 %v1998, 7
        %v2000 = vsub.s32 %v1997, %v1999
        %v2001 = vrot.slane %v1900, %v2000
        %v2003 = vunpack.c.l.s4 1983009808
        %v2004 = vunpack.c.0.s8 %v2003
        %v2005 = vlaneseq
        %v2006 = vshrl.u32 %v2005, 7
        %v2007 = vsub.s32 %v2004, %v2006
        %v2008 = vrot.slane %v1994, %v2007
        %v2009 = vcombine.high %v2001, %v2001
        %v2010 = vcombine.high %v2008, %v2008
        %v2012 = vunpack.c.l.s4 1983009808
        %v2013 = vunpack.c.0.s8 %v2012
        %v2014 = vlaneseq
        %v2015 = vshrl.u32 %v2014, 7
        %v2016 = vsub.s32 %v2013, %v2015
        %v2017 = vrot.slane %v1901, %v2016
        %v2043 = vpack.c.bf16 %v1916, %v1916
        %v2044 = vpack.c.bf16 %v1924, %v1924
        %v2045 = vpack.c.bf16 %v1923, %v1923
        %v2046 = vpack.c.bf16 %v1925, %v1925
        %v2047 = vpack.c.bf16 %v1933, %v1933
        %v2048 = vpack.c.bf16 %v1941, %v1941
        %v2049 = vpack.c.bf16 %v1940, %v1940
        %v2050 = vpack.c.bf16 %v1942, %v1942
        %v2051 = vpack.c.bf16 %v1950, %v1950
        %v2052 = vpack.c.bf16 %v1958, %v1958
        %v2053 = vpack.c.bf16 %v1957, %v1957
        %v2054 = vpack.c.bf16 %v1959, %v1959
        %v2055 = vpack.c.bf16 %v1967, %v1967
        %v2056 = vpack.c.bf16 %v1975, %v1975
        %v2057 = vpack.c.bf16 %v1974, %v1974
        %v2058 = vpack.c.bf16 %v1976, %v1976
        %v2059 = vpack.c.bf16 %v1984, %v1984
        %v2060 = vpack.c.bf16 %v1992, %v1992
        %v2061 = vpack.c.bf16 %v1991, %v1991
        %v2062 = vpack.c.bf16 %v1993, %v1993
        %v2063 = vpack.c.bf16 %v2001, %v2001
        %v2064 = vpack.c.bf16 %v2009, %v2009
        %v2065 = vpack.c.bf16 %v2008, %v2008
        %v2066 = vpack.c.bf16 %v2010, %v2010
        %v2067 = vpack.c.bf16 %v2017, %v2017
        %v2068 = vld [vmem:[%s1845] sm:$0xff]
        %v2069 = vld [vmem:[%s1845 + $0x8] sm:$0xff]
        %v2070 = vld [vmem:[%s1845 + $0x10] sm:$0xff]
        %v2071 = vld [vmem:[%s1845 + $0x18] sm:$0xff]
        %v2072 = vld [vmem:[%s1845 + $0x20] sm:$0xff]
        %v2073 = vld [vmem:[%s1845 + $0x28] sm:$0xff]
        %v2074 = vld [vmem:[%s1845 + $0x30] sm:$0xff]
        %v2075 = vld [vmem:[%s1845 + $0x38] sm:$0xff]
        %v2076 = vld [vmem:[%s1845 + $0x40] sm:$0xff]
        %v2077 = vld [vmem:[%s1845 + $0x48] sm:$0xff]
        %v2078 = vld [vmem:[%s1845 + $0x50] sm:$0xff]
        %v2079 = vld [vmem:[%s1845 + $0x58] sm:$0xff]
        %v2080 = vld [vmem:[%s1845 + $0x60] sm:$0xff]
        %v2081 = vld [vmem:[%s1845 + $0x68] sm:$0xff]
        %v2082 = vld [vmem:[%s1845 + $0x70] sm:$0xff]
        %v2083 = vld [vmem:[%s1845 + $0x78] sm:$0xff]
        %v2084 = vld [vmem:[%s1845 + $0x80] sm:$0xff]
        %v2085 = vld [vmem:[%s1845 + $0x88] sm:$0xff]
        %v2086 = vld [vmem:[%s1845 + $0x90] sm:$0xff]
        %v2087 = vld [vmem:[%s1845 + $0x98] sm:$0xff]
        %v2088 = vld [vmem:[%s1845 + $0xa0] sm:$0xff]
        %v2089 = vld [vmem:[%s1845 + $0xa8] sm:$0xff]
        %v2090 = vld [vmem:[%s1845 + $0xb0] sm:$0xff]
        %v2091 = vld [vmem:[%s1845 + $0xb8] sm:$0xff]
        %v2092 = vld [vmem:[%s1845 + $0xc0] sm:$0xff]
        %v2093 = vld [vmem:[%s1845 + $0xc8] sm:$0xff]
        %v2094 = vld [vmem:[%s1845 + $0xd0] sm:$0xff]
        %v2095 = vld [vmem:[%s1845 + $0xd8] sm:$0xff]
        %v2096 = vld [vmem:[%s1845 + $0xe0] sm:$0xff]
        %v2097 = vld [vmem:[%s1845 + $0xe8] sm:$0xff]
        %v2098 = vld [vmem:[%s1845 + $0xf0] sm:$0xff]
        %v2099 = vld [vmem:[%s1845 + $0xf8] sm:$0xff]
        %v2100 = vld [vmem:[%s1845 + $0x100] sm:$0xff]
        %v2101 = vld [vmem:[%s1845 + $0x108] sm:$0xff]
        %v2102 = vld [vmem:[%s1845 + $0x110] sm:$0xff]
        %v2103 = vld [vmem:[%s1845 + $0x118] sm:$0xff]
        %v2104 = vld [vmem:[%s1845 + $0x120] sm:$0xff]
        %v2105 = vld [vmem:[%s1845 + $0x128] sm:$0xff]
        %v2106 = vld [vmem:[%s1845 + $0x130] sm:$0xff]
        %v2107 = vld [vmem:[%s1845 + $0x138] sm:$0xff]
        %v2108 = vld [vmem:[%s1845 + $0x140] sm:$0xff]
        %v2109 = vld [vmem:[%s1845 + $0x148] sm:$0xff]
        %v2110 = vld [vmem:[%s1845 + $0x150] sm:$0xff]
        %v2111 = vld [vmem:[%s1845 + $0x158] sm:$0xff]
        %v2112 = vld [vmem:[%s1845 + $0x160] sm:$0xff]
        %v2113 = vld [vmem:[%s1845 + $0x168] sm:$0xff]
        %v2114 = vld [vmem:[%s1845 + $0x170] sm:$0xff]
        %v2115 = vld [vmem:[%s1845 + $0x178] sm:$0xff]
        %v2116 = vld [vmem:[%s1845 + $0x180] sm:$0xff]
        %v2117 = vld [vmem:[%s1845 + $0x188] sm:$0xff]
        %v2118 = vld [vmem:[%s1845 + $0x190] sm:$0xff]
        %v2119 = vld [vmem:[%s1845 + $0x198] sm:$0xff]
        %v2120 = vld [vmem:[%s1845 + $0x1a0] sm:$0xff]
        %v2121 = vld [vmem:[%s1845 + $0x1a8] sm:$0xff]
        %v2122 = vld [vmem:[%s1845 + $0x1b0] sm:$0xff]
        %v2123 = vld [vmem:[%s1845 + $0x1b8] sm:$0xff]
        %v2124 = vld [vmem:[%s1845 + $0x1c0] sm:$0xff]
        %v2125 = vld [vmem:[%s1845 + $0x1c8] sm:$0xff]
        %v2126 = vld [vmem:[%s1845 + $0x1d0] sm:$0xff]
        %v2127 = vld [vmem:[%s1845 + $0x1d8] sm:$0xff]
        %v2128 = vld [vmem:[%s1845 + $0x1e0] sm:$0xff]
        %v2129 = vld [vmem:[%s1845 + $0x1e8] sm:$0xff]
        %v2130 = vld [vmem:[%s1845 + $0x1f0] sm:$0xff]
        %v2131 = vld [vmem:[%s1845 + $0x1f8] sm:$0xff]
        %v2132 = vld [vmem:[%s1845 + $0x200] sm:$0xff]
        %v2133 = vld [vmem:[%s1845 + $0x208] sm:$0xff]
        %v2134 = vld [vmem:[%s1845 + $0x210] sm:$0xff]
        %v2135 = vld [vmem:[%s1845 + $0x218] sm:$0xff]
        %v2136 = vld [vmem:[%s1845 + $0x220] sm:$0xff]
        %v2137 = vld [vmem:[%s1845 + $0x228] sm:$0xff]
        %v2138 = vld [vmem:[%s1845 + $0x230] sm:$0xff]
        %v2139 = vld [vmem:[%s1845 + $0x238] sm:$0xff]
        %v2140 = vld [vmem:[%s1845 + $0x240] sm:$0xff]
        %v2141 = vld [vmem:[%s1845 + $0x248] sm:$0xff]
        %v2142 = vld [vmem:[%s1845 + $0x250] sm:$0xff]
        %v2143 = vld [vmem:[%s1845 + $0x258] sm:$0xff]
        %v2144 = vld [vmem:[%s1845 + $0x260] sm:$0xff]
        %v2145 = vld [vmem:[%s1845 + $0x268] sm:$0xff]
        %v2146 = vld [vmem:[%s1845 + $0x270] sm:$0xff]
        %v2147 = vld [vmem:[%s1845 + $0x278] sm:$0xff]
        %v2148 = vld [vmem:[%s1845 + $0x280] sm:$0xff]
        %v2149 = vld [vmem:[%s1845 + $0x288] sm:$0xff]
        %v2150 = vld [vmem:[%s1845 + $0x290] sm:$0xff]
        %v2151 = vld [vmem:[%s1845 + $0x298] sm:$0xff]
        %v2152 = vld [vmem:[%s1845 + $0x2a0] sm:$0xff]
        %v2153 = vld [vmem:[%s1845 + $0x2a8] sm:$0xff]
        %v2154 = vld [vmem:[%s1845 + $0x2b0] sm:$0xff]
        %v2155 = vld [vmem:[%s1845 + $0x2b8] sm:$0xff]
        %v2156 = vld [vmem:[%s1845 + $0x2c0] sm:$0xff]
        %v2157 = vld [vmem:[%s1845 + $0x2c8] sm:$0xff]
        %v2158 = vld [vmem:[%s1845 + $0x2d0] sm:$0xff]
        %v2159 = vld [vmem:[%s1845 + $0x2d8] sm:$0xff]
        %v2160 = vld [vmem:[%s1845 + $0x2e0] sm:$0xff]
        %v2161 = vld [vmem:[%s1845 + $0x2e8] sm:$0xff]
        %v2162 = vld [vmem:[%s1845 + $0x2f0] sm:$0xff]
        %v2163 = vld [vmem:[%s1845 + $0x2f8] sm:$0xff]
        %v2164 = vld [vmem:[%s1845 + $0x300] sm:$0xff]
        %v2165 = vld [vmem:[%s1845 + $0x308] sm:$0xff]
        %v2166 = vld [vmem:[%s1845 + $0x310] sm:$0xff]
        %v2167 = vld [vmem:[%s1845 + $0x318] sm:$0xff]
        %v2168 = vld [vmem:[%s1845 + $0x320] sm:$0xff]
        %v2169 = vld [vmem:[%s1845 + $0x328] sm:$0xff]
        %v2170 = vld [vmem:[%s1845 + $0x330] sm:$0xff]
        %v2171 = vld [vmem:[%s1845 + $0x338] sm:$0xff]
        %v2172 = vld [vmem:[%s1845 + $0x340] sm:$0xff]
        %v2173 = vld [vmem:[%s1845 + $0x348] sm:$0xff]
        %v2174 = vld [vmem:[%s1845 + $0x350] sm:$0xff]
        %v2175 = vld [vmem:[%s1845 + $0x358] sm:$0xff]
        %v2176 = vld [vmem:[%s1845 + $0x360] sm:$0xff]
        %v2177 = vld [vmem:[%s1845 + $0x368] sm:$0xff]
        %v2178 = vld [vmem:[%s1845 + $0x370] sm:$0xff]
        %v2179 = vld [vmem:[%s1845 + $0x378] sm:$0xff]
        %v2180 = vld [vmem:[%s1845 + $0x380] sm:$0xff]
        %v2181 = vld [vmem:[%s1845 + $0x388] sm:$0xff]
        %v2182 = vld [vmem:[%s1845 + $0x390] sm:$0xff]
        %v2183 = vld [vmem:[%s1845 + $0x398] sm:$0xff]
        %v2184 = vld [vmem:[%s1845 + $0x3a0] sm:$0xff]
        %v2185 = vld [vmem:[%s1845 + $0x3a8] sm:$0xff]
        %v2186 = vld [vmem:[%s1845 + $0x3b0] sm:$0xff]
        %v2187 = vld [vmem:[%s1845 + $0x3b8] sm:$0xff]
        %v2188 = vld [vmem:[%s1845 + $0x3c0] sm:$0xff]
        %v2189 = vld [vmem:[%s1845 + $0x3c8] sm:$0xff]
        %v2190 = vld [vmem:[%s1845 + $0x3d0] sm:$0xff]
        %v2191 = vld [vmem:[%s1845 + $0x3d8] sm:$0xff]
        %v2192 = vld [vmem:[%s1845 + $0x3e0] sm:$0xff]
        %v2193 = vld [vmem:[%s1845 + $0x3e8] sm:$0xff]
        %v2194 = vld [vmem:[%s1845 + $0x3f0] sm:$0xff]
        %v2195 = vld [vmem:[%s1845 + $0x3f8] sm:$0xff]
        %v2196 = vld [vmem:[%s1845 + $0x400] sm:$0xff]
        %v2197 = vld [vmem:[%s1845 + $0x408] sm:$0xff]
        %v2198 = vld [vmem:[%s1845 + $0x410] sm:$0xff]
        %v2199 = vld [vmem:[%s1845 + $0x418] sm:$0xff]
        %v2200 = vld [vmem:[%s1845 + $0x420] sm:$0xff]
        %v2201 = vld [vmem:[%s1845 + $0x428] sm:$0xff]
        %v2202 = vld [vmem:[%s1845 + $0x430] sm:$0xff]
        %v2203 = vld [vmem:[%s1845 + $0x438] sm:$0xff]
        %v2204 = vld [vmem:[%s1845 + $0x440] sm:$0xff]
        %v2205 = vld [vmem:[%s1845 + $0x448] sm:$0xff]
        %v2206 = vld [vmem:[%s1845 + $0x450] sm:$0xff]
        %v2207 = vld [vmem:[%s1845 + $0x458] sm:$0xff]
        %v2208 = vld [vmem:[%s1845 + $0x460] sm:$0xff]
        %v2209 = vld [vmem:[%s1845 + $0x468] sm:$0xff]
        %v2210 = vld [vmem:[%s1845 + $0x470] sm:$0xff]
        %v2211 = vld [vmem:[%s1845 + $0x478] sm:$0xff]
        %v2212 = vld [vmem:[%s1845 + $0x480] sm:$0xff]
        %v2213 = vld [vmem:[%s1845 + $0x488] sm:$0xff]
        %v2214 = vld [vmem:[%s1845 + $0x490] sm:$0xff]
        %v2215 = vld [vmem:[%s1845 + $0x498] sm:$0xff]
        %v2216 = vld [vmem:[%s1845 + $0x4a0] sm:$0xff]
        %v2217 = vld [vmem:[%s1845 + $0x4a8] sm:$0xff]
        %v2218 = vld [vmem:[%s1845 + $0x4b0] sm:$0xff]
        %v2219 = vld [vmem:[%s1845 + $0x4b8] sm:$0xff]
        %v2220 = vld [vmem:[%s1845 + $0x4c0] sm:$0xff]
        %v2221 = vld [vmem:[%s1845 + $0x4c8] sm:$0xff]
        %v2222 = vld [vmem:[%s1845 + $0x4d0] sm:$0xff]
        %v2223 = vld [vmem:[%s1845 + $0x4d8] sm:$0xff]
        %v2224 = vld [vmem:[%s1845 + $0x4e0] sm:$0xff]
        %v2225 = vld [vmem:[%s1845 + $0x4e8] sm:$0xff]
        %v2226 = vld [vmem:[%s1845 + $0x4f0] sm:$0xff]
        %v2227 = vld [vmem:[%s1845 + $0x4f8] sm:$0xff]
        %v2228 = vld [vmem:[%s1845 + $0x500] sm:$0xff]
        %v2229 = vld [vmem:[%s1845 + $0x508] sm:$0xff]
        %v2230 = vld [vmem:[%s1845 + $0x510] sm:$0xff]
        %v2231 = vld [vmem:[%s1845 + $0x518] sm:$0xff]
        %v2232 = vld [vmem:[%s1845 + $0x520] sm:$0xff]
        %v2233 = vld [vmem:[%s1845 + $0x528] sm:$0xff]
        %v2234 = vld [vmem:[%s1845 + $0x530] sm:$0xff]
        %v2235 = vld [vmem:[%s1845 + $0x538] sm:$0xff]
        %v2236 = vld [vmem:[%s1845 + $0x540] sm:$0xff]
        %v2237 = vld [vmem:[%s1845 + $0x548] sm:$0xff]
        %v2238 = vld [vmem:[%s1845 + $0x550] sm:$0xff]
        %v2239 = vld [vmem:[%s1845 + $0x558] sm:$0xff]
        %v2240 = vld [vmem:[%s1845 + $0x560] sm:$0xff]
        %v2241 = vld [vmem:[%s1845 + $0x568] sm:$0xff]
        %v2242 = vld [vmem:[%s1845 + $0x570] sm:$0xff]
        %v2243 = vld [vmem:[%s1845 + $0x578] sm:$0xff]
        %v2244 = vld [vmem:[%s1845 + $0x580] sm:$0xff]
        %v2245 = vld [vmem:[%s1845 + $0x588] sm:$0xff]
        %v2246 = vld [vmem:[%s1845 + $0x590] sm:$0xff]
        %v2247 = vld [vmem:[%s1845 + $0x598] sm:$0xff]
        %v2248 = vld [vmem:[%s1845 + $0x5a0] sm:$0xff]
        %v2249 = vld [vmem:[%s1845 + $0x5a8] sm:$0xff]
        %v2250 = vld [vmem:[%s1845 + $0x5b0] sm:$0xff]
        %v2251 = vld [vmem:[%s1845 + $0x5b8] sm:$0xff]
        %v2252 = vld [vmem:[%s1845 + $0x5c0] sm:$0xff]
        %v2253 = vld [vmem:[%s1845 + $0x5c8] sm:$0xff]
        %v2254 = vld [vmem:[%s1845 + $0x5d0] sm:$0xff]
        %v2255 = vld [vmem:[%s1845 + $0x5d8] sm:$0xff]
        %v2256 = vld [vmem:[%s1845 + $0x5e0] sm:$0xff]
        %v2257 = vld [vmem:[%s1845 + $0x5e8] sm:$0xff]
        %v2258 = vld [vmem:[%s1845 + $0x5f0] sm:$0xff]
        %v2259 = vld [vmem:[%s1845 + $0x5f8] sm:$0xff]
        %v2260 = vld [vmem:[%s1845 + $0x600] sm:$0xff]
        %v2261 = vld [vmem:[%s1845 + $0x608] sm:$0xff]
        %v2262 = vld [vmem:[%s1845 + $0x610] sm:$0xff]
        %v2263 = vld [vmem:[%s1845 + $0x618] sm:$0xff]
        %v2264 = vld [vmem:[%s1845 + $0x620] sm:$0xff]
        %v2265 = vld [vmem:[%s1845 + $0x628] sm:$0xff]
        %v2266 = vld [vmem:[%s1845 + $0x630] sm:$0xff]
        %v2267 = vld [vmem:[%s1845 + $0x638] sm:$0xff]
        %v2268 = vld [vmem:[%s1845 + $0x640] sm:$0xff]
        %v2269 = vld [vmem:[%s1845 + $0x648] sm:$0xff]
        %v2270 = vld [vmem:[%s1845 + $0x650] sm:$0xff]
        %v2271 = vld [vmem:[%s1845 + $0x658] sm:$0xff]
        %v2272 = vld [vmem:[%s1845 + $0x660] sm:$0xff]
        %v2273 = vld [vmem:[%s1845 + $0x668] sm:$0xff]
        %v2274 = vld [vmem:[%s1845 + $0x670] sm:$0xff]
        %v2275 = vld [vmem:[%s1845 + $0x678] sm:$0xff]
        %v2276 = vld [vmem:[%s1845 + $0x680] sm:$0xff]
        %v2277 = vld [vmem:[%s1845 + $0x688] sm:$0xff]
        %v2278 = vld [vmem:[%s1845 + $0x690] sm:$0xff]
        %v2279 = vld [vmem:[%s1845 + $0x698] sm:$0xff]
        %v2280 = vld [vmem:[%s1845 + $0x6a0] sm:$0xff]
        %v2281 = vld [vmem:[%s1845 + $0x6a8] sm:$0xff]
        %v2282 = vld [vmem:[%s1845 + $0x6b0] sm:$0xff]
        %v2283 = vld [vmem:[%s1845 + $0x6b8] sm:$0xff]
        %v2284 = vld [vmem:[%s1845 + $0x6c0] sm:$0xff]
        %v2285 = vld [vmem:[%s1845 + $0x6c8] sm:$0xff]
        %v2286 = vld [vmem:[%s1845 + $0x6d0] sm:$0xff]
        %v2287 = vld [vmem:[%s1845 + $0x6d8] sm:$0xff]
        %v2288 = vld [vmem:[%s1845 + $0x6e0] sm:$0xff]
        %v2289 = vld [vmem:[%s1845 + $0x6e8] sm:$0xff]
        %v2290 = vld [vmem:[%s1845 + $0x6f0] sm:$0xff]
        %v2291 = vld [vmem:[%s1845 + $0x6f8] sm:$0xff]
        %v2292 = vld [vmem:[%s1845 + $0x700] sm:$0xff]
        %v2293 = vld [vmem:[%s1845 + $0x708] sm:$0xff]
        %v2294 = vld [vmem:[%s1845 + $0x710] sm:$0xff]
        %v2295 = vld [vmem:[%s1845 + $0x718] sm:$0xff]
        %v2296 = vld [vmem:[%s1845 + $0x720] sm:$0xff]
        %v2297 = vld [vmem:[%s1845 + $0x728] sm:$0xff]
        %v2298 = vld [vmem:[%s1845 + $0x730] sm:$0xff]
        %v2299 = vld [vmem:[%s1845 + $0x738] sm:$0xff]
        %v2300 = vld [vmem:[%s1845 + $0x740] sm:$0xff]
        %v2301 = vld [vmem:[%s1845 + $0x748] sm:$0xff]
        %v2302 = vld [vmem:[%s1845 + $0x750] sm:$0xff]
        %v2303 = vld [vmem:[%s1845 + $0x758] sm:$0xff]
        %v2304 = vld [vmem:[%s1845 + $0x760] sm:$0xff]
        %v2305 = vld [vmem:[%s1845 + $0x768] sm:$0xff]
        %v2306 = vld [vmem:[%s1845 + $0x770] sm:$0xff]
        %v2307 = vld [vmem:[%s1845 + $0x778] sm:$0xff]
        %v2308 = vld [vmem:[%s1845 + $0x780] sm:$0xff]
        %v2309 = vld [vmem:[%s1845 + $0x788] sm:$0xff]
        %v2310 = vld [vmem:[%s1845 + $0x790] sm:$0xff]
        %v2311 = vld [vmem:[%s1845 + $0x798] sm:$0xff]
        %v2312 = vld [vmem:[%s1845 + $0x7a0] sm:$0xff]
        %v2313 = vld [vmem:[%s1845 + $0x7a8] sm:$0xff]
        %v2314 = vld [vmem:[%s1845 + $0x7b0] sm:$0xff]
        %v2315 = vld [vmem:[%s1845 + $0x7b8] sm:$0xff]
        %v2316 = vld [vmem:[%s1845 + $0x7c0] sm:$0xff]
        %v2317 = vld [vmem:[%s1845 + $0x7c8] sm:$0xff]
        %v2318 = vld [vmem:[%s1845 + $0x7d0] sm:$0xff]
        %v2319 = vld [vmem:[%s1845 + $0x7d8] sm:$0xff]
        %v2320 = vld [vmem:[%s1845 + $0x7e0] sm:$0xff]
        %v2321 = vld [vmem:[%s1845 + $0x7e8] sm:$0xff]
        %v2322 = vld [vmem:[%s1845 + $0x7f0] sm:$0xff]
        %v2323 = vld [vmem:[%s1845 + $0x7f8] sm:$0xff]
        %v2324 = vld [vmem:[%s1845 + $0x800] sm:$0xff]
        %v2325 = vld [vmem:[%s1845 + $0x808] sm:$0xff]
        %v2326 = vld [vmem:[%s1845 + $0x810] sm:$0xff]
        %v2327 = vld [vmem:[%s1845 + $0x818] sm:$0xff]
        %v2328 = vld [vmem:[%s1845 + $0x820] sm:$0xff]
        %v2329 = vld [vmem:[%s1845 + $0x828] sm:$0xff]
        %v2330 = vld [vmem:[%s1845 + $0x830] sm:$0xff]
        %v2331 = vld [vmem:[%s1845 + $0x838] sm:$0xff]
        %v2332 = vld [vmem:[%s1845 + $0x840] sm:$0xff]
        %v2333 = vld [vmem:[%s1845 + $0x848] sm:$0xff]
        %v2334 = vld [vmem:[%s1845 + $0x850] sm:$0xff]
        %v2335 = vld [vmem:[%s1845 + $0x858] sm:$0xff]
        %v2336 = vld [vmem:[%s1845 + $0x860] sm:$0xff]
        %v2337 = vld [vmem:[%s1845 + $0x868] sm:$0xff]
        %v2338 = vld [vmem:[%s1845 + $0x870] sm:$0xff]
        %v2339 = vld [vmem:[%s1845 + $0x878] sm:$0xff]
        %v2340 = vld [vmem:[%s1845 + $0x880] sm:$0xff]
        %v2341 = vld [vmem:[%s1845 + $0x888] sm:$0xff]
        %v2342 = vld [vmem:[%s1845 + $0x890] sm:$0xff]
        %v2343 = vld [vmem:[%s1845 + $0x898] sm:$0xff]
        %v2344 = vld [vmem:[%s1845 + $0x8a0] sm:$0xff]
        %v2345 = vld [vmem:[%s1845 + $0x8a8] sm:$0xff]
        %v2346 = vld [vmem:[%s1845 + $0x8b0] sm:$0xff]
        %v2347 = vld [vmem:[%s1845 + $0x8b8] sm:$0xff]
        %v2348 = vld [vmem:[%s1845 + $0x8c0] sm:$0xff]
        %v2349 = vld [vmem:[%s1845 + $0x8c8] sm:$0xff]
        %v2350 = vld [vmem:[%s1845 + $0x8d0] sm:$0xff]
        %v2351 = vld [vmem:[%s1845 + $0x8d8] sm:$0xff]
        %v2352 = vld [vmem:[%s1845 + $0x8e0] sm:$0xff]
        %v2353 = vld [vmem:[%s1845 + $0x8e8] sm:$0xff]
        %v2354 = vld [vmem:[%s1845 + $0x8f0] sm:$0xff]
        %v2355 = vld [vmem:[%s1845 + $0x8f8] sm:$0xff]
        %v2356 = vld [vmem:[%s1845 + $0x900] sm:$0xff]
        %v2357 = vld [vmem:[%s1845 + $0x908] sm:$0xff]
        %v2358 = vld [vmem:[%s1845 + $0x910] sm:$0xff]
        %v2359 = vld [vmem:[%s1845 + $0x918] sm:$0xff]
        %v2360 = vld [vmem:[%s1845 + $0x920] sm:$0xff]
        %v2361 = vld [vmem:[%s1845 + $0x928] sm:$0xff]
        %v2362 = vld [vmem:[%s1845 + $0x930] sm:$0xff]
        %v2363 = vld [vmem:[%s1845 + $0x938] sm:$0xff]
        %v2364 = vld [vmem:[%s1845 + $0x940] sm:$0xff]
        %v2365 = vld [vmem:[%s1845 + $0x948] sm:$0xff]
        %v2366 = vld [vmem:[%s1845 + $0x950] sm:$0xff]
        %v2367 = vld [vmem:[%s1845 + $0x958] sm:$0xff]
        %v2368 = vld [vmem:[%s1845 + $0x960] sm:$0xff]
        %v2369 = vld [vmem:[%s1845 + $0x968] sm:$0xff]
        %v2370 = vld [vmem:[%s1845 + $0x970] sm:$0xff]
        %v2371 = vld [vmem:[%s1845 + $0x978] sm:$0xff]
        %v2372 = vld [vmem:[%s1845 + $0x980] sm:$0xff]
        %v2373 = vld [vmem:[%s1845 + $0x988] sm:$0xff]
        %v2374 = vld [vmem:[%s1845 + $0x990] sm:$0xff]
        %v2375 = vld [vmem:[%s1845 + $0x998] sm:$0xff]
        %v2376 = vld [vmem:[%s1845 + $0x9a0] sm:$0xff]
        %v2377 = vld [vmem:[%s1845 + $0x9a8] sm:$0xff]
        %v2378 = vld [vmem:[%s1845 + $0x9b0] sm:$0xff]
        %v2379 = vld [vmem:[%s1845 + $0x9b8] sm:$0xff]
        %v2380 = vld [vmem:[%s1845 + $0x9c0] sm:$0xff]
        %v2381 = vld [vmem:[%s1845 + $0x9c8] sm:$0xff]
        %v2382 = vld [vmem:[%s1845 + $0x9d0] sm:$0xff]
        %v2383 = vld [vmem:[%s1845 + $0x9d8] sm:$0xff]
        %v2384 = vld [vmem:[%s1845 + $0x9e0] sm:$0xff]
        %v2385 = vld [vmem:[%s1845 + $0x9e8] sm:$0xff]
        %v2386 = vld [vmem:[%s1845 + $0x9f0] sm:$0xff]
        %v2387 = vld [vmem:[%s1845 + $0x9f8] sm:$0xff]
        %v2388 = vld [vmem:[%s1845 + $0xa00] sm:$0xff]
        %v2389 = vld [vmem:[%s1845 + $0xa08] sm:$0xff]
        %v2390 = vld [vmem:[%s1845 + $0xa10] sm:$0xff]
        %v2391 = vld [vmem:[%s1845 + $0xa18] sm:$0xff]
        %v2392 = vld [vmem:[%s1845 + $0xa20] sm:$0xff]
        %v2393 = vld [vmem:[%s1845 + $0xa28] sm:$0xff]
        %v2394 = vld [vmem:[%s1845 + $0xa30] sm:$0xff]
        %v2395 = vld [vmem:[%s1845 + $0xa38] sm:$0xff]
        %v2396 = vld [vmem:[%s1845 + $0xa40] sm:$0xff]
        %v2397 = vld [vmem:[%s1845 + $0xa48] sm:$0xff]
        %v2398 = vld [vmem:[%s1845 + $0xa50] sm:$0xff]
        %v2399 = vld [vmem:[%s1845 + $0xa58] sm:$0xff]
        %v2400 = vld [vmem:[%s1845 + $0xa60] sm:$0xff]
        %v2401 = vld [vmem:[%s1845 + $0xa68] sm:$0xff]
        %v2402 = vld [vmem:[%s1845 + $0xa70] sm:$0xff]
        %v2403 = vld [vmem:[%s1845 + $0xa78] sm:$0xff]
        %v2404 = vld [vmem:[%s1845 + $0xa80] sm:$0xff]
        %v2405 = vld [vmem:[%s1845 + $0xa88] sm:$0xff]
        %v2406 = vld [vmem:[%s1845 + $0xa90] sm:$0xff]
        %v2407 = vld [vmem:[%s1845 + $0xa98] sm:$0xff]
        %v2408 = vld [vmem:[%s1845 + $0xaa0] sm:$0xff]
        %v2409 = vld [vmem:[%s1845 + $0xaa8] sm:$0xff]
        %v2410 = vld [vmem:[%s1845 + $0xab0] sm:$0xff]
        %v2411 = vld [vmem:[%s1845 + $0xab8] sm:$0xff]
        %v2412 = vld [vmem:[%s1845 + $0xac0] sm:$0xff]
        %v2413 = vld [vmem:[%s1845 + $0xac8] sm:$0xff]
        %v2414 = vld [vmem:[%s1845 + $0xad0] sm:$0xff]
        %v2415 = vld [vmem:[%s1845 + $0xad8] sm:$0xff]
        %v2416 = vld [vmem:[%s1845 + $0xae0] sm:$0xff]
        %v2417 = vld [vmem:[%s1845 + $0xae8] sm:$0xff]
        %v2418 = vld [vmem:[%s1845 + $0xaf0] sm:$0xff]
        %v2419 = vld [vmem:[%s1845 + $0xaf8] sm:$0xff]
        %v2420 = vld [vmem:[%s1845 + $0xb00] sm:$0xff]
        %v2421 = vld [vmem:[%s1845 + $0xb08] sm:$0xff]
        %v2422 = vld [vmem:[%s1845 + $0xb10] sm:$0xff]
        %v2423 = vld [vmem:[%s1845 + $0xb18] sm:$0xff]
        %v2424 = vld [vmem:[%s1845 + $0xb20] sm:$0xff]
        %v2425 = vld [vmem:[%s1845 + $0xb28] sm:$0xff]
        %v2426 = vld [vmem:[%s1845 + $0xb30] sm:$0xff]
        %v2427 = vld [vmem:[%s1845 + $0xb38] sm:$0xff]
        %v2428 = vld [vmem:[%s1845 + $0xb40] sm:$0xff]
        %v2429 = vld [vmem:[%s1845 + $0xb48] sm:$0xff]
        %v2430 = vld [vmem:[%s1845 + $0xb50] sm:$0xff]
        %v2431 = vld [vmem:[%s1845 + $0xb58] sm:$0xff]
        %v2432 = vld [vmem:[%s1845 + $0xb60] sm:$0xff]
        %v2433 = vld [vmem:[%s1845 + $0xb68] sm:$0xff]
        %v2434 = vld [vmem:[%s1845 + $0xb70] sm:$0xff]
        %v2435 = vld [vmem:[%s1845 + $0xb78] sm:$0xff]
        %v2436 = vld [vmem:[%s1845 + $0xb80] sm:$0xff]
        %v2437 = vld [vmem:[%s1845 + $0xb88] sm:$0xff]
        %v2438 = vld [vmem:[%s1845 + $0xb90] sm:$0xff]
        %v2439 = vld [vmem:[%s1845 + $0xb98] sm:$0xff]
        %v2440 = vld [vmem:[%s1845 + $0xba0] sm:$0xff]
        %v2441 = vld [vmem:[%s1845 + $0xba8] sm:$0xff]
        %v2442 = vld [vmem:[%s1845 + $0xbb0] sm:$0xff]
        %v2443 = vld [vmem:[%s1845 + $0xbb8] sm:$0xff]
        %v2444 = vld [vmem:[%s1845 + $0xbc0] sm:$0xff]
        %v2445 = vld [vmem:[%s1845 + $0xbc8] sm:$0xff]
        %v2446 = vld [vmem:[%s1845 + $0xbd0] sm:$0xff]
        %v2447 = vld [vmem:[%s1845 + $0xbd8] sm:$0xff]
        %v2448 = vld [vmem:[%s1845 + $0xbe0] sm:$0xff]
        %v2449 = vld [vmem:[%s1845 + $0xbe8] sm:$0xff]
        %v2450 = vld [vmem:[%s1845 + $0xbf0] sm:$0xff]
        %v2451 = vld [vmem:[%s1845 + $0xbf8] sm:$0xff]
        %v2452 = vld [vmem:[%s1845 + $0xc00] sm:$0xff]
        %v2453 = vld [vmem:[%s1845 + $0xc08] sm:$0xff]
        %v2454 = vld [vmem:[%s1845 + $0xc10] sm:$0xff]
        %v2455 = vld [vmem:[%s1845 + $0xc18] sm:$0xff]
        %v2456 = vld [vmem:[%s1845 + $0xc20] sm:$0xff]
        %v2457 = vld [vmem:[%s1845 + $0xc28] sm:$0xff]
        %v2458 = vld [vmem:[%s1845 + $0xc30] sm:$0xff]
        %v2459 = vld [vmem:[%s1845 + $0xc38] sm:$0xff]
        %v2460 = vld [vmem:[%s1845 + $0xc40] sm:$0xff]
        %v2461 = vld [vmem:[%s1845 + $0xc48] sm:$0xff]
        %v2462 = vld [vmem:[%s1845 + $0xc50] sm:$0xff]
        %v2463 = vld [vmem:[%s1845 + $0xc58] sm:$0xff]
        %v2464 = vld [vmem:[%s1845 + $0xc60] sm:$0xff]
        %v2465 = vld [vmem:[%s1845 + $0xc68] sm:$0xff]
        %v2466 = vld [vmem:[%s1845 + $0xc70] sm:$0xff]
        %v2467 = vld [vmem:[%s1845 + $0xc78] sm:$0xff]
        %v2468 = vld [vmem:[%s1879] sm:$0x3]
        %v2470 = vlaneseq
        %v2471 = vshrl.u32 %v2470, 7
        %v2472 = vsub.s32 0, %v2471
        %v2473 = vrot.slane %v2468, %v2472
        %v2474 = vlaneseq
        %v2475 = vshrl.u32 %v2474, 7
        %v2476 = vsub.s32 1, %v2475
        %v2477 = vrot.slane %v2468, %v2476
        %v2880 = vunpack.c.l.b16 %v2068
        %v2881 = vunpack.c.h.b16 %v2068
        %v2882 = vunpack.c.l.b16 %v2069
        %v2883 = vunpack.c.h.b16 %v2069
        %v2884 = vunpack.c.l.b16 %v2070
        %v2885 = vunpack.c.h.b16 %v2070
        %v2886 = vunpack.c.l.b16 %v2071
        %v2887 = vunpack.c.h.b16 %v2071
        %v2888 = vunpack.c.l.b16 %v2072
        %v2889 = vunpack.c.h.b16 %v2072
        %v2890 = vunpack.c.l.b16 %v2073
        %v2891 = vunpack.c.h.b16 %v2073
        %v2892 = vunpack.c.l.b16 %v2074
        %v2893 = vunpack.c.h.b16 %v2074
        %v2894 = vunpack.c.l.b16 %v2075
        %v2895 = vunpack.c.h.b16 %v2075
        %v2896 = vunpack.c.l.b16 %v2076
        %v2897 = vunpack.c.h.b16 %v2076
        %v2898 = vunpack.c.l.b16 %v2077
        %v2899 = vunpack.c.h.b16 %v2077
        %v2900 = vunpack.c.l.b16 %v2078
        %v2901 = vunpack.c.h.b16 %v2078
        %v2902 = vunpack.c.l.b16 %v2079
        %v2903 = vunpack.c.h.b16 %v2079
        %v2904 = vunpack.c.l.b16 %v2080
        %v2905 = vunpack.c.h.b16 %v2080
        %v2906 = vunpack.c.l.b16 %v2081
        %v2907 = vunpack.c.h.b16 %v2081
        %v2908 = vunpack.c.l.b16 %v2082
        %v2909 = vunpack.c.h.b16 %v2082
        %v2910 = vunpack.c.l.b16 %v2083
        %v2911 = vunpack.c.h.b16 %v2083
        %v2912 = vunpack.c.l.b16 %v2084
        %v2913 = vunpack.c.h.b16 %v2084
        %v2914 = vunpack.c.l.b16 %v2085
        %v2915 = vunpack.c.h.b16 %v2085
        %v2916 = vunpack.c.l.b16 %v2086
        %v2917 = vunpack.c.h.b16 %v2086
        %v2918 = vunpack.c.l.b16 %v2087
        %v2919 = vunpack.c.h.b16 %v2087
        %v2920 = vunpack.c.l.b16 %v2088
        %v2921 = vunpack.c.h.b16 %v2088
        %v2922 = vunpack.c.l.b16 %v2089
        %v2923 = vunpack.c.h.b16 %v2089
        %v2924 = vunpack.c.l.b16 %v2090
        %v2925 = vunpack.c.h.b16 %v2090
        %v2926 = vunpack.c.l.b16 %v2091
        %v2927 = vunpack.c.h.b16 %v2091
        %v2928 = vunpack.c.l.b16 %v2092
        %v2929 = vunpack.c.h.b16 %v2092
        %v2930 = vunpack.c.l.b16 %v2093
        %v2931 = vunpack.c.h.b16 %v2093
        %v2932 = vunpack.c.l.b16 %v2094
        %v2933 = vunpack.c.h.b16 %v2094
        %v2934 = vunpack.c.l.b16 %v2095
        %v2935 = vunpack.c.h.b16 %v2095
        %v2936 = vunpack.c.l.b16 %v2096
        %v2937 = vunpack.c.h.b16 %v2096
        %v2938 = vunpack.c.l.b16 %v2097
        %v2939 = vunpack.c.h.b16 %v2097
        %v2940 = vunpack.c.l.b16 %v2098
        %v2941 = vunpack.c.h.b16 %v2098
        %v2942 = vunpack.c.l.b16 %v2099
        %v2943 = vunpack.c.h.b16 %v2099
        %v2944 = vunpack.c.l.b16 %v2100
        %v2945 = vunpack.c.h.b16 %v2100
        %v2946 = vunpack.c.l.b16 %v2101
        %v2947 = vunpack.c.h.b16 %v2101
        %v2948 = vunpack.c.l.b16 %v2102
        %v2949 = vunpack.c.h.b16 %v2102
        %v2950 = vunpack.c.l.b16 %v2103
        %v2951 = vunpack.c.h.b16 %v2103
        %v2952 = vunpack.c.l.b16 %v2104
        %v2953 = vunpack.c.h.b16 %v2104
        %v2954 = vunpack.c.l.b16 %v2105
        %v2955 = vunpack.c.h.b16 %v2105
        %v2956 = vunpack.c.l.b16 %v2106
        %v2957 = vunpack.c.h.b16 %v2106
        %v2958 = vunpack.c.l.b16 %v2107
        %v2959 = vunpack.c.h.b16 %v2107
        %v2960 = vunpack.c.l.b16 %v2108
        %v2961 = vunpack.c.h.b16 %v2108
        %v2962 = vunpack.c.l.b16 %v2109
        %v2963 = vunpack.c.h.b16 %v2109
        %v2964 = vunpack.c.l.b16 %v2110
        %v2965 = vunpack.c.h.b16 %v2110
        %v2966 = vunpack.c.l.b16 %v2111
        %v2967 = vunpack.c.h.b16 %v2111
        %v2968 = vunpack.c.l.b16 %v2112
        %v2969 = vunpack.c.h.b16 %v2112
        %v2970 = vunpack.c.l.b16 %v2113
        %v2971 = vunpack.c.h.b16 %v2113
        %v2972 = vunpack.c.l.b16 %v2114
        %v2973 = vunpack.c.h.b16 %v2114
        %v2974 = vunpack.c.l.b16 %v2115
        %v2975 = vunpack.c.h.b16 %v2115
        %v2976 = vunpack.c.l.b16 %v2116
        %v2977 = vunpack.c.h.b16 %v2116
        %v2978 = vunpack.c.l.b16 %v2117
        %v2979 = vunpack.c.h.b16 %v2117
        %v2980 = vunpack.c.l.b16 %v2118
        %v2981 = vunpack.c.h.b16 %v2118
        %v2982 = vunpack.c.l.b16 %v2119
        %v2983 = vunpack.c.h.b16 %v2119
        %v2984 = vunpack.c.l.b16 %v2120
        %v2985 = vunpack.c.h.b16 %v2120
        %v2986 = vunpack.c.l.b16 %v2121
        %v2987 = vunpack.c.h.b16 %v2121
        %v2988 = vunpack.c.l.b16 %v2122
        %v2989 = vunpack.c.h.b16 %v2122
        %v2990 = vunpack.c.l.b16 %v2123
        %v2991 = vunpack.c.h.b16 %v2123
        %v2992 = vunpack.c.l.b16 %v2124
        %v2993 = vunpack.c.h.b16 %v2124
        %v2994 = vunpack.c.l.b16 %v2125
        %v2995 = vunpack.c.h.b16 %v2125
        %v2996 = vunpack.c.l.b16 %v2126
        %v2997 = vunpack.c.h.b16 %v2126
        %v2998 = vunpack.c.l.b16 %v2127
        %v2999 = vunpack.c.h.b16 %v2127
        %v3000 = vunpack.c.l.b16 %v2128
        %v3001 = vunpack.c.h.b16 %v2128
        %v3002 = vunpack.c.l.b16 %v2129
        %v3003 = vunpack.c.h.b16 %v2129
        %v3004 = vunpack.c.l.b16 %v2130
        %v3005 = vunpack.c.h.b16 %v2130
        %v3006 = vunpack.c.l.b16 %v2131
        %v3007 = vunpack.c.h.b16 %v2131
        %v3008 = vunpack.c.l.b16 %v2132
        %v3009 = vunpack.c.h.b16 %v2132
        %v3010 = vunpack.c.l.b16 %v2133
        %v3011 = vunpack.c.h.b16 %v2133
        %v3012 = vunpack.c.l.b16 %v2134
        %v3013 = vunpack.c.h.b16 %v2134
        %v3014 = vunpack.c.l.b16 %v2135
        %v3015 = vunpack.c.h.b16 %v2135
        %v3016 = vunpack.c.l.b16 %v2136
        %v3017 = vunpack.c.h.b16 %v2136
        %v3018 = vunpack.c.l.b16 %v2137
        %v3019 = vunpack.c.h.b16 %v2137
        %v3020 = vunpack.c.l.b16 %v2138
        %v3021 = vunpack.c.h.b16 %v2138
        %v3022 = vunpack.c.l.b16 %v2139
        %v3023 = vunpack.c.h.b16 %v2139
        %v3024 = vunpack.c.l.b16 %v2140
        %v3025 = vunpack.c.h.b16 %v2140
        %v3026 = vunpack.c.l.b16 %v2141
        %v3027 = vunpack.c.h.b16 %v2141
        %v3028 = vunpack.c.l.b16 %v2142
        %v3029 = vunpack.c.h.b16 %v2142
        %v3030 = vunpack.c.l.b16 %v2143
        %v3031 = vunpack.c.h.b16 %v2143
        %v3032 = vunpack.c.l.b16 %v2144
        %v3033 = vunpack.c.h.b16 %v2144
        %v3034 = vunpack.c.l.b16 %v2145
        %v3035 = vunpack.c.h.b16 %v2145
        %v3036 = vunpack.c.l.b16 %v2146
        %v3037 = vunpack.c.h.b16 %v2146
        %v3038 = vunpack.c.l.b16 %v2147
        %v3039 = vunpack.c.h.b16 %v2147
        %v3040 = vunpack.c.l.b16 %v2148
        %v3041 = vunpack.c.h.b16 %v2148
        %v3042 = vunpack.c.l.b16 %v2149
        %v3043 = vunpack.c.h.b16 %v2149
        %v3044 = vunpack.c.l.b16 %v2150
        %v3045 = vunpack.c.h.b16 %v2150
        %v3046 = vunpack.c.l.b16 %v2151
        %v3047 = vunpack.c.h.b16 %v2151
        %v3048 = vunpack.c.l.b16 %v2152
        %v3049 = vunpack.c.h.b16 %v2152
        %v3050 = vunpack.c.l.b16 %v2153
        %v3051 = vunpack.c.h.b16 %v2153
        %v3052 = vunpack.c.l.b16 %v2154
        %v3053 = vunpack.c.h.b16 %v2154
        %v3054 = vunpack.c.l.b16 %v2155
        %v3055 = vunpack.c.h.b16 %v2155
        %v3056 = vunpack.c.l.b16 %v2156
        %v3057 = vunpack.c.h.b16 %v2156
        %v3058 = vunpack.c.l.b16 %v2157
        %v3059 = vunpack.c.h.b16 %v2157
        %v3060 = vunpack.c.l.b16 %v2158
        %v3061 = vunpack.c.h.b16 %v2158
        %v3062 = vunpack.c.l.b16 %v2159
        %v3063 = vunpack.c.h.b16 %v2159
        %v3064 = vunpack.c.l.b16 %v2160
        %v3065 = vunpack.c.h.b16 %v2160
        %v3066 = vunpack.c.l.b16 %v2161
        %v3067 = vunpack.c.h.b16 %v2161
        %v3068 = vunpack.c.l.b16 %v2162
        %v3069 = vunpack.c.h.b16 %v2162
        %v3070 = vunpack.c.l.b16 %v2163
        %v3071 = vunpack.c.h.b16 %v2163
        %v3072 = vunpack.c.l.b16 %v2164
        %v3073 = vunpack.c.h.b16 %v2164
        %v3074 = vunpack.c.l.b16 %v2165
        %v3075 = vunpack.c.h.b16 %v2165
        %v3076 = vunpack.c.l.b16 %v2166
        %v3077 = vunpack.c.h.b16 %v2166
        %v3078 = vunpack.c.l.b16 %v2167
        %v3079 = vunpack.c.h.b16 %v2167
        %v3080 = vunpack.c.l.b16 %v2168
        %v3081 = vunpack.c.h.b16 %v2168
        %v3082 = vunpack.c.l.b16 %v2169
        %v3083 = vunpack.c.h.b16 %v2169
        %v3084 = vunpack.c.l.b16 %v2170
        %v3085 = vunpack.c.h.b16 %v2170
        %v3086 = vunpack.c.l.b16 %v2171
        %v3087 = vunpack.c.h.b16 %v2171
        %v3088 = vunpack.c.l.b16 %v2172
        %v3089 = vunpack.c.h.b16 %v2172
        %v3090 = vunpack.c.l.b16 %v2173
        %v3091 = vunpack.c.h.b16 %v2173
        %v3092 = vunpack.c.l.b16 %v2174
        %v3093 = vunpack.c.h.b16 %v2174
        %v3094 = vunpack.c.l.b16 %v2175
        %v3095 = vunpack.c.h.b16 %v2175
        %v3096 = vunpack.c.l.b16 %v2176
        %v3097 = vunpack.c.h.b16 %v2176
        %v3098 = vunpack.c.l.b16 %v2177
        %v3099 = vunpack.c.h.b16 %v2177
        %v3100 = vunpack.c.l.b16 %v2178
        %v3101 = vunpack.c.h.b16 %v2178
        %v3102 = vunpack.c.l.b16 %v2179
        %v3103 = vunpack.c.h.b16 %v2179
        %v3104 = vunpack.c.l.b16 %v2180
        %v3105 = vunpack.c.h.b16 %v2180
        %v3106 = vunpack.c.l.b16 %v2181
        %v3107 = vunpack.c.h.b16 %v2181
        %v3108 = vunpack.c.l.b16 %v2182
        %v3109 = vunpack.c.h.b16 %v2182
        %v3110 = vunpack.c.l.b16 %v2183
        %v3111 = vunpack.c.h.b16 %v2183
        %v3112 = vunpack.c.l.b16 %v2184
        %v3113 = vunpack.c.h.b16 %v2184
        %v3114 = vunpack.c.l.b16 %v2185
        %v3115 = vunpack.c.h.b16 %v2185
        %v3116 = vunpack.c.l.b16 %v2186
        %v3117 = vunpack.c.h.b16 %v2186
        %v3118 = vunpack.c.l.b16 %v2187
        %v3119 = vunpack.c.h.b16 %v2187
        %v3120 = vunpack.c.l.b16 %v2188
        %v3121 = vunpack.c.h.b16 %v2188
        %v3122 = vunpack.c.l.b16 %v2189
        %v3123 = vunpack.c.h.b16 %v2189
        %v3124 = vunpack.c.l.b16 %v2190
        %v3125 = vunpack.c.h.b16 %v2190
        %v3126 = vunpack.c.l.b16 %v2191
        %v3127 = vunpack.c.h.b16 %v2191
        %v3128 = vunpack.c.l.b16 %v2192
        %v3129 = vunpack.c.h.b16 %v2192
        %v3130 = vunpack.c.l.b16 %v2193
        %v3131 = vunpack.c.h.b16 %v2193
        %v3132 = vunpack.c.l.b16 %v2194
        %v3133 = vunpack.c.h.b16 %v2194
        %v3134 = vunpack.c.l.b16 %v2195
        %v3135 = vunpack.c.h.b16 %v2195
        %v3136 = vunpack.c.l.b16 %v2196
        %v3137 = vunpack.c.h.b16 %v2196
        %v3138 = vunpack.c.l.b16 %v2197
        %v3139 = vunpack.c.h.b16 %v2197
        %v3140 = vunpack.c.l.b16 %v2198
        %v3141 = vunpack.c.h.b16 %v2198
        %v3142 = vunpack.c.l.b16 %v2199
        %v3143 = vunpack.c.h.b16 %v2199
        %v3144 = vunpack.c.l.b16 %v2200
        %v3145 = vunpack.c.h.b16 %v2200
        %v3146 = vunpack.c.l.b16 %v2201
        %v3147 = vunpack.c.h.b16 %v2201
        %v3148 = vunpack.c.l.b16 %v2202
        %v3149 = vunpack.c.h.b16 %v2202
        %v3150 = vunpack.c.l.b16 %v2203
        %v3151 = vunpack.c.h.b16 %v2203
        %v3152 = vunpack.c.l.b16 %v2204
        %v3153 = vunpack.c.h.b16 %v2204
        %v3154 = vunpack.c.l.b16 %v2205
        %v3155 = vunpack.c.h.b16 %v2205
        %v3156 = vunpack.c.l.b16 %v2206
        %v3157 = vunpack.c.h.b16 %v2206
        %v3158 = vunpack.c.l.b16 %v2207
        %v3159 = vunpack.c.h.b16 %v2207
        %v3160 = vunpack.c.l.b16 %v2208
        %v3161 = vunpack.c.h.b16 %v2208
        %v3162 = vunpack.c.l.b16 %v2209
        %v3163 = vunpack.c.h.b16 %v2209
        %v3164 = vunpack.c.l.b16 %v2210
        %v3165 = vunpack.c.h.b16 %v2210
        %v3166 = vunpack.c.l.b16 %v2211
        %v3167 = vunpack.c.h.b16 %v2211
        %v3168 = vunpack.c.l.b16 %v2212
        %v3169 = vunpack.c.h.b16 %v2212
        %v3170 = vunpack.c.l.b16 %v2213
        %v3171 = vunpack.c.h.b16 %v2213
        %v3172 = vunpack.c.l.b16 %v2214
        %v3173 = vunpack.c.h.b16 %v2214
        %v3174 = vunpack.c.l.b16 %v2215
        %v3175 = vunpack.c.h.b16 %v2215
        %v3176 = vunpack.c.l.b16 %v2216
        %v3177 = vunpack.c.h.b16 %v2216
        %v3178 = vunpack.c.l.b16 %v2217
        %v3179 = vunpack.c.h.b16 %v2217
        %v3180 = vunpack.c.l.b16 %v2218
        %v3181 = vunpack.c.h.b16 %v2218
        %v3182 = vunpack.c.l.b16 %v2219
        %v3183 = vunpack.c.h.b16 %v2219
        %v3184 = vunpack.c.l.b16 %v2220
        %v3185 = vunpack.c.h.b16 %v2220
        %v3186 = vunpack.c.l.b16 %v2221
        %v3187 = vunpack.c.h.b16 %v2221
        %v3188 = vunpack.c.l.b16 %v2222
        %v3189 = vunpack.c.h.b16 %v2222
        %v3190 = vunpack.c.l.b16 %v2223
        %v3191 = vunpack.c.h.b16 %v2223
        %v3192 = vunpack.c.l.b16 %v2224
        %v3193 = vunpack.c.h.b16 %v2224
        %v3194 = vunpack.c.l.b16 %v2225
        %v3195 = vunpack.c.h.b16 %v2225
        %v3196 = vunpack.c.l.b16 %v2226
        %v3197 = vunpack.c.h.b16 %v2226
        %v3198 = vunpack.c.l.b16 %v2227
        %v3199 = vunpack.c.h.b16 %v2227
        %v3200 = vunpack.c.l.b16 %v2228
        %v3201 = vunpack.c.h.b16 %v2228
        %v3202 = vunpack.c.l.b16 %v2229
        %v3203 = vunpack.c.h.b16 %v2229
        %v3204 = vunpack.c.l.b16 %v2230
        %v3205 = vunpack.c.h.b16 %v2230
        %v3206 = vunpack.c.l.b16 %v2231
        %v3207 = vunpack.c.h.b16 %v2231
        %v3208 = vunpack.c.l.b16 %v2232
        %v3209 = vunpack.c.h.b16 %v2232
        %v3210 = vunpack.c.l.b16 %v2233
        %v3211 = vunpack.c.h.b16 %v2233
        %v3212 = vunpack.c.l.b16 %v2234
        %v3213 = vunpack.c.h.b16 %v2234
        %v3214 = vunpack.c.l.b16 %v2235
        %v3215 = vunpack.c.h.b16 %v2235
        %v3216 = vunpack.c.l.b16 %v2236
        %v3217 = vunpack.c.h.b16 %v2236
        %v3218 = vunpack.c.l.b16 %v2237
        %v3219 = vunpack.c.h.b16 %v2237
        %v3220 = vunpack.c.l.b16 %v2238
        %v3221 = vunpack.c.h.b16 %v2238
        %v3222 = vunpack.c.l.b16 %v2239
        %v3223 = vunpack.c.h.b16 %v2239
        %v3224 = vunpack.c.l.b16 %v2240
        %v3225 = vunpack.c.h.b16 %v2240
        %v3226 = vunpack.c.l.b16 %v2241
        %v3227 = vunpack.c.h.b16 %v2241
        %v3228 = vunpack.c.l.b16 %v2242
        %v3229 = vunpack.c.h.b16 %v2242
        %v3230 = vunpack.c.l.b16 %v2243
        %v3231 = vunpack.c.h.b16 %v2243
        %v3232 = vunpack.c.l.b16 %v2244
        %v3233 = vunpack.c.h.b16 %v2244
        %v3234 = vunpack.c.l.b16 %v2245
        %v3235 = vunpack.c.h.b16 %v2245
        %v3236 = vunpack.c.l.b16 %v2246
        %v3237 = vunpack.c.h.b16 %v2246
        %v3238 = vunpack.c.l.b16 %v2247
        %v3239 = vunpack.c.h.b16 %v2247
        %v3240 = vunpack.c.l.b16 %v2248
        %v3241 = vunpack.c.h.b16 %v2248
        %v3242 = vunpack.c.l.b16 %v2249
        %v3243 = vunpack.c.h.b16 %v2249
        %v3244 = vunpack.c.l.b16 %v2250
        %v3245 = vunpack.c.h.b16 %v2250
        %v3246 = vunpack.c.l.b16 %v2251
        %v3247 = vunpack.c.h.b16 %v2251
        %v3248 = vunpack.c.l.b16 %v2252
        %v3249 = vunpack.c.h.b16 %v2252
        %v3250 = vunpack.c.l.b16 %v2253
        %v3251 = vunpack.c.h.b16 %v2253
        %v3252 = vunpack.c.l.b16 %v2254
        %v3253 = vunpack.c.h.b16 %v2254
        %v3254 = vunpack.c.l.b16 %v2255
        %v3255 = vunpack.c.h.b16 %v2255
        %v3256 = vunpack.c.l.b16 %v2256
        %v3257 = vunpack.c.h.b16 %v2256
        %v3258 = vunpack.c.l.b16 %v2257
        %v3259 = vunpack.c.h.b16 %v2257
        %v3260 = vunpack.c.l.b16 %v2258
        %v3261 = vunpack.c.h.b16 %v2258
        %v3262 = vunpack.c.l.b16 %v2259
        %v3263 = vunpack.c.h.b16 %v2259
        %v3264 = vunpack.c.l.b16 %v2260
        %v3265 = vunpack.c.h.b16 %v2260
        %v3266 = vunpack.c.l.b16 %v2261
        %v3267 = vunpack.c.h.b16 %v2261
        %v3268 = vunpack.c.l.b16 %v2262
        %v3269 = vunpack.c.h.b16 %v2262
        %v3270 = vunpack.c.l.b16 %v2263
        %v3271 = vunpack.c.h.b16 %v2263
        %v3272 = vunpack.c.l.b16 %v2264
        %v3273 = vunpack.c.h.b16 %v2264
        %v3274 = vunpack.c.l.b16 %v2265
        %v3275 = vunpack.c.h.b16 %v2265
        %v3276 = vunpack.c.l.b16 %v2266
        %v3277 = vunpack.c.h.b16 %v2266
        %v3278 = vunpack.c.l.b16 %v2267
        %v3279 = vunpack.c.h.b16 %v2267
        %v3280 = vunpack.c.l.b16 %v2268
        %v3281 = vunpack.c.h.b16 %v2268
        %v3282 = vunpack.c.l.b16 %v2269
        %v3283 = vunpack.c.h.b16 %v2269
        %v3284 = vunpack.c.l.b16 %v2270
        %v3285 = vunpack.c.h.b16 %v2270
        %v3286 = vunpack.c.l.b16 %v2271
        %v3287 = vunpack.c.h.b16 %v2271
        %v3288 = vunpack.c.l.b16 %v2272
        %v3289 = vunpack.c.h.b16 %v2272
        %v3290 = vunpack.c.l.b16 %v2273
        %v3291 = vunpack.c.h.b16 %v2273
        %v3292 = vunpack.c.l.b16 %v2274
        %v3293 = vunpack.c.h.b16 %v2274
        %v3294 = vunpack.c.l.b16 %v2275
        %v3295 = vunpack.c.h.b16 %v2275
        %v3296 = vunpack.c.l.b16 %v2276
        %v3297 = vunpack.c.h.b16 %v2276
        %v3298 = vunpack.c.l.b16 %v2277
        %v3299 = vunpack.c.h.b16 %v2277
        %v3300 = vunpack.c.l.b16 %v2278
        %v3301 = vunpack.c.h.b16 %v2278
        %v3302 = vunpack.c.l.b16 %v2279
        %v3303 = vunpack.c.h.b16 %v2279
        %v3304 = vunpack.c.l.b16 %v2280
        %v3305 = vunpack.c.h.b16 %v2280
        %v3306 = vunpack.c.l.b16 %v2281
        %v3307 = vunpack.c.h.b16 %v2281
        %v3308 = vunpack.c.l.b16 %v2282
        %v3309 = vunpack.c.h.b16 %v2282
        %v3310 = vunpack.c.l.b16 %v2283
        %v3311 = vunpack.c.h.b16 %v2283
        %v3312 = vunpack.c.l.b16 %v2284
        %v3313 = vunpack.c.h.b16 %v2284
        %v3314 = vunpack.c.l.b16 %v2285
        %v3315 = vunpack.c.h.b16 %v2285
        %v3316 = vunpack.c.l.b16 %v2286
        %v3317 = vunpack.c.h.b16 %v2286
        %v3318 = vunpack.c.l.b16 %v2287
        %v3319 = vunpack.c.h.b16 %v2287
        %v3320 = vunpack.c.l.b16 %v2288
        %v3321 = vunpack.c.h.b16 %v2288
        %v3322 = vunpack.c.l.b16 %v2289
        %v3323 = vunpack.c.h.b16 %v2289
        %v3324 = vunpack.c.l.b16 %v2290
        %v3325 = vunpack.c.h.b16 %v2290
        %v3326 = vunpack.c.l.b16 %v2291
        %v3327 = vunpack.c.h.b16 %v2291
        %v3328 = vunpack.c.l.b16 %v2292
        %v3329 = vunpack.c.h.b16 %v2292
        %v3330 = vunpack.c.l.b16 %v2293
        %v3331 = vunpack.c.h.b16 %v2293
        %v3332 = vunpack.c.l.b16 %v2294
        %v3333 = vunpack.c.h.b16 %v2294
        %v3334 = vunpack.c.l.b16 %v2295
        %v3335 = vunpack.c.h.b16 %v2295
        %v3336 = vunpack.c.l.b16 %v2296
        %v3337 = vunpack.c.h.b16 %v2296
        %v3338 = vunpack.c.l.b16 %v2297
        %v3339 = vunpack.c.h.b16 %v2297
        %v3340 = vunpack.c.l.b16 %v2298
        %v3341 = vunpack.c.h.b16 %v2298
        %v3342 = vunpack.c.l.b16 %v2299
        %v3343 = vunpack.c.h.b16 %v2299
        %v3344 = vunpack.c.l.b16 %v2300
        %v3345 = vunpack.c.h.b16 %v2300
        %v3346 = vunpack.c.l.b16 %v2301
        %v3347 = vunpack.c.h.b16 %v2301
        %v3348 = vunpack.c.l.b16 %v2302
        %v3349 = vunpack.c.h.b16 %v2302
        %v3350 = vunpack.c.l.b16 %v2303
        %v3351 = vunpack.c.h.b16 %v2303
        %v3352 = vunpack.c.l.b16 %v2304
        %v3353 = vunpack.c.h.b16 %v2304
        %v3354 = vunpack.c.l.b16 %v2305
        %v3355 = vunpack.c.h.b16 %v2305
        %v3356 = vunpack.c.l.b16 %v2306
        %v3357 = vunpack.c.h.b16 %v2306
        %v3358 = vunpack.c.l.b16 %v2307
        %v3359 = vunpack.c.h.b16 %v2307
        %v3360 = vunpack.c.l.b16 %v2308
        %v3361 = vunpack.c.h.b16 %v2308
        %v3362 = vunpack.c.l.b16 %v2309
        %v3363 = vunpack.c.h.b16 %v2309
        %v3364 = vunpack.c.l.b16 %v2310
        %v3365 = vunpack.c.h.b16 %v2310
        %v3366 = vunpack.c.l.b16 %v2311
        %v3367 = vunpack.c.h.b16 %v2311
        %v3368 = vunpack.c.l.b16 %v2312
        %v3369 = vunpack.c.h.b16 %v2312
        %v3370 = vunpack.c.l.b16 %v2313
        %v3371 = vunpack.c.h.b16 %v2313
        %v3372 = vunpack.c.l.b16 %v2314
        %v3373 = vunpack.c.h.b16 %v2314
        %v3374 = vunpack.c.l.b16 %v2315
        %v3375 = vunpack.c.h.b16 %v2315
        %v3376 = vunpack.c.l.b16 %v2316
        %v3377 = vunpack.c.h.b16 %v2316
        %v3378 = vunpack.c.l.b16 %v2317
        %v3379 = vunpack.c.h.b16 %v2317
        %v3380 = vunpack.c.l.b16 %v2318
        %v3381 = vunpack.c.h.b16 %v2318
        %v3382 = vunpack.c.l.b16 %v2319
        %v3383 = vunpack.c.h.b16 %v2319
        %v3384 = vunpack.c.l.b16 %v2320
        %v3385 = vunpack.c.h.b16 %v2320
        %v3386 = vunpack.c.l.b16 %v2321
        %v3387 = vunpack.c.h.b16 %v2321
        %v3388 = vunpack.c.l.b16 %v2322
        %v3389 = vunpack.c.h.b16 %v2322
        %v3390 = vunpack.c.l.b16 %v2323
        %v3391 = vunpack.c.h.b16 %v2323
        %v3392 = vunpack.c.l.b16 %v2324
        %v3393 = vunpack.c.h.b16 %v2324
        %v3394 = vunpack.c.l.b16 %v2325
        %v3395 = vunpack.c.h.b16 %v2325
        %v3396 = vunpack.c.l.b16 %v2326
        %v3397 = vunpack.c.h.b16 %v2326
        %v3398 = vunpack.c.l.b16 %v2327
        %v3399 = vunpack.c.h.b16 %v2327
        %v3400 = vunpack.c.l.b16 %v2328
        %v3401 = vunpack.c.h.b16 %v2328
        %v3402 = vunpack.c.l.b16 %v2329
        %v3403 = vunpack.c.h.b16 %v2329
        %v3404 = vunpack.c.l.b16 %v2330
        %v3405 = vunpack.c.h.b16 %v2330
        %v3406 = vunpack.c.l.b16 %v2331
        %v3407 = vunpack.c.h.b16 %v2331
        %v3408 = vunpack.c.l.b16 %v2332
        %v3409 = vunpack.c.h.b16 %v2332
        %v3410 = vunpack.c.l.b16 %v2333
        %v3411 = vunpack.c.h.b16 %v2333
        %v3412 = vunpack.c.l.b16 %v2334
        %v3413 = vunpack.c.h.b16 %v2334
        %v3414 = vunpack.c.l.b16 %v2335
        %v3415 = vunpack.c.h.b16 %v2335
        %v3416 = vunpack.c.l.b16 %v2336
        %v3417 = vunpack.c.h.b16 %v2336
        %v3418 = vunpack.c.l.b16 %v2337
        %v3419 = vunpack.c.h.b16 %v2337
        %v3420 = vunpack.c.l.b16 %v2338
        %v3421 = vunpack.c.h.b16 %v2338
        %v3422 = vunpack.c.l.b16 %v2339
        %v3423 = vunpack.c.h.b16 %v2339
        %v3424 = vunpack.c.l.b16 %v2340
        %v3425 = vunpack.c.h.b16 %v2340
        %v3426 = vunpack.c.l.b16 %v2341
        %v3427 = vunpack.c.h.b16 %v2341
        %v3428 = vunpack.c.l.b16 %v2342
        %v3429 = vunpack.c.h.b16 %v2342
        %v3430 = vunpack.c.l.b16 %v2343
        %v3431 = vunpack.c.h.b16 %v2343
        %v3432 = vunpack.c.l.b16 %v2344
        %v3433 = vunpack.c.h.b16 %v2344
        %v3434 = vunpack.c.l.b16 %v2345
        %v3435 = vunpack.c.h.b16 %v2345
        %v3436 = vunpack.c.l.b16 %v2346
        %v3437 = vunpack.c.h.b16 %v2346
        %v3438 = vunpack.c.l.b16 %v2347
        %v3439 = vunpack.c.h.b16 %v2347
        %v3440 = vunpack.c.l.b16 %v2348
        %v3441 = vunpack.c.h.b16 %v2348
        %v3442 = vunpack.c.l.b16 %v2349
        %v3443 = vunpack.c.h.b16 %v2349
        %v3444 = vunpack.c.l.b16 %v2350
        %v3445 = vunpack.c.h.b16 %v2350
        %v3446 = vunpack.c.l.b16 %v2351
        %v3447 = vunpack.c.h.b16 %v2351
        %v3448 = vunpack.c.l.b16 %v2352
        %v3449 = vunpack.c.h.b16 %v2352
        %v3450 = vunpack.c.l.b16 %v2353
        %v3451 = vunpack.c.h.b16 %v2353
        %v3452 = vunpack.c.l.b16 %v2354
        %v3453 = vunpack.c.h.b16 %v2354
        %v3454 = vunpack.c.l.b16 %v2355
        %v3455 = vunpack.c.h.b16 %v2355
        %v3456 = vunpack.c.l.b16 %v2356
        %v3457 = vunpack.c.h.b16 %v2356
        %v3458 = vunpack.c.l.b16 %v2357
        %v3459 = vunpack.c.h.b16 %v2357
        %v3460 = vunpack.c.l.b16 %v2358
        %v3461 = vunpack.c.h.b16 %v2358
        %v3462 = vunpack.c.l.b16 %v2359
        %v3463 = vunpack.c.h.b16 %v2359
        %v3464 = vunpack.c.l.b16 %v2360
        %v3465 = vunpack.c.h.b16 %v2360
        %v3466 = vunpack.c.l.b16 %v2361
        %v3467 = vunpack.c.h.b16 %v2361
        %v3468 = vunpack.c.l.b16 %v2362
        %v3469 = vunpack.c.h.b16 %v2362
        %v3470 = vunpack.c.l.b16 %v2363
        %v3471 = vunpack.c.h.b16 %v2363
        %v3472 = vunpack.c.l.b16 %v2364
        %v3473 = vunpack.c.h.b16 %v2364
        %v3474 = vunpack.c.l.b16 %v2365
        %v3475 = vunpack.c.h.b16 %v2365
        %v3476 = vunpack.c.l.b16 %v2366
        %v3477 = vunpack.c.h.b16 %v2366
        %v3478 = vunpack.c.l.b16 %v2367
        %v3479 = vunpack.c.h.b16 %v2367
        %v3480 = vunpack.c.l.b16 %v2368
        %v3481 = vunpack.c.h.b16 %v2368
        %v3482 = vunpack.c.l.b16 %v2369
        %v3483 = vunpack.c.h.b16 %v2369
        %v3484 = vunpack.c.l.b16 %v2370
        %v3485 = vunpack.c.h.b16 %v2370
        %v3486 = vunpack.c.l.b16 %v2371
        %v3487 = vunpack.c.h.b16 %v2371
        %v3488 = vunpack.c.l.b16 %v2372
        %v3489 = vunpack.c.h.b16 %v2372
        %v3490 = vunpack.c.l.b16 %v2373
        %v3491 = vunpack.c.h.b16 %v2373
        %v3492 = vunpack.c.l.b16 %v2374
        %v3493 = vunpack.c.h.b16 %v2374
        %v3494 = vunpack.c.l.b16 %v2375
        %v3495 = vunpack.c.h.b16 %v2375
        %v3496 = vunpack.c.l.b16 %v2376
        %v3497 = vunpack.c.h.b16 %v2376
        %v3498 = vunpack.c.l.b16 %v2377
        %v3499 = vunpack.c.h.b16 %v2377
        %v3500 = vunpack.c.l.b16 %v2378
        %v3501 = vunpack.c.h.b16 %v2378
        %v3502 = vunpack.c.l.b16 %v2379
        %v3503 = vunpack.c.h.b16 %v2379
        %v3504 = vunpack.c.l.b16 %v2380
        %v3505 = vunpack.c.h.b16 %v2380
        %v3506 = vunpack.c.l.b16 %v2381
        %v3507 = vunpack.c.h.b16 %v2381
        %v3508 = vunpack.c.l.b16 %v2382
        %v3509 = vunpack.c.h.b16 %v2382
        %v3510 = vunpack.c.l.b16 %v2383
        %v3511 = vunpack.c.h.b16 %v2383
        %v3512 = vunpack.c.l.b16 %v2384
        %v3513 = vunpack.c.h.b16 %v2384
        %v3514 = vunpack.c.l.b16 %v2385
        %v3515 = vunpack.c.h.b16 %v2385
        %v3516 = vunpack.c.l.b16 %v2386
        %v3517 = vunpack.c.h.b16 %v2386
        %v3518 = vunpack.c.l.b16 %v2387
        %v3519 = vunpack.c.h.b16 %v2387
        %v3520 = vunpack.c.l.b16 %v2388
        %v3521 = vunpack.c.h.b16 %v2388
        %v3522 = vunpack.c.l.b16 %v2389
        %v3523 = vunpack.c.h.b16 %v2389
        %v3524 = vunpack.c.l.b16 %v2390
        %v3525 = vunpack.c.h.b16 %v2390
        %v3526 = vunpack.c.l.b16 %v2391
        %v3527 = vunpack.c.h.b16 %v2391
        %v3528 = vunpack.c.l.b16 %v2392
        %v3529 = vunpack.c.h.b16 %v2392
        %v3530 = vunpack.c.l.b16 %v2393
        %v3531 = vunpack.c.h.b16 %v2393
        %v3532 = vunpack.c.l.b16 %v2394
        %v3533 = vunpack.c.h.b16 %v2394
        %v3534 = vunpack.c.l.b16 %v2395
        %v3535 = vunpack.c.h.b16 %v2395
        %v3536 = vunpack.c.l.b16 %v2396
        %v3537 = vunpack.c.h.b16 %v2396
        %v3538 = vunpack.c.l.b16 %v2397
        %v3539 = vunpack.c.h.b16 %v2397
        %v3540 = vunpack.c.l.b16 %v2398
        %v3541 = vunpack.c.h.b16 %v2398
        %v3542 = vunpack.c.l.b16 %v2399
        %v3543 = vunpack.c.h.b16 %v2399
        %v3544 = vunpack.c.l.b16 %v2400
        %v3545 = vunpack.c.h.b16 %v2400
        %v3546 = vunpack.c.l.b16 %v2401
        %v3547 = vunpack.c.h.b16 %v2401
        %v3548 = vunpack.c.l.b16 %v2402
        %v3549 = vunpack.c.h.b16 %v2402
        %v3550 = vunpack.c.l.b16 %v2403
        %v3551 = vunpack.c.h.b16 %v2403
        %v3552 = vunpack.c.l.b16 %v2404
        %v3553 = vunpack.c.h.b16 %v2404
        %v3554 = vunpack.c.l.b16 %v2405
        %v3555 = vunpack.c.h.b16 %v2405
        %v3556 = vunpack.c.l.b16 %v2406
        %v3557 = vunpack.c.h.b16 %v2406
        %v3558 = vunpack.c.l.b16 %v2407
        %v3559 = vunpack.c.h.b16 %v2407
        %v3560 = vunpack.c.l.b16 %v2408
        %v3561 = vunpack.c.h.b16 %v2408
        %v3562 = vunpack.c.l.b16 %v2409
        %v3563 = vunpack.c.h.b16 %v2409
        %v3564 = vunpack.c.l.b16 %v2410
        %v3565 = vunpack.c.h.b16 %v2410
        %v3566 = vunpack.c.l.b16 %v2411
        %v3567 = vunpack.c.h.b16 %v2411
        %v3568 = vunpack.c.l.b16 %v2412
        %v3569 = vunpack.c.h.b16 %v2412
        %v3570 = vunpack.c.l.b16 %v2413
        %v3571 = vunpack.c.h.b16 %v2413
        %v3572 = vunpack.c.l.b16 %v2414
        %v3573 = vunpack.c.h.b16 %v2414
        %v3574 = vunpack.c.l.b16 %v2415
        %v3575 = vunpack.c.h.b16 %v2415
        %v3576 = vunpack.c.l.b16 %v2416
        %v3577 = vunpack.c.h.b16 %v2416
        %v3578 = vunpack.c.l.b16 %v2417
        %v3579 = vunpack.c.h.b16 %v2417
        %v3580 = vunpack.c.l.b16 %v2418
        %v3581 = vunpack.c.h.b16 %v2418
        %v3582 = vunpack.c.l.b16 %v2419
        %v3583 = vunpack.c.h.b16 %v2419
        %v3584 = vunpack.c.l.b16 %v2420
        %v3585 = vunpack.c.h.b16 %v2420
        %v3586 = vunpack.c.l.b16 %v2421
        %v3587 = vunpack.c.h.b16 %v2421
        %v3588 = vunpack.c.l.b16 %v2422
        %v3589 = vunpack.c.h.b16 %v2422
        %v3590 = vunpack.c.l.b16 %v2423
        %v3591 = vunpack.c.h.b16 %v2423
        %v3592 = vunpack.c.l.b16 %v2424
        %v3593 = vunpack.c.h.b16 %v2424
        %v3594 = vunpack.c.l.b16 %v2425
        %v3595 = vunpack.c.h.b16 %v2425
        %v3596 = vunpack.c.l.b16 %v2426
        %v3597 = vunpack.c.h.b16 %v2426
        %v3598 = vunpack.c.l.b16 %v2427
        %v3599 = vunpack.c.h.b16 %v2427
        %v3600 = vunpack.c.l.b16 %v2428
        %v3601 = vunpack.c.h.b16 %v2428
        %v3602 = vunpack.c.l.b16 %v2429
        %v3603 = vunpack.c.h.b16 %v2429
        %v3604 = vunpack.c.l.b16 %v2430
        %v3605 = vunpack.c.h.b16 %v2430
        %v3606 = vunpack.c.l.b16 %v2431
        %v3607 = vunpack.c.h.b16 %v2431
        %v3608 = vunpack.c.l.b16 %v2432
        %v3609 = vunpack.c.h.b16 %v2432
        %v3610 = vunpack.c.l.b16 %v2433
        %v3611 = vunpack.c.h.b16 %v2433
        %v3612 = vunpack.c.l.b16 %v2434
        %v3613 = vunpack.c.h.b16 %v2434
        %v3614 = vunpack.c.l.b16 %v2435
        %v3615 = vunpack.c.h.b16 %v2435
        %v3616 = vunpack.c.l.b16 %v2436
        %v3617 = vunpack.c.h.b16 %v2436
        %v3618 = vunpack.c.l.b16 %v2437
        %v3619 = vunpack.c.h.b16 %v2437
        %v3620 = vunpack.c.l.b16 %v2438
        %v3621 = vunpack.c.h.b16 %v2438
        %v3622 = vunpack.c.l.b16 %v2439
        %v3623 = vunpack.c.h.b16 %v2439
        %v3624 = vunpack.c.l.b16 %v2440
        %v3625 = vunpack.c.h.b16 %v2440
        %v3626 = vunpack.c.l.b16 %v2441
        %v3627 = vunpack.c.h.b16 %v2441
        %v3628 = vunpack.c.l.b16 %v2442
        %v3629 = vunpack.c.h.b16 %v2442
        %v3630 = vunpack.c.l.b16 %v2443
        %v3631 = vunpack.c.h.b16 %v2443
        %v3632 = vunpack.c.l.b16 %v2444
        %v3633 = vunpack.c.h.b16 %v2444
        %v3634 = vunpack.c.l.b16 %v2445
        %v3635 = vunpack.c.h.b16 %v2445
        %v3636 = vunpack.c.l.b16 %v2446
        %v3637 = vunpack.c.h.b16 %v2446
        %v3638 = vunpack.c.l.b16 %v2447
        %v3639 = vunpack.c.h.b16 %v2447
        %v3640 = vunpack.c.l.b16 %v2448
        %v3641 = vunpack.c.h.b16 %v2448
        %v3642 = vunpack.c.l.b16 %v2449
        %v3643 = vunpack.c.h.b16 %v2449
        %v3644 = vunpack.c.l.b16 %v2450
        %v3645 = vunpack.c.h.b16 %v2450
        %v3646 = vunpack.c.l.b16 %v2451
        %v3647 = vunpack.c.h.b16 %v2451
        %v3648 = vunpack.c.l.b16 %v2452
        %v3649 = vunpack.c.h.b16 %v2452
        %v3650 = vunpack.c.l.b16 %v2453
        %v3651 = vunpack.c.h.b16 %v2453
        %v3652 = vunpack.c.l.b16 %v2454
        %v3653 = vunpack.c.h.b16 %v2454
        %v3654 = vunpack.c.l.b16 %v2455
        %v3655 = vunpack.c.h.b16 %v2455
        %v3656 = vunpack.c.l.b16 %v2456
        %v3657 = vunpack.c.h.b16 %v2456
        %v3658 = vunpack.c.l.b16 %v2457
        %v3659 = vunpack.c.h.b16 %v2457
        %v3660 = vunpack.c.l.b16 %v2458
        %v3661 = vunpack.c.h.b16 %v2458
        %v3662 = vunpack.c.l.b16 %v2459
        %v3663 = vunpack.c.h.b16 %v2459
        %v3664 = vunpack.c.l.b16 %v2460
        %v3665 = vunpack.c.h.b16 %v2460
        %v3666 = vunpack.c.l.b16 %v2461
        %v3667 = vunpack.c.h.b16 %v2461
        %v3668 = vunpack.c.l.b16 %v2462
        %v3669 = vunpack.c.h.b16 %v2462
        %v3670 = vunpack.c.l.b16 %v2463
        %v3671 = vunpack.c.h.b16 %v2463
        %v3672 = vunpack.c.l.b16 %v2464
        %v3673 = vunpack.c.h.b16 %v2464
        %v3674 = vunpack.c.l.b16 %v2465
        %v3675 = vunpack.c.h.b16 %v2465
        %v3676 = vunpack.c.l.b16 %v2466
        %v3677 = vunpack.c.h.b16 %v2466
        %v3678 = vunpack.c.l.b16 %v2467
        %v3679 = vunpack.c.h.b16 %v2467
        %v3680 = vpack.c.b16 %v2882, %v2880
        %v3681 = vpack.c.b16 %v2883, %v2881
        %v3682 = vpack.c.b16 %v2886, %v2884
        %v3683 = vpack.c.b16 %v2887, %v2885
        %v3684 = vpack.c.b16 %v2890, %v2888
        %v3685 = vpack.c.b16 %v2891, %v2889
        %v3686 = vpack.c.b16 %v2894, %v2892
        %v3687 = vpack.c.b16 %v2895, %v2893
        %v3688 = vpack.c.b16 %v2898, %v2896
        %v3689 = vpack.c.b16 %v2899, %v2897
        %v3690 = vpack.c.b16 %v2902, %v2900
        %v3691 = vpack.c.b16 %v2903, %v2901
        %v3692 = vpack.c.b16 %v2906, %v2904
        %v3693 = vpack.c.b16 %v2907, %v2905
        %v3694 = vpack.c.b16 %v2910, %v2908
        %v3695 = vpack.c.b16 %v2911, %v2909
        %v3696 = vpack.c.b16 %v2914, %v2912
        %v3697 = vpack.c.b16 %v2915, %v2913
        %v3698 = vpack.c.b16 %v2918, %v2916
        %v3699 = vpack.c.b16 %v2919, %v2917
        %v3700 = vpack.c.b16 %v2922, %v2920
        %v3701 = vpack.c.b16 %v2923, %v2921
        %v3702 = vpack.c.b16 %v2926, %v2924
        %v3703 = vpack.c.b16 %v2927, %v2925
        %v3704 = vpack.c.b16 %v2930, %v2928
        %v3705 = vpack.c.b16 %v2931, %v2929
        %v3706 = vpack.c.b16 %v2934, %v2932
        %v3707 = vpack.c.b16 %v2935, %v2933
        %v3708 = vpack.c.b16 %v2938, %v2936
        %v3709 = vpack.c.b16 %v2939, %v2937
        %v3710 = vpack.c.b16 %v2942, %v2940
        %v3711 = vpack.c.b16 %v2943, %v2941
        %v3712 = vpack.c.b16 %v2946, %v2944
        %v3713 = vpack.c.b16 %v2947, %v2945
        %v3714 = vpack.c.b16 %v2950, %v2948
        %v3715 = vpack.c.b16 %v2951, %v2949
        %v3716 = vpack.c.b16 %v2954, %v2952
        %v3717 = vpack.c.b16 %v2955, %v2953
        %v3718 = vpack.c.b16 %v2958, %v2956
        %v3719 = vpack.c.b16 %v2959, %v2957
        %v3720 = vpack.c.b16 %v2962, %v2960
        %v3721 = vpack.c.b16 %v2963, %v2961
        %v3722 = vpack.c.b16 %v2966, %v2964
        %v3723 = vpack.c.b16 %v2967, %v2965
        %v3724 = vpack.c.b16 %v2970, %v2968
        %v3725 = vpack.c.b16 %v2971, %v2969
        %v3726 = vpack.c.b16 %v2974, %v2972
        %v3727 = vpack.c.b16 %v2975, %v2973
        %v3728 = vpack.c.b16 %v2978, %v2976
        %v3729 = vpack.c.b16 %v2979, %v2977
        %v3730 = vpack.c.b16 %v2982, %v2980
        %v3731 = vpack.c.b16 %v2983, %v2981
        %v3732 = vpack.c.b16 %v2986, %v2984
        %v3733 = vpack.c.b16 %v2987, %v2985
        %v3734 = vpack.c.b16 %v2990, %v2988
        %v3735 = vpack.c.b16 %v2991, %v2989
        %v3736 = vpack.c.b16 %v2994, %v2992
        %v3737 = vpack.c.b16 %v2995, %v2993
        %v3738 = vpack.c.b16 %v2998, %v2996
        %v3739 = vpack.c.b16 %v2999, %v2997
        %v3740 = vpack.c.b16 %v3002, %v3000
        %v3741 = vpack.c.b16 %v3003, %v3001
        %v3742 = vpack.c.b16 %v3006, %v3004
        %v3743 = vpack.c.b16 %v3007, %v3005
        %v3744 = vpack.c.b16 %v3010, %v3008
        %v3745 = vpack.c.b16 %v3011, %v3009
        %v3746 = vpack.c.b16 %v3014, %v3012
        %v3747 = vpack.c.b16 %v3015, %v3013
        %v3748 = vpack.c.b16 %v3018, %v3016
        %v3749 = vpack.c.b16 %v3019, %v3017
        %v3750 = vpack.c.b16 %v3022, %v3020
        %v3751 = vpack.c.b16 %v3023, %v3021
        %v3752 = vpack.c.b16 %v3026, %v3024
        %v3753 = vpack.c.b16 %v3027, %v3025
        %v3754 = vpack.c.b16 %v3030, %v3028
        %v3755 = vpack.c.b16 %v3031, %v3029
        %v3756 = vpack.c.b16 %v3034, %v3032
        %v3757 = vpack.c.b16 %v3035, %v3033
        %v3758 = vpack.c.b16 %v3038, %v3036
        %v3759 = vpack.c.b16 %v3039, %v3037
        %v3760 = vpack.c.b16 %v3042, %v3040
        %v3761 = vpack.c.b16 %v3043, %v3041
        %v3762 = vpack.c.b16 %v3046, %v3044
        %v3763 = vpack.c.b16 %v3047, %v3045
        %v3764 = vpack.c.b16 %v3050, %v3048
        %v3765 = vpack.c.b16 %v3051, %v3049
        %v3766 = vpack.c.b16 %v3054, %v3052
        %v3767 = vpack.c.b16 %v3055, %v3053
        %v3768 = vpack.c.b16 %v3058, %v3056
        %v3769 = vpack.c.b16 %v3059, %v3057
        %v3770 = vpack.c.b16 %v3062, %v3060
        %v3771 = vpack.c.b16 %v3063, %v3061
        %v3772 = vpack.c.b16 %v3066, %v3064
        %v3773 = vpack.c.b16 %v3067, %v3065
        %v3774 = vpack.c.b16 %v3070, %v3068
        %v3775 = vpack.c.b16 %v3071, %v3069
        %v3776 = vpack.c.b16 %v3074, %v3072
        %v3777 = vpack.c.b16 %v3075, %v3073
        %v3778 = vpack.c.b16 %v3078, %v3076
        %v3779 = vpack.c.b16 %v3079, %v3077
        %v3780 = vpack.c.b16 %v3082, %v3080
        %v3781 = vpack.c.b16 %v3083, %v3081
        %v3782 = vpack.c.b16 %v3086, %v3084
        %v3783 = vpack.c.b16 %v3087, %v3085
        %v3784 = vpack.c.b16 %v3090, %v3088
        %v3785 = vpack.c.b16 %v3091, %v3089
        %v3786 = vpack.c.b16 %v3094, %v3092
        %v3787 = vpack.c.b16 %v3095, %v3093
        %v3788 = vpack.c.b16 %v3098, %v3096
        %v3789 = vpack.c.b16 %v3099, %v3097
        %v3790 = vpack.c.b16 %v3102, %v3100
        %v3791 = vpack.c.b16 %v3103, %v3101
        %v3792 = vpack.c.b16 %v3106, %v3104
        %v3793 = vpack.c.b16 %v3107, %v3105
        %v3794 = vpack.c.b16 %v3110, %v3108
        %v3795 = vpack.c.b16 %v3111, %v3109
        %v3796 = vpack.c.b16 %v3114, %v3112
        %v3797 = vpack.c.b16 %v3115, %v3113
        %v3798 = vpack.c.b16 %v3118, %v3116
        %v3799 = vpack.c.b16 %v3119, %v3117
        %v3800 = vpack.c.b16 %v3122, %v3120
        %v3801 = vpack.c.b16 %v3123, %v3121
        %v3802 = vpack.c.b16 %v3126, %v3124
        %v3803 = vpack.c.b16 %v3127, %v3125
        %v3804 = vpack.c.b16 %v3130, %v3128
        %v3805 = vpack.c.b16 %v3131, %v3129
        %v3806 = vpack.c.b16 %v3134, %v3132
        %v3807 = vpack.c.b16 %v3135, %v3133
        %v3808 = vpack.c.b16 %v3138, %v3136
        %v3809 = vpack.c.b16 %v3139, %v3137
        %v3810 = vpack.c.b16 %v3142, %v3140
        %v3811 = vpack.c.b16 %v3143, %v3141
        %v3812 = vpack.c.b16 %v3146, %v3144
        %v3813 = vpack.c.b16 %v3147, %v3145
        %v3814 = vpack.c.b16 %v3150, %v3148
        %v3815 = vpack.c.b16 %v3151, %v3149
        %v3816 = vpack.c.b16 %v3154, %v3152
        %v3817 = vpack.c.b16 %v3155, %v3153
        %v3818 = vpack.c.b16 %v3158, %v3156
        %v3819 = vpack.c.b16 %v3159, %v3157
        %v3820 = vpack.c.b16 %v3162, %v3160
        %v3821 = vpack.c.b16 %v3163, %v3161
        %v3822 = vpack.c.b16 %v3166, %v3164
        %v3823 = vpack.c.b16 %v3167, %v3165
        %v3824 = vpack.c.b16 %v3170, %v3168
        %v3825 = vpack.c.b16 %v3171, %v3169
        %v3826 = vpack.c.b16 %v3174, %v3172
        %v3827 = vpack.c.b16 %v3175, %v3173
        %v3828 = vpack.c.b16 %v3178, %v3176
        %v3829 = vpack.c.b16 %v3179, %v3177
        %v3830 = vpack.c.b16 %v3182, %v3180
        %v3831 = vpack.c.b16 %v3183, %v3181
        %v3832 = vpack.c.b16 %v3186, %v3184
        %v3833 = vpack.c.b16 %v3187, %v3185
        %v3834 = vpack.c.b16 %v3190, %v3188
        %v3835 = vpack.c.b16 %v3191, %v3189
        %v3836 = vpack.c.b16 %v3194, %v3192
        %v3837 = vpack.c.b16 %v3195, %v3193
        %v3838 = vpack.c.b16 %v3198, %v3196
        %v3839 = vpack.c.b16 %v3199, %v3197
        %v3840 = vpack.c.b16 %v3202, %v3200
        %v3841 = vpack.c.b16 %v3203, %v3201
        %v3842 = vpack.c.b16 %v3206, %v3204
        %v3843 = vpack.c.b16 %v3207, %v3205
        %v3844 = vpack.c.b16 %v3210, %v3208
        %v3845 = vpack.c.b16 %v3211, %v3209
        %v3846 = vpack.c.b16 %v3214, %v3212
        %v3847 = vpack.c.b16 %v3215, %v3213
        %v3848 = vpack.c.b16 %v3218, %v3216
        %v3849 = vpack.c.b16 %v3219, %v3217
        %v3850 = vpack.c.b16 %v3222, %v3220
        %v3851 = vpack.c.b16 %v3223, %v3221
        %v3852 = vpack.c.b16 %v3226, %v3224
        %v3853 = vpack.c.b16 %v3227, %v3225
        %v3854 = vpack.c.b16 %v3230, %v3228
        %v3855 = vpack.c.b16 %v3231, %v3229
        %v3856 = vpack.c.b16 %v3234, %v3232
        %v3857 = vpack.c.b16 %v3235, %v3233
        %v3858 = vpack.c.b16 %v3238, %v3236
        %v3859 = vpack.c.b16 %v3239, %v3237
        %v3860 = vpack.c.b16 %v3242, %v3240
        %v3861 = vpack.c.b16 %v3243, %v3241
        %v3862 = vpack.c.b16 %v3246, %v3244
        %v3863 = vpack.c.b16 %v3247, %v3245
        %v3864 = vpack.c.b16 %v3250, %v3248
        %v3865 = vpack.c.b16 %v3251, %v3249
        %v3866 = vpack.c.b16 %v3254, %v3252
        %v3867 = vpack.c.b16 %v3255, %v3253
        %v3868 = vpack.c.b16 %v3258, %v3256
        %v3869 = vpack.c.b16 %v3259, %v3257
        %v3870 = vpack.c.b16 %v3262, %v3260
        %v3871 = vpack.c.b16 %v3263, %v3261
        %v3872 = vpack.c.b16 %v3266, %v3264
        %v3873 = vpack.c.b16 %v3267, %v3265
        %v3874 = vpack.c.b16 %v3270, %v3268
        %v3875 = vpack.c.b16 %v3271, %v3269
        %v3876 = vpack.c.b16 %v3274, %v3272
        %v3877 = vpack.c.b16 %v3275, %v3273
        %v3878 = vpack.c.b16 %v3278, %v3276
        %v3879 = vpack.c.b16 %v3279, %v3277
        %v3880 = vpack.c.b16 %v3282, %v3280
        %v3881 = vpack.c.b16 %v3283, %v3281
        %v3882 = vpack.c.b16 %v3286, %v3284
        %v3883 = vpack.c.b16 %v3287, %v3285
        %v3884 = vpack.c.b16 %v3290, %v3288
        %v3885 = vpack.c.b16 %v3291, %v3289
        %v3886 = vpack.c.b16 %v3294, %v3292
        %v3887 = vpack.c.b16 %v3295, %v3293
        %v3888 = vpack.c.b16 %v3298, %v3296
        %v3889 = vpack.c.b16 %v3299, %v3297
        %v3890 = vpack.c.b16 %v3302, %v3300
        %v3891 = vpack.c.b16 %v3303, %v3301
        %v3892 = vpack.c.b16 %v3306, %v3304
        %v3893 = vpack.c.b16 %v3307, %v3305
        %v3894 = vpack.c.b16 %v3310, %v3308
        %v3895 = vpack.c.b16 %v3311, %v3309
        %v3896 = vpack.c.b16 %v3314, %v3312
        %v3897 = vpack.c.b16 %v3315, %v3313
        %v3898 = vpack.c.b16 %v3318, %v3316
        %v3899 = vpack.c.b16 %v3319, %v3317
        %v3900 = vpack.c.b16 %v3322, %v3320
        %v3901 = vpack.c.b16 %v3323, %v3321
        %v3902 = vpack.c.b16 %v3326, %v3324
        %v3903 = vpack.c.b16 %v3327, %v3325
        %v3904 = vpack.c.b16 %v3330, %v3328
        %v3905 = vpack.c.b16 %v3331, %v3329
        %v3906 = vpack.c.b16 %v3334, %v3332
        %v3907 = vpack.c.b16 %v3335, %v3333
        %v3908 = vpack.c.b16 %v3338, %v3336
        %v3909 = vpack.c.b16 %v3339, %v3337
        %v3910 = vpack.c.b16 %v3342, %v3340
        %v3911 = vpack.c.b16 %v3343, %v3341
        %v3912 = vpack.c.b16 %v3346, %v3344
        %v3913 = vpack.c.b16 %v3347, %v3345
        %v3914 = vpack.c.b16 %v3350, %v3348
        %v3915 = vpack.c.b16 %v3351, %v3349
        %v3916 = vpack.c.b16 %v3354, %v3352
        %v3917 = vpack.c.b16 %v3355, %v3353
        %v3918 = vpack.c.b16 %v3358, %v3356
        %v3919 = vpack.c.b16 %v3359, %v3357
        %v3920 = vpack.c.b16 %v3362, %v3360
        %v3921 = vpack.c.b16 %v3363, %v3361
        %v3922 = vpack.c.b16 %v3366, %v3364
        %v3923 = vpack.c.b16 %v3367, %v3365
        %v3924 = vpack.c.b16 %v3370, %v3368
        %v3925 = vpack.c.b16 %v3371, %v3369
        %v3926 = vpack.c.b16 %v3374, %v3372
        %v3927 = vpack.c.b16 %v3375, %v3373
        %v3928 = vpack.c.b16 %v3378, %v3376
        %v3929 = vpack.c.b16 %v3379, %v3377
        %v3930 = vpack.c.b16 %v3382, %v3380
        %v3931 = vpack.c.b16 %v3383, %v3381
        %v3932 = vpack.c.b16 %v3386, %v3384
        %v3933 = vpack.c.b16 %v3387, %v3385
        %v3934 = vpack.c.b16 %v3390, %v3388
        %v3935 = vpack.c.b16 %v3391, %v3389
        %v3936 = vpack.c.b16 %v3394, %v3392
        %v3937 = vpack.c.b16 %v3395, %v3393
        %v3938 = vpack.c.b16 %v3398, %v3396
        %v3939 = vpack.c.b16 %v3399, %v3397
        %v3940 = vpack.c.b16 %v3402, %v3400
        %v3941 = vpack.c.b16 %v3403, %v3401
        %v3942 = vpack.c.b16 %v3406, %v3404
        %v3943 = vpack.c.b16 %v3407, %v3405
        %v3944 = vpack.c.b16 %v3410, %v3408
        %v3945 = vpack.c.b16 %v3411, %v3409
        %v3946 = vpack.c.b16 %v3414, %v3412
        %v3947 = vpack.c.b16 %v3415, %v3413
        %v3948 = vpack.c.b16 %v3418, %v3416
        %v3949 = vpack.c.b16 %v3419, %v3417
        %v3950 = vpack.c.b16 %v3422, %v3420
        %v3951 = vpack.c.b16 %v3423, %v3421
        %v3952 = vpack.c.b16 %v3426, %v3424
        %v3953 = vpack.c.b16 %v3427, %v3425
        %v3954 = vpack.c.b16 %v3430, %v3428
        %v3955 = vpack.c.b16 %v3431, %v3429
        %v3956 = vpack.c.b16 %v3434, %v3432
        %v3957 = vpack.c.b16 %v3435, %v3433
        %v3958 = vpack.c.b16 %v3438, %v3436
        %v3959 = vpack.c.b16 %v3439, %v3437
        %v3960 = vpack.c.b16 %v3442, %v3440
        %v3961 = vpack.c.b16 %v3443, %v3441
        %v3962 = vpack.c.b16 %v3446, %v3444
        %v3963 = vpack.c.b16 %v3447, %v3445
        %v3964 = vpack.c.b16 %v3450, %v3448
        %v3965 = vpack.c.b16 %v3451, %v3449
        %v3966 = vpack.c.b16 %v3454, %v3452
        %v3967 = vpack.c.b16 %v3455, %v3453
        %v3968 = vpack.c.b16 %v3458, %v3456
        %v3969 = vpack.c.b16 %v3459, %v3457
        %v3970 = vpack.c.b16 %v3462, %v3460
        %v3971 = vpack.c.b16 %v3463, %v3461
        %v3972 = vpack.c.b16 %v3466, %v3464
        %v3973 = vpack.c.b16 %v3467, %v3465
        %v3974 = vpack.c.b16 %v3470, %v3468
        %v3975 = vpack.c.b16 %v3471, %v3469
        %v3976 = vpack.c.b16 %v3474, %v3472
        %v3977 = vpack.c.b16 %v3475, %v3473
        %v3978 = vpack.c.b16 %v3478, %v3476
        %v3979 = vpack.c.b16 %v3479, %v3477
        %v3980 = vpack.c.b16 %v3482, %v3480
        %v3981 = vpack.c.b16 %v3483, %v3481
        %v3982 = vpack.c.b16 %v3486, %v3484
        %v3983 = vpack.c.b16 %v3487, %v3485
        %v3984 = vpack.c.b16 %v3490, %v3488
        %v3985 = vpack.c.b16 %v3491, %v3489
        %v3986 = vpack.c.b16 %v3494, %v3492
        %v3987 = vpack.c.b16 %v3495, %v3493
        %v3988 = vpack.c.b16 %v3498, %v3496
        %v3989 = vpack.c.b16 %v3499, %v3497
        %v3990 = vpack.c.b16 %v3502, %v3500
        %v3991 = vpack.c.b16 %v3503, %v3501
        %v3992 = vpack.c.b16 %v3506, %v3504
        %v3993 = vpack.c.b16 %v3507, %v3505
        %v3994 = vpack.c.b16 %v3510, %v3508
        %v3995 = vpack.c.b16 %v3511, %v3509
        %v3996 = vpack.c.b16 %v3514, %v3512
        %v3997 = vpack.c.b16 %v3515, %v3513
        %v3998 = vpack.c.b16 %v3518, %v3516
        %v3999 = vpack.c.b16 %v3519, %v3517
        %v4000 = vpack.c.b16 %v3522, %v3520
        %v4001 = vpack.c.b16 %v3523, %v3521
        %v4002 = vpack.c.b16 %v3526, %v3524
        %v4003 = vpack.c.b16 %v3527, %v3525
        %v4004 = vpack.c.b16 %v3530, %v3528
        %v4005 = vpack.c.b16 %v3531, %v3529
        %v4006 = vpack.c.b16 %v3534, %v3532
        %v4007 = vpack.c.b16 %v3535, %v3533
        %v4008 = vpack.c.b16 %v3538, %v3536
        %v4009 = vpack.c.b16 %v3539, %v3537
        %v4010 = vpack.c.b16 %v3542, %v3540
        %v4011 = vpack.c.b16 %v3543, %v3541
        %v4012 = vpack.c.b16 %v3546, %v3544
        %v4013 = vpack.c.b16 %v3547, %v3545
        %v4014 = vpack.c.b16 %v3550, %v3548
        %v4015 = vpack.c.b16 %v3551, %v3549
        %v4016 = vpack.c.b16 %v3554, %v3552
        %v4017 = vpack.c.b16 %v3555, %v3553
        %v4018 = vpack.c.b16 %v3558, %v3556
        %v4019 = vpack.c.b16 %v3559, %v3557
        %v4020 = vpack.c.b16 %v3562, %v3560
        %v4021 = vpack.c.b16 %v3563, %v3561
        %v4022 = vpack.c.b16 %v3566, %v3564
        %v4023 = vpack.c.b16 %v3567, %v3565
        %v4024 = vpack.c.b16 %v3570, %v3568
        %v4025 = vpack.c.b16 %v3571, %v3569
        %v4026 = vpack.c.b16 %v3574, %v3572
        %v4027 = vpack.c.b16 %v3575, %v3573
        %v4028 = vpack.c.b16 %v3578, %v3576
        %v4029 = vpack.c.b16 %v3579, %v3577
        %v4030 = vpack.c.b16 %v3582, %v3580
        %v4031 = vpack.c.b16 %v3583, %v3581
        %v4032 = vpack.c.b16 %v3586, %v3584
        %v4033 = vpack.c.b16 %v3587, %v3585
        %v4034 = vpack.c.b16 %v3590, %v3588
        %v4035 = vpack.c.b16 %v3591, %v3589
        %v4036 = vpack.c.b16 %v3594, %v3592
        %v4037 = vpack.c.b16 %v3595, %v3593
        %v4038 = vpack.c.b16 %v3598, %v3596
        %v4039 = vpack.c.b16 %v3599, %v3597
        %v4040 = vpack.c.b16 %v3602, %v3600
        %v4041 = vpack.c.b16 %v3603, %v3601
        %v4042 = vpack.c.b16 %v3606, %v3604
        %v4043 = vpack.c.b16 %v3607, %v3605
        %v4044 = vpack.c.b16 %v3610, %v3608
        %v4045 = vpack.c.b16 %v3611, %v3609
        %v4046 = vpack.c.b16 %v3614, %v3612
        %v4047 = vpack.c.b16 %v3615, %v3613
        %v4048 = vpack.c.b16 %v3618, %v3616
        %v4049 = vpack.c.b16 %v3619, %v3617
        %v4050 = vpack.c.b16 %v3622, %v3620
        %v4051 = vpack.c.b16 %v3623, %v3621
        %v4052 = vpack.c.b16 %v3626, %v3624
        %v4053 = vpack.c.b16 %v3627, %v3625
        %v4054 = vpack.c.b16 %v3630, %v3628
        %v4055 = vpack.c.b16 %v3631, %v3629
        %v4056 = vpack.c.b16 %v3634, %v3632
        %v4057 = vpack.c.b16 %v3635, %v3633
        %v4058 = vpack.c.b16 %v3638, %v3636
        %v4059 = vpack.c.b16 %v3639, %v3637
        %v4060 = vpack.c.b16 %v3642, %v3640
        %v4061 = vpack.c.b16 %v3643, %v3641
        %v4062 = vpack.c.b16 %v3646, %v3644
        %v4063 = vpack.c.b16 %v3647, %v3645
        %v4064 = vpack.c.b16 %v3650, %v3648
        %v4065 = vpack.c.b16 %v3651, %v3649
        %v4066 = vpack.c.b16 %v3654, %v3652
        %v4067 = vpack.c.b16 %v3655, %v3653
        %v4068 = vpack.c.b16 %v3658, %v3656
        %v4069 = vpack.c.b16 %v3659, %v3657
        %v4070 = vpack.c.b16 %v3662, %v3660
        %v4071 = vpack.c.b16 %v3663, %v3661
        %v4072 = vpack.c.b16 %v3666, %v3664
        %v4073 = vpack.c.b16 %v3667, %v3665
        %v4074 = vpack.c.b16 %v3670, %v3668
        %v4075 = vpack.c.b16 %v3671, %v3669
        %v4076 = vpack.c.b16 %v3674, %v3672
        %v4077 = vpack.c.b16 %v3675, %v3673
        %v4078 = vpack.c.b16 %v3678, %v3676
        %v4079 = vpack.c.b16 %v3679, %v3677
        %4480 = vmatprep.subr.bf16.mxu0 %v3695
        %4481 = vmatpush1.bf16.msra.mxu0 %v3694
        %4482 = vmatprep.subr.bf16.mxu0 %v3693
        %4483 = vmatpush1.bf16.msra.mxu0 %v3692
        %4484 = vmatprep.subr.bf16.mxu0 %v3691
        %4485 = vmatpush1.bf16.msra.mxu0 %v3690
        %4486 = vmatprep.subr.bf16.mxu0 %v3689
        %4487 = vmatpush1.bf16.msra.mxu0 %v3688
        %4488 = vmatprep.subr.bf16.mxu0 %v3687
        %4489 = vmatpush1.bf16.msra.mxu0 %v3686
        %4490 = vmatprep.subr.bf16.mxu0 %v3685
        %4491 = vmatpush1.bf16.msra.mxu0 %v3684
        %4492 = vmatprep.subr.bf16.mxu0 %v3683
        %4493 = vmatpush1.bf16.msra.mxu0 %v3682
        %4494 = vmatprep.subr.bf16.mxu0 %v3681
        %4495 = vmatpush1.bf16.msra.mxu0 %v3680
        %4496 = vmatprep.subr.bf16.mxu0 %v3711
        %4497 = vmatpush2.bf16.msra.mxu0 %v3710
        %4498 = vmatprep.subr.bf16.mxu0 %v3709
        %4499 = vmatpush2.bf16.msra.mxu0 %v3708
        %4500 = vmatprep.subr.bf16.mxu0 %v3707
        %4501 = vmatpush2.bf16.msra.mxu0 %v3706
        %4502 = vmatprep.subr.bf16.mxu0 %v3705
        %4503 = vmatpush2.bf16.msra.mxu0 %v3704
        %4504 = vmatprep.subr.bf16.mxu0 %v3703
        %4505 = vmatpush2.bf16.msra.mxu0 %v3702
        %4506 = vmatprep.subr.bf16.mxu0 %v3701
        %4507 = vmatpush2.bf16.msra.mxu0 %v3700
        %4508 = vmatprep.subr.bf16.mxu0 %v3699
        %4509 = vmatpush2.bf16.msra.mxu0 %v3698
        %4510 = vmatprep.subr.bf16.mxu0 %v3697
        %4511 = vmatpush2.bf16.msra.mxu0 %v3696
        %4512 = vmatprep.mubr.bf16.mxu0 %v2044
        %4513 = vmatmul.mubr.bf16.gmra.mxu0 %v2043
        %v4514 = vpop.f32.mrf.mxu0
        %v4515 = vadd.f32 %v2473, %v4514
        %v4516 = vpop.f32.mrf.mxu0
        %v4517 = vadd.f32 %v2477, %v4516
        %v4518 = vpop.f32.mrf.mxu0
        %v4519 = vpop.f32.mrf.mxu0
        %4520 = vdwg.mxu0
        %4521 = vmatprep.subr.bf16.mxu0 %v3727
        %4522 = vmatpush1.bf16.msra.mxu0 %v3726
        %4523 = vmatprep.subr.bf16.mxu0 %v3725
        %4524 = vmatpush1.bf16.msra.mxu0 %v3724
        %4525 = vmatprep.subr.bf16.mxu0 %v3723
        %4526 = vmatpush1.bf16.msra.mxu0 %v3722
        %4527 = vmatprep.subr.bf16.mxu0 %v3721
        %4528 = vmatpush1.bf16.msra.mxu0 %v3720
        %4529 = vmatprep.subr.bf16.mxu0 %v3719
        %4530 = vmatpush1.bf16.msra.mxu0 %v3718
        %4531 = vmatprep.subr.bf16.mxu0 %v3717
        %4532 = vmatpush1.bf16.msra.mxu0 %v3716
        %4533 = vmatprep.subr.bf16.mxu0 %v3715
        %4534 = vmatpush1.bf16.msra.mxu0 %v3714
        %4535 = vmatprep.subr.bf16.mxu0 %v3713
        %4536 = vmatpush1.bf16.msra.mxu0 %v3712
        %4537 = vmatprep.subr.bf16.mxu0 %v3743
        %4538 = vmatpush2.bf16.msra.mxu0 %v3742
        %4539 = vmatprep.subr.bf16.mxu0 %v3741
        %4540 = vmatpush2.bf16.msra.mxu0 %v3740
        %4541 = vmatprep.subr.bf16.mxu0 %v3739
        %4542 = vmatpush2.bf16.msra.mxu0 %v3738
        %4543 = vmatprep.subr.bf16.mxu0 %v3737
        %4544 = vmatpush2.bf16.msra.mxu0 %v3736
        %4545 = vmatprep.subr.bf16.mxu0 %v3735
        %4546 = vmatpush2.bf16.msra.mxu0 %v3734
        %4547 = vmatprep.subr.bf16.mxu0 %v3733
        %4548 = vmatpush2.bf16.msra.mxu0 %v3732
        %4549 = vmatprep.subr.bf16.mxu0 %v3731
        %4550 = vmatpush2.bf16.msra.mxu0 %v3730
        %4551 = vmatprep.subr.bf16.mxu0 %v3729
        %4552 = vmatpush2.bf16.msra.mxu0 %v3728
        %4553 = vmatprep.mubr.bf16.mxu0 %v2046
        %4554 = vmatmul.mubr.bf16.gmra.mxu0 %v2045
        %v4555 = vpop.f32.mrf.mxu0
        %v4556 = vadd.f32 %v4515, %v4555
        %v4557 = vpop.f32.mrf.mxu0
        %v4558 = vadd.f32 %v4517, %v4557
        %v4559 = vpop.f32.mrf.mxu0
        %v4560 = vpop.f32.mrf.mxu0
        %4561 = vdwg.mxu0
        %4562 = vmatprep.subr.bf16.mxu0 %v3759
        %4563 = vmatpush1.bf16.msra.mxu0 %v3758
        %4564 = vmatprep.subr.bf16.mxu0 %v3757
        %4565 = vmatpush1.bf16.msra.mxu0 %v3756
        %4566 = vmatprep.subr.bf16.mxu0 %v3755
        %4567 = vmatpush1.bf16.msra.mxu0 %v3754
        %4568 = vmatprep.subr.bf16.mxu0 %v3753
        %4569 = vmatpush1.bf16.msra.mxu0 %v3752
        %4570 = vmatprep.subr.bf16.mxu0 %v3751
        %4571 = vmatpush1.bf16.msra.mxu0 %v3750
        %4572 = vmatprep.subr.bf16.mxu0 %v3749
        %4573 = vmatpush1.bf16.msra.mxu0 %v3748
        %4574 = vmatprep.subr.bf16.mxu0 %v3747
        %4575 = vmatpush1.bf16.msra.mxu0 %v3746
        %4576 = vmatprep.subr.bf16.mxu0 %v3745
        %4577 = vmatpush1.bf16.msra.mxu0 %v3744
        %4578 = vmatprep.subr.bf16.mxu0 %v3775
        %4579 = vmatpush2.bf16.msra.mxu0 %v3774
        %4580 = vmatprep.subr.bf16.mxu0 %v3773
        %4581 = vmatpush2.bf16.msra.mxu0 %v3772
        %4582 = vmatprep.subr.bf16.mxu0 %v3771
        %4583 = vmatpush2.bf16.msra.mxu0 %v3770
        %4584 = vmatprep.subr.bf16.mxu0 %v3769
        %4585 = vmatpush2.bf16.msra.mxu0 %v3768
        %4586 = vmatprep.subr.bf16.mxu0 %v3767
        %4587 = vmatpush2.bf16.msra.mxu0 %v3766
        %4588 = vmatprep.subr.bf16.mxu0 %v3765
        %4589 = vmatpush2.bf16.msra.mxu0 %v3764
        %4590 = vmatprep.subr.bf16.mxu0 %v3763
        %4591 = vmatpush2.bf16.msra.mxu0 %v3762
        %4592 = vmatprep.subr.bf16.mxu0 %v3761
        %4593 = vmatpush2.bf16.msra.mxu0 %v3760
        %4594 = vmatprep.mubr.bf16.mxu0 %v2048
        %4595 = vmatmul.mubr.bf16.gmra.mxu0 %v2047
        %v4596 = vpop.f32.mrf.mxu0
        %v4597 = vadd.f32 %v4556, %v4596
        %v4598 = vpop.f32.mrf.mxu0
        %v4599 = vadd.f32 %v4558, %v4598
        %v4600 = vpop.f32.mrf.mxu0
        %v4601 = vpop.f32.mrf.mxu0
        %4602 = vdwg.mxu0
        %4603 = vmatprep.subr.bf16.mxu0 %v3791
        %4604 = vmatpush1.bf16.msra.mxu0 %v3790
        %4605 = vmatprep.subr.bf16.mxu0 %v3789
        %4606 = vmatpush1.bf16.msra.mxu0 %v3788
        %4607 = vmatprep.subr.bf16.mxu0 %v3787
        %4608 = vmatpush1.bf16.msra.mxu0 %v3786
        %4609 = vmatprep.subr.bf16.mxu0 %v3785
        %4610 = vmatpush1.bf16.msra.mxu0 %v3784
        %4611 = vmatprep.subr.bf16.mxu0 %v3783
        %4612 = vmatpush1.bf16.msra.mxu0 %v3782
        %4613 = vmatprep.subr.bf16.mxu0 %v3781
        %4614 = vmatpush1.bf16.msra.mxu0 %v3780
        %4615 = vmatprep.subr.bf16.mxu0 %v3779
        %4616 = vmatpush1.bf16.msra.mxu0 %v3778
        %4617 = vmatprep.subr.bf16.mxu0 %v3777
        %4618 = vmatpush1.bf16.msra.mxu0 %v3776
        %4619 = vmatprep.subr.bf16.mxu0 %v3807
        %4620 = vmatpush2.bf16.msra.mxu0 %v3806
        %4621 = vmatprep.subr.bf16.mxu0 %v3805
        %4622 = vmatpush2.bf16.msra.mxu0 %v3804
        %4623 = vmatprep.subr.bf16.mxu0 %v3803
        %4624 = vmatpush2.bf16.msra.mxu0 %v3802
        %4625 = vmatprep.subr.bf16.mxu0 %v3801
        %4626 = vmatpush2.bf16.msra.mxu0 %v3800
        %4627 = vmatprep.subr.bf16.mxu0 %v3799
        %4628 = vmatpush2.bf16.msra.mxu0 %v3798
        %4629 = vmatprep.subr.bf16.mxu0 %v3797
        %4630 = vmatpush2.bf16.msra.mxu0 %v3796
        %4631 = vmatprep.subr.bf16.mxu0 %v3795
        %4632 = vmatpush2.bf16.msra.mxu0 %v3794
        %4633 = vmatprep.subr.bf16.mxu0 %v3793
        %4634 = vmatpush2.bf16.msra.mxu0 %v3792
        %4635 = vmatprep.mubr.bf16.mxu0 %v2050
        %4636 = vmatmul.mubr.bf16.gmra.mxu0 %v2049
        %v4637 = vpop.f32.mrf.mxu0
        %v4638 = vadd.f32 %v4597, %v4637
        %v4639 = vpop.f32.mrf.mxu0
        %v4640 = vadd.f32 %v4599, %v4639
        %v4641 = vpop.f32.mrf.mxu0
        %v4642 = vpop.f32.mrf.mxu0
        %4643 = vdwg.mxu0
        %4644 = vmatprep.subr.bf16.mxu0 %v3823
        %4645 = vmatpush1.bf16.msra.mxu0 %v3822
        %4646 = vmatprep.subr.bf16.mxu0 %v3821
        %4647 = vmatpush1.bf16.msra.mxu0 %v3820
        %4648 = vmatprep.subr.bf16.mxu0 %v3819
        %4649 = vmatpush1.bf16.msra.mxu0 %v3818
        %4650 = vmatprep.subr.bf16.mxu0 %v3817
        %4651 = vmatpush1.bf16.msra.mxu0 %v3816
        %4652 = vmatprep.subr.bf16.mxu0 %v3815
        %4653 = vmatpush1.bf16.msra.mxu0 %v3814
        %4654 = vmatprep.subr.bf16.mxu0 %v3813
        %4655 = vmatpush1.bf16.msra.mxu0 %v3812
        %4656 = vmatprep.subr.bf16.mxu0 %v3811
        %4657 = vmatpush1.bf16.msra.mxu0 %v3810
        %4658 = vmatprep.subr.bf16.mxu0 %v3809
        %4659 = vmatpush1.bf16.msra.mxu0 %v3808
        %4660 = vmatprep.subr.bf16.mxu0 %v3839
        %4661 = vmatpush2.bf16.msra.mxu0 %v3838
        %4662 = vmatprep.subr.bf16.mxu0 %v3837
        %4663 = vmatpush2.bf16.msra.mxu0 %v3836
        %4664 = vmatprep.subr.bf16.mxu0 %v3835
        %4665 = vmatpush2.bf16.msra.mxu0 %v3834
        %4666 = vmatprep.subr.bf16.mxu0 %v3833
        %4667 = vmatpush2.bf16.msra.mxu0 %v3832
        %4668 = vmatprep.subr.bf16.mxu0 %v3831
        %4669 = vmatpush2.bf16.msra.mxu0 %v3830
        %4670 = vmatprep.subr.bf16.mxu0 %v3829
        %4671 = vmatpush2.bf16.msra.mxu0 %v3828
        %4672 = vmatprep.subr.bf16.mxu0 %v3827
        %4673 = vmatpush2.bf16.msra.mxu0 %v3826
        %4674 = vmatprep.subr.bf16.mxu0 %v3825
        %4675 = vmatpush2.bf16.msra.mxu0 %v3824
        %4676 = vmatprep.mubr.bf16.mxu0 %v2052
        %4677 = vmatmul.mubr.bf16.gmra.mxu0 %v2051
        %v4678 = vpop.f32.mrf.mxu0
        %v4679 = vadd.f32 %v4638, %v4678
        %v4680 = vpop.f32.mrf.mxu0
        %v4681 = vadd.f32 %v4640, %v4680
        %v4682 = vpop.f32.mrf.mxu0
        %v4683 = vpop.f32.mrf.mxu0
        %4684 = vdwg.mxu0
        %4685 = vmatprep.subr.bf16.mxu0 %v3855
        %4686 = vmatpush1.bf16.msra.mxu0 %v3854
        %4687 = vmatprep.subr.bf16.mxu0 %v3853
        %4688 = vmatpush1.bf16.msra.mxu0 %v3852
        %4689 = vmatprep.subr.bf16.mxu0 %v3851
        %4690 = vmatpush1.bf16.msra.mxu0 %v3850
        %4691 = vmatprep.subr.bf16.mxu0 %v3849
        %4692 = vmatpush1.bf16.msra.mxu0 %v3848
        %4693 = vmatprep.subr.bf16.mxu0 %v3847
        %4694 = vmatpush1.bf16.msra.mxu0 %v3846
        %4695 = vmatprep.subr.bf16.mxu0 %v3845
        %4696 = vmatpush1.bf16.msra.mxu0 %v3844
        %4697 = vmatprep.subr.bf16.mxu0 %v3843
        %4698 = vmatpush1.bf16.msra.mxu0 %v3842
        %4699 = vmatprep.subr.bf16.mxu0 %v3841
        %4700 = vmatpush1.bf16.msra.mxu0 %v3840
        %4701 = vmatprep.subr.bf16.mxu0 %v3871
        %4702 = vmatpush2.bf16.msra.mxu0 %v3870
        %4703 = vmatprep.subr.bf16.mxu0 %v3869
        %4704 = vmatpush2.bf16.msra.mxu0 %v3868
        %4705 = vmatprep.subr.bf16.mxu0 %v3867
        %4706 = vmatpush2.bf16.msra.mxu0 %v3866
        %4707 = vmatprep.subr.bf16.mxu0 %v3865
        %4708 = vmatpush2.bf16.msra.mxu0 %v3864
        %4709 = vmatprep.subr.bf16.mxu0 %v3863
        %4710 = vmatpush2.bf16.msra.mxu0 %v3862
        %4711 = vmatprep.subr.bf16.mxu0 %v3861
        %4712 = vmatpush2.bf16.msra.mxu0 %v3860
        %4713 = vmatprep.subr.bf16.mxu0 %v3859
        %4714 = vmatpush2.bf16.msra.mxu0 %v3858
        %4715 = vmatprep.subr.bf16.mxu0 %v3857
        %4716 = vmatpush2.bf16.msra.mxu0 %v3856
        %4717 = vmatprep.mubr.bf16.mxu0 %v2054
        %4718 = vmatmul.mubr.bf16.gmra.mxu0 %v2053
        %v4719 = vpop.f32.mrf.mxu0
        %v4720 = vadd.f32 %v4679, %v4719
        %v4721 = vpop.f32.mrf.mxu0
        %v4722 = vadd.f32 %v4681, %v4721
        %v4723 = vpop.f32.mrf.mxu0
        %v4724 = vpop.f32.mrf.mxu0
        %4725 = vdwg.mxu0
        %4726 = vmatprep.subr.bf16.mxu0 %v3887
        %4727 = vmatpush1.bf16.msra.mxu0 %v3886
        %4728 = vmatprep.subr.bf16.mxu0 %v3885
        %4729 = vmatpush1.bf16.msra.mxu0 %v3884
        %4730 = vmatprep.subr.bf16.mxu0 %v3883
        %4731 = vmatpush1.bf16.msra.mxu0 %v3882
        %4732 = vmatprep.subr.bf16.mxu0 %v3881
        %4733 = vmatpush1.bf16.msra.mxu0 %v3880
        %4734 = vmatprep.subr.bf16.mxu0 %v3879
        %4735 = vmatpush1.bf16.msra.mxu0 %v3878
        %4736 = vmatprep.subr.bf16.mxu0 %v3877
        %4737 = vmatpush1.bf16.msra.mxu0 %v3876
        %4738 = vmatprep.subr.bf16.mxu0 %v3875
        %4739 = vmatpush1.bf16.msra.mxu0 %v3874
        %4740 = vmatprep.subr.bf16.mxu0 %v3873
        %4741 = vmatpush1.bf16.msra.mxu0 %v3872
        %4742 = vmatprep.subr.bf16.mxu0 %v3903
        %4743 = vmatpush2.bf16.msra.mxu0 %v3902
        %4744 = vmatprep.subr.bf16.mxu0 %v3901
        %4745 = vmatpush2.bf16.msra.mxu0 %v3900
        %4746 = vmatprep.subr.bf16.mxu0 %v3899
        %4747 = vmatpush2.bf16.msra.mxu0 %v3898
        %4748 = vmatprep.subr.bf16.mxu0 %v3897
        %4749 = vmatpush2.bf16.msra.mxu0 %v3896
        %4750 = vmatprep.subr.bf16.mxu0 %v3895
        %4751 = vmatpush2.bf16.msra.mxu0 %v3894
        %4752 = vmatprep.subr.bf16.mxu0 %v3893
        %4753 = vmatpush2.bf16.msra.mxu0 %v3892
        %4754 = vmatprep.subr.bf16.mxu0 %v3891
        %4755 = vmatpush2.bf16.msra.mxu0 %v3890
        %4756 = vmatprep.subr.bf16.mxu0 %v3889
        %4757 = vmatpush2.bf16.msra.mxu0 %v3888
        %4758 = vmatprep.mubr.bf16.mxu0 %v2056
        %4759 = vmatmul.mubr.bf16.gmra.mxu0 %v2055
        %v4760 = vpop.f32.mrf.mxu0
        %v4761 = vadd.f32 %v4720, %v4760
        %v4762 = vpop.f32.mrf.mxu0
        %v4763 = vadd.f32 %v4722, %v4762
        %v4764 = vpop.f32.mrf.mxu0
        %v4765 = vpop.f32.mrf.mxu0
        %4766 = vdwg.mxu0
        %4767 = vmatprep.subr.bf16.mxu0 %v3919
        %4768 = vmatpush1.bf16.msra.mxu0 %v3918
        %4769 = vmatprep.subr.bf16.mxu0 %v3917
        %4770 = vmatpush1.bf16.msra.mxu0 %v3916
        %4771 = vmatprep.subr.bf16.mxu0 %v3915
        %4772 = vmatpush1.bf16.msra.mxu0 %v3914
        %4773 = vmatprep.subr.bf16.mxu0 %v3913
        %4774 = vmatpush1.bf16.msra.mxu0 %v3912
        %4775 = vmatprep.subr.bf16.mxu0 %v3911
        %4776 = vmatpush1.bf16.msra.mxu0 %v3910
        %4777 = vmatprep.subr.bf16.mxu0 %v3909
        %4778 = vmatpush1.bf16.msra.mxu0 %v3908
        %4779 = vmatprep.subr.bf16.mxu0 %v3907
        %4780 = vmatpush1.bf16.msra.mxu0 %v3906
        %4781 = vmatprep.subr.bf16.mxu0 %v3905
        %4782 = vmatpush1.bf16.msra.mxu0 %v3904
        %4783 = vmatprep.subr.bf16.mxu0 %v3935
        %4784 = vmatpush2.bf16.msra.mxu0 %v3934
        %4785 = vmatprep.subr.bf16.mxu0 %v3933
        %4786 = vmatpush2.bf16.msra.mxu0 %v3932
        %4787 = vmatprep.subr.bf16.mxu0 %v3931
        %4788 = vmatpush2.bf16.msra.mxu0 %v3930
        %4789 = vmatprep.subr.bf16.mxu0 %v3929
        %4790 = vmatpush2.bf16.msra.mxu0 %v3928
        %4791 = vmatprep.subr.bf16.mxu0 %v3927
        %4792 = vmatpush2.bf16.msra.mxu0 %v3926
        %4793 = vmatprep.subr.bf16.mxu0 %v3925
        %4794 = vmatpush2.bf16.msra.mxu0 %v3924
        %4795 = vmatprep.subr.bf16.mxu0 %v3923
        %4796 = vmatpush2.bf16.msra.mxu0 %v3922
        %4797 = vmatprep.subr.bf16.mxu0 %v3921
        %4798 = vmatpush2.bf16.msra.mxu0 %v3920
        %4799 = vmatprep.mubr.bf16.mxu0 %v2058
        %4800 = vmatmul.mubr.bf16.gmra.mxu0 %v2057
        %v4801 = vpop.f32.mrf.mxu0
        %v4802 = vadd.f32 %v4761, %v4801
        %v4803 = vpop.f32.mrf.mxu0
        %v4804 = vadd.f32 %v4763, %v4803
        %v4805 = vpop.f32.mrf.mxu0
        %v4806 = vpop.f32.mrf.mxu0
        %4807 = vdwg.mxu0
        %4808 = vmatprep.subr.bf16.mxu0 %v3951
        %4809 = vmatpush1.bf16.msra.mxu0 %v3950
        %4810 = vmatprep.subr.bf16.mxu0 %v3949
        %4811 = vmatpush1.bf16.msra.mxu0 %v3948
        %4812 = vmatprep.subr.bf16.mxu0 %v3947
        %4813 = vmatpush1.bf16.msra.mxu0 %v3946
        %4814 = vmatprep.subr.bf16.mxu0 %v3945
        %4815 = vmatpush1.bf16.msra.mxu0 %v3944
        %4816 = vmatprep.subr.bf16.mxu0 %v3943
        %4817 = vmatpush1.bf16.msra.mxu0 %v3942
        %4818 = vmatprep.subr.bf16.mxu0 %v3941
        %4819 = vmatpush1.bf16.msra.mxu0 %v3940
        %4820 = vmatprep.subr.bf16.mxu0 %v3939
        %4821 = vmatpush1.bf16.msra.mxu0 %v3938
        %4822 = vmatprep.subr.bf16.mxu0 %v3937
        %4823 = vmatpush1.bf16.msra.mxu0 %v3936
        %4824 = vmatprep.subr.bf16.mxu0 %v3967
        %4825 = vmatpush2.bf16.msra.mxu0 %v3966
        %4826 = vmatprep.subr.bf16.mxu0 %v3965
        %4827 = vmatpush2.bf16.msra.mxu0 %v3964
        %4828 = vmatprep.subr.bf16.mxu0 %v3963
        %4829 = vmatpush2.bf16.msra.mxu0 %v3962
        %4830 = vmatprep.subr.bf16.mxu0 %v3961
        %4831 = vmatpush2.bf16.msra.mxu0 %v3960
        %4832 = vmatprep.subr.bf16.mxu0 %v3959
        %4833 = vmatpush2.bf16.msra.mxu0 %v3958
        %4834 = vmatprep.subr.bf16.mxu0 %v3957
        %4835 = vmatpush2.bf16.msra.mxu0 %v3956
        %4836 = vmatprep.subr.bf16.mxu0 %v3955
        %4837 = vmatpush2.bf16.msra.mxu0 %v3954
        %4838 = vmatprep.subr.bf16.mxu0 %v3953
        %4839 = vmatpush2.bf16.msra.mxu0 %v3952
        %4840 = vmatprep.mubr.bf16.mxu0 %v2060
        %4841 = vmatmul.mubr.bf16.gmra.mxu0 %v2059
        %v4842 = vpop.f32.mrf.mxu0
        %v4843 = vadd.f32 %v4802, %v4842
        %v4844 = vpop.f32.mrf.mxu0
        %v4845 = vadd.f32 %v4804, %v4844
        %v4846 = vpop.f32.mrf.mxu0
        %v4847 = vpop.f32.mrf.mxu0
        %4848 = vdwg.mxu0
        %4849 = vmatprep.subr.bf16.mxu0 %v3983
        %4850 = vmatpush1.bf16.msra.mxu0 %v3982
        %4851 = vmatprep.subr.bf16.mxu0 %v3981
        %4852 = vmatpush1.bf16.msra.mxu0 %v3980
        %4853 = vmatprep.subr.bf16.mxu0 %v3979
        %4854 = vmatpush1.bf16.msra.mxu0 %v3978
        %4855 = vmatprep.subr.bf16.mxu0 %v3977
        %4856 = vmatpush1.bf16.msra.mxu0 %v3976
        %4857 = vmatprep.subr.bf16.mxu0 %v3975
        %4858 = vmatpush1.bf16.msra.mxu0 %v3974
        %4859 = vmatprep.subr.bf16.mxu0 %v3973
        %4860 = vmatpush1.bf16.msra.mxu0 %v3972
        %4861 = vmatprep.subr.bf16.mxu0 %v3971
        %4862 = vmatpush1.bf16.msra.mxu0 %v3970
        %4863 = vmatprep.subr.bf16.mxu0 %v3969
        %4864 = vmatpush1.bf16.msra.mxu0 %v3968
        %4865 = vmatprep.subr.bf16.mxu0 %v3999
        %4866 = vmatpush2.bf16.msra.mxu0 %v3998
        %4867 = vmatprep.subr.bf16.mxu0 %v3997
        %4868 = vmatpush2.bf16.msra.mxu0 %v3996
        %4869 = vmatprep.subr.bf16.mxu0 %v3995
        %4870 = vmatpush2.bf16.msra.mxu0 %v3994
        %4871 = vmatprep.subr.bf16.mxu0 %v3993
        %4872 = vmatpush2.bf16.msra.mxu0 %v3992
        %4873 = vmatprep.subr.bf16.mxu0 %v3991
        %4874 = vmatpush2.bf16.msra.mxu0 %v3990
        %4875 = vmatprep.subr.bf16.mxu0 %v3989
        %4876 = vmatpush2.bf16.msra.mxu0 %v3988
        %4877 = vmatprep.subr.bf16.mxu0 %v3987
        %4878 = vmatpush2.bf16.msra.mxu0 %v3986
        %4879 = vmatprep.subr.bf16.mxu0 %v3985
        %4880 = vmatpush2.bf16.msra.mxu0 %v3984
        %4881 = vmatprep.mubr.bf16.mxu0 %v2062
        %4882 = vmatmul.mubr.bf16.gmra.mxu0 %v2061
        %v4883 = vpop.f32.mrf.mxu0
        %v4884 = vadd.f32 %v4843, %v4883
        %v4885 = vpop.f32.mrf.mxu0
        %v4886 = vadd.f32 %v4845, %v4885
        %v4887 = vpop.f32.mrf.mxu0
        %v4888 = vpop.f32.mrf.mxu0
        %4889 = vdwg.mxu0
        %4890 = vmatprep.subr.bf16.mxu0 %v4015
        %4891 = vmatpush1.bf16.msra.mxu0 %v4014
        %4892 = vmatprep.subr.bf16.mxu0 %v4013
        %4893 = vmatpush1.bf16.msra.mxu0 %v4012
        %4894 = vmatprep.subr.bf16.mxu0 %v4011
        %4895 = vmatpush1.bf16.msra.mxu0 %v4010
        %4896 = vmatprep.subr.bf16.mxu0 %v4009
        %4897 = vmatpush1.bf16.msra.mxu0 %v4008
        %4898 = vmatprep.subr.bf16.mxu0 %v4007
        %4899 = vmatpush1.bf16.msra.mxu0 %v4006
        %4900 = vmatprep.subr.bf16.mxu0 %v4005
        %4901 = vmatpush1.bf16.msra.mxu0 %v4004
        %4902 = vmatprep.subr.bf16.mxu0 %v4003
        %4903 = vmatpush1.bf16.msra.mxu0 %v4002
        %4904 = vmatprep.subr.bf16.mxu0 %v4001
        %4905 = vmatpush1.bf16.msra.mxu0 %v4000
        %4906 = vmatprep.subr.bf16.mxu0 %v4031
        %4907 = vmatpush2.bf16.msra.mxu0 %v4030
        %4908 = vmatprep.subr.bf16.mxu0 %v4029
        %4909 = vmatpush2.bf16.msra.mxu0 %v4028
        %4910 = vmatprep.subr.bf16.mxu0 %v4027
        %4911 = vmatpush2.bf16.msra.mxu0 %v4026
        %4912 = vmatprep.subr.bf16.mxu0 %v4025
        %4913 = vmatpush2.bf16.msra.mxu0 %v4024
        %4914 = vmatprep.subr.bf16.mxu0 %v4023
        %4915 = vmatpush2.bf16.msra.mxu0 %v4022
        %4916 = vmatprep.subr.bf16.mxu0 %v4021
        %4917 = vmatpush2.bf16.msra.mxu0 %v4020
        %4918 = vmatprep.subr.bf16.mxu0 %v4019
        %4919 = vmatpush2.bf16.msra.mxu0 %v4018
        %4920 = vmatprep.subr.bf16.mxu0 %v4017
        %4921 = vmatpush2.bf16.msra.mxu0 %v4016
        %4922 = vmatprep.mubr.bf16.mxu0 %v2064
        %4923 = vmatmul.mubr.bf16.gmra.mxu0 %v2063
        %v4924 = vpop.f32.mrf.mxu0
        %v4925 = vadd.f32 %v4884, %v4924
        %v4926 = vpop.f32.mrf.mxu0
        %v4927 = vadd.f32 %v4886, %v4926
        %v4928 = vpop.f32.mrf.mxu0
        %v4929 = vpop.f32.mrf.mxu0
        %4930 = vdwg.mxu0
        %4931 = vmatprep.subr.bf16.mxu0 %v4047
        %4932 = vmatpush1.bf16.msra.mxu0 %v4046
        %4933 = vmatprep.subr.bf16.mxu0 %v4045
        %4934 = vmatpush1.bf16.msra.mxu0 %v4044
        %4935 = vmatprep.subr.bf16.mxu0 %v4043
        %4936 = vmatpush1.bf16.msra.mxu0 %v4042
        %4937 = vmatprep.subr.bf16.mxu0 %v4041
        %4938 = vmatpush1.bf16.msra.mxu0 %v4040
        %4939 = vmatprep.subr.bf16.mxu0 %v4039
        %4940 = vmatpush1.bf16.msra.mxu0 %v4038
        %4941 = vmatprep.subr.bf16.mxu0 %v4037
        %4942 = vmatpush1.bf16.msra.mxu0 %v4036
        %4943 = vmatprep.subr.bf16.mxu0 %v4035
        %4944 = vmatpush1.bf16.msra.mxu0 %v4034
        %4945 = vmatprep.subr.bf16.mxu0 %v4033
        %4946 = vmatpush1.bf16.msra.mxu0 %v4032
        %4947 = vmatprep.subr.bf16.mxu0 %v4063
        %4948 = vmatpush2.bf16.msra.mxu0 %v4062
        %4949 = vmatprep.subr.bf16.mxu0 %v4061
        %4950 = vmatpush2.bf16.msra.mxu0 %v4060
        %4951 = vmatprep.subr.bf16.mxu0 %v4059
        %4952 = vmatpush2.bf16.msra.mxu0 %v4058
        %4953 = vmatprep.subr.bf16.mxu0 %v4057
        %4954 = vmatpush2.bf16.msra.mxu0 %v4056
        %4955 = vmatprep.subr.bf16.mxu0 %v4055
        %4956 = vmatpush2.bf16.msra.mxu0 %v4054
        %4957 = vmatprep.subr.bf16.mxu0 %v4053
        %4958 = vmatpush2.bf16.msra.mxu0 %v4052
        %4959 = vmatprep.subr.bf16.mxu0 %v4051
        %4960 = vmatpush2.bf16.msra.mxu0 %v4050
        %4961 = vmatprep.subr.bf16.mxu0 %v4049
        %4962 = vmatpush2.bf16.msra.mxu0 %v4048
        %4963 = vmatprep.mubr.bf16.mxu0 %v2066
        %4964 = vmatmul.mubr.bf16.gmra.mxu0 %v2065
        %v4965 = vpop.f32.mrf.mxu0
        %v4966 = vadd.f32 %v4925, %v4965
        %v4967 = vpop.f32.mrf.mxu0
        %v4968 = vadd.f32 %v4927, %v4967
        %v4969 = vpop.f32.mrf.mxu0
        %v4970 = vpop.f32.mrf.mxu0
        %4971 = vdwg.mxu0
        %4972 = vmatprep.subr.bf16.mxu0 %v4079
        %4973 = vmatpush1.bf16.msra.mxu0 %v4078
        %4974 = vmatprep.subr.bf16.mxu0 %v4077
        %4975 = vmatpush1.bf16.msra.mxu0 %v4076
        %4976 = vmatprep.subr.bf16.mxu0 %v4075
        %4977 = vmatpush1.bf16.msra.mxu0 %v4074
        %4978 = vmatprep.subr.bf16.mxu0 %v4073
        %4979 = vmatpush1.bf16.msra.mxu0 %v4072
        %4980 = vmatprep.subr.bf16.mxu0 %v4071
        %4981 = vmatpush1.bf16.msra.mxu0 %v4070
        %4982 = vmatprep.subr.bf16.mxu0 %v4069
        %4983 = vmatpush1.bf16.msra.mxu0 %v4068
        %4984 = vmatprep.subr.bf16.mxu0 %v4067
        %4985 = vmatpush1.bf16.msra.mxu0 %v4066
        %4986 = vmatprep.subr.bf16.mxu0 %v4065
        %4987 = vmatpush1.bf16.msra.mxu0 %v4064
        %4988 = vmatprep.subr.bf16.mxu0 0
        %4989 = vmatpush2.bf16.msra.mxu0 0
        %4990 = vmatprep.subr.bf16.mxu0 0
        %4991 = vmatpush2.bf16.msra.mxu0 0
        %4992 = vmatprep.subr.bf16.mxu0 0
        %4993 = vmatpush2.bf16.msra.mxu0 0
        %4994 = vmatprep.subr.bf16.mxu0 0
        %4995 = vmatpush2.bf16.msra.mxu0 0
        %4996 = vmatprep.subr.bf16.mxu0 0
        %4997 = vmatpush2.bf16.msra.mxu0 0
        %4998 = vmatprep.subr.bf16.mxu0 0
        %4999 = vmatpush2.bf16.msra.mxu0 0
        %5000 = vmatprep.subr.bf16.mxu0 0
        %5001 = vmatpush2.bf16.msra.mxu0 0
        %5002 = vmatprep.subr.bf16.mxu0 0
        %5003 = vmatpush2.bf16.msra.mxu0 0
        %5004 = vmatprep.mubr.bf16.mxu0 0
        %5005 = vmatmul.mubr.bf16.gmra.mxu0 %v2067
        %v5006 = vpop.f32.mrf.mxu0
        %v5007 = vadd.f32 %v4966, %v5006
        %v5008 = vpop.f32.mrf.mxu0
        %v5009 = vadd.f32 %v4968, %v5008
        %v5010 = vpop.f32.mrf.mxu0
        %v5011 = vpop.f32.mrf.mxu0
        %5012 = vdwg.mxu0
        %v5013 = vmax.f32 %v5007, 0.0
        %v5014 = vmax.f32 %v5009, 0.0
        %v5015 = vld [vmem:[#allocation2] sm:$0xff]
        %v5016 = vld [vmem:[#allocation2 + $0x8] sm:$0xff]
        %v5017 = vpack.c.bf16 %v5013, %v5013
        %v5018 = vpack.c.bf16 %v5014, %v5014
        %v5019 = vld [vmem:[%s1886] sm:$0xff]
        %v5020 = vld [vmem:[%s1886 + $0x8] sm:$0xff]
        %v5021 = vld [vmem:[%s1886 + $0x10] sm:$0xff]
        %v5022 = vld [vmem:[%s1886 + $0x18] sm:$0xff]
        %v5023 = vld [vmem:[%s1886 + $0x20] sm:$0xff]
        %v5024 = vld [vmem:[%s1886 + $0x28] sm:$0xff]
        %v5025 = vld [vmem:[%s1886 + $0x30] sm:$0xff]
        %v5026 = vld [vmem:[%s1886 + $0x38] sm:$0xff]
        %v5027 = vld [vmem:[%s1886 + $0x40] sm:$0xff]
        %v5028 = vld [vmem:[%s1886 + $0x48] sm:$0xff]
        %v5029 = vld [vmem:[%s1886 + $0x50] sm:$0xff]
        %v5030 = vld [vmem:[%s1886 + $0x58] sm:$0xff]
        %v5031 = vld [vmem:[%s1886 + $0x60] sm:$0xff]
        %v5032 = vld [vmem:[%s1886 + $0x68] sm:$0xff]
        %v5033 = vld [vmem:[%s1886 + $0x70] sm:$0xff]
        %v5034 = vld [vmem:[%s1886 + $0x78] sm:$0xff]
        %v5035 = vld [vmem:[%s1886 + $0x80] sm:$0xff]
        %v5036 = vld [vmem:[%s1886 + $0x88] sm:$0xff]
        %v5037 = vld [vmem:[%s1886 + $0x90] sm:$0xff]
        %v5038 = vld [vmem:[%s1886 + $0x98] sm:$0xff]
        %v5039 = vld [vmem:[%s1886 + $0xa0] sm:$0xff]
        %v5040 = vld [vmem:[%s1886 + $0xa8] sm:$0xff]
        %v5041 = vld [vmem:[%s1886 + $0xb0] sm:$0xff]
        %v5042 = vld [vmem:[%s1886 + $0xb8] sm:$0xff]
        %v5043 = vld [vmem:[%s1886 + $0xc0] sm:$0xff]
        %v5044 = vld [vmem:[%s1886 + $0xc8] sm:$0xff]
        %v5045 = vld [vmem:[%s1886 + $0xd0] sm:$0xff]
        %v5046 = vld [vmem:[%s1886 + $0xd8] sm:$0xff]
        %v5047 = vld [vmem:[%s1886 + $0xe0] sm:$0xff]
        %v5048 = vld [vmem:[%s1886 + $0xe8] sm:$0xff]
        %v5049 = vld [vmem:[%s1886 + $0xf0] sm:$0xff]
        %v5050 = vld [vmem:[%s1886 + $0xf8] sm:$0xff]
        %v5051 = vld [vmem:[%s1886 + $0x100] sm:$0xff]
        %v5052 = vld [vmem:[%s1886 + $0x108] sm:$0xff]
        %v5053 = vld [vmem:[%s1886 + $0x110] sm:$0xff]
        %v5054 = vld [vmem:[%s1886 + $0x118] sm:$0xff]
        %v5055 = vld [vmem:[%s1886 + $0x120] sm:$0xff]
        %v5056 = vld [vmem:[%s1886 + $0x128] sm:$0xff]
        %v5057 = vld [vmem:[%s1886 + $0x130] sm:$0xff]
        %v5058 = vld [vmem:[%s1886 + $0x138] sm:$0xff]
        %v5059 = vld [vmem:[%s1886 + $0x140] sm:$0xff]
        %v5060 = vld [vmem:[%s1886 + $0x148] sm:$0xff]
        %v5061 = vld [vmem:[%s1886 + $0x150] sm:$0xff]
        %v5062 = vld [vmem:[%s1886 + $0x158] sm:$0xff]
        %v5063 = vld [vmem:[%s1886 + $0x160] sm:$0xff]
        %v5064 = vld [vmem:[%s1886 + $0x168] sm:$0xff]
        %v5065 = vld [vmem:[%s1886 + $0x170] sm:$0xff]
        %v5066 = vld [vmem:[%s1886 + $0x178] sm:$0xff]
        %v5067 = vld [vmem:[%s1886 + $0x180] sm:$0xff]
        %v5068 = vld [vmem:[%s1886 + $0x188] sm:$0xff]
        %v5069 = vld [vmem:[%s1886 + $0x190] sm:$0xff]
        %v5070 = vld [vmem:[%s1886 + $0x198] sm:$0xff]
        %v5071 = vld [vmem:[%s1886 + $0x1a0] sm:$0xff]
        %v5072 = vld [vmem:[%s1886 + $0x1a8] sm:$0xff]
        %v5073 = vld [vmem:[%s1886 + $0x1b0] sm:$0xff]
        %v5074 = vld [vmem:[%s1886 + $0x1b8] sm:$0xff]
        %v5075 = vld [vmem:[%s1886 + $0x1c0] sm:$0xff]
        %v5076 = vld [vmem:[%s1886 + $0x1c8] sm:$0xff]
        %v5077 = vld [vmem:[%s1886 + $0x1d0] sm:$0xff]
        %v5078 = vld [vmem:[%s1886 + $0x1d8] sm:$0xff]
        %v5079 = vld [vmem:[%s1886 + $0x1e0] sm:$0xff]
        %v5080 = vld [vmem:[%s1886 + $0x1e8] sm:$0xff]
        %v5081 = vld [vmem:[%s1886 + $0x1f0] sm:$0xff]
        %v5082 = vld [vmem:[%s1886 + $0x1f8] sm:$0xff]
        %v5083 = vld [vmem:[%s1886 + $0x200] sm:$0xff]
        %v5084 = vld [vmem:[%s1886 + $0x208] sm:$0xff]
        %v5085 = vld [vmem:[%s1886 + $0x210] sm:$0xff]
        %v5086 = vld [vmem:[%s1886 + $0x218] sm:$0xff]
        %v5087 = vld [vmem:[%s1886 + $0x220] sm:$0xff]
        %v5088 = vld [vmem:[%s1886 + $0x228] sm:$0xff]
        %v5089 = vld [vmem:[%s1886 + $0x230] sm:$0xff]
        %v5090 = vld [vmem:[%s1886 + $0x238] sm:$0xff]
        %v5091 = vld [vmem:[%s1886 + $0x240] sm:$0xff]
        %v5092 = vld [vmem:[%s1886 + $0x248] sm:$0xff]
        %v5093 = vld [vmem:[%s1886 + $0x250] sm:$0xff]
        %v5094 = vld [vmem:[%s1886 + $0x258] sm:$0xff]
        %v5095 = vld [vmem:[%s1886 + $0x260] sm:$0xff]
        %v5096 = vld [vmem:[%s1886 + $0x268] sm:$0xff]
        %v5097 = vld [vmem:[%s1886 + $0x270] sm:$0xff]
        %v5098 = vld [vmem:[%s1886 + $0x278] sm:$0xff]
        %v5099 = vld [vmem:[%s1886 + $0x280] sm:$0xff]
        %v5100 = vld [vmem:[%s1886 + $0x288] sm:$0xff]
        %v5101 = vld [vmem:[%s1886 + $0x290] sm:$0xff]
        %v5102 = vld [vmem:[%s1886 + $0x298] sm:$0xff]
        %v5103 = vld [vmem:[%s1886 + $0x2a0] sm:$0xff]
        %v5104 = vld [vmem:[%s1886 + $0x2a8] sm:$0xff]
        %v5105 = vld [vmem:[%s1886 + $0x2b0] sm:$0xff]
        %v5106 = vld [vmem:[%s1886 + $0x2b8] sm:$0xff]
        %v5107 = vld [vmem:[%s1886 + $0x2c0] sm:$0xff]
        %v5108 = vld [vmem:[%s1886 + $0x2c8] sm:$0xff]
        %v5109 = vld [vmem:[%s1886 + $0x2d0] sm:$0xff]
        %v5110 = vld [vmem:[%s1886 + $0x2d8] sm:$0xff]
        %v5111 = vld [vmem:[%s1886 + $0x2e0] sm:$0xff]
        %v5112 = vld [vmem:[%s1886 + $0x2e8] sm:$0xff]
        %v5113 = vld [vmem:[%s1886 + $0x2f0] sm:$0xff]
        %v5114 = vld [vmem:[%s1886 + $0x2f8] sm:$0xff]
        %v5115 = vld [vmem:[%s1886 + $0x300] sm:$0xff]
        %v5116 = vld [vmem:[%s1886 + $0x308] sm:$0xff]
        %v5117 = vld [vmem:[%s1886 + $0x310] sm:$0xff]
        %v5118 = vld [vmem:[%s1886 + $0x318] sm:$0xff]
        %v5119 = vld [vmem:[%s1886 + $0x320] sm:$0xff]
        %v5120 = vld [vmem:[%s1886 + $0x328] sm:$0xff]
        %v5121 = vld [vmem:[%s1886 + $0x330] sm:$0xff]
        %v5122 = vld [vmem:[%s1886 + $0x338] sm:$0xff]
        %v5123 = vld [vmem:[%s1886 + $0x340] sm:$0xff]
        %v5124 = vld [vmem:[%s1886 + $0x348] sm:$0xff]
        %v5125 = vld [vmem:[%s1886 + $0x350] sm:$0xff]
        %v5126 = vld [vmem:[%s1886 + $0x358] sm:$0xff]
        %v5127 = vld [vmem:[%s1886 + $0x360] sm:$0xff]
        %v5128 = vld [vmem:[%s1886 + $0x368] sm:$0xff]
        %v5129 = vld [vmem:[%s1886 + $0x370] sm:$0xff]
        %v5130 = vld [vmem:[%s1886 + $0x378] sm:$0xff]
        %v5131 = vld [vmem:[%s1886 + $0x380] sm:$0xff]
        %v5132 = vld [vmem:[%s1886 + $0x388] sm:$0xff]
        %v5133 = vld [vmem:[%s1886 + $0x390] sm:$0xff]
        %v5134 = vld [vmem:[%s1886 + $0x398] sm:$0xff]
        %v5135 = vld [vmem:[%s1886 + $0x3a0] sm:$0xff]
        %v5136 = vld [vmem:[%s1886 + $0x3a8] sm:$0xff]
        %v5137 = vld [vmem:[%s1886 + $0x3b0] sm:$0xff]
        %v5138 = vld [vmem:[%s1886 + $0x3b8] sm:$0xff]
        %v5139 = vld [vmem:[%s1886 + $0x3c0] sm:$0xff]
        %v5140 = vld [vmem:[%s1886 + $0x3c8] sm:$0xff]
        %v5141 = vld [vmem:[%s1886 + $0x3d0] sm:$0xff]
        %v5142 = vld [vmem:[%s1886 + $0x3d8] sm:$0xff]
        %v5143 = vld [vmem:[%s1886 + $0x3e0] sm:$0xff]
        %v5144 = vld [vmem:[%s1886 + $0x3e8] sm:$0xff]
        %v5145 = vld [vmem:[%s1886 + $0x3f0] sm:$0xff]
        %v5146 = vld [vmem:[%s1886 + $0x3f8] sm:$0xff]
        %v5275 = vunpack.c.l.b16 %v5019
        %v5276 = vunpack.c.h.b16 %v5019
        %v5277 = vunpack.c.l.b16 %v5020
        %v5278 = vunpack.c.h.b16 %v5020
        %v5279 = vunpack.c.l.b16 %v5021
        %v5280 = vunpack.c.h.b16 %v5021
        %v5281 = vunpack.c.l.b16 %v5022
        %v5282 = vunpack.c.h.b16 %v5022
        %v5283 = vunpack.c.l.b16 %v5023
        %v5284 = vunpack.c.h.b16 %v5023
        %v5285 = vunpack.c.l.b16 %v5024
        %v5286 = vunpack.c.h.b16 %v5024
        %v5287 = vunpack.c.l.b16 %v5025
        %v5288 = vunpack.c.h.b16 %v5025
        %v5289 = vunpack.c.l.b16 %v5026
        %v5290 = vunpack.c.h.b16 %v5026
        %v5291 = vunpack.c.l.b16 %v5027
        %v5292 = vunpack.c.h.b16 %v5027
        %v5293 = vunpack.c.l.b16 %v5028
        %v5294 = vunpack.c.h.b16 %v5028
        %v5295 = vunpack.c.l.b16 %v5029
        %v5296 = vunpack.c.h.b16 %v5029
        %v5297 = vunpack.c.l.b16 %v5030
        %v5298 = vunpack.c.h.b16 %v5030
        %v5299 = vunpack.c.l.b16 %v5031
        %v5300 = vunpack.c.h.b16 %v5031
        %v5301 = vunpack.c.l.b16 %v5032
        %v5302 = vunpack.c.h.b16 %v5032
        %v5303 = vunpack.c.l.b16 %v5033
        %v5304 = vunpack.c.h.b16 %v5033
        %v5305 = vunpack.c.l.b16 %v5034
        %v5306 = vunpack.c.h.b16 %v5034
        %v5307 = vunpack.c.l.b16 %v5035
        %v5308 = vunpack.c.h.b16 %v5035
        %v5309 = vunpack.c.l.b16 %v5036
        %v5310 = vunpack.c.h.b16 %v5036
        %v5311 = vunpack.c.l.b16 %v5037
        %v5312 = vunpack.c.h.b16 %v5037
        %v5313 = vunpack.c.l.b16 %v5038
        %v5314 = vunpack.c.h.b16 %v5038
        %v5315 = vunpack.c.l.b16 %v5039
        %v5316 = vunpack.c.h.b16 %v5039
        %v5317 = vunpack.c.l.b16 %v5040
        %v5318 = vunpack.c.h.b16 %v5040
        %v5319 = vunpack.c.l.b16 %v5041
        %v5320 = vunpack.c.h.b16 %v5041
        %v5321 = vunpack.c.l.b16 %v5042
        %v5322 = vunpack.c.h.b16 %v5042
        %v5323 = vunpack.c.l.b16 %v5043
        %v5324 = vunpack.c.h.b16 %v5043
        %v5325 = vunpack.c.l.b16 %v5044
        %v5326 = vunpack.c.h.b16 %v5044
        %v5327 = vunpack.c.l.b16 %v5045
        %v5328 = vunpack.c.h.b16 %v5045
        %v5329 = vunpack.c.l.b16 %v5046
        %v5330 = vunpack.c.h.b16 %v5046
        %v5331 = vunpack.c.l.b16 %v5047
        %v5332 = vunpack.c.h.b16 %v5047
        %v5333 = vunpack.c.l.b16 %v5048
        %v5334 = vunpack.c.h.b16 %v5048
        %v5335 = vunpack.c.l.b16 %v5049
        %v5336 = vunpack.c.h.b16 %v5049
        %v5337 = vunpack.c.l.b16 %v5050
        %v5338 = vunpack.c.h.b16 %v5050
        %v5339 = vunpack.c.l.b16 %v5051
        %v5340 = vunpack.c.h.b16 %v5051
        %v5341 = vunpack.c.l.b16 %v5052
        %v5342 = vunpack.c.h.b16 %v5052
        %v5343 = vunpack.c.l.b16 %v5053
        %v5344 = vunpack.c.h.b16 %v5053
        %v5345 = vunpack.c.l.b16 %v5054
        %v5346 = vunpack.c.h.b16 %v5054
        %v5347 = vunpack.c.l.b16 %v5055
        %v5348 = vunpack.c.h.b16 %v5055
        %v5349 = vunpack.c.l.b16 %v5056
        %v5350 = vunpack.c.h.b16 %v5056
        %v5351 = vunpack.c.l.b16 %v5057
        %v5352 = vunpack.c.h.b16 %v5057
        %v5353 = vunpack.c.l.b16 %v5058
        %v5354 = vunpack.c.h.b16 %v5058
        %v5355 = vunpack.c.l.b16 %v5059
        %v5356 = vunpack.c.h.b16 %v5059
        %v5357 = vunpack.c.l.b16 %v5060
        %v5358 = vunpack.c.h.b16 %v5060
        %v5359 = vunpack.c.l.b16 %v5061
        %v5360 = vunpack.c.h.b16 %v5061
        %v5361 = vunpack.c.l.b16 %v5062
        %v5362 = vunpack.c.h.b16 %v5062
        %v5363 = vunpack.c.l.b16 %v5063
        %v5364 = vunpack.c.h.b16 %v5063
        %v5365 = vunpack.c.l.b16 %v5064
        %v5366 = vunpack.c.h.b16 %v5064
        %v5367 = vunpack.c.l.b16 %v5065
        %v5368 = vunpack.c.h.b16 %v5065
        %v5369 = vunpack.c.l.b16 %v5066
        %v5370 = vunpack.c.h.b16 %v5066
        %v5371 = vunpack.c.l.b16 %v5067
        %v5372 = vunpack.c.h.b16 %v5067
        %v5373 = vunpack.c.l.b16 %v5068
        %v5374 = vunpack.c.h.b16 %v5068
        %v5375 = vunpack.c.l.b16 %v5069
        %v5376 = vunpack.c.h.b16 %v5069
        %v5377 = vunpack.c.l.b16 %v5070
        %v5378 = vunpack.c.h.b16 %v5070
        %v5379 = vunpack.c.l.b16 %v5071
        %v5380 = vunpack.c.h.b16 %v5071
        %v5381 = vunpack.c.l.b16 %v5072
        %v5382 = vunpack.c.h.b16 %v5072
        %v5383 = vunpack.c.l.b16 %v5073
        %v5384 = vunpack.c.h.b16 %v5073
        %v5385 = vunpack.c.l.b16 %v5074
        %v5386 = vunpack.c.h.b16 %v5074
        %v5387 = vunpack.c.l.b16 %v5075
        %v5388 = vunpack.c.h.b16 %v5075
        %v5389 = vunpack.c.l.b16 %v5076
        %v5390 = vunpack.c.h.b16 %v5076
        %v5391 = vunpack.c.l.b16 %v5077
        %v5392 = vunpack.c.h.b16 %v5077
        %v5393 = vunpack.c.l.b16 %v5078
        %v5394 = vunpack.c.h.b16 %v5078
        %v5395 = vunpack.c.l.b16 %v5079
        %v5396 = vunpack.c.h.b16 %v5079
        %v5397 = vunpack.c.l.b16 %v5080
        %v5398 = vunpack.c.h.b16 %v5080
        %v5399 = vunpack.c.l.b16 %v5081
        %v5400 = vunpack.c.h.b16 %v5081
        %v5401 = vunpack.c.l.b16 %v5082
        %v5402 = vunpack.c.h.b16 %v5082
        %v5403 = vunpack.c.l.b16 %v5083
        %v5404 = vunpack.c.h.b16 %v5083
        %v5405 = vunpack.c.l.b16 %v5084
        %v5406 = vunpack.c.h.b16 %v5084
        %v5407 = vunpack.c.l.b16 %v5085
        %v5408 = vunpack.c.h.b16 %v5085
        %v5409 = vunpack.c.l.b16 %v5086
        %v5410 = vunpack.c.h.b16 %v5086
        %v5411 = vunpack.c.l.b16 %v5087
        %v5412 = vunpack.c.h.b16 %v5087
        %v5413 = vunpack.c.l.b16 %v5088
        %v5414 = vunpack.c.h.b16 %v5088
        %v5415 = vunpack.c.l.b16 %v5089
        %v5416 = vunpack.c.h.b16 %v5089
        %v5417 = vunpack.c.l.b16 %v5090
        %v5418 = vunpack.c.h.b16 %v5090
        %v5419 = vunpack.c.l.b16 %v5091
        %v5420 = vunpack.c.h.b16 %v5091
        %v5421 = vunpack.c.l.b16 %v5092
        %v5422 = vunpack.c.h.b16 %v5092
        %v5423 = vunpack.c.l.b16 %v5093
        %v5424 = vunpack.c.h.b16 %v5093
        %v5425 = vunpack.c.l.b16 %v5094
        %v5426 = vunpack.c.h.b16 %v5094
        %v5427 = vunpack.c.l.b16 %v5095
        %v5428 = vunpack.c.h.b16 %v5095
        %v5429 = vunpack.c.l.b16 %v5096
        %v5430 = vunpack.c.h.b16 %v5096
        %v5431 = vunpack.c.l.b16 %v5097
        %v5432 = vunpack.c.h.b16 %v5097
        %v5433 = vunpack.c.l.b16 %v5098
        %v5434 = vunpack.c.h.b16 %v5098
        %v5435 = vunpack.c.l.b16 %v5099
        %v5436 = vunpack.c.h.b16 %v5099
        %v5437 = vunpack.c.l.b16 %v5100
        %v5438 = vunpack.c.h.b16 %v5100
        %v5439 = vunpack.c.l.b16 %v5101
        %v5440 = vunpack.c.h.b16 %v5101
        %v5441 = vunpack.c.l.b16 %v5102
        %v5442 = vunpack.c.h.b16 %v5102
        %v5443 = vunpack.c.l.b16 %v5103
        %v5444 = vunpack.c.h.b16 %v5103
        %v5445 = vunpack.c.l.b16 %v5104
        %v5446 = vunpack.c.h.b16 %v5104
        %v5447 = vunpack.c.l.b16 %v5105
        %v5448 = vunpack.c.h.b16 %v5105
        %v5449 = vunpack.c.l.b16 %v5106
        %v5450 = vunpack.c.h.b16 %v5106
        %v5451 = vunpack.c.l.b16 %v5107
        %v5452 = vunpack.c.h.b16 %v5107
        %v5453 = vunpack.c.l.b16 %v5108
        %v5454 = vunpack.c.h.b16 %v5108
        %v5455 = vunpack.c.l.b16 %v5109
        %v5456 = vunpack.c.h.b16 %v5109
        %v5457 = vunpack.c.l.b16 %v5110
        %v5458 = vunpack.c.h.b16 %v5110
        %v5459 = vunpack.c.l.b16 %v5111
        %v5460 = vunpack.c.h.b16 %v5111
        %v5461 = vunpack.c.l.b16 %v5112
        %v5462 = vunpack.c.h.b16 %v5112
        %v5463 = vunpack.c.l.b16 %v5113
        %v5464 = vunpack.c.h.b16 %v5113
        %v5465 = vunpack.c.l.b16 %v5114
        %v5466 = vunpack.c.h.b16 %v5114
        %v5467 = vunpack.c.l.b16 %v5115
        %v5468 = vunpack.c.h.b16 %v5115
        %v5469 = vunpack.c.l.b16 %v5116
        %v5470 = vunpack.c.h.b16 %v5116
        %v5471 = vunpack.c.l.b16 %v5117
        %v5472 = vunpack.c.h.b16 %v5117
        %v5473 = vunpack.c.l.b16 %v5118
        %v5474 = vunpack.c.h.b16 %v5118
        %v5475 = vunpack.c.l.b16 %v5119
        %v5476 = vunpack.c.h.b16 %v5119
        %v5477 = vunpack.c.l.b16 %v5120
        %v5478 = vunpack.c.h.b16 %v5120
        %v5479 = vunpack.c.l.b16 %v5121
        %v5480 = vunpack.c.h.b16 %v5121
        %v5481 = vunpack.c.l.b16 %v5122
        %v5482 = vunpack.c.h.b16 %v5122
        %v5483 = vunpack.c.l.b16 %v5123
        %v5484 = vunpack.c.h.b16 %v5123
        %v5485 = vunpack.c.l.b16 %v5124
        %v5486 = vunpack.c.h.b16 %v5124
        %v5487 = vunpack.c.l.b16 %v5125
        %v5488 = vunpack.c.h.b16 %v5125
        %v5489 = vunpack.c.l.b16 %v5126
        %v5490 = vunpack.c.h.b16 %v5126
        %v5491 = vunpack.c.l.b16 %v5127
        %v5492 = vunpack.c.h.b16 %v5127
        %v5493 = vunpack.c.l.b16 %v5128
        %v5494 = vunpack.c.h.b16 %v5128
        %v5495 = vunpack.c.l.b16 %v5129
        %v5496 = vunpack.c.h.b16 %v5129
        %v5497 = vunpack.c.l.b16 %v5130
        %v5498 = vunpack.c.h.b16 %v5130
        %v5499 = vunpack.c.l.b16 %v5131
        %v5500 = vunpack.c.h.b16 %v5131
        %v5501 = vunpack.c.l.b16 %v5132
        %v5502 = vunpack.c.h.b16 %v5132
        %v5503 = vunpack.c.l.b16 %v5133
        %v5504 = vunpack.c.h.b16 %v5133
        %v5505 = vunpack.c.l.b16 %v5134
        %v5506 = vunpack.c.h.b16 %v5134
        %v5507 = vunpack.c.l.b16 %v5135
        %v5508 = vunpack.c.h.b16 %v5135
        %v5509 = vunpack.c.l.b16 %v5136
        %v5510 = vunpack.c.h.b16 %v5136
        %v5511 = vunpack.c.l.b16 %v5137
        %v5512 = vunpack.c.h.b16 %v5137
        %v5513 = vunpack.c.l.b16 %v5138
        %v5514 = vunpack.c.h.b16 %v5138
        %v5515 = vunpack.c.l.b16 %v5139
        %v5516 = vunpack.c.h.b16 %v5139
        %v5517 = vunpack.c.l.b16 %v5140
        %v5518 = vunpack.c.h.b16 %v5140
        %v5519 = vunpack.c.l.b16 %v5141
        %v5520 = vunpack.c.h.b16 %v5141
        %v5521 = vunpack.c.l.b16 %v5142
        %v5522 = vunpack.c.h.b16 %v5142
        %v5523 = vunpack.c.l.b16 %v5143
        %v5524 = vunpack.c.h.b16 %v5143
        %v5525 = vunpack.c.l.b16 %v5144
        %v5526 = vunpack.c.h.b16 %v5144
        %v5527 = vunpack.c.l.b16 %v5145
        %v5528 = vunpack.c.h.b16 %v5145
        %v5529 = vunpack.c.l.b16 %v5146
        %v5530 = vunpack.c.h.b16 %v5146
        %v5531 = vpack.c.b16 %v5283, %v5275
        %v5532 = vpack.c.b16 %v5284, %v5276
        %v5533 = vpack.c.b16 %v5285, %v5277
        %v5534 = vpack.c.b16 %v5286, %v5278
        %v5535 = vpack.c.b16 %v5287, %v5279
        %v5536 = vpack.c.b16 %v5288, %v5280
        %v5537 = vpack.c.b16 %v5289, %v5281
        %v5538 = vpack.c.b16 %v5290, %v5282
        %v5539 = vpack.c.b16 %v5299, %v5291
        %v5540 = vpack.c.b16 %v5300, %v5292
        %v5541 = vpack.c.b16 %v5301, %v5293
        %v5542 = vpack.c.b16 %v5302, %v5294
        %v5543 = vpack.c.b16 %v5303, %v5295
        %v5544 = vpack.c.b16 %v5304, %v5296
        %v5545 = vpack.c.b16 %v5305, %v5297
        %v5546 = vpack.c.b16 %v5306, %v5298
        %v5547 = vpack.c.b16 %v5315, %v5307
        %v5548 = vpack.c.b16 %v5316, %v5308
        %v5549 = vpack.c.b16 %v5317, %v5309
        %v5550 = vpack.c.b16 %v5318, %v5310
        %v5551 = vpack.c.b16 %v5319, %v5311
        %v5552 = vpack.c.b16 %v5320, %v5312
        %v5553 = vpack.c.b16 %v5321, %v5313
        %v5554 = vpack.c.b16 %v5322, %v5314
        %v5555 = vpack.c.b16 %v5331, %v5323
        %v5556 = vpack.c.b16 %v5332, %v5324
        %v5557 = vpack.c.b16 %v5333, %v5325
        %v5558 = vpack.c.b16 %v5334, %v5326
        %v5559 = vpack.c.b16 %v5335, %v5327
        %v5560 = vpack.c.b16 %v5336, %v5328
        %v5561 = vpack.c.b16 %v5337, %v5329
        %v5562 = vpack.c.b16 %v5338, %v5330
        %v5563 = vpack.c.b16 %v5347, %v5339
        %v5564 = vpack.c.b16 %v5348, %v5340
        %v5565 = vpack.c.b16 %v5349, %v5341
        %v5566 = vpack.c.b16 %v5350, %v5342
        %v5567 = vpack.c.b16 %v5351, %v5343
        %v5568 = vpack.c.b16 %v5352, %v5344
        %v5569 = vpack.c.b16 %v5353, %v5345
        %v5570 = vpack.c.b16 %v5354, %v5346
        %v5571 = vpack.c.b16 %v5363, %v5355
        %v5572 = vpack.c.b16 %v5364, %v5356
        %v5573 = vpack.c.b16 %v5365, %v5357
        %v5574 = vpack.c.b16 %v5366, %v5358
        %v5575 = vpack.c.b16 %v5367, %v5359
        %v5576 = vpack.c.b16 %v5368, %v5360
        %v5577 = vpack.c.b16 %v5369, %v5361
        %v5578 = vpack.c.b16 %v5370, %v5362
        %v5579 = vpack.c.b16 %v5379, %v5371
        %v5580 = vpack.c.b16 %v5380, %v5372
        %v5581 = vpack.c.b16 %v5381, %v5373
        %v5582 = vpack.c.b16 %v5382, %v5374
        %v5583 = vpack.c.b16 %v5383, %v5375
        %v5584 = vpack.c.b16 %v5384, %v5376
        %v5585 = vpack.c.b16 %v5385, %v5377
        %v5586 = vpack.c.b16 %v5386, %v5378
        %v5587 = vpack.c.b16 %v5395, %v5387
        %v5588 = vpack.c.b16 %v5396, %v5388
        %v5589 = vpack.c.b16 %v5397, %v5389
        %v5590 = vpack.c.b16 %v5398, %v5390
        %v5591 = vpack.c.b16 %v5399, %v5391
        %v5592 = vpack.c.b16 %v5400, %v5392
        %v5593 = vpack.c.b16 %v5401, %v5393
        %v5594 = vpack.c.b16 %v5402, %v5394
        %v5595 = vpack.c.b16 %v5411, %v5403
        %v5596 = vpack.c.b16 %v5412, %v5404
        %v5597 = vpack.c.b16 %v5413, %v5405
        %v5598 = vpack.c.b16 %v5414, %v5406
        %v5599 = vpack.c.b16 %v5415, %v5407
        %v5600 = vpack.c.b16 %v5416, %v5408
        %v5601 = vpack.c.b16 %v5417, %v5409
        %v5602 = vpack.c.b16 %v5418, %v5410
        %v5603 = vpack.c.b16 %v5427, %v5419
        %v5604 = vpack.c.b16 %v5428, %v5420
        %v5605 = vpack.c.b16 %v5429, %v5421
        %v5606 = vpack.c.b16 %v5430, %v5422
        %v5607 = vpack.c.b16 %v5431, %v5423
        %v5608 = vpack.c.b16 %v5432, %v5424
        %v5609 = vpack.c.b16 %v5433, %v5425
        %v5610 = vpack.c.b16 %v5434, %v5426
        %v5611 = vpack.c.b16 %v5443, %v5435
        %v5612 = vpack.c.b16 %v5444, %v5436
        %v5613 = vpack.c.b16 %v5445, %v5437
        %v5614 = vpack.c.b16 %v5446, %v5438
        %v5615 = vpack.c.b16 %v5447, %v5439
        %v5616 = vpack.c.b16 %v5448, %v5440
        %v5617 = vpack.c.b16 %v5449, %v5441
        %v5618 = vpack.c.b16 %v5450, %v5442
        %v5619 = vpack.c.b16 %v5459, %v5451
        %v5620 = vpack.c.b16 %v5460, %v5452
        %v5621 = vpack.c.b16 %v5461, %v5453
        %v5622 = vpack.c.b16 %v5462, %v5454
        %v5623 = vpack.c.b16 %v5463, %v5455
        %v5624 = vpack.c.b16 %v5464, %v5456
        %v5625 = vpack.c.b16 %v5465, %v5457
        %v5626 = vpack.c.b16 %v5466, %v5458
        %v5627 = vpack.c.b16 %v5475, %v5467
        %v5628 = vpack.c.b16 %v5476, %v5468
        %v5629 = vpack.c.b16 %v5477, %v5469
        %v5630 = vpack.c.b16 %v5478, %v5470
        %v5631 = vpack.c.b16 %v5479, %v5471
        %v5632 = vpack.c.b16 %v5480, %v5472
        %v5633 = vpack.c.b16 %v5481, %v5473
        %v5634 = vpack.c.b16 %v5482, %v5474
        %v5635 = vpack.c.b16 %v5491, %v5483
        %v5636 = vpack.c.b16 %v5492, %v5484
        %v5637 = vpack.c.b16 %v5493, %v5485
        %v5638 = vpack.c.b16 %v5494, %v5486
        %v5639 = vpack.c.b16 %v5495, %v5487
        %v5640 = vpack.c.b16 %v5496, %v5488
        %v5641 = vpack.c.b16 %v5497, %v5489
        %v5642 = vpack.c.b16 %v5498, %v5490
        %v5643 = vpack.c.b16 %v5507, %v5499
        %v5644 = vpack.c.b16 %v5508, %v5500
        %v5645 = vpack.c.b16 %v5509, %v5501
        %v5646 = vpack.c.b16 %v5510, %v5502
        %v5647 = vpack.c.b16 %v5511, %v5503
        %v5648 = vpack.c.b16 %v5512, %v5504
        %v5649 = vpack.c.b16 %v5513, %v5505
        %v5650 = vpack.c.b16 %v5514, %v5506
        %v5651 = vpack.c.b16 %v5523, %v5515
        %v5652 = vpack.c.b16 %v5524, %v5516
        %v5653 = vpack.c.b16 %v5525, %v5517
        %v5654 = vpack.c.b16 %v5526, %v5518
        %v5655 = vpack.c.b16 %v5527, %v5519
        %v5656 = vpack.c.b16 %v5528, %v5520
        %v5657 = vpack.c.b16 %v5529, %v5521
        %v5658 = vpack.c.b16 %v5530, %v5522
        %5787 = vmatprep.subr.bf16.mxu0 %v5588
        %5788 = vmatpush1.bf16.msra.mxu0 %v5587
        %5789 = vmatprep.subr.bf16.mxu0 %v5580
        %5790 = vmatpush1.bf16.msra.mxu0 %v5579
        %5791 = vmatprep.subr.bf16.mxu0 %v5572
        %5792 = vmatpush1.bf16.msra.mxu0 %v5571
        %5793 = vmatprep.subr.bf16.mxu0 %v5564
        %5794 = vmatpush1.bf16.msra.mxu0 %v5563
        %5795 = vmatprep.subr.bf16.mxu0 %v5556
        %5796 = vmatpush1.bf16.msra.mxu0 %v5555
        %5797 = vmatprep.subr.bf16.mxu0 %v5548
        %5798 = vmatpush1.bf16.msra.mxu0 %v5547
        %5799 = vmatprep.subr.bf16.mxu0 %v5540
        %5800 = vmatpush1.bf16.msra.mxu0 %v5539
        %5801 = vmatprep.subr.bf16.mxu0 %v5532
        %5802 = vmatpush1.bf16.msra.mxu0 %v5531
        %5803 = vmatprep.subr.bf16.mxu0 %v5652
        %5804 = vmatpush2.bf16.msra.mxu0 %v5651
        %5805 = vmatprep.subr.bf16.mxu0 %v5644
        %5806 = vmatpush2.bf16.msra.mxu0 %v5643
        %5807 = vmatprep.subr.bf16.mxu0 %v5636
        %5808 = vmatpush2.bf16.msra.mxu0 %v5635
        %5809 = vmatprep.subr.bf16.mxu0 %v5628
        %5810 = vmatpush2.bf16.msra.mxu0 %v5627
        %5811 = vmatprep.subr.bf16.mxu0 %v5620
        %5812 = vmatpush2.bf16.msra.mxu0 %v5619
        %5813 = vmatprep.subr.bf16.mxu0 %v5612
        %5814 = vmatpush2.bf16.msra.mxu0 %v5611
        %5815 = vmatprep.subr.bf16.mxu0 %v5604
        %5816 = vmatpush2.bf16.msra.mxu0 %v5603
        %5817 = vmatprep.subr.bf16.mxu0 %v5596
        %5818 = vmatpush2.bf16.msra.mxu0 %v5595
        %5819 = vmatprep.mubr.bf16.mxu0 %v5018
        %5820 = vmatmul.mubr.bf16.gmra.mxu0 %v5017
        %v5821 = vpop.f32.mrf.mxu0
        %v5822 = vadd.f32 0.0, %v5821
        %v5823 = vpop.f32.mrf.mxu0
        %v5824 = vadd.f32 0.0, %v5823
        %v5825 = vpop.f32.mrf.mxu0
        %v5826 = vpop.f32.mrf.mxu0
        %5827 = vdwg.mxu0
        %5828 = vmatprep.subr.bf16.mxu0 %v5590
        %5829 = vmatpush1.bf16.msra.mxu0 %v5589
        %5830 = vmatprep.subr.bf16.mxu0 %v5582
        %5831 = vmatpush1.bf16.msra.mxu0 %v5581
        %5832 = vmatprep.subr.bf16.mxu0 %v5574
        %5833 = vmatpush1.bf16.msra.mxu0 %v5573
        %5834 = vmatprep.subr.bf16.mxu0 %v5566
        %5835 = vmatpush1.bf16.msra.mxu0 %v5565
        %5836 = vmatprep.subr.bf16.mxu0 %v5558
        %5837 = vmatpush1.bf16.msra.mxu0 %v5557
        %5838 = vmatprep.subr.bf16.mxu0 %v5550
        %5839 = vmatpush1.bf16.msra.mxu0 %v5549
        %5840 = vmatprep.subr.bf16.mxu0 %v5542
        %5841 = vmatpush1.bf16.msra.mxu0 %v5541
        %5842 = vmatprep.subr.bf16.mxu0 %v5534
        %5843 = vmatpush1.bf16.msra.mxu0 %v5533
        %5844 = vmatprep.subr.bf16.mxu0 %v5654
        %5845 = vmatpush2.bf16.msra.mxu0 %v5653
        %5846 = vmatprep.subr.bf16.mxu0 %v5646
        %5847 = vmatpush2.bf16.msra.mxu0 %v5645
        %5848 = vmatprep.subr.bf16.mxu0 %v5638
        %5849 = vmatpush2.bf16.msra.mxu0 %v5637
        %5850 = vmatprep.subr.bf16.mxu0 %v5630
        %5851 = vmatpush2.bf16.msra.mxu0 %v5629
        %5852 = vmatprep.subr.bf16.mxu0 %v5622
        %5853 = vmatpush2.bf16.msra.mxu0 %v5621
        %5854 = vmatprep.subr.bf16.mxu0 %v5614
        %5855 = vmatpush2.bf16.msra.mxu0 %v5613
        %5856 = vmatprep.subr.bf16.mxu0 %v5606
        %5857 = vmatpush2.bf16.msra.mxu0 %v5605
        %5858 = vmatprep.subr.bf16.mxu0 %v5598
        %5859 = vmatpush2.bf16.msra.mxu0 %v5597
        %5860 = vmatprep.mubr.bf16.mxu0 %v5018
        %5861 = vmatmul.mubr.bf16.gmra.mxu0 %v5017
        %v5862 = vpop.f32.mrf.mxu0
        %v5863 = vadd.f32 0.0, %v5862
        %v5864 = vpop.f32.mrf.mxu0
        %v5865 = vadd.f32 0.0, %v5864
        %v5866 = vpop.f32.mrf.mxu0
        %v5867 = vpop.f32.mrf.mxu0
        %5868 = vdwg.mxu0
        %5869 = vmatprep.subr.bf16.mxu0 %v5592
        %5870 = vmatpush1.bf16.msra.mxu0 %v5591
        %5871 = vmatprep.subr.bf16.mxu0 %v5584
        %5872 = vmatpush1.bf16.msra.mxu0 %v5583
        %5873 = vmatprep.subr.bf16.mxu0 %v5576
        %5874 = vmatpush1.bf16.msra.mxu0 %v5575
        %5875 = vmatprep.subr.bf16.mxu0 %v5568
        %5876 = vmatpush1.bf16.msra.mxu0 %v5567
        %5877 = vmatprep.subr.bf16.mxu0 %v5560
        %5878 = vmatpush1.bf16.msra.mxu0 %v5559
        %5879 = vmatprep.subr.bf16.mxu0 %v5552
        %5880 = vmatpush1.bf16.msra.mxu0 %v5551
        %5881 = vmatprep.subr.bf16.mxu0 %v5544
        %5882 = vmatpush1.bf16.msra.mxu0 %v5543
        %5883 = vmatprep.subr.bf16.mxu0 %v5536
        %5884 = vmatpush1.bf16.msra.mxu0 %v5535
        %5885 = vmatprep.subr.bf16.mxu0 %v5656
        %5886 = vmatpush2.bf16.msra.mxu0 %v5655
        %5887 = vmatprep.subr.bf16.mxu0 %v5648
        %5888 = vmatpush2.bf16.msra.mxu0 %v5647
        %5889 = vmatprep.subr.bf16.mxu0 %v5640
        %5890 = vmatpush2.bf16.msra.mxu0 %v5639
        %5891 = vmatprep.subr.bf16.mxu0 %v5632
        %5892 = vmatpush2.bf16.msra.mxu0 %v5631
        %5893 = vmatprep.subr.bf16.mxu0 %v5624
        %5894 = vmatpush2.bf16.msra.mxu0 %v5623
        %5895 = vmatprep.subr.bf16.mxu0 %v5616
        %5896 = vmatpush2.bf16.msra.mxu0 %v5615
        %5897 = vmatprep.subr.bf16.mxu0 %v5608
        %5898 = vmatpush2.bf16.msra.mxu0 %v5607
        %5899 = vmatprep.subr.bf16.mxu0 %v5600
        %5900 = vmatpush2.bf16.msra.mxu0 %v5599
        %5901 = vmatprep.mubr.bf16.mxu0 %v5018
        %5902 = vmatmul.mubr.bf16.gmra.mxu0 %v5017
        %v5903 = vpop.f32.mrf.mxu0
        %v5904 = vadd.f32 0.0, %v5903
        %v5905 = vpop.f32.mrf.mxu0
        %v5906 = vadd.f32 0.0, %v5905
        %v5907 = vpop.f32.mrf.mxu0
        %v5908 = vpop.f32.mrf.mxu0
        %5909 = vdwg.mxu0
        %5910 = vmatprep.subr.bf16.mxu0 %v5594
        %5911 = vmatpush1.bf16.msra.mxu0 %v5593
        %5912 = vmatprep.subr.bf16.mxu0 %v5586
        %5913 = vmatpush1.bf16.msra.mxu0 %v5585
        %5914 = vmatprep.subr.bf16.mxu0 %v5578
        %5915 = vmatpush1.bf16.msra.mxu0 %v5577
        %5916 = vmatprep.subr.bf16.mxu0 %v5570
        %5917 = vmatpush1.bf16.msra.mxu0 %v5569
        %5918 = vmatprep.subr.bf16.mxu0 %v5562
        %5919 = vmatpush1.bf16.msra.mxu0 %v5561
        %5920 = vmatprep.subr.bf16.mxu0 %v5554
        %5921 = vmatpush1.bf16.msra.mxu0 %v5553
        %5922 = vmatprep.subr.bf16.mxu0 %v5546
        %5923 = vmatpush1.bf16.msra.mxu0 %v5545
        %5924 = vmatprep.subr.bf16.mxu0 %v5538
        %5925 = vmatpush1.bf16.msra.mxu0 %v5537
        %5926 = vmatprep.subr.bf16.mxu0 %v5658
        %5927 = vmatpush2.bf16.msra.mxu0 %v5657
        %5928 = vmatprep.subr.bf16.mxu0 %v5650
        %5929 = vmatpush2.bf16.msra.mxu0 %v5649
        %5930 = vmatprep.subr.bf16.mxu0 %v5642
        %5931 = vmatpush2.bf16.msra.mxu0 %v5641
        %5932 = vmatprep.subr.bf16.mxu0 %v5634
        %5933 = vmatpush2.bf16.msra.mxu0 %v5633
        %5934 = vmatprep.subr.bf16.mxu0 %v5626
        %5935 = vmatpush2.bf16.msra.mxu0 %v5625
        %5936 = vmatprep.subr.bf16.mxu0 %v5618
        %5937 = vmatpush2.bf16.msra.mxu0 %v5617
        %5938 = vmatprep.subr.bf16.mxu0 %v5610
        %5939 = vmatpush2.bf16.msra.mxu0 %v5609
        %5940 = vmatprep.subr.bf16.mxu0 %v5602
        %5941 = vmatpush2.bf16.msra.mxu0 %v5601
        %5942 = vmatprep.mubr.bf16.mxu0 %v5018
        %5943 = vmatmul.mubr.bf16.gmra.mxu0 %v5017
        %v5944 = vpop.f32.mrf.mxu0
        %v5945 = vadd.f32 0.0, %v5944
        %v5946 = vpop.f32.mrf.mxu0
        %v5947 = vadd.f32 0.0, %v5946
        %v5948 = vpop.f32.mrf.mxu0
        %v5949 = vpop.f32.mrf.mxu0
        %5950 = vdwg.mxu0
        %v5959 = vcombine.low %v5822, %v5824
        %v5960 = vcombine.low %v5863, %v5865
        %v5962 = vunpack.c.l.s4 1983009808
        %v5963 = vunpack.c.0.s8 %v5962
        %v5964 = vlaneseq
        %v5965 = vshrl.u32 %v5964, 7
        %v5966 = vsub.s32 %v5963, %v5965
        %v5967 = vrot.slane %v5959, %v5966
        %v5969 = vunpack.c.l.s4 1983009808
        %v5970 = vunpack.c.0.s8 %v5969
        %v5971 = vlaneseq
        %v5972 = vshrl.u32 %v5971, 7
        %v5973 = vsub.s32 %v5970, %v5972
        %v5974 = vrot.slane %v5960, %v5973
        %v5975 = vcombine.low %v5967, %v5974
        %v5976 = vcombine.low %v5904, %v5906
        %v5977 = vcombine.low %v5945, %v5947
        %v5979 = vunpack.c.l.s4 1983009808
        %v5980 = vunpack.c.0.s8 %v5979
        %v5981 = vlaneseq
        %v5982 = vshrl.u32 %v5981, 7
        %v5983 = vsub.s32 %v5980, %v5982
        %v5984 = vrot.slane %v5976, %v5983
        %v5986 = vunpack.c.l.s4 1983009808
        %v5987 = vunpack.c.0.s8 %v5986
        %v5988 = vlaneseq
        %v5989 = vshrl.u32 %v5988, 7
        %v5990 = vsub.s32 %v5987, %v5989
        %v5991 = vrot.slane %v5977, %v5990
        %v5992 = vcombine.low %v5984, %v5991
        %v5995 = vadd.f32 %v5015, %v5975
        %v5996 = vadd.f32 %v5016, %v5992
        %5997 = vst [vmem:[#allocation2] sm:$0xff] %v5995
        %5998 = vst [vmem:[#allocation2 + $0x8] sm:$0xff] %v5996
        %p5999 = scmp.eq.s32.totalorder %s17, 3
        // Predicated region
        $region83: #{convnet_forward.5} parent=73 // pred_check
          %p6000 = pneg %p5999
        $region84: #{convnet_forward.5} parent=73 // pred_check_branch
          %6002 = sbr.rel (%p6000) target = $region86
        $region85: #{convnet_forward.5} parent=73 // pred_region
          %v6003 = vld [vmem:[#allocation2] sm:$0xff]
          %v6004 = vld [vmem:[#allocation2 + $0x8] sm:$0xff]
          %v6005 = vld [vmem:[%s4] sm:$0xff]
          %v6007 = vlaneseq
          %v6008 = vshrl.u32 %v6007, 7
          %v6009 = vsub.s32 0, %v6008
          %v6010 = vrot.slane %v6005, %v6009
          %v6011 = vlaneseq
          %v6012 = vshrl.u32 %v6011, 7
          %v6013 = vsub.s32 1, %v6012
          %v6014 = vrot.slane %v6005, %v6013
          %v6015 = vlaneseq
          %v6016 = vshrl.u32 %v6015, 7
          %v6017 = vsub.s32 2, %v6016
          %v6018 = vrot.slane %v6005, %v6017
          %v6019 = vlaneseq
          %v6020 = vshrl.u32 %v6019, 7
          %v6021 = vsub.s32 3, %v6020
          %v6022 = vrot.slane %v6005, %v6021
          %v6023 = vlaneseq
          %v6024 = vshrl.u32 %v6023, 7
          %v6025 = vsub.s32 4, %v6024
          %v6026 = vrot.slane %v6005, %v6025
          %v6027 = vlaneseq
          %v6028 = vshrl.u32 %v6027, 7
          %v6029 = vsub.s32 5, %v6028
          %v6030 = vrot.slane %v6005, %v6029
          %v6031 = vlaneseq
          %v6032 = vshrl.u32 %v6031, 7
          %v6033 = vsub.s32 6, %v6032
          %v6034 = vrot.slane %v6005, %v6033
          %v6035 = vlaneseq
          %v6036 = vshrl.u32 %v6035, 7
          %v6037 = vsub.s32 7, %v6036
          %v6038 = vrot.slane %v6005, %v6037
          %v6039 = vcombine.low %v6010, %v6014
          %v6040 = vcombine.low %v6018, %v6022
          %v6042 = vunpack.c.l.s4 1983009808
          %v6043 = vunpack.c.0.s8 %v6042
          %v6044 = vlaneseq
          %v6045 = vshrl.u32 %v6044, 7
          %v6046 = vsub.s32 %v6043, %v6045
          %v6047 = vrot.slane %v6039, %v6046
          %v6049 = vunpack.c.l.s4 1983009808
          %v6050 = vunpack.c.0.s8 %v6049
          %v6051 = vlaneseq
          %v6052 = vshrl.u32 %v6051, 7
          %v6053 = vsub.s32 %v6050, %v6052
          %v6054 = vrot.slane %v6040, %v6053
          %v6055 = vcombine.low %v6047, %v6054
          %v6056 = vcombine.low %v6026, %v6030
          %v6057 = vcombine.low %v6034, %v6038
          %v6059 = vunpack.c.l.s4 1983009808
          %v6060 = vunpack.c.0.s8 %v6059
          %v6061 = vlaneseq
          %v6062 = vshrl.u32 %v6061, 7
          %v6063 = vsub.s32 %v6060, %v6062
          %v6064 = vrot.slane %v6056, %v6063
          %v6066 = vunpack.c.l.s4 1983009808
          %v6067 = vunpack.c.0.s8 %v6066
          %v6068 = vlaneseq
          %v6069 = vshrl.u32 %v6068, 7
          %v6070 = vsub.s32 %v6067, %v6069
          %v6071 = vrot.slane %v6057, %v6070
          %v6072 = vcombine.low %v6064, %v6071
          %v6075 = vadd.f32 %v6003, %v6055
          %v6076 = vadd.f32 %v6004, %v6072
          %v6077 = vmax.f32 %v6075, 0.0
          %v6078 = vmax.f32 %v6076, 0.0
          %6079 = vst [vmem:[#allocation4] sm:$0xff] %v6077
          %6080 = vst [vmem:[#allocation4 + $0x8] sm:$0xff] %v6078
        $region86: #{convnet_forward.5} parent=73 // pred_fallthru
          _
        // Predicated region
        $region87: #{convnet_forward.5} parent=73 // pred_check
          %p6081 = pneg %p150
        $region88: #{convnet_forward.5} parent=73 // pred_check_branch
          %6083 = sbr.rel (%p6081) target = $region90
        $region89: #{convnet_forward.5} parent=73 // pred_region
          %s6085 = ssub.s32 256, 256
          %6086 = vsyncadd [#allocation5], %s6085
          %s6088 = sshll.u32 [#allocation4], 4
          %s6089 = int_to_ptr.vmem [resolvable:$true] %s6088
          %6091 = dma.vmem_to_hbm [thread:$0]  %s6089, 256, %s5, [#allocation5]
        $region90: #{convnet_forward.5} parent=73 // pred_fallthru
          _
        // Predicated region
        $region91: #{convnet_forward.5} parent=73 // pred_check
          %p6092 = pneg %p150
        $region92: #{convnet_forward.5} parent=73 // pred_check_branch
          %6094 = sbr.rel (%p6092) target = $region94
        $region93: #{convnet_forward.5} parent=73 // pred_region
          %6095 = dma.done [#allocation5], 256
        $region94: #{convnet_forward.5} parent=73 // pred_fallthru
          _
      $region74: #{convnet_forward.5} parent=5 // pred_fallthru
        _
      %p6096 = scmp.le.s32.totalorder 2, %s12
      // Predicated region
      $region95: #{convnet_forward.5} parent=5 // pred_check
        %p6097 = pneg %p6096
      $region96: #{convnet_forward.5} parent=5 // pred_check_branch
        %6099 = sbr.rel (%p6097) target = $region98
      $region97: #{convnet_forward.5} parent=5 // pred_region
        %s6100 = ssub.s32 %s12, 2
      $region98: #{convnet_forward.5} parent=5 // pred_fallthru
        _
    $region6: #{convnet_forward.5} parent=1 // loop_footer
      %s16 = sadd.s32 1, %s12
    $region7: #{convnet_forward.5} parent=1 // loop_footer_branch
      %11 = sbr.rel target = $region3
    $region8: #{convnet_forward.5} parent=1 // loop_exit
      _
    %6101 = vsyncpa [#allocation5], 1
    %s6102 = scalar_lea.sflag [#allocation5], 1
    %6103 = vsyncpa %s6102, 1

</llo_original>
